<compile_context>
chip_gen: v7x
topology: tpu7x:2x2x1
jax: 0.10.0
libtpu: 0.0.40
codegen_flags: <defaults>
</compile_context>

<pallas_src>
import functools
import math

import jax
import jax.numpy as jnp
from jax.experimental import pallas as pl
from jax.experimental.pallas import tpu as pltpu


# ----------------------------------------------------------------------------
# Fused conv kernel (im2col-free, lane-dense output)
# ----------------------------------------------------------------------------
def _conv_kernel(x_ref, w_ref, b_ref, o_ref, *, kh, kw, wp, l_out, activation):
    """x_ref: (1, Cin, Hp*Wp)  w_ref: (kh*kw, Cout, Cin)  b_ref: (Cout, 1)
    o_ref: (1, Cout, L_out); flat index j = y*Wp + x (the last kw-1 columns of
    each row are wrap-around garbage and get trimmed by the wrapper)."""
    x = x_ref[0]                                           # (Cin, Hp*Wp) f32
    cout = o_ref.shape[1]
    acc = jnp.zeros((cout, l_out), jnp.float32)
    for ih in range(kh):
        for iw in range(kw):
            s = ih * wp + iw
            tap = x[:, s:s + l_out].astype(jnp.bfloat16)        # (Cin, L_out)
            w_t = w_ref[ih * kw + iw].astype(jnp.bfloat16)      # (Cout, Cin)
            acc = acc + jnp.dot(w_t, tap, preferred_element_type=jnp.float32)
    acc = acc + b_ref[...]
    if activation == "relu":
        acc = jnp.maximum(acc, 0.0)
    o_ref[0] = acc.astype(o_ref.dtype)


def _conv_core(xp, w, b, activation):
    """VALID, stride-1 conv on an already-padded NCHW input via the fused kernel."""
    n, cin, hp, wp = xp.shape
    kh, kw, _, cout = w.shape
    ho, wo = hp - kh + 1, wp - kw + 1
    l_in = hp * wp
    l_out = (ho - 1) * wp + wo
    xf = xp.reshape(n, cin, l_in).astype(jnp.float32)
    wk = jnp.transpose(w, (0, 1, 3, 2)).reshape(kh * kw, cout, cin)
    wk = wk.astype(jnp.float32)
    bk = b.reshape(cout, 1).astype(jnp.float32)

    out_flat = pl.pallas_call(
        functools.partial(_conv_kernel, kh=kh, kw=kw, wp=wp, l_out=l_out,
                          activation=activation),
        out_shape=jax.ShapeDtypeStruct((n, cout, l_out), jnp.float32),
        grid=(n,),
        in_specs=[
            pl.BlockSpec((1, cin, l_in), lambda i: (i, 0, 0)),
            pl.BlockSpec((kh * kw, cout, cin), lambda i: (0, 0, 0)),
            pl.BlockSpec((cout, 1), lambda i: (0, 0)),
        ],
        out_specs=pl.BlockSpec((1, cout, l_out), lambda i: (i, 0, 0)),
        compiler_params=pltpu.CompilerParams(dimension_semantics=("parallel",)),
    )(xf, wk, bk)

    out = jnp.pad(out_flat, ((0, 0), (0, 0), (0, ho * wp - l_out)))
    return out.reshape(n, cout, ho, wp)[:, :, :, :wo]


def _space_to_depth_s2(x, w, pad):
    """Rewrite a stride-2 conv as a stride-1 conv via polyphase decomposition
    (wrapper-side XLA only; keeps the kernel free of strided loads)."""
    n, cin, h, w_sz = x.shape
    kh, kw, _, cout = w.shape
    ho = (h + 2 * pad - kh) // 2 + 1
    wo = (w_sz + 2 * pad - kw) // 2 + 1
    kh2, kw2 = (kh + 1) // 2, (kw + 1) // 2
    nh, nw = ho + kh2 - 1, wo + kw2 - 1
    hp = max(2 * nh, h + 2 * pad)
    wp = max(2 * nw, w_sz + 2 * pad)
    xp = jnp.pad(x, ((0, 0), (0, 0), (pad, hp - h - pad), (pad, wp - w_sz - pad)))
    phases = []
    for py in (0, 1):
        for px in (0, 1):
            phases.append(xp[:, :, py::2, px::2][:, :, :nh, :nw])
    x_eff = jnp.concatenate(phases, axis=1)                 # (N, 4*Cin, nh, nw)

    w_eff = jnp.zeros((kh2, kw2, 4 * cin, cout), w.dtype)
    for p, (py, px) in enumerate(((0, 0), (0, 1), (1, 0), (1, 1))):
        for ay in range(kh2):
            for ax in range(kw2):
                dy, dx = 2 * ay + py, 2 * ax + px
                if dy < kh and dx < kw:
                    w_eff = w_eff.at[ay, ax, p * cin:(p + 1) * cin, :].set(w[dy, dx])
    return x_eff, w_eff


def conv2d(x, w, b, stride=1, padding=0, activation=None):
    """NCHW conv through the fused Pallas kernel (stride 1 or 2)."""
    if stride == 1:
        if padding:
            x = jnp.pad(x, ((0, 0), (0, 0), (padding, padding), (padding, padding)))
        return _conv_core(x, w, b, activation)
    if stride == 2:
        x_eff, w_eff = _space_to_depth_s2(x, w, padding)
        return _conv_core(x_eff, w_eff, b, activation)
    raise NotImplementedError("only stride 1 or 2 is supported")


# ----------------------------------------------------------------------------
# Global average pool (in-kernel reduction, no width-1 matmul)
# ----------------------------------------------------------------------------
def _gap_kernel(x_ref, o_ref):
    o_ref[...] = jnp.mean(x_ref[...], axis=2, keepdims=True)


def global_avg_pool(x):
    n, c, h, w = x.shape
    xf = x.reshape(n, c, h * w).astype(jnp.float32)
    pooled = pl.pallas_call(
        _gap_kernel,
        out_shape=jax.ShapeDtypeStruct((n, c, 1), jnp.float32),
        grid=(n,),
        in_specs=[pl.BlockSpec((1, c, h * w), lambda i: (i, 0, 0))],
        out_specs=pl.BlockSpec((1, c, 1), lambda i: (i, 0, 0)),
        compiler_params=pltpu.CompilerParams(dimension_semantics=("parallel",)),
    )(xf)
    return pooled.reshape(n, c, 1, 1)


# ----------------------------------------------------------------------------
# Generic row-tiled matmul (used for separable bilinear resize)
# ----------------------------------------------------------------------------
def _matmul_kernel(a_ref, b_ref, o_ref):
    o_ref[...] = jnp.dot(a_ref[...], b_ref[...],
                         preferred_element_type=jnp.float32).astype(o_ref.dtype)


def pallas_matmul(a, b):
    m, k = a.shape
    _, n2 = b.shape
    tm = m if m <= 1024 else 1024        # cap tile; cdiv grid handles the edge
    return pl.pallas_call(
        _matmul_kernel,
        out_shape=jax.ShapeDtypeStruct((m, n2), jnp.float32),
        grid=(pl.cdiv(m, tm),),
        in_specs=[pl.BlockSpec((tm, k), lambda i: (i, 0)),
                  pl.BlockSpec((k, n2), lambda i: (0, 0))],
        out_specs=pl.BlockSpec((tm, n2), lambda i: (i, 0)),
        compiler_params=pltpu.CompilerParams(dimension_semantics=("parallel",)),
    )(a.astype(jnp.float32), b.astype(jnp.float32))


def _interp_matrix(in_size, out_size):
    # PyTorch bilinear, align_corners=False
    j = jnp.arange(out_size, dtype=jnp.float32)
    src = (j + 0.5) * (in_size / out_size) - 0.5
    src = jnp.maximum(src, 0.0)
    i0 = jnp.clip(jnp.floor(src).astype(jnp.int32), 0, in_size - 1)
    i1 = jnp.minimum(i0 + 1, in_size - 1)
    lam = src - i0.astype(jnp.float32)
    rows = jnp.arange(out_size)
    a = jnp.zeros((out_size, in_size), jnp.float32)
    a = a.at[rows, i0].add(1.0 - lam)
    a = a.at[rows, i1].add(lam)
    return a


def _resize_last(x, a):
    lead = x.shape[:-1]
    m = math.prod(lead)
    y = pallas_matmul(x.reshape(m, x.shape[-1]), a.T)
    return y.reshape(*lead, a.shape[0])


def bilinear_resize(x, out_h, out_w):
    """x: (N, C, H, W) -> (N, C, out_h, out_w); PyTorch align_corners=False."""
    _, _, h, w = x.shape
    if (h, w) == (out_h, out_w):
        return x
    x = _resize_last(x, _interp_matrix(w, out_w))           # W direction
    x = jnp.swapaxes(x, 2, 3)
    x = _resize_last(x, _interp_matrix(h, out_h))           # H direction
    return jnp.swapaxes(x, 2, 3)


# ----------------------------------------------------------------------------
# Fused ConvLSTM (single kernel over the (batch, time) grid, h/c in VMEM)
# ----------------------------------------------------------------------------
def _convlstm_kernel(seq_ref, h0_ref, c0_ref, wx_ref, wh_ref, b_ref, mask_ref,
                     h_out_ref, c_out_ref, h_scr, c_scr, *, kh, kw, wp, l_out, hd):
    t = pl.program_id(1)

    @pl.when(t == 0)
    def _init():
        h_scr[...] = h0_ref[0]
        c_scr[...] = c0_ref[0]

    x = seq_ref[0, 0]                       # (Cin, Hp*Wp)
    h = h_scr[...]                          # (hd,  Hp*Wp), zero padded frame
    acc = jnp.zeros((4 * hd, l_out), jnp.float32)
    for ih in range(kh):
        for iw in range(kw):
            s = ih * wp + iw
            x_tap = x[:, s:s + l_out].astype(jnp.bfloat16)
            h_tap = h[:, s:s + l_out].astype(jnp.bfloat16)
            acc = acc + jnp.dot(wx_ref[ih * kw + iw].astype(jnp.bfloat16), x_tap,
                                preferred_element_type=jnp.float32)
            acc = acc + jnp.dot(wh_ref[ih * kw + iw].astype(jnp.bfloat16), h_tap,
                                preferred_element_type=jnp.float32)
    acc = acc + b_ref[...]

    # gates on sublanes (4*hd rows), spatial M on lanes; sigmoids via EUP recip
    i_g = pl.reciprocal(1.0 + jnp.exp(-acc[0 * hd:1 * hd]), approx=True)
    f_g = pl.reciprocal(1.0 + jnp.exp(-acc[1 * hd:2 * hd]), approx=True)
    o_g = pl.reciprocal(1.0 + jnp.exp(-acc[2 * hd:3 * hd]), approx=True)
    g_g = jnp.tanh(acc[3 * hd:4 * hd])

    c_new = f_g * c_scr[...] + i_g * g_g
    h_new = o_g * jnp.tanh(c_new)
    c_scr[...] = c_new
    # write h back into the zero-padded frame (mask kills wrap-around columns)
    h_valid = jnp.where(mask_ref[...] > 0.5, h_new, 0.0)
    h_scr[:, wp + 1: wp + 1 + l_out] = h_valid

    @pl.when(t == pl.num_programs(1) - 1)
    def _store():
        h_out_ref[0] = h_new
        c_out_ref[0] = c_new


def convlstm_forward(lstm_params, seq, h0, c0):
    """One-layer ConvLSTM (input_dim=2, hidden_dim=2, 3x3, batch_first).
    seq: (N, T, Cin, H, W);  h0/c0: (N, hd, H, W)  ->  final (h, c)."""
    n, t_len, cin, h, w = seq.shape
    hd = h0.shape[1]
    kh = kw = 3
    pad = 1
    hp, wp = h + 2 * pad, w + 2 * pad
    l_in = hp * wp
    l_out = (h - 1) * wp + w

    seq_p = jnp.pad(seq, ((0, 0), (0, 0), (0, 0), (pad, pad), (pad, pad)))
    seq_p = seq_p.reshape(n, t_len, cin, l_in).astype(jnp.float32)
    h0_p = jnp.pad(h0, ((0, 0), (0, 0), (pad, pad), (pad, pad)))
    h0_p = h0_p.reshape(n, hd, l_in).astype(jnp.float32)
    c0_f = jnp.pad(c0, ((0, 0), (0, 0), (0, 0), (0, wp - w)))
    c0_f = c0_f.reshape(n, hd, h * wp)[:, :, :l_out].astype(jnp.float32)

    wk = jnp.transpose(lstm_params["w"], (0, 1, 3, 2)).reshape(kh * kw, 4 * hd,
                                                               cin + hd)
    wx = wk[:, :, :cin].astype(jnp.float32)
    wh = wk[:, :, cin:].astype(jnp.float32)
    bk = lstm_params["b"].reshape(4 * hd, 1).astype(jnp.float32)
    mask = (jnp.arange(l_out) % wp < w).astype(jnp.float32).reshape(1, l_out)

    h_f, c_f = pl.pallas_call(
        functools.partial(_convlstm_kernel, kh=kh, kw=kw, wp=wp,
                          l_out=l_out, hd=hd),
        out_shape=(jax.ShapeDtypeStruct((n, hd, l_out), jnp.float32),
                   jax.ShapeDtypeStruct((n, hd, l_out), jnp.float32)),
        grid=(n, t_len),
        in_specs=[
            pl.BlockSpec((1, 1, cin, l_in), lambda i, t: (i, t, 0, 0)),
            pl.BlockSpec((1, hd, l_in), lambda i, t: (i, 0, 0)),
            pl.BlockSpec((1, hd, l_out), lambda i, t: (i, 0, 0)),
            pl.BlockSpec((kh * kw, 4 * hd, cin), lambda i, t: (0, 0, 0)),
            pl.BlockSpec((kh * kw, 4 * hd, hd), lambda i, t: (0, 0, 0)),
            pl.BlockSpec((4 * hd, 1), lambda i, t: (0, 0)),
            pl.BlockSpec((1, l_out), lambda i, t: (0, 0)),
        ],
        out_specs=(pl.BlockSpec((1, hd, l_out), lambda i, t: (i, 0, 0)),
                   pl.BlockSpec((1, hd, l_out), lambda i, t: (i, 0, 0))),
        scratch_shapes=[pltpu.VMEM((hd, l_in), jnp.float32),
                        pltpu.VMEM((hd, l_out), jnp.float32)],
        compiler_params=pltpu.CompilerParams(
            dimension_semantics=("parallel", "arbitrary")),
    )(seq_p, h0_p, c0_f, wx, wh, bk, mask)

    def unflat(z):
        z = jnp.pad(z, ((0, 0), (0, 0), (0, h * wp - l_out)))
        return z.reshape(n, hd, h, wp)[:, :, :, :w]

    return unflat(h_f), unflat(c_f)


# ----------------------------------------------------------------------------
# Parameters (deterministic)
# ----------------------------------------------------------------------------
def init_params(key):
    def conv_param(k, kh, kw, cin, cout):
        k1, k2 = jax.random.split(k)
        return {
            "w": jax.random.normal(k1, (kh, kw, cin, cout), jnp.float32) * 0.1,
            "b": jax.random.normal(k2, (cout,), jnp.float32) * 0.01,
        }

    keys = jax.random.split(key, 10)
    return {
        "stem":      conv_param(keys[0], 3, 3, 3, 8),     # /2
        "low":       conv_param(keys[1], 3, 3, 8, 16),    # /4 (low-level feats)
        "high":      conv_param(keys[2], 3, 3, 16, 32),   # /8 (high-level feats)
        "aspp1":     conv_param(keys[3], 1, 1, 32, 16),
        "aspp_pool": conv_param(keys[4], 1, 1, 32, 16),
        "aspp_proj": conv_param(keys[5], 1, 1, 32, 16),
        "low_proj":  conv_param(keys[6], 1, 1, 16, 8),
        "dec":       conv_param(keys[7], 3, 3, 24, 16),
        "cls":       conv_param(keys[8], 1, 1, 16, 2),
        # ConvLSTM: input_dim=2, hidden_dim=2, kernel (3,3), conv(4 -> 8)
        "lstm":      conv_param(keys[9], 3, 3, 4, 8),
    }


# ----------------------------------------------------------------------------
# Model forward (mirrors Deeplabv3Plus_lstmV7.forward), all NCHW
# ----------------------------------------------------------------------------
def base_forward(params, x):
    """Simplified DeepLabV3+ returning 2-class logits at input resolution."""
    p = params
    stem = conv2d(x, p["stem"]["w"], p["stem"]["b"], stride=2, padding=1,
                  activation="relu")
    low = conv2d(stem, p["low"]["w"], p["low"]["b"], stride=2, padding=1,
                 activation="relu")
    high = conv2d(low, p["high"]["w"], p["high"]["b"], stride=2, padding=1,
                  activation="relu")

    a1 = conv2d(high, p["aspp1"]["w"], p["aspp1"]["b"], activation="relu")
    pooled = global_avg_pool(high)
    ap = conv2d(pooled, p["aspp_pool"]["w"], p["aspp_pool"]["b"],
                activation="relu")
    ap = jnp.broadcast_to(ap, a1.shape)          # 1x1 -> HxW (resize of 1x1)
    aspp = conv2d(jnp.concatenate([a1, ap], axis=1),
                  p["aspp_proj"]["w"], p["aspp_proj"]["b"], activation="relu")

    up = bilinear_resize(aspp, low.shape[2], low.shape[3])
    lowp = conv2d(low, p["low_proj"]["w"], p["low_proj"]["b"], activation="relu")
    dec = conv2d(jnp.concatenate([up, lowp], axis=1),
                 p["dec"]["w"], p["dec"]["b"], padding=1, activation="relu")
    logits = conv2d(dec, p["cls"]["w"], p["cls"]["b"])
    return bilinear_resize(logits, x.shape[2], x.shape[3])   # (N, 2, H, W)


def model_step(params, x, old0, old1, h0, c0):
    logits = base_forward(params, x)                         # (N, 2, H, W)
    # The PyTorch module re-interpolates base(x) to the input size; base_forward
    # already returns input-resolution logits, so that resize is the identity
    # and is skipped (no-op work removed).
    seq = jnp.stack([old0, old1, logits], axis=1)            # (N, 3, 2, H, W)
    h_last, c_last = convlstm_forward(params["lstm"], seq, h0, c0)
    return h_last, c_last


class Deeplabv3PlusLstmV7:
    def __init__(self, params, keep_hidden=True):
        self.params = params
        self.keep_hidden = keep_hidden
        self.hidden = None
        self.old_pred = [None, None]
        self._step = jax.jit(model_step)

    def reset(self):
        self.hidden = None
        self.old_pred = [None, None]

    def forward(self, x_nchw):
        x = x_nchw.astype(jnp.float32)
        n, _, h, w = x.shape
        zeros = jnp.zeros((n, 2, h, w), jnp.float32)
        old0 = self.old_pred[0] if self.old_pred[0] is not None else zeros
        old1 = self.old_pred[1] if self.old_pred[1] is not None else zeros
        if self.keep_hidden and self.hidden is not None:
            h0, c0 = self.hidden
        else:
            h0, c0 = zeros, zeros

        out, c_last = self._step(self.params, x, old0, old1, h0, c0)

        self.hidden = (out, c_last)              # detach(): no-op in JAX
        self.old_pred = [old1, out]
        return out                               # (N, 2, H, W) NCHW


# ----------------------------------------------------------------------------
if __name__ == "__main__":
    key = jax.random.PRNGKey(0)
    pkey, xkey = jax.random.split(key)
    params = init_params(pkey)

    x = jax.random.normal(xkey, (2, 3, 16, 16), jnp.float32)   # NCHW like PyTorch

    model = Deeplabv3PlusLstmV7(params, keep_hidden=True)
    out1 = model.forward(x)
    out2 = model.forward(x)          # exercises carried hidden state / old_pred
    out2 = jax.block_until_ready(out2)

    assert out1.shape == (2, 2, 16, 16), out1.shape
    assert out2.shape == (2, 2, 16, 16), out2.shape
    assert out2.dtype == jnp.float32
    assert bool(jnp.all(jnp.isfinite(out2)))
    print("KERNEL_OK")
</pallas_src>

<mosaic_0001>
module attributes {stable_mosaic.version = 11 : i64} {
  func.func private @main(%arg0: i32) attributes {dimension_semantics = [#tpu.dimension_semantics<core_parallel>], iteration_bounds = array<i64: 2>, tpu.core_type = #tpu.core_type<sc_scalar_subcore>, window_params = []} {
    return
  }
}

module attributes {stable_mosaic.version = 11 : i64} {
  func.func private @main(%arg0: i32) attributes {dimension_semantics = [#tpu.dimension_semantics<core_parallel>], iteration_bounds = array<i64: 2>, tpu.core_type = #tpu.core_type<sc_scalar_subcore>, window_params = []} {
    return
  }
}

module attributes {stable_mosaic.version = 11 : i64} {
  func.func @_conv_kernel(%arg0: i32, %arg1: memref<1x12x81xf32, #tpu.memory_space<vmem>>, %arg2: memref<4x8x12xf32, #tpu.memory_space<vmem>>, %arg3: memref<8x1xf32, #tpu.memory_space<vmem>>, %arg4: memref<1x8x71xf32, #tpu.memory_space<vmem>>) attributes {dimension_semantics = [#tpu.dimension_semantics<parallel>], iteration_bounds = array<i64: 2>, scalar_prefetch = 0 : i64, scratch_operands = 0 : i64, tpu.core_type = #tpu.core_type<tc>, window_params = [{transform_indices = @transform_0, window_bounds = array<i64: 1, 12, 81>}, {pipeline_mode = #tpu.pipeline_mode<synchronous>, transform_indices = @transform_1, window_bounds = array<i64: 4, 8, 12>}, {pipeline_mode = #tpu.pipeline_mode<synchronous>, transform_indices = @transform_2, window_bounds = array<i64: 8, 1>}, {transform_indices = @transform_3, window_bounds = array<i64: 1, 8, 71>}]} {
    %c0 = arith.constant 0 : index
    %c0_0 = arith.constant 0 : index
    %c0_1 = arith.constant 0 : index
    %0 = vector.load %arg1[%c0, %c0_0, %c0_1] : memref<1x12x81xf32, #tpu.memory_space<vmem>>, vector<1x12x81xf32>
    %1 = vector.shape_cast %0 : vector<1x12x81xf32> to vector<12x81xf32>
    %cst = arith.constant 0.000000e+00 : f32
    %2 = vector.broadcast %cst : f32 to vector<8x71xf32>
    %3 = vector.extract_strided_slice %1 {offsets = [0, 0], sizes = [12, 71], strides = [1, 1]} : vector<12x81xf32> to vector<12x71xf32>
    %4 = arith.truncf %3 : vector<12x71xf32> to vector<12x71xbf16>
    %c0_2 = arith.constant 0 : index
    %c0_3 = arith.constant 0 : index
    %c0_4 = arith.constant 0 : index
    %5 = vector.load %arg2[%c0_2, %c0_3, %c0_4] : memref<4x8x12xf32, #tpu.memory_space<vmem>>, vector<1x8x12xf32>
    %6 = vector.shape_cast %5 : vector<1x8x12xf32> to vector<8x12xf32>
    %7 = arith.truncf %6 : vector<8x12xf32> to vector<8x12xbf16>
    %cst_5 = arith.constant dense<0.000000e+00> : vector<8x71xf32>
    %8 = tpu.matmul %7, %4, %cst_5 {dimension_numbers = #tpu.dot_dimension_numbers<[1], [0], [0], [1], [0, 0, 1, 1], [], []>} : vector<8x12xbf16>, vector<12x71xbf16>, vector<8x71xf32> -> vector<8x71xf32>
    %9 = arith.addf %2, %8 : vector<8x71xf32>
    %10 = vector.extract_strided_slice %1 {offsets = [0, 1], sizes = [12, 71], strides = [1, 1]} : vector<12x81xf32> to vector<12x71xf32>
    %11 = arith.truncf %10 : vector<12x71xf32> to vector<12x71xbf16>
    %c1 = arith.constant 1 : index
    %c0_6 = arith.constant 0 : index
    %c0_7 = arith.constant 0 : index
    %12 = vector.load %arg2[%c1, %c0_6, %c0_7] : memref<4x8x12xf32, #tpu.memory_space<vmem>>, vector<1x8x12xf32>
    %13 = vector.shape_cast %12 : vector<1x8x12xf32> to vector<8x12xf32>
    %14 = arith.truncf %13 : vector<8x12xf32> to vector<8x12xbf16>
    %cst_8 = arith.constant dense<0.000000e+00> : vector<8x71xf32>
    %15 = tpu.matmul %14, %11, %cst_8 {dimension_numbers = #tpu.dot_dimension_numbers<[1], [0], [0], [1], [0, 0, 1, 1], [], []>} : vector<8x12xbf16>, vector<12x71xbf16>, vector<8x71xf32> -> vector<8x71xf32>
    %16 = arith.addf %9, %15 : vector<8x71xf32>
    %17 = vector.extract_strided_slice %1 {offsets = [0, 9], sizes = [12, 71], strides = [1, 1]} : vector<12x81xf32> to vector<12x71xf32>
    %18 = arith.truncf %17 : vector<12x71xf32> to vector<12x71xbf16>
    %c2 = arith.constant 2 : index
    %c0_9 = arith.constant 0 : index
    %c0_10 = arith.constant 0 : index
    %19 = vector.load %arg2[%c2, %c0_9, %c0_10] : memref<4x8x12xf32, #tpu.memory_space<vmem>>, vector<1x8x12xf32>
    %20 = vector.shape_cast %19 : vector<1x8x12xf32> to vector<8x12xf32>
    %21 = arith.truncf %20 : vector<8x12xf32> to vector<8x12xbf16>
    %cst_11 = arith.constant dense<0.000000e+00> : vector<8x71xf32>
    %22 = tpu.matmul %21, %18, %cst_11 {dimension_numbers = #tpu.dot_dimension_numbers<[1], [0], [0], [1], [0, 0, 1, 1], [], []>} : vector<8x12xbf16>, vector<12x71xbf16>, vector<8x71xf32> -> vector<8x71xf32>
    %23 = arith.addf %16, %22 : vector<8x71xf32>
    %24 = vector.extract_strided_slice %1 {offsets = [0, 10], sizes = [12, 71], strides = [1, 1]} : vector<12x81xf32> to vector<12x71xf32>
    %25 = arith.truncf %24 : vector<12x71xf32> to vector<12x71xbf16>
    %c3 = arith.constant 3 : index
    %c0_12 = arith.constant 0 : index
    %c0_13 = arith.constant 0 : index
    %26 = vector.load %arg2[%c3, %c0_12, %c0_13] : memref<4x8x12xf32, #tpu.memory_space<vmem>>, vector<1x8x12xf32>
    %27 = vector.shape_cast %26 : vector<1x8x12xf32> to vector<8x12xf32>
    %28 = arith.truncf %27 : vector<8x12xf32> to vector<8x12xbf16>
    %cst_14 = arith.constant dense<0.000000e+00> : vector<8x71xf32>
    %29 = tpu.matmul %28, %25, %cst_14 {dimension_numbers = #tpu.dot_dimension_numbers<[1], [0], [0], [1], [0, 0, 1, 1], [], []>} : vector<8x12xbf16>, vector<12x71xbf16>, vector<8x71xf32> -> vector<8x71xf32>
    %30 = arith.addf %23, %29 : vector<8x71xf32>
    %c0_15 = arith.constant 0 : index
    %c0_16 = arith.constant 0 : index
    %31 = vector.load %arg3[%c0_15, %c0_16] : memref<8x1xf32, #tpu.memory_space<vmem>>, vector<8x1xf32>
    %32 = vector.broadcast %31 : vector<8x1xf32> to vector<8x71xf32>
    %33 = arith.addf %30, %32 : vector<8x71xf32>
    %cst_17 = arith.constant 0.000000e+00 : f32
    %34 = vector.broadcast %cst_17 : f32 to vector<8x71xf32>
    %35 = arith.maximumf %33, %34 : vector<8x71xf32>
    %c0_18 = arith.constant 0 : index
    %c0_19 = arith.constant 0 : index
    %c0_20 = arith.constant 0 : index
    %36 = vector.load %arg4[%c0_18, %c0_19, %c0_20] : memref<1x8x71xf32, #tpu.memory_space<vmem>>, vector<1x8x71xf32>
    %37 = vector.shape_cast %36 : vector<1x8x71xf32> to vector<8x71xf32>
    %38 = vector.shape_cast %35 : vector<8x71xf32> to vector<1x8x71xf32>
    tpu.vector_store %arg4[%c0_18, %c0_19, %c0_20], %38 {strides = array<i32>} : memref<1x8x71xf32, #tpu.memory_space<vmem>>, vector<1x8x71xf32>,
    return
  }
  func.func @transform_0(%arg0: i32) -> (i32, i32, i32) {
    %c0_i32 = arith.constant 0 : i32
    %c0_i32_0 = arith.constant 0 : i32
    %c0_i32_1 = arith.constant 0 : i32
    return %arg0, %c0_i32, %c0_i32_0 : i32, i32, i32
  }
  func.func @transform_1(%arg0: i32) -> (i32, i32, i32) {
    %c0_i32 = arith.constant 0 : i32
    %c0_i32_0 = arith.constant 0 : i32
    %c0_i32_1 = arith.constant 0 : i32
    %c0_i32_2 = arith.constant 0 : i32
    return %c0_i32, %c0_i32_0, %c0_i32_1 : i32, i32, i32
  }
  func.func @transform_2(%arg0: i32) -> (i32, i32) {
    %c0_i32 = arith.constant 0 : i32
    %c0_i32_0 = arith.constant 0 : i32
    %c0_i32_1 = arith.constant 0 : i32
    return %c0_i32, %c0_i32_0 : i32, i32
  }
  func.func @transform_3(%arg0: i32) -> (i32, i32, i32) {
    %c0_i32 = arith.constant 0 : i32
    %c0_i32_0 = arith.constant 0 : i32
    %c0_i32_1 = arith.constant 0 : i32
    return %arg0, %c0_i32, %c0_i32_0 : i32, i32, i32
  }
}

module attributes {stable_mosaic.version = 11 : i64} {
  func.func @_conv_kernel(%arg0: i32, %arg1: memref<1x32x25xf32, #tpu.memory_space<vmem>>, %arg2: memref<4x16x32xf32, #tpu.memory_space<vmem>>, %arg3: memref<16x1xf32, #tpu.memory_space<vmem>>, %arg4: memref<1x16x19xf32, #tpu.memory_space<vmem>>) attributes {dimension_semantics = [#tpu.dimension_semantics<parallel>], iteration_bounds = array<i64: 2>, scalar_prefetch = 0 : i64, scratch_operands = 0 : i64, tpu.core_type = #tpu.core_type<tc>, window_params = [{transform_indices = @transform_0, window_bounds = array<i64: 1, 32, 25>}, {pipeline_mode = #tpu.pipeline_mode<synchronous>, transform_indices = @transform_1, window_bounds = array<i64: 4, 16, 32>}, {pipeline_mode = #tpu.pipeline_mode<synchronous>, transform_indices = @transform_2, window_bounds = array<i64: 16, 1>}, {transform_indices = @transform_3, window_bounds = array<i64: 1, 16, 19>}]} {
    %c0 = arith.constant 0 : index
    %c0_0 = arith.constant 0 : index
    %c0_1 = arith.constant 0 : index
    %0 = vector.load %arg1[%c0, %c0_0, %c0_1] : memref<1x32x25xf32, #tpu.memory_space<vmem>>, vector<1x32x25xf32>
    %1 = vector.shape_cast %0 : vector<1x32x25xf32> to vector<32x25xf32>
    %cst = arith.constant 0.000000e+00 : f32
    %2 = vector.broadcast %cst : f32 to vector<16x19xf32>
    %3 = vector.extract_strided_slice %1 {offsets = [0, 0], sizes = [32, 19], strides = [1, 1]} : vector<32x25xf32> to vector<32x19xf32>
    %4 = arith.truncf %3 : vector<32x19xf32> to vector<32x19xbf16>
    %c0_2 = arith.constant 0 : index
    %c0_3 = arith.constant 0 : index
    %c0_4 = arith.constant 0 : index
    %5 = vector.load %arg2[%c0_2, %c0_3, %c0_4] : memref<4x16x32xf32, #tpu.memory_space<vmem>>, vector<1x16x32xf32>
    %6 = vector.shape_cast %5 : vector<1x16x32xf32> to vector<16x32xf32>
    %7 = arith.truncf %6 : vector<16x32xf32> to vector<16x32xbf16>
    %cst_5 = arith.constant dense<0.000000e+00> : vector<16x19xf32>
    %8 = tpu.matmul %7, %4, %cst_5 {dimension_numbers = #tpu.dot_dimension_numbers<[1], [0], [0], [1], [0, 0, 1, 1], [], []>} : vector<16x32xbf16>, vector<32x19xbf16>, vector<16x19xf32> -> vector<16x19xf32>
    %9 = arith.addf %2, %8 : vector<16x19xf32>
    %10 = vector.extract_strided_slice %1 {offsets = [0, 1], sizes = [32, 19], strides = [1, 1]} : vector<32x25xf32> to vector<32x19xf32>
    %11 = arith.truncf %10 : vector<32x19xf32> to vector<32x19xbf16>
    %c1 = arith.constant 1 : index
    %c0_6 = arith.constant 0 : index
    %c0_7 = arith.constant 0 : index
    %12 = vector.load %arg2[%c1, %c0_6, %c0_7] : memref<4x16x32xf32, #tpu.memory_space<vmem>>, vector<1x16x32xf32>
    %13 = vector.shape_cast %12 : vector<1x16x32xf32> to vector<16x32xf32>
    %14 = arith.truncf %13 : vector<16x32xf32> to vector<16x32xbf16>
    %cst_8 = arith.constant dense<0.000000e+00> : vector<16x19xf32>
    %15 = tpu.matmul %14, %11, %cst_8 {dimension_numbers = #tpu.dot_dimension_numbers<[1], [0], [0], [1], [0, 0, 1, 1], [], []>} : vector<16x32xbf16>, vector<32x19xbf16>, vector<16x19xf32> -> vector<16x19xf32>
    %16 = arith.addf %9, %15 : vector<16x19xf32>
    %17 = vector.extract_strided_slice %1 {offsets = [0, 5], sizes = [32, 19], strides = [1, 1]} : vector<32x25xf32> to vector<32x19xf32>
    %18 = arith.truncf %17 : vector<32x19xf32> to vector<32x19xbf16>
    %c2 = arith.constant 2 : index
    %c0_9 = arith.constant 0 : index
    %c0_10 = arith.constant 0 : index
    %19 = vector.load %arg2[%c2, %c0_9, %c0_10] : memref<4x16x32xf32, #tpu.memory_space<vmem>>, vector<1x16x32xf32>
    %20 = vector.shape_cast %19 : vector<1x16x32xf32> to vector<16x32xf32>
    %21 = arith.truncf %20 : vector<16x32xf32> to vector<16x32xbf16>
    %cst_11 = arith.constant dense<0.000000e+00> : vector<16x19xf32>
    %22 = tpu.matmul %21, %18, %cst_11 {dimension_numbers = #tpu.dot_dimension_numbers<[1], [0], [0], [1], [0, 0, 1, 1], [], []>} : vector<16x32xbf16>, vector<32x19xbf16>, vector<16x19xf32> -> vector<16x19xf32>
    %23 = arith.addf %16, %22 : vector<16x19xf32>
    %24 = vector.extract_strided_slice %1 {offsets = [0, 6], sizes = [32, 19], strides = [1, 1]} : vector<32x25xf32> to vector<32x19xf32>
    %25 = arith.truncf %24 : vector<32x19xf32> to vector<32x19xbf16>
    %c3 = arith.constant 3 : index
    %c0_12 = arith.constant 0 : index
    %c0_13 = arith.constant 0 : index
    %26 = vector.load %arg2[%c3, %c0_12, %c0_13] : memref<4x16x32xf32, #tpu.memory_space<vmem>>, vector<1x16x32xf32>
    %27 = vector.shape_cast %26 : vector<1x16x32xf32> to vector<16x32xf32>
    %28 = arith.truncf %27 : vector<16x32xf32> to vector<16x32xbf16>
    %cst_14 = arith.constant dense<0.000000e+00> : vector<16x19xf32>
    %29 = tpu.matmul %28, %25, %cst_14 {dimension_numbers = #tpu.dot_dimension_numbers<[1], [0], [0], [1], [0, 0, 1, 1], [], []>} : vector<16x32xbf16>, vector<32x19xbf16>, vector<16x19xf32> -> vector<16x19xf32>
    %30 = arith.addf %23, %29 : vector<16x19xf32>
    %c0_15 = arith.constant 0 : index
    %c0_16 = arith.constant 0 : index
    %31 = vector.load %arg3[%c0_15, %c0_16] : memref<16x1xf32, #tpu.memory_space<vmem>>, vector<16x1xf32>
    %32 = vector.broadcast %31 : vector<16x1xf32> to vector<16x19xf32>
    %33 = arith.addf %30, %32 : vector<16x19xf32>
    %cst_17 = arith.constant 0.000000e+00 : f32
    %34 = vector.broadcast %cst_17 : f32 to vector<16x19xf32>
    %35 = arith.maximumf %33, %34 : vector<16x19xf32>
    %c0_18 = arith.constant 0 : index
    %c0_19 = arith.constant 0 : index
    %c0_20 = arith.constant 0 : index
    %36 = vector.load %arg4[%c0_18, %c0_19, %c0_20] : memref<1x16x19xf32, #tpu.memory_space<vmem>>, vector<1x16x19xf32>
    %37 = vector.shape_cast %36 : vector<1x16x19xf32> to vector<16x19xf32>
    %38 = vector.shape_cast %35 : vector<16x19xf32> to vector<1x16x19xf32>
    tpu.vector_store %arg4[%c0_18, %c0_19, %c0_20], %38 {strides = array<i32>} : memref<1x16x19xf32, #tpu.memory_space<vmem>>, vector<1x16x19xf32>,
    return
  }
  func.func @transform_0(%arg0: i32) -> (i32, i32, i32) {
    %c0_i32 = arith.constant 0 : i32
    %c0_i32_0 = arith.constant 0 : i32
    %c0_i32_1 = arith.constant 0 : i32
    return %arg0, %c0_i32, %c0_i32_0 : i32, i32, i32
  }
  func.func @transform_1(%arg0: i32) -> (i32, i32, i32) {
    %c0_i32 = arith.constant 0 : i32
    %c0_i32_0 = arith.constant 0 : i32
    %c0_i32_1 = arith.constant 0 : i32
    %c0_i32_2 = arith.constant 0 : i32
    return %c0_i32, %c0_i32_0, %c0_i32_1 : i32, i32, i32
  }
  func.func @transform_2(%arg0: i32) -> (i32, i32) {
    %c0_i32 = arith.constant 0 : i32
    %c0_i32_0 = arith.constant 0 : i32
    %c0_i32_1 = arith.constant 0 : i32
    return %c0_i32, %c0_i32_0 : i32, i32
  }
  func.func @transform_3(%arg0: i32) -> (i32, i32, i32) {
    %c0_i32 = arith.constant 0 : i32
    %c0_i32_0 = arith.constant 0 : i32
    %c0_i32_1 = arith.constant 0 : i32
    return %arg0, %c0_i32, %c0_i32_0 : i32, i32, i32
  }
}

module attributes {stable_mosaic.version = 11 : i64} {
  func.func @_conv_kernel(%arg0: i32, %arg1: memref<1x16x16xf32, #tpu.memory_space<vmem>>, %arg2: memref<1x8x16xf32, #tpu.memory_space<vmem>>, %arg3: memref<8x1xf32, #tpu.memory_space<vmem>>, %arg4: memref<1x8x16xf32, #tpu.memory_space<vmem>>) attributes {dimension_semantics = [#tpu.dimension_semantics<parallel>], iteration_bounds = array<i64: 2>, scalar_prefetch = 0 : i64, scratch_operands = 0 : i64, tpu.core_type = #tpu.core_type<tc>, window_params = [{transform_indices = @transform_0, window_bounds = array<i64: 1, 16, 16>}, {pipeline_mode = #tpu.pipeline_mode<synchronous>, transform_indices = @transform_1, window_bounds = array<i64: 1, 8, 16>}, {pipeline_mode = #tpu.pipeline_mode<synchronous>, transform_indices = @transform_2, window_bounds = array<i64: 8, 1>}, {transform_indices = @transform_3, window_bounds = array<i64: 1, 8, 16>}]} {
    %c0 = arith.constant 0 : index
    %c0_0 = arith.constant 0 : index
    %c0_1 = arith.constant 0 : index
    %0 = vector.load %arg1[%c0, %c0_0, %c0_1] : memref<1x16x16xf32, #tpu.memory_space<vmem>>, vector<1x16x16xf32>
    %1 = vector.shape_cast %0 : vector<1x16x16xf32> to vector<16x16xf32>
    %cst = arith.constant 0.000000e+00 : f32
    %2 = vector.broadcast %cst : f32 to vector<8x16xf32>
    %3 = arith.truncf %1 : vector<16x16xf32> to vector<16x16xbf16>
    %c0_2 = arith.constant 0 : index
    %c0_3 = arith.constant 0 : index
    %c0_4 = arith.constant 0 : index
    %4 = vector.load %arg2[%c0_2, %c0_3, %c0_4] : memref<1x8x16xf32, #tpu.memory_space<vmem>>, vector<1x8x16xf32>
    %5 = vector.shape_cast %4 : vector<1x8x16xf32> to vector<8x16xf32>
    %6 = arith.truncf %5 : vector<8x16xf32> to vector<8x16xbf16>
    %cst_5 = arith.constant dense<0.000000e+00> : vector<8x16xf32>
    %7 = tpu.matmul %6, %3, %cst_5 {dimension_numbers = #tpu.dot_dimension_numbers<[1], [0], [0], [1], [0, 0, 1, 1], [], []>} : vector<8x16xbf16>, vector<16x16xbf16>, vector<8x16xf32> -> vector<8x16xf32>
    %8 = arith.addf %2, %7 : vector<8x16xf32>
    %c0_6 = arith.constant 0 : index
    %c0_7 = arith.constant 0 : index
    %9 = vector.load %arg3[%c0_6, %c0_7] : memref<8x1xf32, #tpu.memory_space<vmem>>, vector<8x1xf32>
    %10 = vector.broadcast %9 : vector<8x1xf32> to vector<8x16xf32>
    %11 = arith.addf %8, %10 : vector<8x16xf32>
    %cst_8 = arith.constant 0.000000e+00 : f32
    %12 = vector.broadcast %cst_8 : f32 to vector<8x16xf32>
    %13 = arith.maximumf %11, %12 : vector<8x16xf32>
    %c0_9 = arith.constant 0 : index
    %c0_10 = arith.constant 0 : index
    %c0_11 = arith.constant 0 : index
    %14 = vector.load %arg4[%c0_9, %c0_10, %c0_11] : memref<1x8x16xf32, #tpu.memory_space<vmem>>, vector<1x8x16xf32>
    %15 = vector.shape_cast %14 : vector<1x8x16xf32> to vector<8x16xf32>
    %16 = vector.shape_cast %13 : vector<8x16xf32> to vector<1x8x16xf32>
    tpu.vector_store %arg4[%c0_9, %c0_10, %c0_11], %16 {strides = array<i32>} : memref<1x8x16xf32, #tpu.memory_space<vmem>>, vector<1x8x16xf32>,
    return
  }
  func.func @transform_0(%arg0: i32) -> (i32, i32, i32) {
    %c0_i32 = arith.constant 0 : i32
    %c0_i32_0 = arith.constant 0 : i32
    %c0_i32_1 = arith.constant 0 : i32
    return %arg0, %c0_i32, %c0_i32_0 : i32, i32, i32
  }
  func.func @transform_1(%arg0: i32) -> (i32, i32, i32) {
    %c0_i32 = arith.constant 0 : i32
    %c0_i32_0 = arith.constant 0 : i32
    %c0_i32_1 = arith.constant 0 : i32
    %c0_i32_2 = arith.constant 0 : i32
    return %c0_i32, %c0_i32_0, %c0_i32_1 : i32, i32, i32
  }
  func.func @transform_2(%arg0: i32) -> (i32, i32) {
    %c0_i32 = arith.constant 0 : i32
    %c0_i32_0 = arith.constant 0 : i32
    %c0_i32_1 = arith.constant 0 : i32
    return %c0_i32, %c0_i32_0 : i32, i32
  }
  func.func @transform_3(%arg0: i32) -> (i32, i32, i32) {
    %c0_i32 = arith.constant 0 : i32
    %c0_i32_0 = arith.constant 0 : i32
    %c0_i32_1 = arith.constant 0 : i32
    return %arg0, %c0_i32, %c0_i32_0 : i32, i32, i32
  }
}

module attributes {stable_mosaic.version = 11 : i64} {
  func.func @_conv_kernel(%arg0: i32, %arg1: memref<1x64x9xf32, #tpu.memory_space<vmem>>, %arg2: memref<4x32x64xf32, #tpu.memory_space<vmem>>, %arg3: memref<32x1xf32, #tpu.memory_space<vmem>>, %arg4: memref<1x32x5xf32, #tpu.memory_space<vmem>>) attributes {dimension_semantics = [#tpu.dimension_semantics<parallel>], iteration_bounds = array<i64: 2>, scalar_prefetch = 0 : i64, scratch_operands = 0 : i64, tpu.core_type = #tpu.core_type<tc>, window_params = [{transform_indices = @transform_0, window_bounds = array<i64: 1, 64, 9>}, {pipeline_mode = #tpu.pipeline_mode<synchronous>, transform_indices = @transform_1, window_bounds = array<i64: 4, 32, 64>}, {pipeline_mode = #tpu.pipeline_mode<synchronous>, transform_indices = @transform_2, window_bounds = array<i64: 32, 1>}, {transform_indices = @transform_3, window_bounds = array<i64: 1, 32, 5>}]} {
    %c0 = arith.constant 0 : index
    %c0_0 = arith.constant 0 : index
    %c0_1 = arith.constant 0 : index
    %0 = vector.load %arg1[%c0, %c0_0, %c0_1] : memref<1x64x9xf32, #tpu.memory_space<vmem>>, vector<1x64x9xf32>
    %1 = vector.shape_cast %0 : vector<1x64x9xf32> to vector<64x9xf32>
    %cst = arith.constant 0.000000e+00 : f32
    %2 = vector.broadcast %cst : f32 to vector<32x5xf32>
    %3 = vector.extract_strided_slice %1 {offsets = [0, 0], sizes = [64, 5], strides = [1, 1]} : vector<64x9xf32> to vector<64x5xf32>
    %4 = arith.truncf %3 : vector<64x5xf32> to vector<64x5xbf16>
    %c0_2 = arith.constant 0 : index
    %c0_3 = arith.constant 0 : index
    %c0_4 = arith.constant 0 : index
    %5 = vector.load %arg2[%c0_2, %c0_3, %c0_4] : memref<4x32x64xf32, #tpu.memory_space<vmem>>, vector<1x32x64xf32>
    %6 = vector.shape_cast %5 : vector<1x32x64xf32> to vector<32x64xf32>
    %7 = arith.truncf %6 : vector<32x64xf32> to vector<32x64xbf16>
    %cst_5 = arith.constant dense<0.000000e+00> : vector<32x5xf32>
    %8 = tpu.matmul %7, %4, %cst_5 {dimension_numbers = #tpu.dot_dimension_numbers<[1], [0], [0], [1], [0, 0, 1, 1], [], []>} : vector<32x64xbf16>, vector<64x5xbf16>, vector<32x5xf32> -> vector<32x5xf32>
    %9 = arith.addf %2, %8 : vector<32x5xf32>
    %10 = vector.extract_strided_slice %1 {offsets = [0, 1], sizes = [64, 5], strides = [1, 1]} : vector<64x9xf32> to vector<64x5xf32>
    %11 = arith.truncf %10 : vector<64x5xf32> to vector<64x5xbf16>
    %c1 = arith.constant 1 : index
    %c0_6 = arith.constant 0 : index
    %c0_7 = arith.constant 0 : index
    %12 = vector.load %arg2[%c1, %c0_6, %c0_7] : memref<4x32x64xf32, #tpu.memory_space<vmem>>, vector<1x32x64xf32>
    %13 = vector.shape_cast %12 : vector<1x32x64xf32> to vector<32x64xf32>
    %14 = arith.truncf %13 : vector<32x64xf32> to vector<32x64xbf16>
    %cst_8 = arith.constant dense<0.000000e+00> : vector<32x5xf32>
    %15 = tpu.matmul %14, %11, %cst_8 {dimension_numbers = #tpu.dot_dimension_numbers<[1], [0], [0], [1], [0, 0, 1, 1], [], []>} : vector<32x64xbf16>, vector<64x5xbf16>, vector<32x5xf32> -> vector<32x5xf32>
    %16 = arith.addf %9, %15 : vector<32x5xf32>
    %17 = vector.extract_strided_slice %1 {offsets = [0, 3], sizes = [64, 5], strides = [1, 1]} : vector<64x9xf32> to vector<64x5xf32>
    %18 = arith.truncf %17 : vector<64x5xf32> to vector<64x5xbf16>
    %c2 = arith.constant 2 : index
    %c0_9 = arith.constant 0 : index
    %c0_10 = arith.constant 0 : index
    %19 = vector.load %arg2[%c2, %c0_9, %c0_10] : memref<4x32x64xf32, #tpu.memory_space<vmem>>, vector<1x32x64xf32>
    %20 = vector.shape_cast %19 : vector<1x32x64xf32> to vector<32x64xf32>
    %21 = arith.truncf %20 : vector<32x64xf32> to vector<32x64xbf16>
    %cst_11 = arith.constant dense<0.000000e+00> : vector<32x5xf32>
    %22 = tpu.matmul %21, %18, %cst_11 {dimension_numbers = #tpu.dot_dimension_numbers<[1], [0], [0], [1], [0, 0, 1, 1], [], []>} : vector<32x64xbf16>, vector<64x5xbf16>, vector<32x5xf32> -> vector<32x5xf32>
    %23 = arith.addf %16, %22 : vector<32x5xf32>
    %24 = vector.extract_strided_slice %1 {offsets = [0, 4], sizes = [64, 5], strides = [1, 1]} : vector<64x9xf32> to vector<64x5xf32>
    %25 = arith.truncf %24 : vector<64x5xf32> to vector<64x5xbf16>
    %c3 = arith.constant 3 : index
    %c0_12 = arith.constant 0 : index
    %c0_13 = arith.constant 0 : index
    %26 = vector.load %arg2[%c3, %c0_12, %c0_13] : memref<4x32x64xf32, #tpu.memory_space<vmem>>, vector<1x32x64xf32>
    %27 = vector.shape_cast %26 : vector<1x32x64xf32> to vector<32x64xf32>
    %28 = arith.truncf %27 : vector<32x64xf32> to vector<32x64xbf16>
    %cst_14 = arith.constant dense<0.000000e+00> : vector<32x5xf32>
    %29 = tpu.matmul %28, %25, %cst_14 {dimension_numbers = #tpu.dot_dimension_numbers<[1], [0], [0], [1], [0, 0, 1, 1], [], []>} : vector<32x64xbf16>, vector<64x5xbf16>, vector<32x5xf32> -> vector<32x5xf32>
    %30 = arith.addf %23, %29 : vector<32x5xf32>
    %c0_15 = arith.constant 0 : index
    %c0_16 = arith.constant 0 : index
    %31 = vector.load %arg3[%c0_15, %c0_16] : memref<32x1xf32, #tpu.memory_space<vmem>>, vector<32x1xf32>
    %32 = vector.broadcast %31 : vector<32x1xf32> to vector<32x5xf32>
    %33 = arith.addf %30, %32 : vector<32x5xf32>
    %cst_17 = arith.constant 0.000000e+00 : f32
    %34 = vector.broadcast %cst_17 : f32 to vector<32x5xf32>
    %35 = arith.maximumf %33, %34 : vector<32x5xf32>
    %c0_18 = arith.constant 0 : index
    %c0_19 = arith.constant 0 : index
    %c0_20 = arith.constant 0 : index
    %36 = vector.load %arg4[%c0_18, %c0_19, %c0_20] : memref<1x32x5xf32, #tpu.memory_space<vmem>>, vector<1x32x5xf32>
    %37 = vector.shape_cast %36 : vector<1x32x5xf32> to vector<32x5xf32>
    %38 = vector.shape_cast %35 : vector<32x5xf32> to vector<1x32x5xf32>
    tpu.vector_store %arg4[%c0_18, %c0_19, %c0_20], %38 {strides = array<i32>} : memref<1x32x5xf32, #tpu.memory_space<vmem>>, vector<1x32x5xf32>,
    return
  }
  func.func @transform_0(%arg0: i32) -> (i32, i32, i32) {
    %c0_i32 = arith.constant 0 : i32
    %c0_i32_0 = arith.constant 0 : i32
    %c0_i32_1 = arith.constant 0 : i32
    return %arg0, %c0_i32, %c0_i32_0 : i32, i32, i32
  }
  func.func @transform_1(%arg0: i32) -> (i32, i32, i32) {
    %c0_i32 = arith.constant 0 : i32
    %c0_i32_0 = arith.constant 0 : i32
    %c0_i32_1 = arith.constant 0 : i32
    %c0_i32_2 = arith.constant 0 : i32
    return %c0_i32, %c0_i32_0, %c0_i32_1 : i32, i32, i32
  }
  func.func @transform_2(%arg0: i32) -> (i32, i32) {
    %c0_i32 = arith.constant 0 : i32
    %c0_i32_0 = arith.constant 0 : i32
    %c0_i32_1 = arith.constant 0 : i32
    return %c0_i32, %c0_i32_0 : i32, i32
  }
  func.func @transform_3(%arg0: i32) -> (i32, i32, i32) {
    %c0_i32 = arith.constant 0 : i32
    %c0_i32_0 = arith.constant 0 : i32
    %c0_i32_1 = arith.constant 0 : i32
    return %arg0, %c0_i32, %c0_i32_0 : i32, i32, i32
  }
}

module attributes {stable_mosaic.version = 11 : i64} {
  func.func @_gap_kernel(%arg0: i32, %arg1: memref<1x32x4xf32, #tpu.memory_space<vmem>>, %arg2: memref<1x32x1xf32, #tpu.memory_space<vmem>>) attributes {dimension_semantics = [#tpu.dimension_semantics<parallel>], iteration_bounds = array<i64: 2>, scalar_prefetch = 0 : i64, scratch_operands = 0 : i64, tpu.core_type = #tpu.core_type<tc>, window_params = [{transform_indices = @transform_0, window_bounds = array<i64: 1, 32, 4>}, {transform_indices = @transform_1, window_bounds = array<i64: 1, 32, 1>}]} {
    %c0 = arith.constant 0 : index
    %c0_0 = arith.constant 0 : index
    %c0_1 = arith.constant 0 : index
    %0 = vector.load %arg1[%c0, %c0_0, %c0_1] : memref<1x32x4xf32, #tpu.memory_space<vmem>>, vector<1x32x4xf32>
    %cst = arith.constant dense<0.000000e+00> : vector<1x32xf32>
    %1 = vector.multi_reduction <add>, %0, %cst [2] : vector<1x32x4xf32> to vector<1x32xf32>
    %2 = vector.shape_cast %1 : vector<1x32xf32> to vector<1x32x1xf32>
    %cst_2 = arith.constant 4.000000e+00 : f32
    %3 = vector.broadcast %cst_2 : f32 to vector<1x32x1xf32>
    %4 = arith.divf %2, %3 : vector<1x32x1xf32>
    %c0_3 = arith.constant 0 : index
    %c0_4 = arith.constant 0 : index
    %c0_5 = arith.constant 0 : index
    %5 = vector.load %arg2[%c0_3, %c0_4, %c0_5] : memref<1x32x1xf32, #tpu.memory_space<vmem>>, vector<1x32x1xf32>
    tpu.vector_store %arg2[%c0_3, %c0_4, %c0_5], %4 {strides = array<i32>} : memref<1x32x1xf32, #tpu.memory_space<vmem>>, vector<1x32x1xf32>,
    return
  }
  func.func @transform_0(%arg0: i32) -> (i32, i32, i32) {
    %c0_i32 = arith.constant 0 : i32
    %c0_i32_0 = arith.constant 0 : i32
    %c0_i32_1 = arith.constant 0 : i32
    return %arg0, %c0_i32, %c0_i32_0 : i32, i32, i32
  }
  func.func @transform_1(%arg0: i32) -> (i32, i32, i32) {
    %c0_i32 = arith.constant 0 : i32
    %c0_i32_0 = arith.constant 0 : i32
    %c0_i32_1 = arith.constant 0 : i32
    return %arg0, %c0_i32, %c0_i32_0 : i32, i32, i32
  }
}

module attributes {stable_mosaic.version = 11 : i64} {
  func.func @_conv_kernel(%arg0: i32, %arg1: memref<1x32x1xf32, #tpu.memory_space<vmem>>, %arg2: memref<1x16x32xf32, #tpu.memory_space<vmem>>, %arg3: memref<16x1xf32, #tpu.memory_space<vmem>>, %arg4: memref<1x16x1xf32, #tpu.memory_space<vmem>>) attributes {dimension_semantics = [#tpu.dimension_semantics<parallel>], iteration_bounds = array<i64: 2>, scalar_prefetch = 0 : i64, scratch_operands = 0 : i64, tpu.core_type = #tpu.core_type<tc>, window_params = [{transform_indices = @transform_0, window_bounds = array<i64: 1, 32, 1>}, {pipeline_mode = #tpu.pipeline_mode<synchronous>, transform_indices = @transform_1, window_bounds = array<i64: 1, 16, 32>}, {pipeline_mode = #tpu.pipeline_mode<synchronous>, transform_indices = @transform_2, window_bounds = array<i64: 16, 1>}, {transform_indices = @transform_3, window_bounds = array<i64: 1, 16, 1>}]} {
    %c0 = arith.constant 0 : index
    %c0_0 = arith.constant 0 : index
    %c0_1 = arith.constant 0 : index
    %0 = vector.load %arg1[%c0, %c0_0, %c0_1] : memref<1x32x1xf32, #tpu.memory_space<vmem>>, vector<1x32x1xf32>
    %1 = vector.shape_cast %0 : vector<1x32x1xf32> to vector<32x1xf32>
    %cst = arith.constant 0.000000e+00 : f32
    %2 = vector.broadcast %cst : f32 to vector<16x1xf32>
    %3 = arith.truncf %1 : vector<32x1xf32> to vector<32x1xbf16>
    %c0_2 = arith.constant 0 : index
    %c0_3 = arith.constant 0 : index
    %c0_4 = arith.constant 0 : index
    %4 = vector.load %arg2[%c0_2, %c0_3, %c0_4] : memref<1x16x32xf32, #tpu.memory_space<vmem>>, vector<1x16x32xf32>
    %5 = vector.shape_cast %4 : vector<1x16x32xf32> to vector<16x32xf32>
    %6 = arith.truncf %5 : vector<16x32xf32> to vector<16x32xbf16>
    %cst_5 = arith.constant dense<0.000000e+00> : vector<16x1xf32>
    %7 = tpu.matmul %6, %3, %cst_5 {dimension_numbers = #tpu.dot_dimension_numbers<[1], [0], [0], [1], [0, 0, 1, 1], [], []>} : vector<16x32xbf16>, vector<32x1xbf16>, vector<16x1xf32> -> vector<16x1xf32>
    %8 = arith.addf %2, %7 : vector<16x1xf32>
    %c0_6 = arith.constant 0 : index
    %c0_7 = arith.constant 0 : index
    %9 = vector.load %arg3[%c0_6, %c0_7] : memref<16x1xf32, #tpu.memory_space<vmem>>, vector<16x1xf32>
    %10 = arith.addf %8, %9 : vector<16x1xf32>
    %cst_8 = arith.constant 0.000000e+00 : f32
    %11 = vector.broadcast %cst_8 : f32 to vector<16x1xf32>
    %12 = arith.maximumf %10, %11 : vector<16x1xf32>
    %c0_9 = arith.constant 0 : index
    %c0_10 = arith.constant 0 : index
    %c0_11 = arith.constant 0 : index
    %13 = vector.load %arg4[%c0_9, %c0_10, %c0_11] : memref<1x16x1xf32, #tpu.memory_space<vmem>>, vector<1x16x1xf32>
    %14 = vector.shape_cast %13 : vector<1x16x1xf32> to vector<16x1xf32>
    %15 = vector.shape_cast %12 : vector<16x1xf32> to vector<1x16x1xf32>
    tpu.vector_store %arg4[%c0_9, %c0_10, %c0_11], %15 {strides = array<i32>} : memref<1x16x1xf32, #tpu.memory_space<vmem>>, vector<1x16x1xf32>,
    return
  }
  func.func @transform_0(%arg0: i32) -> (i32, i32, i32) {
    %c0_i32 = arith.constant 0 : i32
    %c0_i32_0 = arith.constant 0 : i32
    %c0_i32_1 = arith.constant 0 : i32
    return %arg0, %c0_i32, %c0_i32_0 : i32, i32, i32
  }
  func.func @transform_1(%arg0: i32) -> (i32, i32, i32) {
    %c0_i32 = arith.constant 0 : i32
    %c0_i32_0 = arith.constant 0 : i32
    %c0_i32_1 = arith.constant 0 : i32
    %c0_i32_2 = arith.constant 0 : i32
    return %c0_i32, %c0_i32_0, %c0_i32_1 : i32, i32, i32
  }
  func.func @transform_2(%arg0: i32) -> (i32, i32) {
    %c0_i32 = arith.constant 0 : i32
    %c0_i32_0 = arith.constant 0 : i32
    %c0_i32_1 = arith.constant 0 : i32
    return %c0_i32, %c0_i32_0 : i32, i32
  }
  func.func @transform_3(%arg0: i32) -> (i32, i32, i32) {
    %c0_i32 = arith.constant 0 : i32
    %c0_i32_0 = arith.constant 0 : i32
    %c0_i32_1 = arith.constant 0 : i32
    return %arg0, %c0_i32, %c0_i32_0 : i32, i32, i32
  }
}

module attributes {stable_mosaic.version = 11 : i64} {
  func.func @_conv_kernel(%arg0: i32, %arg1: memref<1x32x4xf32, #tpu.memory_space<vmem>>, %arg2: memref<1x16x32xf32, #tpu.memory_space<vmem>>, %arg3: memref<16x1xf32, #tpu.memory_space<vmem>>, %arg4: memref<1x16x4xf32, #tpu.memory_space<vmem>>) attributes {dimension_semantics = [#tpu.dimension_semantics<parallel>], iteration_bounds = array<i64: 2>, scalar_prefetch = 0 : i64, scratch_operands = 0 : i64, tpu.core_type = #tpu.core_type<tc>, window_params = [{transform_indices = @transform_0, window_bounds = array<i64: 1, 32, 4>}, {pipeline_mode = #tpu.pipeline_mode<synchronous>, transform_indices = @transform_1, window_bounds = array<i64: 1, 16, 32>}, {pipeline_mode = #tpu.pipeline_mode<synchronous>, transform_indices = @transform_2, window_bounds = array<i64: 16, 1>}, {transform_indices = @transform_3, window_bounds = array<i64: 1, 16, 4>}]} {
    %c0 = arith.constant 0 : index
    %c0_0 = arith.constant 0 : index
    %c0_1 = arith.constant 0 : index
    %0 = vector.load %arg1[%c0, %c0_0, %c0_1] : memref<1x32x4xf32, #tpu.memory_space<vmem>>, vector<1x32x4xf32>
    %1 = vector.shape_cast %0 : vector<1x32x4xf32> to vector<32x4xf32>
    %cst = arith.constant 0.000000e+00 : f32
    %2 = vector.broadcast %cst : f32 to vector<16x4xf32>
    %3 = arith.truncf %1 : vector<32x4xf32> to vector<32x4xbf16>
    %c0_2 = arith.constant 0 : index
    %c0_3 = arith.constant 0 : index
    %c0_4 = arith.constant 0 : index
    %4 = vector.load %arg2[%c0_2, %c0_3, %c0_4] : memref<1x16x32xf32, #tpu.memory_space<vmem>>, vector<1x16x32xf32>
    %5 = vector.shape_cast %4 : vector<1x16x32xf32> to vector<16x32xf32>
    %6 = arith.truncf %5 : vector<16x32xf32> to vector<16x32xbf16>
    %cst_5 = arith.constant dense<0.000000e+00> : vector<16x4xf32>
    %7 = tpu.matmul %6, %3, %cst_5 {dimension_numbers = #tpu.dot_dimension_numbers<[1], [0], [0], [1], [0, 0, 1, 1], [], []>} : vector<16x32xbf16>, vector<32x4xbf16>, vector<16x4xf32> -> vector<16x4xf32>
    %8 = arith.addf %2, %7 : vector<16x4xf32>
    %c0_6 = arith.constant 0 : index
    %c0_7 = arith.constant 0 : index
    %9 = vector.load %arg3[%c0_6, %c0_7] : memref<16x1xf32, #tpu.memory_space<vmem>>, vector<16x1xf32>
    %10 = vector.broadcast %9 : vector<16x1xf32> to vector<16x4xf32>
    %11 = arith.addf %8, %10 : vector<16x4xf32>
    %cst_8 = arith.constant 0.000000e+00 : f32
    %12 = vector.broadcast %cst_8 : f32 to vector<16x4xf32>
    %13 = arith.maximumf %11, %12 : vector<16x4xf32>
    %c0_9 = arith.constant 0 : index
    %c0_10 = arith.constant 0 : index
    %c0_11 = arith.constant 0 : index
    %14 = vector.load %arg4[%c0_9, %c0_10, %c0_11] : memref<1x16x4xf32, #tpu.memory_space<vmem>>, vector<1x16x4xf32>
    %15 = vector.shape_cast %14 : vector<1x16x4xf32> to vector<16x4xf32>
    %16 = vector.shape_cast %13 : vector<16x4xf32> to vector<1x16x4xf32>
    tpu.vector_store %arg4[%c0_9, %c0_10, %c0_11], %16 {strides = array<i32>} : memref<1x16x4xf32, #tpu.memory_space<vmem>>, vector<1x16x4xf32>,
    return
  }
  func.func @transform_0(%arg0: i32) -> (i32, i32, i32) {
    %c0_i32 = arith.constant 0 : i32
    %c0_i32_0 = arith.constant 0 : i32
    %c0_i32_1 = arith.constant 0 : i32
    return %arg0, %c0_i32, %c0_i32_0 : i32, i32, i32
  }
  func.func @transform_1(%arg0: i32) -> (i32, i32, i32) {
    %c0_i32 = arith.constant 0 : i32
    %c0_i32_0 = arith.constant 0 : i32
    %c0_i32_1 = arith.constant 0 : i32
    %c0_i32_2 = arith.constant 0 : i32
    return %c0_i32, %c0_i32_0, %c0_i32_1 : i32, i32, i32
  }
  func.func @transform_2(%arg0: i32) -> (i32, i32) {
    %c0_i32 = arith.constant 0 : i32
    %c0_i32_0 = arith.constant 0 : i32
    %c0_i32_1 = arith.constant 0 : i32
    return %c0_i32, %c0_i32_0 : i32, i32
  }
  func.func @transform_3(%arg0: i32) -> (i32, i32, i32) {
    %c0_i32 = arith.constant 0 : i32
    %c0_i32_0 = arith.constant 0 : i32
    %c0_i32_1 = arith.constant 0 : i32
    return %arg0, %c0_i32, %c0_i32_0 : i32, i32, i32
  }
}

module attributes {stable_mosaic.version = 11 : i64} {
  func.func @_matmul_kernel(%arg0: i32, %arg1: memref<64x2xf32, #tpu.memory_space<vmem>>, %arg2: memref<2x4xf32, #tpu.memory_space<vmem>>, %arg3: memref<64x4xf32, #tpu.memory_space<vmem>>) attributes {dimension_semantics = [#tpu.dimension_semantics<parallel>], iteration_bounds = array<i64: 1>, scalar_prefetch = 0 : i64, scratch_operands = 0 : i64, tpu.core_type = #tpu.core_type<tc>, window_params = [{transform_indices = @transform_0, window_bounds = array<i64: 64, 2>}, {pipeline_mode = #tpu.pipeline_mode<synchronous>, transform_indices = @transform_1, window_bounds = array<i64: 2, 4>}, {transform_indices = @transform_2, window_bounds = array<i64: 64, 4>}]} {
    %c0 = arith.constant 0 : index
    %c0_0 = arith.constant 0 : index
    %0 = vector.load %arg1[%c0, %c0_0] : memref<64x2xf32, #tpu.memory_space<vmem>>, vector<64x2xf32>
    %c0_1 = arith.constant 0 : index
    %c0_2 = arith.constant 0 : index
    %1 = vector.load %arg2[%c0_1, %c0_2] : memref<2x4xf32, #tpu.memory_space<vmem>>, vector<2x4xf32>
    %cst = arith.constant dense<0.000000e+00> : vector<64x4xf32>
    %2 = tpu.matmul %0, %1, %cst {dimension_numbers = #tpu.dot_dimension_numbers<[1], [0], [0], [1], [0, 0, 1, 1], [], []>} : vector<64x2xf32>, vector<2x4xf32>, vector<64x4xf32> -> vector<64x4xf32>
    %c0_3 = arith.constant 0 : index
    %c0_4 = arith.constant 0 : index
    %3 = vector.load %arg3[%c0_3, %c0_4] : memref<64x4xf32, #tpu.memory_space<vmem>>, vector<64x4xf32>
    tpu.vector_store %arg3[%c0_3, %c0_4], %2 {strides = array<i32>} : memref<64x4xf32, #tpu.memory_space<vmem>>, vector<64x4xf32>,
    return
  }
  func.func @transform_0(%arg0: i32) -> (i32, i32) {
    %c0_i32 = arith.constant 0 : i32
    %c0_i32_0 = arith.constant 0 : i32
    return %arg0, %c0_i32 : i32, i32
  }
  func.func @transform_1(%arg0: i32) -> (i32, i32) {
    %c0_i32 = arith.constant 0 : i32
    %c0_i32_0 = arith.constant 0 : i32
    %c0_i32_1 = arith.constant 0 : i32
    return %c0_i32, %c0_i32_0 : i32, i32
  }
  func.func @transform_2(%arg0: i32) -> (i32, i32) {
    %c0_i32 = arith.constant 0 : i32
    %c0_i32_0 = arith.constant 0 : i32
    return %arg0, %c0_i32 : i32, i32
  }
}

module attributes {stable_mosaic.version = 11 : i64} {
  func.func @_matmul_kernel(%arg0: i32, %arg1: memref<128x2xf32, #tpu.memory_space<vmem>>, %arg2: memref<2x4xf32, #tpu.memory_space<vmem>>, %arg3: memref<128x4xf32, #tpu.memory_space<vmem>>) attributes {dimension_semantics = [#tpu.dimension_semantics<parallel>], iteration_bounds = array<i64: 1>, scalar_prefetch = 0 : i64, scratch_operands = 0 : i64, tpu.core_type = #tpu.core_type<tc>, window_params = [{transform_indices = @transform_0, window_bounds = array<i64: 128, 2>}, {pipeline_mode = #tpu.pipeline_mode<synchronous>, transform_indices = @transform_1, window_bounds = array<i64: 2, 4>}, {transform_indices = @transform_2, window_bounds = array<i64: 128, 4>}]} {
    %c0 = arith.constant 0 : index
    %c0_0 = arith.constant 0 : index
    %0 = vector.load %arg1[%c0, %c0_0] : memref<128x2xf32, #tpu.memory_space<vmem>>, vector<128x2xf32>
    %c0_1 = arith.constant 0 : index
    %c0_2 = arith.constant 0 : index
    %1 = vector.load %arg2[%c0_1, %c0_2] : memref<2x4xf32, #tpu.memory_space<vmem>>, vector<2x4xf32>
    %cst = arith.constant dense<0.000000e+00> : vector<128x4xf32>
    %2 = tpu.matmul %0, %1, %cst {dimension_numbers = #tpu.dot_dimension_numbers<[1], [0], [0], [1], [0, 0, 1, 1], [], []>} : vector<128x2xf32>, vector<2x4xf32>, vector<128x4xf32> -> vector<128x4xf32>
    %c0_3 = arith.constant 0 : index
    %c0_4 = arith.constant 0 : index
    %3 = vector.load %arg3[%c0_3, %c0_4] : memref<128x4xf32, #tpu.memory_space<vmem>>, vector<128x4xf32>
    tpu.vector_store %arg3[%c0_3, %c0_4], %2 {strides = array<i32>} : memref<128x4xf32, #tpu.memory_space<vmem>>, vector<128x4xf32>,
    return
  }
  func.func @transform_0(%arg0: i32) -> (i32, i32) {
    %c0_i32 = arith.constant 0 : i32
    %c0_i32_0 = arith.constant 0 : i32
    return %arg0, %c0_i32 : i32, i32
  }
  func.func @transform_1(%arg0: i32) -> (i32, i32) {
    %c0_i32 = arith.constant 0 : i32
    %c0_i32_0 = arith.constant 0 : i32
    %c0_i32_1 = arith.constant 0 : i32
    return %c0_i32, %c0_i32_0 : i32, i32
  }
  func.func @transform_2(%arg0: i32) -> (i32, i32) {
    %c0_i32 = arith.constant 0 : i32
    %c0_i32_0 = arith.constant 0 : i32
    return %arg0, %c0_i32 : i32, i32
  }
}

module attributes {stable_mosaic.version = 11 : i64} {
  func.func @_conv_kernel(%arg0: i32, %arg1: memref<1x24x36xf32, #tpu.memory_space<vmem>>, %arg2: memref<9x16x24xf32, #tpu.memory_space<vmem>>, %arg3: memref<16x1xf32, #tpu.memory_space<vmem>>, %arg4: memref<1x16x22xf32, #tpu.memory_space<vmem>>) attributes {dimension_semantics = [#tpu.dimension_semantics<parallel>], iteration_bounds = array<i64: 2>, scalar_prefetch = 0 : i64, scratch_operands = 0 : i64, tpu.core_type = #tpu.core_type<tc>, window_params = [{transform_indices = @transform_0, window_bounds = array<i64: 1, 24, 36>}, {pipeline_mode = #tpu.pipeline_mode<synchronous>, transform_indices = @transform_1, window_bounds = array<i64: 9, 16, 24>}, {pipeline_mode = #tpu.pipeline_mode<synchronous>, transform_indices = @transform_2, window_bounds = array<i64: 16, 1>}, {transform_indices = @transform_3, window_bounds = array<i64: 1, 16, 22>}]} {
    %c0 = arith.constant 0 : index
    %c0_0 = arith.constant 0 : index
    %c0_1 = arith.constant 0 : index
    %0 = vector.load %arg1[%c0, %c0_0, %c0_1] : memref<1x24x36xf32, #tpu.memory_space<vmem>>, vector<1x24x36xf32>
    %1 = vector.shape_cast %0 : vector<1x24x36xf32> to vector<24x36xf32>
    %cst = arith.constant 0.000000e+00 : f32
    %2 = vector.broadcast %cst : f32 to vector<16x22xf32>
    %3 = vector.extract_strided_slice %1 {offsets = [0, 0], sizes = [24, 22], strides = [1, 1]} : vector<24x36xf32> to vector<24x22xf32>
    %4 = arith.truncf %3 : vector<24x22xf32> to vector<24x22xbf16>
    %c0_2 = arith.constant 0 : index
    %c0_3 = arith.constant 0 : index
    %c0_4 = arith.constant 0 : index
    %5 = vector.load %arg2[%c0_2, %c0_3, %c0_4] : memref<9x16x24xf32, #tpu.memory_space<vmem>>, vector<1x16x24xf32>
    %6 = vector.shape_cast %5 : vector<1x16x24xf32> to vector<16x24xf32>
    %7 = arith.truncf %6 : vector<16x24xf32> to vector<16x24xbf16>
    %cst_5 = arith.constant dense<0.000000e+00> : vector<16x22xf32>
    %8 = tpu.matmul %7, %4, %cst_5 {dimension_numbers = #tpu.dot_dimension_numbers<[1], [0], [0], [1], [0, 0, 1, 1], [], []>} : vector<16x24xbf16>, vector<24x22xbf16>, vector<16x22xf32> -> vector<16x22xf32>
    %9 = arith.addf %2, %8 : vector<16x22xf32>
    %10 = vector.extract_strided_slice %1 {offsets = [0, 1], sizes = [24, 22], strides = [1, 1]} : vector<24x36xf32> to vector<24x22xf32>
    %11 = arith.truncf %10 : vector<24x22xf32> to vector<24x22xbf16>
    %c1 = arith.constant 1 : index
    %c0_6 = arith.constant 0 : index
    %c0_7 = arith.constant 0 : index
    %12 = vector.load %arg2[%c1, %c0_6, %c0_7] : memref<9x16x24xf32, #tpu.memory_space<vmem>>, vector<1x16x24xf32>
    %13 = vector.shape_cast %12 : vector<1x16x24xf32> to vector<16x24xf32>
    %14 = arith.truncf %13 : vector<16x24xf32> to vector<16x24xbf16>
    %cst_8 = arith.constant dense<0.000000e+00> : vector<16x22xf32>
    %15 = tpu.matmul %14, %11, %cst_8 {dimension_numbers = #tpu.dot_dimension_numbers<[1], [0], [0], [1], [0, 0, 1, 1], [], []>} : vector<16x24xbf16>, vector<24x22xbf16>, vector<16x22xf32> -> vector<16x22xf32>
    %16 = arith.addf %9, %15 : vector<16x22xf32>
    %17 = vector.extract_strided_slice %1 {offsets = [0, 2], sizes = [24, 22], strides = [1, 1]} : vector<24x36xf32> to vector<24x22xf32>
    %18 = arith.truncf %17 : vector<24x22xf32> to vector<24x22xbf16>
    %c2 = arith.constant 2 : index
    %c0_9 = arith.constant 0 : index
    %c0_10 = arith.constant 0 : index
    %19 = vector.load %arg2[%c2, %c0_9, %c0_10] : memref<9x16x24xf32, #tpu.memory_space<vmem>>, vector<1x16x24xf32>
    %20 = vector.shape_cast %19 : vector<1x16x24xf32> to vector<16x24xf32>
    %21 = arith.truncf %20 : vector<16x24xf32> to vector<16x24xbf16>
    %cst_11 = arith.constant dense<0.000000e+00> : vector<16x22xf32>
    %22 = tpu.matmul %21, %18, %cst_11 {dimension_numbers = #tpu.dot_dimension_numbers<[1], [0], [0], [1], [0, 0, 1, 1], [], []>} : vector<16x24xbf16>, vector<24x22xbf16>, vector<16x22xf32> -> vector<16x22xf32>
    %23 = arith.addf %16, %22 : vector<16x22xf32>
    %24 = vector.extract_strided_slice %1 {offsets = [0, 6], sizes = [24, 22], strides = [1, 1]} : vector<24x36xf32> to vector<24x22xf32>
    %25 = arith.truncf %24 : vector<24x22xf32> to vector<24x22xbf16>
    %c3 = arith.constant 3 : index
    %c0_12 = arith.constant 0 : index
    %c0_13 = arith.constant 0 : index
    %26 = vector.load %arg2[%c3, %c0_12, %c0_13] : memref<9x16x24xf32, #tpu.memory_space<vmem>>, vector<1x16x24xf32>
    %27 = vector.shape_cast %26 : vector<1x16x24xf32> to vector<16x24xf32>
    %28 = arith.truncf %27 : vector<16x24xf32> to vector<16x24xbf16>
    %cst_14 = arith.constant dense<0.000000e+00> : vector<16x22xf32>
    %29 = tpu.matmul %28, %25, %cst_14 {dimension_numbers = #tpu.dot_dimension_numbers<[1], [0], [0], [1], [0, 0, 1, 1], [], []>} : vector<16x24xbf16>, vector<24x22xbf16>, vector<16x22xf32> -> vector<16x22xf32>
    %30 = arith.addf %23, %29 : vector<16x22xf32>
    %31 = vector.extract_strided_slice %1 {offsets = [0, 7], sizes = [24, 22], strides = [1, 1]} : vector<24x36xf32> to vector<24x22xf32>
    %32 = arith.truncf %31 : vector<24x22xf32> to vector<24x22xbf16>
    %c4 = arith.constant 4 : index
    %c0_15 = arith.constant 0 : index
    %c0_16 = arith.constant 0 : index
    %33 = vector.load %arg2[%c4, %c0_15, %c0_16] : memref<9x16x24xf32, #tpu.memory_space<vmem>>, vector<1x16x24xf32>
    %34 = vector.shape_cast %33 : vector<1x16x24xf32> to vector<16x24xf32>
    %35 = arith.truncf %34 : vector<16x24xf32> to vector<16x24xbf16>
    %cst_17 = arith.constant dense<0.000000e+00> : vector<16x22xf32>
    %36 = tpu.matmul %35, %32, %cst_17 {dimension_numbers = #tpu.dot_dimension_numbers<[1], [0], [0], [1], [0, 0, 1, 1], [], []>} : vector<16x24xbf16>, vector<24x22xbf16>, vector<16x22xf32> -> vector<16x22xf32>
    %37 = arith.addf %30, %36 : vector<16x22xf32>
    %38 = vector.extract_strided_slice %1 {offsets = [0, 8], sizes = [24, 22], strides = [1, 1]} : vector<24x36xf32> to vector<24x22xf32>
    %39 = arith.truncf %38 : vector<24x22xf32> to vector<24x22xbf16>
    %c5 = arith.constant 5 : index
    %c0_18 = arith.constant 0 : index
    %c0_19 = arith.constant 0 : index
    %40 = vector.load %arg2[%c5, %c0_18, %c0_19] : memref<9x16x24xf32, #tpu.memory_space<vmem>>, vector<1x16x24xf32>
    %41 = vector.shape_cast %40 : vector<1x16x24xf32> to vector<16x24xf32>
    %42 = arith.truncf %41 : vector<16x24xf32> to vector<16x24xbf16>
    %cst_20 = arith.constant dense<0.000000e+00> : vector<16x22xf32>
    %43 = tpu.matmul %42, %39, %cst_20 {dimension_numbers = #tpu.dot_dimension_numbers<[1], [0], [0], [1], [0, 0, 1, 1], [], []>} : vector<16x24xbf16>, vector<24x22xbf16>, vector<16x22xf32> -> vector<16x22xf32>
    %44 = arith.addf %37, %43 : vector<16x22xf32>
    %45 = vector.extract_strided_slice %1 {offsets = [0, 12], sizes = [24, 22], strides = [1, 1]} : vector<24x36xf32> to vector<24x22xf32>
    %46 = arith.truncf %45 : vector<24x22xf32> to vector<24x22xbf16>
    %c6 = arith.constant 6 : index
    %c0_21 = arith.constant 0 : index
    %c0_22 = arith.constant 0 : index
    %47 = vector.load %arg2[%c6, %c0_21, %c0_22] : memref<9x16x24xf32, #tpu.memory_space<vmem>>, vector<1x16x24xf32>
    %48 = vector.shape_cast %47 : vector<1x16x24xf32> to vector<16x24xf32>
    %49 = arith.truncf %48 : vector<16x24xf32> to vector<16x24xbf16>
    %cst_23 = arith.constant dense<0.000000e+00> : vector<16x22xf32>
    %50 = tpu.matmul %49, %46, %cst_23 {dimension_numbers = #tpu.dot_dimension_numbers<[1], [0], [0], [1], [0, 0, 1, 1], [], []>} : vector<16x24xbf16>, vector<24x22xbf16>, vector<16x22xf32> -> vector<16x22xf32>
    %51 = arith.addf %44, %50 : vector<16x22xf32>
    %52 = vector.extract_strided_slice %1 {offsets = [0, 13], sizes = [24, 22], strides = [1, 1]} : vector<24x36xf32> to vector<24x22xf32>
    %53 = arith.truncf %52 : vector<24x22xf32> to vector<24x22xbf16>
    %c7 = arith.constant 7 : index
    %c0_24 = arith.constant 0 : index
    %c0_25 = arith.constant 0 : index
    %54 = vector.load %arg2[%c7, %c0_24, %c0_25] : memref<9x16x24xf32, #tpu.memory_space<vmem>>, vector<1x16x24xf32>
    %55 = vector.shape_cast %54 : vector<1x16x24xf32> to vector<16x24xf32>
    %56 = arith.truncf %55 : vector<16x24xf32> to vector<16x24xbf16>
    %cst_26 = arith.constant dense<0.000000e+00> : vector<16x22xf32>
    %57 = tpu.matmul %56, %53, %cst_26 {dimension_numbers = #tpu.dot_dimension_numbers<[1], [0], [0], [1], [0, 0, 1, 1], [], []>} : vector<16x24xbf16>, vector<24x22xbf16>, vector<16x22xf32> -> vector<16x22xf32>
    %58 = arith.addf %51, %57 : vector<16x22xf32>
    %59 = vector.extract_strided_slice %1 {offsets = [0, 14], sizes = [24, 22], strides = [1, 1]} : vector<24x36xf32> to vector<24x22xf32>
    %60 = arith.truncf %59 : vector<24x22xf32> to vector<24x22xbf16>
    %c8 = arith.constant 8 : index
    %c0_27 = arith.constant 0 : index
    %c0_28 = arith.constant 0 : index
    %61 = vector.load %arg2[%c8, %c0_27, %c0_28] : memref<9x16x24xf32, #tpu.memory_space<vmem>>, vector<1x16x24xf32>
    %62 = vector.shape_cast %61 : vector<1x16x24xf32> to vector<16x24xf32>
    %63 = arith.truncf %62 : vector<16x24xf32> to vector<16x24xbf16>
    %cst_29 = arith.constant dense<0.000000e+00> : vector<16x22xf32>
    %64 = tpu.matmul %63, %60, %cst_29 {dimension_numbers = #tpu.dot_dimension_numbers<[1], [0], [0], [1], [0, 0, 1, 1], [], []>} : vector<16x24xbf16>, vector<24x22xbf16>, vector<16x22xf32> -> vector<16x22xf32>
    %65 = arith.addf %58, %64 : vector<16x22xf32>
    %c0_30 = arith.constant 0 : index
    %c0_31 = arith.constant 0 : index
    %66 = vector.load %arg3[%c0_30, %c0_31] : memref<16x1xf32, #tpu.memory_space<vmem>>, vector<16x1xf32>
    %67 = vector.broadcast %66 : vector<16x1xf32> to vector<16x22xf32>
    %68 = arith.addf %65, %67 : vector<16x22xf32>
    %cst_32 = arith.constant 0.000000e+00 : f32
    %69 = vector.broadcast %cst_32 : f32 to vector<16x22xf32>
    %70 = arith.maximumf %68, %69 : vector<16x22xf32>
    %c0_33 = arith.constant 0 : index
    %c0_34 = arith.constant 0 : index
    %c0_35 = arith.constant 0 : index
    %71 = vector.load %arg4[%c0_33, %c0_34, %c0_35] : memref<1x16x22xf32, #tpu.memory_space<vmem>>, vector<1x16x22xf32>
    %72 = vector.shape_cast %71 : vector<1x16x22xf32> to vector<16x22xf32>
    %73 = vector.shape_cast %70 : vector<16x22xf32> to vector<1x16x22xf32>
    tpu.vector_store %arg4[%c0_33, %c0_34, %c0_35], %73 {strides = array<i32>} : memref<1x16x22xf32, #tpu.memory_space<vmem>>, vector<1x16x22xf32>,
    return
  }
  func.func @transform_0(%arg0: i32) -> (i32, i32, i32) {
    %c0_i32 = arith.constant 0 : i32
    %c0_i32_0 = arith.constant 0 : i32
    %c0_i32_1 = arith.constant 0 : i32
    return %arg0, %c0_i32, %c0_i32_0 : i32, i32, i32
  }
  func.func @transform_1(%arg0: i32) -> (i32, i32, i32) {
    %c0_i32 = arith.constant 0 : i32
    %c0_i32_0 = arith.constant 0 : i32
    %c0_i32_1 = arith.constant 0 : i32
    %c0_i32_2 = arith.constant 0 : i32
    return %c0_i32, %c0_i32_0, %c0_i32_1 : i32, i32, i32
  }
  func.func @transform_2(%arg0: i32) -> (i32, i32) {
    %c0_i32 = arith.constant 0 : i32
    %c0_i32_0 = arith.constant 0 : i32
    %c0_i32_1 = arith.constant 0 : i32
    return %c0_i32, %c0_i32_0 : i32, i32
  }
  func.func @transform_3(%arg0: i32) -> (i32, i32, i32) {
    %c0_i32 = arith.constant 0 : i32
    %c0_i32_0 = arith.constant 0 : i32
    %c0_i32_1 = arith.constant 0 : i32
    return %arg0, %c0_i32, %c0_i32_0 : i32, i32, i32
  }
}

module attributes {stable_mosaic.version = 11 : i64} {
  func.func @_conv_kernel(%arg0: i32, %arg1: memref<1x16x16xf32, #tpu.memory_space<vmem>>, %arg2: memref<1x2x16xf32, #tpu.memory_space<vmem>>, %arg3: memref<2x1xf32, #tpu.memory_space<vmem>>, %arg4: memref<1x2x16xf32, #tpu.memory_space<vmem>>) attributes {dimension_semantics = [#tpu.dimension_semantics<parallel>], iteration_bounds = array<i64: 2>, scalar_prefetch = 0 : i64, scratch_operands = 0 : i64, tpu.core_type = #tpu.core_type<tc>, window_params = [{transform_indices = @transform_0, window_bounds = array<i64: 1, 16, 16>}, {pipeline_mode = #tpu.pipeline_mode<synchronous>, transform_indices = @transform_1, window_bounds = array<i64: 1, 2, 16>}, {pipeline_mode = #tpu.pipeline_mode<synchronous>, transform_indices = @transform_2, window_bounds = array<i64: 2, 1>}, {transform_indices = @transform_3, window_bounds = array<i64: 1, 2, 16>}]} {
    %c0 = arith.constant 0 : index
    %c0_0 = arith.constant 0 : index
    %c0_1 = arith.constant 0 : index
    %0 = vector.load %arg1[%c0, %c0_0, %c0_1] : memref<1x16x16xf32, #tpu.memory_space<vmem>>, vector<1x16x16xf32>
    %1 = vector.shape_cast %0 : vector<1x16x16xf32> to vector<16x16xf32>
    %cst = arith.constant 0.000000e+00 : f32
    %2 = vector.broadcast %cst : f32 to vector<2x16xf32>
    %3 = arith.truncf %1 : vector<16x16xf32> to vector<16x16xbf16>
    %c0_2 = arith.constant 0 : index
    %c0_3 = arith.constant 0 : index
    %c0_4 = arith.constant 0 : index
    %4 = vector.load %arg2[%c0_2, %c0_3, %c0_4] : memref<1x2x16xf32, #tpu.memory_space<vmem>>, vector<1x2x16xf32>
    %5 = vector.shape_cast %4 : vector<1x2x16xf32> to vector<2x16xf32>
    %6 = arith.truncf %5 : vector<2x16xf32> to vector<2x16xbf16>
    %cst_5 = arith.constant dense<0.000000e+00> : vector<2x16xf32>
    %7 = tpu.matmul %6, %3, %cst_5 {dimension_numbers = #tpu.dot_dimension_numbers<[1], [0], [0], [1], [0, 0, 1, 1], [], []>} : vector<2x16xbf16>, vector<16x16xbf16>, vector<2x16xf32> -> vector<2x16xf32>
    %8 = arith.addf %2, %7 : vector<2x16xf32>
    %c0_6 = arith.constant 0 : index
    %c0_7 = arith.constant 0 : index
    %9 = vector.load %arg3[%c0_6, %c0_7] : memref<2x1xf32, #tpu.memory_space<vmem>>, vector<2x1xf32>
    %10 = vector.broadcast %9 : vector<2x1xf32> to vector<2x16xf32>
    %11 = arith.addf %8, %10 : vector<2x16xf32>
    %c0_8 = arith.constant 0 : index
    %c0_9 = arith.constant 0 : index
    %c0_10 = arith.constant 0 : index
    %12 = vector.load %arg4[%c0_8, %c0_9, %c0_10] : memref<1x2x16xf32, #tpu.memory_space<vmem>>, vector<1x2x16xf32>
    %13 = vector.shape_cast %12 : vector<1x2x16xf32> to vector<2x16xf32>
    %14 = vector.shape_cast %11 : vector<2x16xf32> to vector<1x2x16xf32>
    tpu.vector_store %arg4[%c0_8, %c0_9, %c0_10], %14 {strides = array<i32>} : memref<1x2x16xf32, #tpu.memory_space<vmem>>, vector<1x2x16xf32>,
    return
  }
  func.func @transform_0(%arg0: i32) -> (i32, i32, i32) {
    %c0_i32 = arith.constant 0 : i32
    %c0_i32_0 = arith.constant 0 : i32
    %c0_i32_1 = arith.constant 0 : i32
    return %arg0, %c0_i32, %c0_i32_0 : i32, i32, i32
  }
  func.func @transform_1(%arg0: i32) -> (i32, i32, i32) {
    %c0_i32 = arith.constant 0 : i32
    %c0_i32_0 = arith.constant 0 : i32
    %c0_i32_1 = arith.constant 0 : i32
    %c0_i32_2 = arith.constant 0 : i32
    return %c0_i32, %c0_i32_0, %c0_i32_1 : i32, i32, i32
  }
  func.func @transform_2(%arg0: i32) -> (i32, i32) {
    %c0_i32 = arith.constant 0 : i32
    %c0_i32_0 = arith.constant 0 : i32
    %c0_i32_1 = arith.constant 0 : i32
    return %c0_i32, %c0_i32_0 : i32, i32
  }
  func.func @transform_3(%arg0: i32) -> (i32, i32, i32) {
    %c0_i32 = arith.constant 0 : i32
    %c0_i32_0 = arith.constant 0 : i32
    %c0_i32_1 = arith.constant 0 : i32
    return %arg0, %c0_i32, %c0_i32_0 : i32, i32, i32
  }
}

module attributes {stable_mosaic.version = 11 : i64} {
  func.func @_matmul_kernel(%arg0: i32, %arg1: memref<16x4xf32, #tpu.memory_space<vmem>>, %arg2: memref<4x16xf32, #tpu.memory_space<vmem>>, %arg3: memref<16x16xf32, #tpu.memory_space<vmem>>) attributes {dimension_semantics = [#tpu.dimension_semantics<parallel>], iteration_bounds = array<i64: 1>, scalar_prefetch = 0 : i64, scratch_operands = 0 : i64, tpu.core_type = #tpu.core_type<tc>, window_params = [{transform_indices = @transform_0, window_bounds = array<i64: 16, 4>}, {pipeline_mode = #tpu.pipeline_mode<synchronous>, transform_indices = @transform_1, window_bounds = array<i64: 4, 16>}, {transform_indices = @transform_2, window_bounds = array<i64: 16, 16>}]} {
    %c0 = arith.constant 0 : index
    %c0_0 = arith.constant 0 : index
    %0 = vector.load %arg1[%c0, %c0_0] : memref<16x4xf32, #tpu.memory_space<vmem>>, vector<16x4xf32>
    %c0_1 = arith.constant 0 : index
    %c0_2 = arith.constant 0 : index
    %1 = vector.load %arg2[%c0_1, %c0_2] : memref<4x16xf32, #tpu.memory_space<vmem>>, vector<4x16xf32>
    %cst = arith.constant dense<0.000000e+00> : vector<16x16xf32>
    %2 = tpu.matmul %0, %1, %cst {dimension_numbers = #tpu.dot_dimension_numbers<[1], [0], [0], [1], [0, 0, 1, 1], [], []>} : vector<16x4xf32>, vector<4x16xf32>, vector<16x16xf32> -> vector<16x16xf32>
    %c0_3 = arith.constant 0 : index
    %c0_4 = arith.constant 0 : index
    %3 = vector.load %arg3[%c0_3, %c0_4] : memref<16x16xf32, #tpu.memory_space<vmem>>, vector<16x16xf32>
    tpu.vector_store %arg3[%c0_3, %c0_4], %2 {strides = array<i32>} : memref<16x16xf32, #tpu.memory_space<vmem>>, vector<16x16xf32>,
    return
  }
  func.func @transform_0(%arg0: i32) -> (i32, i32) {
    %c0_i32 = arith.constant 0 : i32
    %c0_i32_0 = arith.constant 0 : i32
    return %arg0, %c0_i32 : i32, i32
  }
  func.func @transform_1(%arg0: i32) -> (i32, i32) {
    %c0_i32 = arith.constant 0 : i32
    %c0_i32_0 = arith.constant 0 : i32
    %c0_i32_1 = arith.constant 0 : i32
    return %c0_i32, %c0_i32_0 : i32, i32
  }
  func.func @transform_2(%arg0: i32) -> (i32, i32) {
    %c0_i32 = arith.constant 0 : i32
    %c0_i32_0 = arith.constant 0 : i32
    return %arg0, %c0_i32 : i32, i32
  }
}

module attributes {stable_mosaic.version = 11 : i64} {
  func.func @_matmul_kernel(%arg0: i32, %arg1: memref<64x4xf32, #tpu.memory_space<vmem>>, %arg2: memref<4x16xf32, #tpu.memory_space<vmem>>, %arg3: memref<64x16xf32, #tpu.memory_space<vmem>>) attributes {dimension_semantics = [#tpu.dimension_semantics<parallel>], iteration_bounds = array<i64: 1>, scalar_prefetch = 0 : i64, scratch_operands = 0 : i64, tpu.core_type = #tpu.core_type<tc>, window_params = [{transform_indices = @transform_0, window_bounds = array<i64: 64, 4>}, {pipeline_mode = #tpu.pipeline_mode<synchronous>, transform_indices = @transform_1, window_bounds = array<i64: 4, 16>}, {transform_indices = @transform_2, window_bounds = array<i64: 64, 16>}]} {
    %c0 = arith.constant 0 : index
    %c0_0 = arith.constant 0 : index
    %0 = vector.load %arg1[%c0, %c0_0] : memref<64x4xf32, #tpu.memory_space<vmem>>, vector<64x4xf32>
    %c0_1 = arith.constant 0 : index
    %c0_2 = arith.constant 0 : index
    %1 = vector.load %arg2[%c0_1, %c0_2] : memref<4x16xf32, #tpu.memory_space<vmem>>, vector<4x16xf32>
    %cst = arith.constant dense<0.000000e+00> : vector<64x16xf32>
    %2 = tpu.matmul %0, %1, %cst {dimension_numbers = #tpu.dot_dimension_numbers<[1], [0], [0], [1], [0, 0, 1, 1], [], []>} : vector<64x4xf32>, vector<4x16xf32>, vector<64x16xf32> -> vector<64x16xf32>
    %c0_3 = arith.constant 0 : index
    %c0_4 = arith.constant 0 : index
    %3 = vector.load %arg3[%c0_3, %c0_4] : memref<64x16xf32, #tpu.memory_space<vmem>>, vector<64x16xf32>
    tpu.vector_store %arg3[%c0_3, %c0_4], %2 {strides = array<i32>} : memref<64x16xf32, #tpu.memory_space<vmem>>, vector<64x16xf32>,
    return
  }
  func.func @transform_0(%arg0: i32) -> (i32, i32) {
    %c0_i32 = arith.constant 0 : i32
    %c0_i32_0 = arith.constant 0 : i32
    return %arg0, %c0_i32 : i32, i32
  }
  func.func @transform_1(%arg0: i32) -> (i32, i32) {
    %c0_i32 = arith.constant 0 : i32
    %c0_i32_0 = arith.constant 0 : i32
    %c0_i32_1 = arith.constant 0 : i32
    return %c0_i32, %c0_i32_0 : i32, i32
  }
  func.func @transform_2(%arg0: i32) -> (i32, i32) {
    %c0_i32 = arith.constant 0 : i32
    %c0_i32_0 = arith.constant 0 : i32
    return %arg0, %c0_i32 : i32, i32
  }
}

module attributes {stable_mosaic.version = 11 : i64} {
  func.func @_convlstm_kernel(%arg0: i32, %arg1: i32, %arg2: memref<1x1x2x324xf32, #tpu.memory_space<vmem>>, %arg3: memref<1x2x324xf32, #tpu.memory_space<vmem>>, %arg4: memref<1x2x286xf32, #tpu.memory_space<vmem>>, %arg5: memref<9x8x2xf32, #tpu.memory_space<vmem>>, %arg6: memref<9x8x2xf32, #tpu.memory_space<vmem>>, %arg7: memref<8x1xf32, #tpu.memory_space<vmem>>, %arg8: memref<1x286xf32, #tpu.memory_space<vmem>>, %arg9: memref<1x2x286xf32, #tpu.memory_space<vmem>>, %arg10: memref<1x2x286xf32, #tpu.memory_space<vmem>>, %arg11: memref<2x324xf32, #tpu.memory_space<vmem>>, %arg12: memref<2x286xf32, #tpu.memory_space<vmem>>) attributes {dimension_semantics = [#tpu.dimension_semantics<parallel>, #tpu.dimension_semantics<arbitrary>], iteration_bounds = array<i64: 2, 3>, scalar_prefetch = 0 : i64, scratch_operands = 2 : i64, tpu.core_type = #tpu.core_type<tc>, window_params = [{transform_indices = @transform_0, window_bounds = array<i64: 1, 1, 2, 324>}, {transform_indices = @transform_1, window_bounds = array<i64: 1, 2, 324>}, {transform_indices = @transform_2, window_bounds = array<i64: 1, 2, 286>}, {pipeline_mode = #tpu.pipeline_mode<synchronous>, transform_indices = @transform_3, window_bounds = array<i64: 9, 8, 2>}, {pipeline_mode = #tpu.pipeline_mode<synchronous>, transform_indices = @transform_4, window_bounds = array<i64: 9, 8, 2>}, {pipeline_mode = #tpu.pipeline_mode<synchronous>, transform_indices = @transform_5, window_bounds = array<i64: 8, 1>}, {pipeline_mode = #tpu.pipeline_mode<synchronous>, transform_indices = @transform_6, window_bounds = array<i64: 1, 286>}, {transform_indices = @transform_7, window_bounds = array<i64: 1, 2, 286>}, {transform_indices = @transform_8, window_bounds = array<i64: 1, 2, 286>}]} {
    %c0_i32 = arith.constant 0 : i32
    %0 = arith.cmpi eq, %arg1, %c0_i32 : i32
    %1 = arith.extui %0 : i1 to i32
    %c0_i32_0 = arith.constant 0 : i32
    %2 = arith.cmpi ne, %1, %c0_i32_0 : i32
    scf.if %2 {
      %c0_88 = arith.constant 0 : index
      %c0_89 = arith.constant 0 : index
      %c0_90 = arith.constant 0 : index
      %177 = vector.load %arg3[%c0_88, %c0_89, %c0_90] : memref<1x2x324xf32, #tpu.memory_space<vmem>>, vector<1x2x324xf32>
      %178 = vector.shape_cast %177 : vector<1x2x324xf32> to vector<2x324xf32>
      %c0_91 = arith.constant 0 : index
      %c0_92 = arith.constant 0 : index
      %179 = vector.load %arg11[%c0_91, %c0_92] : memref<2x324xf32, #tpu.memory_space<vmem>>, vector<2x324xf32>
      tpu.vector_store %arg11[%c0_91, %c0_92], %178 {strides = array<i32>} : memref<2x324xf32, #tpu.memory_space<vmem>>, vector<2x324xf32>,
      %c0_93 = arith.constant 0 : index
      %c0_94 = arith.constant 0 : index
      %c0_95 = arith.constant 0 : index
      %180 = vector.load %arg4[%c0_93, %c0_94, %c0_95] : memref<1x2x286xf32, #tpu.memory_space<vmem>>, vector<1x2x286xf32>
      %181 = vector.shape_cast %180 : vector<1x2x286xf32> to vector<2x286xf32>
      %c0_96 = arith.constant 0 : index
      %c0_97 = arith.constant 0 : index
      %182 = vector.load %arg12[%c0_96, %c0_97] : memref<2x286xf32, #tpu.memory_space<vmem>>, vector<2x286xf32>
      tpu.vector_store %arg12[%c0_96, %c0_97], %181 {strides = array<i32>} : memref<2x286xf32, #tpu.memory_space<vmem>>, vector<2x286xf32>,
    } else {
    }
    %c0 = arith.constant 0 : index
    %c0_1 = arith.constant 0 : index
    %c0_2 = arith.constant 0 : index
    %c0_3 = arith.constant 0 : index
    %3 = vector.load %arg2[%c0, %c0_1, %c0_2, %c0_3] : memref<1x1x2x324xf32, #tpu.memory_space<vmem>>, vector<1x1x2x324xf32>
    %4 = vector.shape_cast %3 : vector<1x1x2x324xf32> to vector<2x324xf32>
    %c0_4 = arith.constant 0 : index
    %c0_5 = arith.constant 0 : index
    %5 = vector.load %arg11[%c0_4, %c0_5] : memref<2x324xf32, #tpu.memory_space<vmem>>, vector<2x324xf32>
    %cst = arith.constant 0.000000e+00 : f32
    %6 = vector.broadcast %cst : f32 to vector<8x286xf32>
    %7 = vector.extract_strided_slice %4 {offsets = [0, 0], sizes = [2, 286], strides = [1, 1]} : vector<2x324xf32> to vector<2x286xf32>
    %8 = arith.truncf %7 : vector<2x286xf32> to vector<2x286xbf16>
    %9 = vector.extract_strided_slice %5 {offsets = [0, 0], sizes = [2, 286], strides = [1, 1]} : vector<2x324xf32> to vector<2x286xf32>
    %10 = arith.truncf %9 : vector<2x286xf32> to vector<2x286xbf16>
    %c0_6 = arith.constant 0 : index
    %c0_7 = arith.constant 0 : index
    %c0_8 = arith.constant 0 : index
    %11 = vector.load %arg5[%c0_6, %c0_7, %c0_8] : memref<9x8x2xf32, #tpu.memory_space<vmem>>, vector<1x8x2xf32>
    %12 = vector.shape_cast %11 : vector<1x8x2xf32> to vector<8x2xf32>
    %13 = arith.truncf %12 : vector<8x2xf32> to vector<8x2xbf16>
    %cst_9 = arith.constant dense<0.000000e+00> : vector<8x286xf32>
    %14 = tpu.matmul %13, %8, %cst_9 {dimension_numbers = #tpu.dot_dimension_numbers<[1], [0], [0], [1], [0, 0, 1, 1], [], []>} : vector<8x2xbf16>, vector<2x286xbf16>, vector<8x286xf32> -> vector<8x286xf32>
    %15 = arith.addf %6, %14 : vector<8x286xf32>
    %c0_10 = arith.constant 0 : index
    %c0_11 = arith.constant 0 : index
    %c0_12 = arith.constant 0 : index
    %16 = vector.load %arg6[%c0_10, %c0_11, %c0_12] : memref<9x8x2xf32, #tpu.memory_space<vmem>>, vector<1x8x2xf32>
    %17 = vector.shape_cast %16 : vector<1x8x2xf32> to vector<8x2xf32>
    %18 = arith.truncf %17 : vector<8x2xf32> to vector<8x2xbf16>
    %cst_13 = arith.constant dense<0.000000e+00> : vector<8x286xf32>
    %19 = tpu.matmul %18, %10, %cst_13 {dimension_numbers = #tpu.dot_dimension_numbers<[1], [0], [0], [1], [0, 0, 1, 1], [], []>} : vector<8x2xbf16>, vector<2x286xbf16>, vector<8x286xf32> -> vector<8x286xf32>
    %20 = arith.addf %15, %19 : vector<8x286xf32>
    %21 = vector.extract_strided_slice %4 {offsets = [0, 1], sizes = [2, 286], strides = [1, 1]} : vector<2x324xf32> to vector<2x286xf32>
    %22 = arith.truncf %21 : vector<2x286xf32> to vector<2x286xbf16>
    %23 = vector.extract_strided_slice %5 {offsets = [0, 1], sizes = [2, 286], strides = [1, 1]} : vector<2x324xf32> to vector<2x286xf32>
    %24 = arith.truncf %23 : vector<2x286xf32> to vector<2x286xbf16>
    %c1 = arith.constant 1 : index
    %c0_14 = arith.constant 0 : index
    %c0_15 = arith.constant 0 : index
    %25 = vector.load %arg5[%c1, %c0_14, %c0_15] : memref<9x8x2xf32, #tpu.memory_space<vmem>>, vector<1x8x2xf32>
    %26 = vector.shape_cast %25 : vector<1x8x2xf32> to vector<8x2xf32>
    %27 = arith.truncf %26 : vector<8x2xf32> to vector<8x2xbf16>
    %cst_16 = arith.constant dense<0.000000e+00> : vector<8x286xf32>
    %28 = tpu.matmul %27, %22, %cst_16 {dimension_numbers = #tpu.dot_dimension_numbers<[1], [0], [0], [1], [0, 0, 1, 1], [], []>} : vector<8x2xbf16>, vector<2x286xbf16>, vector<8x286xf32> -> vector<8x286xf32>
    %29 = arith.addf %20, %28 : vector<8x286xf32>
    %c1_17 = arith.constant 1 : index
    %c0_18 = arith.constant 0 : index
    %c0_19 = arith.constant 0 : index
    %30 = vector.load %arg6[%c1_17, %c0_18, %c0_19] : memref<9x8x2xf32, #tpu.memory_space<vmem>>, vector<1x8x2xf32>
    %31 = vector.shape_cast %30 : vector<1x8x2xf32> to vector<8x2xf32>
    %32 = arith.truncf %31 : vector<8x2xf32> to vector<8x2xbf16>
    %cst_20 = arith.constant dense<0.000000e+00> : vector<8x286xf32>
    %33 = tpu.matmul %32, %24, %cst_20 {dimension_numbers = #tpu.dot_dimension_numbers<[1], [0], [0], [1], [0, 0, 1, 1], [], []>} : vector<8x2xbf16>, vector<2x286xbf16>, vector<8x286xf32> -> vector<8x286xf32>
    %34 = arith.addf %29, %33 : vector<8x286xf32>
    %35 = vector.extract_strided_slice %4 {offsets = [0, 2], sizes = [2, 286], strides = [1, 1]} : vector<2x324xf32> to vector<2x286xf32>
    %36 = arith.truncf %35 : vector<2x286xf32> to vector<2x286xbf16>
    %37 = vector.extract_strided_slice %5 {offsets = [0, 2], sizes = [2, 286], strides = [1, 1]} : vector<2x324xf32> to vector<2x286xf32>
    %38 = arith.truncf %37 : vector<2x286xf32> to vector<2x286xbf16>
    %c2 = arith.constant 2 : index
    %c0_21 = arith.constant 0 : index
    %c0_22 = arith.constant 0 : index
    %39 = vector.load %arg5[%c2, %c0_21, %c0_22] : memref<9x8x2xf32, #tpu.memory_space<vmem>>, vector<1x8x2xf32>
    %40 = vector.shape_cast %39 : vector<1x8x2xf32> to vector<8x2xf32>
    %41 = arith.truncf %40 : vector<8x2xf32> to vector<8x2xbf16>
    %cst_23 = arith.constant dense<0.000000e+00> : vector<8x286xf32>
    %42 = tpu.matmul %41, %36, %cst_23 {dimension_numbers = #tpu.dot_dimension_numbers<[1], [0], [0], [1], [0, 0, 1, 1], [], []>} : vector<8x2xbf16>, vector<2x286xbf16>, vector<8x286xf32> -> vector<8x286xf32>
    %43 = arith.addf %34, %42 : vector<8x286xf32>
    %c2_24 = arith.constant 2 : index
    %c0_25 = arith.constant 0 : index
    %c0_26 = arith.constant 0 : index
    %44 = vector.load %arg6[%c2_24, %c0_25, %c0_26] : memref<9x8x2xf32, #tpu.memory_space<vmem>>, vector<1x8x2xf32>
    %45 = vector.shape_cast %44 : vector<1x8x2xf32> to vector<8x2xf32>
    %46 = arith.truncf %45 : vector<8x2xf32> to vector<8x2xbf16>
    %cst_27 = arith.constant dense<0.000000e+00> : vector<8x286xf32>
    %47 = tpu.matmul %46, %38, %cst_27 {dimension_numbers = #tpu.dot_dimension_numbers<[1], [0], [0], [1], [0, 0, 1, 1], [], []>} : vector<8x2xbf16>, vector<2x286xbf16>, vector<8x286xf32> -> vector<8x286xf32>
    %48 = arith.addf %43, %47 : vector<8x286xf32>
    %49 = vector.extract_strided_slice %4 {offsets = [0, 18], sizes = [2, 286], strides = [1, 1]} : vector<2x324xf32> to vector<2x286xf32>
    %50 = arith.truncf %49 : vector<2x286xf32> to vector<2x286xbf16>
    %51 = vector.extract_strided_slice %5 {offsets = [0, 18], sizes = [2, 286], strides = [1, 1]} : vector<2x324xf32> to vector<2x286xf32>
    %52 = arith.truncf %51 : vector<2x286xf32> to vector<2x286xbf16>
    %c3 = arith.constant 3 : index
    %c0_28 = arith.constant 0 : index
    %c0_29 = arith.constant 0 : index
    %53 = vector.load %arg5[%c3, %c0_28, %c0_29] : memref<9x8x2xf32, #tpu.memory_space<vmem>>, vector<1x8x2xf32>
    %54 = vector.shape_cast %53 : vector<1x8x2xf32> to vector<8x2xf32>
    %55 = arith.truncf %54 : vector<8x2xf32> to vector<8x2xbf16>
    %cst_30 = arith.constant dense<0.000000e+00> : vector<8x286xf32>
    %56 = tpu.matmul %55, %50, %cst_30 {dimension_numbers = #tpu.dot_dimension_numbers<[1], [0], [0], [1], [0, 0, 1, 1], [], []>} : vector<8x2xbf16>, vector<2x286xbf16>, vector<8x286xf32> -> vector<8x286xf32>
    %57 = arith.addf %48, %56 : vector<8x286xf32>
    %c3_31 = arith.constant 3 : index
    %c0_32 = arith.constant 0 : index
    %c0_33 = arith.constant 0 : index
    %58 = vector.load %arg6[%c3_31, %c0_32, %c0_33] : memref<9x8x2xf32, #tpu.memory_space<vmem>>, vector<1x8x2xf32>
    %59 = vector.shape_cast %58 : vector<1x8x2xf32> to vector<8x2xf32>
    %60 = arith.truncf %59 : vector<8x2xf32> to vector<8x2xbf16>
    %cst_34 = arith.constant dense<0.000000e+00> : vector<8x286xf32>
    %61 = tpu.matmul %60, %52, %cst_34 {dimension_numbers = #tpu.dot_dimension_numbers<[1], [0], [0], [1], [0, 0, 1, 1], [], []>} : vector<8x2xbf16>, vector<2x286xbf16>, vector<8x286xf32> -> vector<8x286xf32>
    %62 = arith.addf %57, %61 : vector<8x286xf32>
    %63 = vector.extract_strided_slice %4 {offsets = [0, 19], sizes = [2, 286], strides = [1, 1]} : vector<2x324xf32> to vector<2x286xf32>
    %64 = arith.truncf %63 : vector<2x286xf32> to vector<2x286xbf16>
    %65 = vector.extract_strided_slice %5 {offsets = [0, 19], sizes = [2, 286], strides = [1, 1]} : vector<2x324xf32> to vector<2x286xf32>
    %66 = arith.truncf %65 : vector<2x286xf32> to vector<2x286xbf16>
    %c4 = arith.constant 4 : index
    %c0_35 = arith.constant 0 : index
    %c0_36 = arith.constant 0 : index
    %67 = vector.load %arg5[%c4, %c0_35, %c0_36] : memref<9x8x2xf32, #tpu.memory_space<vmem>>, vector<1x8x2xf32>
    %68 = vector.shape_cast %67 : vector<1x8x2xf32> to vector<8x2xf32>
    %69 = arith.truncf %68 : vector<8x2xf32> to vector<8x2xbf16>
    %cst_37 = arith.constant dense<0.000000e+00> : vector<8x286xf32>
    %70 = tpu.matmul %69, %64, %cst_37 {dimension_numbers = #tpu.dot_dimension_numbers<[1], [0], [0], [1], [0, 0, 1, 1], [], []>} : vector<8x2xbf16>, vector<2x286xbf16>, vector<8x286xf32> -> vector<8x286xf32>
    %71 = arith.addf %62, %70 : vector<8x286xf32>
    %c4_38 = arith.constant 4 : index
    %c0_39 = arith.constant 0 : index
    %c0_40 = arith.constant 0 : index
    %72 = vector.load %arg6[%c4_38, %c0_39, %c0_40] : memref<9x8x2xf32, #tpu.memory_space<vmem>>, vector<1x8x2xf32>
    %73 = vector.shape_cast %72 : vector<1x8x2xf32> to vector<8x2xf32>
    %74 = arith.truncf %73 : vector<8x2xf32> to vector<8x2xbf16>
    %cst_41 = arith.constant dense<0.000000e+00> : vector<8x286xf32>
    %75 = tpu.matmul %74, %66, %cst_41 {dimension_numbers = #tpu.dot_dimension_numbers<[1], [0], [0], [1], [0, 0, 1, 1], [], []>} : vector<8x2xbf16>, vector<2x286xbf16>, vector<8x286xf32> -> vector<8x286xf32>
    %76 = arith.addf %71, %75 : vector<8x286xf32>
    %77 = vector.extract_strided_slice %4 {offsets = [0, 20], sizes = [2, 286], strides = [1, 1]} : vector<2x324xf32> to vector<2x286xf32>
    %78 = arith.truncf %77 : vector<2x286xf32> to vector<2x286xbf16>
    %79 = vector.extract_strided_slice %5 {offsets = [0, 20], sizes = [2, 286], strides = [1, 1]} : vector<2x324xf32> to vector<2x286xf32>
    %80 = arith.truncf %79 : vector<2x286xf32> to vector<2x286xbf16>
    %c5 = arith.constant 5 : index
    %c0_42 = arith.constant 0 : index
    %c0_43 = arith.constant 0 : index
    %81 = vector.load %arg5[%c5, %c0_42, %c0_43] : memref<9x8x2xf32, #tpu.memory_space<vmem>>, vector<1x8x2xf32>
    %82 = vector.shape_cast %81 : vector<1x8x2xf32> to vector<8x2xf32>
    %83 = arith.truncf %82 : vector<8x2xf32> to vector<8x2xbf16>
    %cst_44 = arith.constant dense<0.000000e+00> : vector<8x286xf32>
    %84 = tpu.matmul %83, %78, %cst_44 {dimension_numbers = #tpu.dot_dimension_numbers<[1], [0], [0], [1], [0, 0, 1, 1], [], []>} : vector<8x2xbf16>, vector<2x286xbf16>, vector<8x286xf32> -> vector<8x286xf32>
    %85 = arith.addf %76, %84 : vector<8x286xf32>
    %c5_45 = arith.constant 5 : index
    %c0_46 = arith.constant 0 : index
    %c0_47 = arith.constant 0 : index
    %86 = vector.load %arg6[%c5_45, %c0_46, %c0_47] : memref<9x8x2xf32, #tpu.memory_space<vmem>>, vector<1x8x2xf32>
    %87 = vector.shape_cast %86 : vector<1x8x2xf32> to vector<8x2xf32>
    %88 = arith.truncf %87 : vector<8x2xf32> to vector<8x2xbf16>
    %cst_48 = arith.constant dense<0.000000e+00> : vector<8x286xf32>
    %89 = tpu.matmul %88, %80, %cst_48 {dimension_numbers = #tpu.dot_dimension_numbers<[1], [0], [0], [1], [0, 0, 1, 1], [], []>} : vector<8x2xbf16>, vector<2x286xbf16>, vector<8x286xf32> -> vector<8x286xf32>
    %90 = arith.addf %85, %89 : vector<8x286xf32>
    %91 = vector.extract_strided_slice %4 {offsets = [0, 36], sizes = [2, 286], strides = [1, 1]} : vector<2x324xf32> to vector<2x286xf32>
    %92 = arith.truncf %91 : vector<2x286xf32> to vector<2x286xbf16>
    %93 = vector.extract_strided_slice %5 {offsets = [0, 36], sizes = [2, 286], strides = [1, 1]} : vector<2x324xf32> to vector<2x286xf32>
    %94 = arith.truncf %93 : vector<2x286xf32> to vector<2x286xbf16>
    %c6 = arith.constant 6 : index
    %c0_49 = arith.constant 0 : index
    %c0_50 = arith.constant 0 : index
    %95 = vector.load %arg5[%c6, %c0_49, %c0_50] : memref<9x8x2xf32, #tpu.memory_space<vmem>>, vector<1x8x2xf32>
    %96 = vector.shape_cast %95 : vector<1x8x2xf32> to vector<8x2xf32>
    %97 = arith.truncf %96 : vector<8x2xf32> to vector<8x2xbf16>
    %cst_51 = arith.constant dense<0.000000e+00> : vector<8x286xf32>
    %98 = tpu.matmul %97, %92, %cst_51 {dimension_numbers = #tpu.dot_dimension_numbers<[1], [0], [0], [1], [0, 0, 1, 1], [], []>} : vector<8x2xbf16>, vector<2x286xbf16>, vector<8x286xf32> -> vector<8x286xf32>
    %99 = arith.addf %90, %98 : vector<8x286xf32>
    %c6_52 = arith.constant 6 : index
    %c0_53 = arith.constant 0 : index
    %c0_54 = arith.constant 0 : index
    %100 = vector.load %arg6[%c6_52, %c0_53, %c0_54] : memref<9x8x2xf32, #tpu.memory_space<vmem>>, vector<1x8x2xf32>
    %101 = vector.shape_cast %100 : vector<1x8x2xf32> to vector<8x2xf32>
    %102 = arith.truncf %101 : vector<8x2xf32> to vector<8x2xbf16>
    %cst_55 = arith.constant dense<0.000000e+00> : vector<8x286xf32>
    %103 = tpu.matmul %102, %94, %cst_55 {dimension_numbers = #tpu.dot_dimension_numbers<[1], [0], [0], [1], [0, 0, 1, 1], [], []>} : vector<8x2xbf16>, vector<2x286xbf16>, vector<8x286xf32> -> vector<8x286xf32>
    %104 = arith.addf %99, %103 : vector<8x286xf32>
    %105 = vector.extract_strided_slice %4 {offsets = [0, 37], sizes = [2, 286], strides = [1, 1]} : vector<2x324xf32> to vector<2x286xf32>
    %106 = arith.truncf %105 : vector<2x286xf32> to vector<2x286xbf16>
    %107 = vector.extract_strided_slice %5 {offsets = [0, 37], sizes = [2, 286], strides = [1, 1]} : vector<2x324xf32> to vector<2x286xf32>
    %108 = arith.truncf %107 : vector<2x286xf32> to vector<2x286xbf16>
    %c7 = arith.constant 7 : index
    %c0_56 = arith.constant 0 : index
    %c0_57 = arith.constant 0 : index
    %109 = vector.load %arg5[%c7, %c0_56, %c0_57] : memref<9x8x2xf32, #tpu.memory_space<vmem>>, vector<1x8x2xf32>
    %110 = vector.shape_cast %109 : vector<1x8x2xf32> to vector<8x2xf32>
    %111 = arith.truncf %110 : vector<8x2xf32> to vector<8x2xbf16>
    %cst_58 = arith.constant dense<0.000000e+00> : vector<8x286xf32>
    %112 = tpu.matmul %111, %106, %cst_58 {dimension_numbers = #tpu.dot_dimension_numbers<[1], [0], [0], [1], [0, 0, 1, 1], [], []>} : vector<8x2xbf16>, vector<2x286xbf16>, vector<8x286xf32> -> vector<8x286xf32>
    %113 = arith.addf %104, %112 : vector<8x286xf32>
    %c7_59 = arith.constant 7 : index
    %c0_60 = arith.constant 0 : index
    %c0_61 = arith.constant 0 : index
    %114 = vector.load %arg6[%c7_59, %c0_60, %c0_61] : memref<9x8x2xf32, #tpu.memory_space<vmem>>, vector<1x8x2xf32>
    %115 = vector.shape_cast %114 : vector<1x8x2xf32> to vector<8x2xf32>
    %116 = arith.truncf %115 : vector<8x2xf32> to vector<8x2xbf16>
    %cst_62 = arith.constant dense<0.000000e+00> : vector<8x286xf32>
    %117 = tpu.matmul %116, %108, %cst_62 {dimension_numbers = #tpu.dot_dimension_numbers<[1], [0], [0], [1], [0, 0, 1, 1], [], []>} : vector<8x2xbf16>, vector<2x286xbf16>, vector<8x286xf32> -> vector<8x286xf32>
    %118 = arith.addf %113, %117 : vector<8x286xf32>
    %119 = vector.extract_strided_slice %4 {offsets = [0, 38], sizes = [2, 286], strides = [1, 1]} : vector<2x324xf32> to vector<2x286xf32>
    %120 = arith.truncf %119 : vector<2x286xf32> to vector<2x286xbf16>
    %121 = vector.extract_strided_slice %5 {offsets = [0, 38], sizes = [2, 286], strides = [1, 1]} : vector<2x324xf32> to vector<2x286xf32>
    %122 = arith.truncf %121 : vector<2x286xf32> to vector<2x286xbf16>
    %c8 = arith.constant 8 : index
    %c0_63 = arith.constant 0 : index
    %c0_64 = arith.constant 0 : index
    %123 = vector.load %arg5[%c8, %c0_63, %c0_64] : memref<9x8x2xf32, #tpu.memory_space<vmem>>, vector<1x8x2xf32>
    %124 = vector.shape_cast %123 : vector<1x8x2xf32> to vector<8x2xf32>
    %125 = arith.truncf %124 : vector<8x2xf32> to vector<8x2xbf16>
    %cst_65 = arith.constant dense<0.000000e+00> : vector<8x286xf32>
    %126 = tpu.matmul %125, %120, %cst_65 {dimension_numbers = #tpu.dot_dimension_numbers<[1], [0], [0], [1], [0, 0, 1, 1], [], []>} : vector<8x2xbf16>, vector<2x286xbf16>, vector<8x286xf32> -> vector<8x286xf32>
    %127 = arith.addf %118, %126 : vector<8x286xf32>
    %c8_66 = arith.constant 8 : index
    %c0_67 = arith.constant 0 : index
    %c0_68 = arith.constant 0 : index
    %128 = vector.load %arg6[%c8_66, %c0_67, %c0_68] : memref<9x8x2xf32, #tpu.memory_space<vmem>>, vector<1x8x2xf32>
    %129 = vector.shape_cast %128 : vector<1x8x2xf32> to vector<8x2xf32>
    %130 = arith.truncf %129 : vector<8x2xf32> to vector<8x2xbf16>
    %cst_69 = arith.constant dense<0.000000e+00> : vector<8x286xf32>
    %131 = tpu.matmul %130, %122, %cst_69 {dimension_numbers = #tpu.dot_dimension_numbers<[1], [0], [0], [1], [0, 0, 1, 1], [], []>} : vector<8x2xbf16>, vector<2x286xbf16>, vector<8x286xf32> -> vector<8x286xf32>
    %132 = arith.addf %127, %131 : vector<8x286xf32>
    %c0_70 = arith.constant 0 : index
    %c0_71 = arith.constant 0 : index
    %133 = vector.load %arg7[%c0_70, %c0_71] : memref<8x1xf32, #tpu.memory_space<vmem>>, vector<8x1xf32>
    %134 = vector.broadcast %133 : vector<8x1xf32> to vector<8x286xf32>
    %135 = arith.addf %132, %134 : vector<8x286xf32>
    %136 = vector.extract_strided_slice %135 {offsets = [0, 0], sizes = [2, 286], strides = [1, 1]} : vector<8x286xf32> to vector<2x286xf32>
    %cst_72 = arith.constant 0.000000e+00 : f32
    %137 = vector.broadcast %cst_72 : f32 to vector<2x286xf32>
    %138 = arith.subf %137, %136 : vector<2x286xf32>
    %139 = math.exp %138 : vector<2x286xf32>
    %cst_73 = arith.constant 1.000000e+00 : f32
    %140 = vector.broadcast %cst_73 : f32 to vector<2x286xf32>
    %141 = arith.addf %140, %139 : vector<2x286xf32>
    %142 = tpu.reciprocal %141 {approx = true} : vector<2x286xf32> -> vector<2x286xf32>
    %143 = vector.extract_strided_slice %135 {offsets = [2, 0], sizes = [2, 286], strides = [1, 1]} : vector<8x286xf32> to vector<2x286xf32>
    %cst_74 = arith.constant 0.000000e+00 : f32
    %144 = vector.broadcast %cst_74 : f32 to vector<2x286xf32>
    %145 = arith.subf %144, %143 : vector<2x286xf32>
    %146 = math.exp %145 : vector<2x286xf32>
    %cst_75 = arith.constant 1.000000e+00 : f32
    %147 = vector.broadcast %cst_75 : f32 to vector<2x286xf32>
    %148 = arith.addf %147, %146 : vector<2x286xf32>
    %149 = tpu.reciprocal %148 {approx = true} : vector<2x286xf32> -> vector<2x286xf32>
    %150 = vector.extract_strided_slice %135 {offsets = [4, 0], sizes = [2, 286], strides = [1, 1]} : vector<8x286xf32> to vector<2x286xf32>
    %cst_76 = arith.constant 0.000000e+00 : f32
    %151 = vector.broadcast %cst_76 : f32 to vector<2x286xf32>
    %152 = arith.subf %151, %150 : vector<2x286xf32>
    %153 = math.exp %152 : vector<2x286xf32>
    %cst_77 = arith.constant 1.000000e+00 : f32
    %154 = vector.broadcast %cst_77 : f32 to vector<2x286xf32>
    %155 = arith.addf %154, %153 : vector<2x286xf32>
    %156 = tpu.reciprocal %155 {approx = true} : vector<2x286xf32> -> vector<2x286xf32>
    %157 = vector.extract_strided_slice %135 {offsets = [6, 0], sizes = [2, 286], strides = [1, 1]} : vector<8x286xf32> to vector<2x286xf32>
    %158 = math.tanh %157 : vector<2x286xf32>
    %c0_78 = arith.constant 0 : index
    %c0_79 = arith.constant 0 : index
    %159 = vector.load %arg12[%c0_78, %c0_79] : memref<2x286xf32, #tpu.memory_space<vmem>>, vector<2x286xf32>
    %160 = arith.mulf %149, %159 : vector<2x286xf32>
    %161 = arith.mulf %142, %158 : vector<2x286xf32>
    %162 = arith.addf %160, %161 : vector<2x286xf32>
    %163 = math.tanh %162 : vector<2x286xf32>
    %164 = arith.mulf %156, %163 : vector<2x286xf32>
    %c0_80 = arith.constant 0 : index
    %c0_81 = arith.constant 0 : index
    %165 = vector.load %arg12[%c0_80, %c0_81] : memref<2x286xf32, #tpu.memory_space<vmem>>, vector<2x286xf32>
    tpu.vector_store %arg12[%c0_80, %c0_81], %162 {strides = array<i32>} : memref<2x286xf32, #tpu.memory_space<vmem>>, vector<2x286xf32>,
    %c0_82 = arith.constant 0 : index
    %c0_83 = arith.constant 0 : index
    %166 = vector.load %arg8[%c0_82, %c0_83] : memref<1x286xf32, #tpu.memory_space<vmem>>, vector<1x286xf32>
    %cst_84 = arith.constant 5.000000e-01 : f32
    %167 = vector.broadcast %cst_84 : f32 to vector<1x286xf32>
    %168 = arith.cmpf ogt, %166, %167 : vector<1x286xf32>
    %cst_85 = arith.constant 0.000000e+00 : f32
    %169 = vector.shape_cast %168 : vector<1x286xi1> to vector<1x286xi1>
    %170 = vector.broadcast %169 : vector<1x286xi1> to vector<2x286xi1>
    %171 = vector.broadcast %cst_85 : f32 to vector<2x286xf32>
    %172 = arith.select %170, %164, %171 : vector<2x286xi1>, vector<2x286xf32>
    %c0_86 = arith.constant 0 : index
    %c19 = arith.constant 19 : index
    %173 = vector.load %arg11[%c0_86, %c19] : memref<2x324xf32, #tpu.memory_space<vmem>>, vector<2x286xf32>
    tpu.vector_store %arg11[%c0_86, %c19], %172 {strides = array<i32>} : memref<2x324xf32, #tpu.memory_space<vmem>>, vector<2x286xf32>,
    %c2_i32 = arith.constant 2 : i32
    %174 = arith.cmpi eq, %arg1, %c2_i32 : i32
    %175 = arith.extui %174 : i1 to i32
    %c0_i32_87 = arith.constant 0 : i32
    %176 = arith.cmpi ne, %175, %c0_i32_87 : i32
    scf.if %176 {
      %c0_88 = arith.constant 0 : index
      %c0_89 = arith.constant 0 : index
      %c0_90 = arith.constant 0 : index
      %177 = vector.load %arg9[%c0_88, %c0_89, %c0_90] : memref<1x2x286xf32, #tpu.memory_space<vmem>>, vector<1x2x286xf32>
      %178 = vector.shape_cast %177 : vector<1x2x286xf32> to vector<2x286xf32>
      %179 = vector.shape_cast %164 : vector<2x286xf32> to vector<1x2x286xf32>
      tpu.vector_store %arg9[%c0_88, %c0_89, %c0_90], %179 {strides = array<i32>} : memref<1x2x286xf32, #tpu.memory_space<vmem>>, vector<1x2x286xf32>,
      %c0_91 = arith.constant 0 : index
      %c0_92 = arith.constant 0 : index
      %c0_93 = arith.constant 0 : index
      %180 = vector.load %arg10[%c0_91, %c0_92, %c0_93] : memref<1x2x286xf32, #tpu.memory_space<vmem>>, vector<1x2x286xf32>
      %181 = vector.shape_cast %180 : vector<1x2x286xf32> to vector<2x286xf32>
      %182 = vector.shape_cast %162 : vector<2x286xf32> to vector<1x2x286xf32>
      tpu.vector_store %arg10[%c0_91, %c0_92, %c0_93], %182 {strides = array<i32>} : memref<1x2x286xf32, #tpu.memory_space<vmem>>, vector<1x2x286xf32>,
    } else {
    }
    return
  }
  func.func @transform_0(%arg0: i32, %arg1: i32) -> (i32, i32, i32, i32) {
    %c0_i32 = arith.constant 0 : i32
    %c0_i32_0 = arith.constant 0 : i32
    %c0_i32_1 = arith.constant 0 : i32
    return %arg0, %arg1, %c0_i32, %c0_i32_0 : i32, i32, i32, i32
  }
  func.func @transform_1(%arg0: i32, %arg1: i32) -> (i32, i32, i32) {
    %c0_i32 = arith.constant 0 : i32
    %c0_i32_0 = arith.constant 0 : i32
    %c0_i32_1 = arith.constant 0 : i32
    return %arg0, %c0_i32, %c0_i32_0 : i32, i32, i32
  }
  func.func @transform_2(%arg0: i32, %arg1: i32) -> (i32, i32, i32) {
    %c0_i32 = arith.constant 0 : i32
    %c0_i32_0 = arith.constant 0 : i32
    %c0_i32_1 = arith.constant 0 : i32
    return %arg0, %c0_i32, %c0_i32_0 : i32, i32, i32
  }
  func.func @transform_3(%arg0: i32, %arg1: i32) -> (i32, i32, i32) {
    %c0_i32 = arith.constant 0 : i32
    %c0_i32_0 = arith.constant 0 : i32
    %c0_i32_1 = arith.constant 0 : i32
    %c0_i32_2 = arith.constant 0 : i32
    return %c0_i32, %c0_i32_0, %c0_i32_1 : i32, i32, i32
  }
  func.func @transform_4(%arg0: i32, %arg1: i32) -> (i32, i32, i32) {
    %c0_i32 = arith.constant 0 : i32
    %c0_i32_0 = arith.constant 0 : i32
    %c0_i32_1 = arith.constant 0 : i32
    %c0_i32_2 = arith.constant 0 : i32
    return %c0_i32, %c0_i32_0, %c0_i32_1 : i32, i32, i32
  }
  func.func @transform_5(%arg0: i32, %arg1: i32) -> (i32, i32) {
    %c0_i32 = arith.constant 0 : i32
    %c0_i32_0 = arith.constant 0 : i32
    %c0_i32_1 = arith.constant 0 : i32
    return %c0_i32, %c0_i32_0 : i32, i32
  }
  func.func @transform_6(%arg0: i32, %arg1: i32) -> (i32, i32) {
    %c0_i32 = arith.constant 0 : i32
    %c0_i32_0 = arith.constant 0 : i32
    %c0_i32_1 = arith.constant 0 : i32
    return %c0_i32, %c0_i32_0 : i32, i32
  }
  func.func @transform_7(%arg0: i32, %arg1: i32) -> (i32, i32, i32) {
    %c0_i32 = arith.constant 0 : i32
    %c0_i32_0 = arith.constant 0 : i32
    %c0_i32_1 = arith.constant 0 : i32
    return %arg0, %c0_i32, %c0_i32_0 : i32, i32, i32
  }
  func.func @transform_8(%arg0: i32, %arg1: i32) -> (i32, i32, i32) {
    %c0_i32 = arith.constant 0 : i32
    %c0_i32_0 = arith.constant 0 : i32
    %c0_i32_1 = arith.constant 0 : i32
    return %arg0, %c0_i32, %c0_i32_0 : i32, i32, i32
  }
}

</mosaic_0001>

<llo_original>
// kernel: model_step.15
$region0: #{model_step.15}
  #allocation0 [shape = 'u32[]', space=smem, size = 0x4, offset = 0x4, fixed_abs, tag = 'smem constant byte address 0x4 - core index']
  #allocation1 [shape = 'u32[144,128]{1,0:T(1,128)}', space=vmem, size = 0x12000, scoped, tag = 'internal scratch']
  %s0 = inlined_call_operand.vmem [shape: f32[2,12,81], index: 0, kind: input, shape index: {}]
  %s1 = inlined_call_operand.vmem [shape: f32[4,8,12], index: 1, kind: input, shape index: {}]
  %s2 = inlined_call_operand.vmem [shape: f32[8,1], index: 2, kind: input, shape index: {}]
  %s3 = inlined_call_operand.vmem [shape: f32[2,8,71], index: 3, kind: output, shape index: {}]
  %s4 = sld [smem:[#allocation0]]
  $region45: #{model_step.15} parent=0
    _
  %s6 = ssub.s32 1, %s4
  %s7 = scalar_select 0, %s6, %s4
  loop: start=0, step=1, limit=4
  $region2: #{model_step.15} parent=0 // loop_pre_header
    _
  $region3: #{model_step.15} parent=0 // loop_header
    %s9 = sphi 0, %s13
    %p10 = scmp.ge.s32.totalorder %s9, 4
    %s19 = sphi 0, %s21
    %s22 = sphi 0, %s19
    %s23 = sphi 0, %s22
    %s39 = sphi 0, %s23
    %s43 = sphi 0, %s43
    %s45 = sphi 0, %s43
    %s46 = sphi 0, %s45
    %s60 = sphi 0, %s46
    %s64 = sphi 0, %s64
    %s66 = sphi 0, %s64
    %s67 = sphi 0, %s66
    %s81 = sphi 0, %s67
    %s87 = sphi 0, %s89
    %s90 = sphi 0, %s87
    %s91 = sphi 0, %s90
    %s107 = sphi 0, %s91
  $region4: #{model_step.15} parent=0 // loop_header_branch
    %12 = sbr.rel (%p10) target = $region8
  $region5: #{model_step.15} parent=0 // loop_body
    %s14 = ssub.s32 %s9, 1
    %s15 = ssub.s32 %s9, 2
    %s16 = sadd.s32 %s9, 1
    %s17 = ssub.s32 %s9, %s16
    %p18 = scmp.eq.s32.totalorder %s17, 0
    %s20 = sadd.s32 %s19, 1
    %s21 = scalar_select %p18, %s19, %s20
    %p24 = pneg %p18
    %p25 = scmp.eq.s32.totalorder %s9, 1
    %p26 = por %p24, %p25
    %p27 = scmp.ne.s32.totalorder %s19, %s22
    %p28 = scmp.eq.s32.totalorder %s9, 0
    %p29 = por %p27, %p28
    %p30 = scmp.ne.s32.totalorder %s19, %s22
    %p31 = scmp.eq.s32.totalorder %s14, 1
    %p32 = por %p30, %p31
    %p33 = scmp.ne.s32.totalorder %s22, %s23
    %p34 = scmp.eq.s32.totalorder %s14, 0
    %p35 = por %p33, %p34
    %p36 = scmp.ne.s32.totalorder %s22, %s23
    %p37 = scmp.eq.s32.totalorder %s15, 1
    %p38 = por %p36, %p37
    %p40 = scmp.ne.s32.totalorder %s23, %s39
    %p41 = scmp.eq.s32.totalorder %s15, 0
    %p42 = por %p40, %p41
    %s44 = sadd.s32 %s43, 1
    %p47 = scmp.eq.s32.totalorder %s9, 1
    %p48 = scmp.ne.s32.totalorder %s43, %s45
    %p49 = scmp.eq.s32.totalorder %s9, 0
    %p50 = por %p48, %p49
    %p51 = scmp.ne.s32.totalorder %s43, %s45
    %p52 = scmp.eq.s32.totalorder %s14, 1
    %p53 = por %p51, %p52
    %p54 = scmp.ne.s32.totalorder %s45, %s46
    %p55 = scmp.eq.s32.totalorder %s14, 0
    %p56 = por %p54, %p55
    %p57 = scmp.ne.s32.totalorder %s45, %s46
    %p58 = scmp.eq.s32.totalorder %s15, 1
    %p59 = por %p57, %p58
    %p61 = scmp.ne.s32.totalorder %s46, %s60
    %p62 = scmp.eq.s32.totalorder %s15, 0
    %p63 = por %p61, %p62
    %s65 = sadd.s32 %s64, 1
    %p68 = scmp.eq.s32.totalorder %s9, 1
    %p69 = scmp.ne.s32.totalorder %s64, %s66
    %p70 = scmp.eq.s32.totalorder %s9, 0
    %p71 = por %p69, %p70
    %p72 = scmp.ne.s32.totalorder %s64, %s66
    %p73 = scmp.eq.s32.totalorder %s14, 1
    %p74 = por %p72, %p73
    %p75 = scmp.ne.s32.totalorder %s66, %s67
    %p76 = scmp.eq.s32.totalorder %s14, 0
    %p77 = por %p75, %p76
    %p78 = scmp.ne.s32.totalorder %s66, %s67
    %p79 = scmp.eq.s32.totalorder %s15, 1
    %p80 = por %p78, %p79
    %p82 = scmp.ne.s32.totalorder %s67, %s81
    %p83 = scmp.eq.s32.totalorder %s15, 0
    %p84 = por %p82, %p83
    %s85 = ssub.s32 %s9, %s16
    %p86 = scmp.eq.s32.totalorder %s85, 0
    %s88 = sadd.s32 %s87, 1
    %s89 = scalar_select %p86, %s87, %s88
    %p92 = pneg %p86
    %p93 = scmp.eq.s32.totalorder %s9, 1
    %p94 = por %p92, %p93
    %p95 = scmp.ne.s32.totalorder %s87, %s90
    %p96 = scmp.eq.s32.totalorder %s9, 0
    %p97 = por %p95, %p96
    %p98 = scmp.ne.s32.totalorder %s87, %s90
    %p99 = scmp.eq.s32.totalorder %s14, 1
    %p100 = por %p98, %p99
    %p101 = scmp.ne.s32.totalorder %s90, %s91
    %p102 = scmp.eq.s32.totalorder %s14, 0
    %p103 = por %p101, %p102
    %p104 = scmp.ne.s32.totalorder %s90, %s91
    %p105 = scmp.eq.s32.totalorder %s15, 1
    %p106 = por %p104, %p105
    %p108 = scmp.ne.s32.totalorder %s91, %s107
    %p109 = scmp.eq.s32.totalorder %s15, 0
    %p110 = por %p108, %p109
    %p111 = scmp.le.s32.totalorder 1, %s9
    %p112 = scmp.lt.s32.totalorder %s9, 3
    %p113 = pnand %p111, %p112
    %p114 = pneg %p113
    // Predicated region
    $region9: #{model_step.15} parent=5 // pred_check
      _
    $region10: #{model_step.15} parent=5 // pred_check_branch
      %116 = sbr.rel (%p113) target = $region12
    $region11: #{model_step.15} parent=5 // pred_region
      %s117 = ssub.s32 %s9, 1
      // Predicated region
      $region13: #{model_step.15} parent=11 // pred_check
        %p118 = pneg %p56
      $region14: #{model_step.15} parent=11 // pred_check_branch
        %120 = sbr.rel (%p118) target = $region16
      $region15: #{model_step.15} parent=11 // pred_region
        _
      $region16: #{model_step.15} parent=11 // pred_fallthru
        _
      // Predicated region
      $region17: #{model_step.15} parent=11 // pred_check
        %p121 = pneg %p77
      $region18: #{model_step.15} parent=11 // pred_check_branch
        %123 = sbr.rel (%p121) target = $region20
      $region19: #{model_step.15} parent=11 // pred_region
        _
      $region20: #{model_step.15} parent=11 // pred_fallthru
        _
    $region12: #{model_step.15} parent=5 // pred_fallthru
      _
    %p124 = scmp.lt.s32.totalorder %s9, 2
    // Predicated region
    $region21: #{model_step.15} parent=5 // pred_check
      %p125 = pneg %p124
    $region22: #{model_step.15} parent=5 // pred_check_branch
      %127 = sbr.rel (%p125) target = $region24
    $region23: #{model_step.15} parent=5 // pred_region
      // Predicated region
      $region25: #{model_step.15} parent=23 // pred_check
        %p128 = pneg %p29
      $region26: #{model_step.15} parent=23 // pred_check_branch
        %130 = sbr.rel (%p128) target = $region28
      $region27: #{model_step.15} parent=23 // pred_region
        %p131 = scmp.lt.s32.totalorder %s9, 1
        %s132 = scalar_select %p131, %s9, 1
        %s133 = smul.addr %s132, 2
        %s134 = smul.addr %s133, 8
        %s135 = scalar_lea.vmem %s0, %s134
      $region28: #{model_step.15} parent=23 // pred_fallthru
        _
    $region24: #{model_step.15} parent=5 // pred_fallthru
      _
    %p136 = scmp.le.s32.totalorder 1, %s9
    %p137 = scmp.lt.s32.totalorder %s9, 3
    %p138 = pnand %p136, %p137
    %p139 = pneg %p138
    // Predicated region
    $region29: #{model_step.15} parent=5 // pred_check
      _
    $region30: #{model_step.15} parent=5 // pred_check_branch
      %141 = sbr.rel (%p138) target = $region32
    $region31: #{model_step.15} parent=5 // pred_region
      %s142 = ssub.s32 %s9, 1
      %p143 = scmp.lt.s32.totalorder %s14, 1
      %s144 = scalar_select %p143, %s14, 1
      %s145 = smul.addr %s144, 2
      %s146 = smul.addr %s145, 8
      %s147 = scalar_lea.vmem %s0, %s146
      %p148 = pneg %p35
      %p149 = pneg %p32
      %p150 = pneg %p56
      %p151 = pneg %p53
      %p152 = pneg %p77
      %p153 = pneg %p74
      %p154 = pneg %p103
      %p155 = pneg %p100
      %p156 = scmp.lt.s32.totalorder %s14, 1
      %s157 = scalar_select %p156, %s14, 1
      %s158 = smul.addr %s157, 8
      %s159 = scalar_lea.vmem %s3, %s158
      %p160 = scmp.lt.s32.totalorder %s14, 1
      %s161 = scalar_select %p160, %s14, 1
      %s162 = smul.addr %s161, 2
      %s163 = smul.addr %s162, 8
      %s164 = scalar_lea.vmem %s0, %s163
      %p165 = scmp.lt.s32.totalorder %s14, 1
      %s166 = scalar_select %p165, %s14, 1
      %s167 = smul.addr %s166, 8
      %s168 = scalar_lea.vmem %s3, %s167
      %v170 = vld [vmem:[%s164] sm:$0xff]
      %v171 = vld [vmem:[%s164 + $0x8] sm:$0xf]
      %v172 = vpack.c.bf16 %v171, %v170
      %v173 = vld [vmem:[%s1] sm:$0xff]
      %v174 = vpack.c.bf16 %v173, %v173
      %s175 = scalar_lea.vmem %s1, 8
      %v176 = vld [vmem:[%s175] sm:$0xff]
      %v177 = vpack.c.bf16 %v176, %v176
      %179 = vrot.lane.b32.xlu0 %v172, 127
      %v180 = vpop.permute.xlu0 %179
      %vm181 = vcmask 97280
      %v183 = vsel %vm181, %v177, 0
      %vm185 = vcmask 1045504
      %v187 = vsel %vm185, %v180, 0
      %189 = vmatprep.subr.bf16.mxu0 0
      %190 = vmatpush1.bf16.msra.mxu0 %v187
      %191 = vmatprep.subr.bf16.mxu0 0
      %192 = vmatpush1.bf16.msra.mxu0 0
      %193 = vmatprep.subr.bf16.mxu0 0
      %194 = vmatpush1.bf16.msra.mxu0 0
      %195 = vmatprep.subr.bf16.mxu0 0
      %196 = vmatpush1.bf16.msra.mxu0 0
      %197 = vmatprep.subr.bf16.mxu0 0
      %198 = vmatpush1.bf16.msra.mxu0 0
      %199 = vmatprep.subr.bf16.mxu0 0
      %200 = vmatpush1.bf16.msra.mxu0 0
      %201 = vmatprep.subr.bf16.mxu0 0
      %202 = vmatpush1.bf16.msra.mxu0 0
      %203 = vmatprep.subr.bf16.mxu0 0
      %204 = vmatpush1.bf16.msra.mxu0 0
      %205 = vmatprep.subr.bf16.mxu0 0
      %206 = vmatpush1.bf16.msra.mxu0 0
      %207 = vmatprep.subr.bf16.mxu0 0
      %208 = vmatpush1.bf16.msra.mxu0 0
      %209 = vmatprep.subr.bf16.mxu0 0
      %210 = vmatpush1.bf16.msra.mxu0 0
      %211 = vmatprep.subr.bf16.mxu0 0
      %212 = vmatpush1.bf16.msra.mxu0 0
      %213 = vmatprep.subr.bf16.mxu0 0
      %214 = vmatpush1.bf16.msra.mxu0 0
      %215 = vmatprep.subr.bf16.mxu0 0
      %216 = vmatpush1.bf16.msra.mxu0 0
      %217 = vmatprep.subr.bf16.mxu0 0
      %218 = vmatpush1.bf16.msra.mxu0 0
      %219 = vmatprep.subr.bf16.mxu0 0
      %220 = vmatpush1.bf16.msra.mxu0 0
      %221 = vmatprep.mubr.bf16.mxu0 0
      %222 = vmatmul.mubr.bf16.gmra.mrb[0].mxu0 %v183
      %v223 = vpop.f32.mrb[0].mxu0
      %v224 = vadd.f32 0.0, %v223
      %v225 = vpop.f32.mrb[0].mxu0
      %v226 = vpop.f32.mrb[0].mxu0
      %v227 = vpop.f32.mrb[0].mxu0
      %228 = vdwg.mxu0
      %v230 = vsel %vm181, %v174, 0
      %v233 = vsel %vm185, %v172, 0
      %235 = vmatprep.subr.bf16.mxu0 0
      %236 = vmatpush1.bf16.msra.mxu0 %v233
      %237 = vmatprep.subr.bf16.mxu0 0
      %238 = vmatpush1.bf16.msra.mxu0 0
      %239 = vmatprep.subr.bf16.mxu0 0
      %240 = vmatpush1.bf16.msra.mxu0 0
      %241 = vmatprep.subr.bf16.mxu0 0
      %242 = vmatpush1.bf16.msra.mxu0 0
      %243 = vmatprep.subr.bf16.mxu0 0
      %244 = vmatpush1.bf16.msra.mxu0 0
      %245 = vmatprep.subr.bf16.mxu0 0
      %246 = vmatpush1.bf16.msra.mxu0 0
      %247 = vmatprep.subr.bf16.mxu0 0
      %248 = vmatpush1.bf16.msra.mxu0 0
      %249 = vmatprep.subr.bf16.mxu0 0
      %250 = vmatpush1.bf16.msra.mxu0 0
      %251 = vmatprep.subr.bf16.mxu0 0
      %252 = vmatpush1.bf16.msra.mxu0 0
      %253 = vmatprep.subr.bf16.mxu0 0
      %254 = vmatpush1.bf16.msra.mxu0 0
      %255 = vmatprep.subr.bf16.mxu0 0
      %256 = vmatpush1.bf16.msra.mxu0 0
      %257 = vmatprep.subr.bf16.mxu0 0
      %258 = vmatpush1.bf16.msra.mxu0 0
      %259 = vmatprep.subr.bf16.mxu0 0
      %260 = vmatpush1.bf16.msra.mxu0 0
      %261 = vmatprep.subr.bf16.mxu0 0
      %262 = vmatpush1.bf16.msra.mxu0 0
      %263 = vmatprep.subr.bf16.mxu0 0
      %264 = vmatpush1.bf16.msra.mxu0 0
      %265 = vmatprep.subr.bf16.mxu0 0
      %266 = vmatpush1.bf16.msra.mxu0 0
      %267 = vmatprep.mubr.bf16.mxu0 0
      %268 = vmatmul.mubr.bf16.gmra.mrb[0].mxu0 %v230
      %v269 = vpop.f32.mrb[0].mxu0
      %v270 = vadd.f32 %v224, %v269
      %v271 = vpop.f32.mrb[0].mxu0
      %v272 = vpop.f32.mrb[0].mxu0
      %v273 = vpop.f32.mrb[0].mxu0
      %274 = vdwg.mxu0
      %s275 = scalar_lea.vmem %s1, 16
      %v276 = vld [vmem:[%s275] sm:$0xff]
      %v277 = vpack.c.bf16 %v276, %v276
      %278 = vrot.lane.b32.xlu0 %v172, 119
      %v279 = vpop.permute.xlu0 %278
      %v281 = vsel %vm181, %v277, 0
      %v284 = vsel %vm185, %v279, 0
      %286 = vmatprep.subr.bf16.mxu0 0
      %287 = vmatpush1.bf16.msra.mxu0 %v284
      %288 = vmatprep.subr.bf16.mxu0 0
      %289 = vmatpush1.bf16.msra.mxu0 0
      %290 = vmatprep.subr.bf16.mxu0 0
      %291 = vmatpush1.bf16.msra.mxu0 0
      %292 = vmatprep.subr.bf16.mxu0 0
      %293 = vmatpush1.bf16.msra.mxu0 0
      %294 = vmatprep.subr.bf16.mxu0 0
      %295 = vmatpush1.bf16.msra.mxu0 0
      %296 = vmatprep.subr.bf16.mxu0 0
      %297 = vmatpush1.bf16.msra.mxu0 0
      %298 = vmatprep.subr.bf16.mxu0 0
      %299 = vmatpush1.bf16.msra.mxu0 0
      %300 = vmatprep.subr.bf16.mxu0 0
      %301 = vmatpush1.bf16.msra.mxu0 0
      %302 = vmatprep.subr.bf16.mxu0 0
      %303 = vmatpush1.bf16.msra.mxu0 0
      %304 = vmatprep.subr.bf16.mxu0 0
      %305 = vmatpush1.bf16.msra.mxu0 0
      %306 = vmatprep.subr.bf16.mxu0 0
      %307 = vmatpush1.bf16.msra.mxu0 0
      %308 = vmatprep.subr.bf16.mxu0 0
      %309 = vmatpush1.bf16.msra.mxu0 0
      %310 = vmatprep.subr.bf16.mxu0 0
      %311 = vmatpush1.bf16.msra.mxu0 0
      %312 = vmatprep.subr.bf16.mxu0 0
      %313 = vmatpush1.bf16.msra.mxu0 0
      %314 = vmatprep.subr.bf16.mxu0 0
      %315 = vmatpush1.bf16.msra.mxu0 0
      %316 = vmatprep.subr.bf16.mxu0 0
      %317 = vmatpush1.bf16.msra.mxu0 0
      %318 = vmatprep.mubr.bf16.mxu0 0
      %319 = vmatmul.mubr.bf16.gmra.mrb[0].mxu0 %v281
      %v320 = vpop.f32.mrb[0].mxu0
      %v321 = vadd.f32 0.0, %v320
      %v322 = vpop.f32.mrb[0].mxu0
      %v323 = vpop.f32.mrb[0].mxu0
      %v324 = vpop.f32.mrb[0].mxu0
      %325 = vdwg.mxu0
      %v326 = vadd.f32 %v270, %v321
      %s327 = scalar_lea.vmem %s1, 24
      %v328 = vld [vmem:[%s327] sm:$0xff]
      %v329 = vpack.c.bf16 %v328, %v328
      %330 = vrot.lane.b32.xlu0 %v172, 118
      %v331 = vpop.permute.xlu0 %330
      %v333 = vsel %vm181, %v329, 0
      %v336 = vsel %vm185, %v331, 0
      %338 = vmatprep.subr.bf16.mxu0 0
      %339 = vmatpush1.bf16.msra.mxu0 %v336
      %340 = vmatprep.subr.bf16.mxu0 0
      %341 = vmatpush1.bf16.msra.mxu0 0
      %342 = vmatprep.subr.bf16.mxu0 0
      %343 = vmatpush1.bf16.msra.mxu0 0
      %344 = vmatprep.subr.bf16.mxu0 0
      %345 = vmatpush1.bf16.msra.mxu0 0
      %346 = vmatprep.subr.bf16.mxu0 0
      %347 = vmatpush1.bf16.msra.mxu0 0
      %348 = vmatprep.subr.bf16.mxu0 0
      %349 = vmatpush1.bf16.msra.mxu0 0
      %350 = vmatprep.subr.bf16.mxu0 0
      %351 = vmatpush1.bf16.msra.mxu0 0
      %352 = vmatprep.subr.bf16.mxu0 0
      %353 = vmatpush1.bf16.msra.mxu0 0
      %354 = vmatprep.subr.bf16.mxu0 0
      %355 = vmatpush1.bf16.msra.mxu0 0
      %356 = vmatprep.subr.bf16.mxu0 0
      %357 = vmatpush1.bf16.msra.mxu0 0
      %358 = vmatprep.subr.bf16.mxu0 0
      %359 = vmatpush1.bf16.msra.mxu0 0
      %360 = vmatprep.subr.bf16.mxu0 0
      %361 = vmatpush1.bf16.msra.mxu0 0
      %362 = vmatprep.subr.bf16.mxu0 0
      %363 = vmatpush1.bf16.msra.mxu0 0
      %364 = vmatprep.subr.bf16.mxu0 0
      %365 = vmatpush1.bf16.msra.mxu0 0
      %366 = vmatprep.subr.bf16.mxu0 0
      %367 = vmatpush1.bf16.msra.mxu0 0
      %368 = vmatprep.subr.bf16.mxu0 0
      %369 = vmatpush1.bf16.msra.mxu0 0
      %370 = vmatprep.mubr.bf16.mxu0 0
      %371 = vmatmul.mubr.bf16.gmra.mrb[0].mxu0 %v333
      %v372 = vpop.f32.mrb[0].mxu0
      %v373 = vadd.f32 0.0, %v372
      %v374 = vpop.f32.mrb[0].mxu0
      %v375 = vpop.f32.mrb[0].mxu0
      %v376 = vpop.f32.mrb[0].mxu0
      %377 = vdwg.mxu0
      %v378 = vadd.f32 %v326, %v373
      %v379 = vld [vmem:[%s2] sm:$0xff]
      %381 = vset.pattern.permute.xlu0 0
      %382 = vperm.xlu0 %381, %v379
      %v383 = vpop.permute.xlu0 %382
      %v385 = vadd.f32 %v378, %v383
      %v386 = vmax.f32 %v385, 0.0
      %vm387 = vcmask 580608
      %388 = vst.msk [vmem:[%s168] sm:$0xff] %vm387, %v386
      %p389 = scmp.lt.s32.totalorder %s14, 1
      %s390 = scalar_select %p389, %s14, 1
      %s391 = smul.addr %s390, 8
      %s392 = scalar_lea.vmem %s3, %s391
      // Predicated region
      $region33: #{model_step.15} parent=31 // pred_check
        %p393 = pneg %p100
      $region34: #{model_step.15} parent=31 // pred_check_branch
        %395 = sbr.rel (%p393) target = $region36
      $region35: #{model_step.15} parent=31 // pred_region
        _
      $region36: #{model_step.15} parent=31 // pred_fallthru
        _
    $region32: #{model_step.15} parent=5 // pred_fallthru
      _
    %p396 = scmp.le.s32.totalorder 2, %s9
    // Predicated region
    $region37: #{model_step.15} parent=5 // pred_check
      %p397 = pneg %p396
    $region38: #{model_step.15} parent=5 // pred_check_branch
      %399 = sbr.rel (%p397) target = $region40
    $region39: #{model_step.15} parent=5 // pred_region
      %s400 = ssub.s32 %s9, 2
      // Predicated region
      $region41: #{model_step.15} parent=39 // pred_check
        %p401 = pneg %p106
      $region42: #{model_step.15} parent=39 // pred_check_branch
        %403 = sbr.rel (%p401) target = $region44
      $region43: #{model_step.15} parent=39 // pred_region
        %p404 = scmp.lt.s32.totalorder %s15, 1
        %s405 = scalar_select %p404, %s15, 1
        %s406 = smul.addr %s405, 8
        %s407 = scalar_lea.vmem %s3, %s406
      $region44: #{model_step.15} parent=39 // pred_fallthru
        _
    $region40: #{model_step.15} parent=5 // pred_fallthru
      _
  $region6: #{model_step.15} parent=0 // loop_footer
    %s13 = sadd.s32 1, %s9
  $region7: #{model_step.15} parent=0 // loop_footer_branch
    %8 = sbr.rel target = $region3
  $region8: #{model_step.15} parent=0 // loop_exit
    _

// kernel: model_step.16
$region0: #{model_step.16}
  #allocation0 [shape = 'u32[]', space=smem, size = 0x4, offset = 0x4, fixed_abs, tag = 'smem constant byte address 0x4 - core index']
  #allocation1 [shape = 'u32[144,128]{1,0:T(1,128)}', space=vmem, size = 0x12000, scoped, tag = 'internal scratch']
  %s0 = inlined_call_operand.vmem [shape: f32[2,32,25], index: 0, kind: input, shape index: {}]
  %s1 = inlined_call_operand.vmem [shape: f32[4,16,32], index: 1, kind: input, shape index: {}]
  %s2 = inlined_call_operand.vmem [shape: f32[16,1], index: 2, kind: input, shape index: {}]
  %s3 = inlined_call_operand.vmem [shape: f32[2,16,19], index: 3, kind: output, shape index: {}]
  %s4 = sld [smem:[#allocation0]]
  $region45: #{model_step.16} parent=0
    _
  %s6 = ssub.s32 1, %s4
  %s7 = scalar_select 0, %s6, %s4
  loop: start=0, step=1, limit=4
  $region2: #{model_step.16} parent=0 // loop_pre_header
    _
  $region3: #{model_step.16} parent=0 // loop_header
    %s9 = sphi 0, %s13
    %p10 = scmp.ge.s32.totalorder %s9, 4
    %s19 = sphi 0, %s21
    %s22 = sphi 0, %s19
    %s23 = sphi 0, %s22
    %s39 = sphi 0, %s23
    %s43 = sphi 0, %s43
    %s45 = sphi 0, %s43
    %s46 = sphi 0, %s45
    %s60 = sphi 0, %s46
    %s64 = sphi 0, %s64
    %s66 = sphi 0, %s64
    %s67 = sphi 0, %s66
    %s81 = sphi 0, %s67
    %s87 = sphi 0, %s89
    %s90 = sphi 0, %s87
    %s91 = sphi 0, %s90
    %s107 = sphi 0, %s91
  $region4: #{model_step.16} parent=0 // loop_header_branch
    %12 = sbr.rel (%p10) target = $region8
  $region5: #{model_step.16} parent=0 // loop_body
    %s14 = ssub.s32 %s9, 1
    %s15 = ssub.s32 %s9, 2
    %s16 = sadd.s32 %s9, 1
    %s17 = ssub.s32 %s9, %s16
    %p18 = scmp.eq.s32.totalorder %s17, 0
    %s20 = sadd.s32 %s19, 1
    %s21 = scalar_select %p18, %s19, %s20
    %p24 = pneg %p18
    %p25 = scmp.eq.s32.totalorder %s9, 1
    %p26 = por %p24, %p25
    %p27 = scmp.ne.s32.totalorder %s19, %s22
    %p28 = scmp.eq.s32.totalorder %s9, 0
    %p29 = por %p27, %p28
    %p30 = scmp.ne.s32.totalorder %s19, %s22
    %p31 = scmp.eq.s32.totalorder %s14, 1
    %p32 = por %p30, %p31
    %p33 = scmp.ne.s32.totalorder %s22, %s23
    %p34 = scmp.eq.s32.totalorder %s14, 0
    %p35 = por %p33, %p34
    %p36 = scmp.ne.s32.totalorder %s22, %s23
    %p37 = scmp.eq.s32.totalorder %s15, 1
    %p38 = por %p36, %p37
    %p40 = scmp.ne.s32.totalorder %s23, %s39
    %p41 = scmp.eq.s32.totalorder %s15, 0
    %p42 = por %p40, %p41
    %s44 = sadd.s32 %s43, 1
    %p47 = scmp.eq.s32.totalorder %s9, 1
    %p48 = scmp.ne.s32.totalorder %s43, %s45
    %p49 = scmp.eq.s32.totalorder %s9, 0
    %p50 = por %p48, %p49
    %p51 = scmp.ne.s32.totalorder %s43, %s45
    %p52 = scmp.eq.s32.totalorder %s14, 1
    %p53 = por %p51, %p52
    %p54 = scmp.ne.s32.totalorder %s45, %s46
    %p55 = scmp.eq.s32.totalorder %s14, 0
    %p56 = por %p54, %p55
    %p57 = scmp.ne.s32.totalorder %s45, %s46
    %p58 = scmp.eq.s32.totalorder %s15, 1
    %p59 = por %p57, %p58
    %p61 = scmp.ne.s32.totalorder %s46, %s60
    %p62 = scmp.eq.s32.totalorder %s15, 0
    %p63 = por %p61, %p62
    %s65 = sadd.s32 %s64, 1
    %p68 = scmp.eq.s32.totalorder %s9, 1
    %p69 = scmp.ne.s32.totalorder %s64, %s66
    %p70 = scmp.eq.s32.totalorder %s9, 0
    %p71 = por %p69, %p70
    %p72 = scmp.ne.s32.totalorder %s64, %s66
    %p73 = scmp.eq.s32.totalorder %s14, 1
    %p74 = por %p72, %p73
    %p75 = scmp.ne.s32.totalorder %s66, %s67
    %p76 = scmp.eq.s32.totalorder %s14, 0
    %p77 = por %p75, %p76
    %p78 = scmp.ne.s32.totalorder %s66, %s67
    %p79 = scmp.eq.s32.totalorder %s15, 1
    %p80 = por %p78, %p79
    %p82 = scmp.ne.s32.totalorder %s67, %s81
    %p83 = scmp.eq.s32.totalorder %s15, 0
    %p84 = por %p82, %p83
    %s85 = ssub.s32 %s9, %s16
    %p86 = scmp.eq.s32.totalorder %s85, 0
    %s88 = sadd.s32 %s87, 1
    %s89 = scalar_select %p86, %s87, %s88
    %p92 = pneg %p86
    %p93 = scmp.eq.s32.totalorder %s9, 1
    %p94 = por %p92, %p93
    %p95 = scmp.ne.s32.totalorder %s87, %s90
    %p96 = scmp.eq.s32.totalorder %s9, 0
    %p97 = por %p95, %p96
    %p98 = scmp.ne.s32.totalorder %s87, %s90
    %p99 = scmp.eq.s32.totalorder %s14, 1
    %p100 = por %p98, %p99
    %p101 = scmp.ne.s32.totalorder %s90, %s91
    %p102 = scmp.eq.s32.totalorder %s14, 0
    %p103 = por %p101, %p102
    %p104 = scmp.ne.s32.totalorder %s90, %s91
    %p105 = scmp.eq.s32.totalorder %s15, 1
    %p106 = por %p104, %p105
    %p108 = scmp.ne.s32.totalorder %s91, %s107
    %p109 = scmp.eq.s32.totalorder %s15, 0
    %p110 = por %p108, %p109
    %p111 = scmp.le.s32.totalorder 1, %s9
    %p112 = scmp.lt.s32.totalorder %s9, 3
    %p113 = pnand %p111, %p112
    %p114 = pneg %p113
    // Predicated region
    $region9: #{model_step.16} parent=5 // pred_check
      _
    $region10: #{model_step.16} parent=5 // pred_check_branch
      %116 = sbr.rel (%p113) target = $region12
    $region11: #{model_step.16} parent=5 // pred_region
      %s117 = ssub.s32 %s9, 1
      // Predicated region
      $region13: #{model_step.16} parent=11 // pred_check
        %p118 = pneg %p56
      $region14: #{model_step.16} parent=11 // pred_check_branch
        %120 = sbr.rel (%p118) target = $region16
      $region15: #{model_step.16} parent=11 // pred_region
        _
      $region16: #{model_step.16} parent=11 // pred_fallthru
        _
      // Predicated region
      $region17: #{model_step.16} parent=11 // pred_check
        %p121 = pneg %p77
      $region18: #{model_step.16} parent=11 // pred_check_branch
        %123 = sbr.rel (%p121) target = $region20
      $region19: #{model_step.16} parent=11 // pred_region
        _
      $region20: #{model_step.16} parent=11 // pred_fallthru
        _
    $region12: #{model_step.16} parent=5 // pred_fallthru
      _
    %p124 = scmp.lt.s32.totalorder %s9, 2
    // Predicated region
    $region21: #{model_step.16} parent=5 // pred_check
      %p125 = pneg %p124
    $region22: #{model_step.16} parent=5 // pred_check_branch
      %127 = sbr.rel (%p125) target = $region24
    $region23: #{model_step.16} parent=5 // pred_region
      // Predicated region
      $region25: #{model_step.16} parent=23 // pred_check
        %p128 = pneg %p29
      $region26: #{model_step.16} parent=23 // pred_check_branch
        %130 = sbr.rel (%p128) target = $region28
      $region27: #{model_step.16} parent=23 // pred_region
        %p131 = scmp.lt.s32.totalorder %s9, 1
        %s132 = scalar_select %p131, %s9, 1
        %s133 = smul.addr %s132, 4
        %s134 = smul.addr %s133, 8
        %s135 = scalar_lea.vmem %s0, %s134
      $region28: #{model_step.16} parent=23 // pred_fallthru
        _
    $region24: #{model_step.16} parent=5 // pred_fallthru
      _
    %p136 = scmp.le.s32.totalorder 1, %s9
    %p137 = scmp.lt.s32.totalorder %s9, 3
    %p138 = pnand %p136, %p137
    %p139 = pneg %p138
    // Predicated region
    $region29: #{model_step.16} parent=5 // pred_check
      _
    $region30: #{model_step.16} parent=5 // pred_check_branch
      %141 = sbr.rel (%p138) target = $region32
    $region31: #{model_step.16} parent=5 // pred_region
      %s142 = ssub.s32 %s9, 1
      %p143 = scmp.lt.s32.totalorder %s14, 1
      %s144 = scalar_select %p143, %s14, 1
      %s145 = smul.addr %s144, 4
      %s146 = smul.addr %s145, 8
      %s147 = scalar_lea.vmem %s0, %s146
      %p148 = pneg %p35
      %p149 = pneg %p32
      %p150 = pneg %p56
      %p151 = pneg %p53
      %p152 = pneg %p77
      %p153 = pneg %p74
      %p154 = pneg %p103
      %p155 = pneg %p100
      %p156 = scmp.lt.s32.totalorder %s14, 1
      %s157 = scalar_select %p156, %s14, 1
      %s158 = smul.addr %s157, 2
      %s159 = smul.addr %s158, 8
      %s160 = scalar_lea.vmem %s3, %s159
      %p161 = scmp.lt.s32.totalorder %s14, 1
      %s162 = scalar_select %p161, %s14, 1
      %s163 = smul.addr %s162, 4
      %s164 = smul.addr %s163, 8
      %s165 = scalar_lea.vmem %s0, %s164
      %p166 = scmp.lt.s32.totalorder %s14, 1
      %s167 = scalar_select %p166, %s14, 1
      %s168 = smul.addr %s167, 2
      %s169 = smul.addr %s168, 8
      %s170 = scalar_lea.vmem %s3, %s169
      %v172 = vld [vmem:[%s165] sm:$0xff]
      %v173 = vld [vmem:[%s165 + $0x8] sm:$0xff]
      %v174 = vld [vmem:[%s165 + $0x10] sm:$0xff]
      %v175 = vld [vmem:[%s165 + $0x18] sm:$0xff]
      %v176 = vpack.c.bf16 %v173, %v172
      %v177 = vpack.c.bf16 %v175, %v174
      %v178 = vld [vmem:[%s1] sm:$0xff]
      %v179 = vld [vmem:[%s1 + $0x8] sm:$0xff]
      %v180 = vpack.c.bf16 %v179, %v178
      %s181 = scalar_lea.vmem %s1, 16
      %v182 = vld [vmem:[%s181] sm:$0xff]
      %v183 = vld [vmem:[%s181 + $0x8] sm:$0xff]
      %v184 = vpack.c.bf16 %v183, %v182
      %187 = vrot.lane.b32.xlu0 %v176, 127
      %v188 = vpop.permute.xlu0 %187
      %189 = vrot.lane.b32.xlu0 %v177, 127
      %v190 = vpop.permute.xlu0 %189
      %vm193 = vcmask 261120
      %v195 = vsel %vm193, %v184, 0
      %197 = vmatprep.subr.bf16.mxu0 0
      %198 = vmatpush1.bf16.msra.mxu0 %v188
      %199 = vmatprep.subr.bf16.mxu0 0
      %200 = vmatpush1.bf16.msra.mxu0 %v190
      %201 = vmatprep.subr.bf16.mxu0 0
      %202 = vmatpush1.bf16.msra.mxu0 0
      %203 = vmatprep.subr.bf16.mxu0 0
      %204 = vmatpush1.bf16.msra.mxu0 0
      %205 = vmatprep.subr.bf16.mxu0 0
      %206 = vmatpush1.bf16.msra.mxu0 0
      %207 = vmatprep.subr.bf16.mxu0 0
      %208 = vmatpush1.bf16.msra.mxu0 0
      %209 = vmatprep.subr.bf16.mxu0 0
      %210 = vmatpush1.bf16.msra.mxu0 0
      %211 = vmatprep.subr.bf16.mxu0 0
      %212 = vmatpush1.bf16.msra.mxu0 0
      %213 = vmatprep.subr.bf16.mxu0 0
      %214 = vmatpush1.bf16.msra.mxu0 0
      %215 = vmatprep.subr.bf16.mxu0 0
      %216 = vmatpush1.bf16.msra.mxu0 0
      %217 = vmatprep.subr.bf16.mxu0 0
      %218 = vmatpush1.bf16.msra.mxu0 0
      %219 = vmatprep.subr.bf16.mxu0 0
      %220 = vmatpush1.bf16.msra.mxu0 0
      %221 = vmatprep.subr.bf16.mxu0 0
      %222 = vmatpush1.bf16.msra.mxu0 0
      %223 = vmatprep.subr.bf16.mxu0 0
      %224 = vmatpush1.bf16.msra.mxu0 0
      %225 = vmatprep.subr.bf16.mxu0 0
      %226 = vmatpush1.bf16.msra.mxu0 0
      %227 = vmatprep.subr.bf16.mxu0 0
      %228 = vmatpush1.bf16.msra.mxu0 0
      %229 = vmatprep.mubr.bf16.mxu0 0
      %230 = vmatmul.mubr.bf16.gmra.mrb[0].mxu0 %v195
      %v231 = vpop.f32.mrb[0].mxu0
      %v232 = vadd.f32 0.0, %v231
      %v233 = vpop.f32.mrb[0].mxu0
      %v234 = vpop.f32.mrb[0].mxu0
      %v235 = vadd.f32 0.0, %v234
      %v236 = vpop.f32.mrb[0].mxu0
      %237 = vdwg.mxu0
      %v239 = vsel %vm193, %v180, 0
      %241 = vmatprep.subr.bf16.mxu0 0
      %242 = vmatpush1.bf16.msra.mxu0 %v176
      %243 = vmatprep.subr.bf16.mxu0 0
      %244 = vmatpush1.bf16.msra.mxu0 %v177
      %245 = vmatprep.subr.bf16.mxu0 0
      %246 = vmatpush1.bf16.msra.mxu0 0
      %247 = vmatprep.subr.bf16.mxu0 0
      %248 = vmatpush1.bf16.msra.mxu0 0
      %249 = vmatprep.subr.bf16.mxu0 0
      %250 = vmatpush1.bf16.msra.mxu0 0
      %251 = vmatprep.subr.bf16.mxu0 0
      %252 = vmatpush1.bf16.msra.mxu0 0
      %253 = vmatprep.subr.bf16.mxu0 0
      %254 = vmatpush1.bf16.msra.mxu0 0
      %255 = vmatprep.subr.bf16.mxu0 0
      %256 = vmatpush1.bf16.msra.mxu0 0
      %257 = vmatprep.subr.bf16.mxu0 0
      %258 = vmatpush1.bf16.msra.mxu0 0
      %259 = vmatprep.subr.bf16.mxu0 0
      %260 = vmatpush1.bf16.msra.mxu0 0
      %261 = vmatprep.subr.bf16.mxu0 0
      %262 = vmatpush1.bf16.msra.mxu0 0
      %263 = vmatprep.subr.bf16.mxu0 0
      %264 = vmatpush1.bf16.msra.mxu0 0
      %265 = vmatprep.subr.bf16.mxu0 0
      %266 = vmatpush1.bf16.msra.mxu0 0
      %267 = vmatprep.subr.bf16.mxu0 0
      %268 = vmatpush1.bf16.msra.mxu0 0
      %269 = vmatprep.subr.bf16.mxu0 0
      %270 = vmatpush1.bf16.msra.mxu0 0
      %271 = vmatprep.subr.bf16.mxu0 0
      %272 = vmatpush1.bf16.msra.mxu0 0
      %273 = vmatprep.mubr.bf16.mxu0 0
      %274 = vmatmul.mubr.bf16.gmra.mrb[0].mxu0 %v239
      %v275 = vpop.f32.mrb[0].mxu0
      %v276 = vadd.f32 %v232, %v275
      %v277 = vpop.f32.mrb[0].mxu0
      %v278 = vpop.f32.mrb[0].mxu0
      %v279 = vadd.f32 %v235, %v278
      %v280 = vpop.f32.mrb[0].mxu0
      %281 = vdwg.mxu0
      %s282 = scalar_lea.vmem %s1, 32
      %v283 = vld [vmem:[%s282] sm:$0xff]
      %v284 = vld [vmem:[%s282 + $0x8] sm:$0xff]
      %v285 = vpack.c.bf16 %v284, %v283
      %286 = vrot.lane.b32.xlu0 %v176, 123
      %v287 = vpop.permute.xlu0 %286
      %288 = vrot.lane.b32.xlu0 %v177, 123
      %v289 = vpop.permute.xlu0 %288
      %v293 = vsel %vm193, %v285, 0
      %295 = vmatprep.subr.bf16.mxu0 0
      %296 = vmatpush1.bf16.msra.mxu0 %v287
      %297 = vmatprep.subr.bf16.mxu0 0
      %298 = vmatpush1.bf16.msra.mxu0 %v289
      %299 = vmatprep.subr.bf16.mxu0 0
      %300 = vmatpush1.bf16.msra.mxu0 0
      %301 = vmatprep.subr.bf16.mxu0 0
      %302 = vmatpush1.bf16.msra.mxu0 0
      %303 = vmatprep.subr.bf16.mxu0 0
      %304 = vmatpush1.bf16.msra.mxu0 0
      %305 = vmatprep.subr.bf16.mxu0 0
      %306 = vmatpush1.bf16.msra.mxu0 0
      %307 = vmatprep.subr.bf16.mxu0 0
      %308 = vmatpush1.bf16.msra.mxu0 0
      %309 = vmatprep.subr.bf16.mxu0 0
      %310 = vmatpush1.bf16.msra.mxu0 0
      %311 = vmatprep.subr.bf16.mxu0 0
      %312 = vmatpush1.bf16.msra.mxu0 0
      %313 = vmatprep.subr.bf16.mxu0 0
      %314 = vmatpush1.bf16.msra.mxu0 0
      %315 = vmatprep.subr.bf16.mxu0 0
      %316 = vmatpush1.bf16.msra.mxu0 0
      %317 = vmatprep.subr.bf16.mxu0 0
      %318 = vmatpush1.bf16.msra.mxu0 0
      %319 = vmatprep.subr.bf16.mxu0 0
      %320 = vmatpush1.bf16.msra.mxu0 0
      %321 = vmatprep.subr.bf16.mxu0 0
      %322 = vmatpush1.bf16.msra.mxu0 0
      %323 = vmatprep.subr.bf16.mxu0 0
      %324 = vmatpush1.bf16.msra.mxu0 0
      %325 = vmatprep.subr.bf16.mxu0 0
      %326 = vmatpush1.bf16.msra.mxu0 0
      %327 = vmatprep.mubr.bf16.mxu0 0
      %328 = vmatmul.mubr.bf16.gmra.mrb[0].mxu0 %v293
      %v329 = vpop.f32.mrb[0].mxu0
      %v330 = vadd.f32 0.0, %v329
      %v331 = vpop.f32.mrb[0].mxu0
      %v332 = vpop.f32.mrb[0].mxu0
      %v333 = vadd.f32 0.0, %v332
      %v334 = vpop.f32.mrb[0].mxu0
      %335 = vdwg.mxu0
      %v336 = vadd.f32 %v276, %v330
      %v337 = vadd.f32 %v279, %v333
      %s338 = scalar_lea.vmem %s1, 48
      %v339 = vld [vmem:[%s338] sm:$0xff]
      %v340 = vld [vmem:[%s338 + $0x8] sm:$0xff]
      %v341 = vpack.c.bf16 %v340, %v339
      %342 = vrot.lane.b32.xlu0 %v176, 122
      %v343 = vpop.permute.xlu0 %342
      %344 = vrot.lane.b32.xlu0 %v177, 122
      %v345 = vpop.permute.xlu0 %344
      %v349 = vsel %vm193, %v341, 0
      %351 = vmatprep.subr.bf16.mxu0 0
      %352 = vmatpush1.bf16.msra.mxu0 %v343
      %353 = vmatprep.subr.bf16.mxu0 0
      %354 = vmatpush1.bf16.msra.mxu0 %v345
      %355 = vmatprep.subr.bf16.mxu0 0
      %356 = vmatpush1.bf16.msra.mxu0 0
      %357 = vmatprep.subr.bf16.mxu0 0
      %358 = vmatpush1.bf16.msra.mxu0 0
      %359 = vmatprep.subr.bf16.mxu0 0
      %360 = vmatpush1.bf16.msra.mxu0 0
      %361 = vmatprep.subr.bf16.mxu0 0
      %362 = vmatpush1.bf16.msra.mxu0 0
      %363 = vmatprep.subr.bf16.mxu0 0
      %364 = vmatpush1.bf16.msra.mxu0 0
      %365 = vmatprep.subr.bf16.mxu0 0
      %366 = vmatpush1.bf16.msra.mxu0 0
      %367 = vmatprep.subr.bf16.mxu0 0
      %368 = vmatpush1.bf16.msra.mxu0 0
      %369 = vmatprep.subr.bf16.mxu0 0
      %370 = vmatpush1.bf16.msra.mxu0 0
      %371 = vmatprep.subr.bf16.mxu0 0
      %372 = vmatpush1.bf16.msra.mxu0 0
      %373 = vmatprep.subr.bf16.mxu0 0
      %374 = vmatpush1.bf16.msra.mxu0 0
      %375 = vmatprep.subr.bf16.mxu0 0
      %376 = vmatpush1.bf16.msra.mxu0 0
      %377 = vmatprep.subr.bf16.mxu0 0
      %378 = vmatpush1.bf16.msra.mxu0 0
      %379 = vmatprep.subr.bf16.mxu0 0
      %380 = vmatpush1.bf16.msra.mxu0 0
      %381 = vmatprep.subr.bf16.mxu0 0
      %382 = vmatpush1.bf16.msra.mxu0 0
      %383 = vmatprep.mubr.bf16.mxu0 0
      %384 = vmatmul.mubr.bf16.gmra.mrb[0].mxu0 %v349
      %v385 = vpop.f32.mrb[0].mxu0
      %v386 = vadd.f32 0.0, %v385
      %v387 = vpop.f32.mrb[0].mxu0
      %v388 = vpop.f32.mrb[0].mxu0
      %v389 = vadd.f32 0.0, %v388
      %v390 = vpop.f32.mrb[0].mxu0
      %391 = vdwg.mxu0
      %v392 = vadd.f32 %v336, %v386
      %v393 = vadd.f32 %v337, %v389
      %v394 = vld [vmem:[%s2] sm:$0xff]
      %v395 = vld [vmem:[%s2 + $0x8] sm:$0xff]
      %397 = vset.pattern.permute.xlu0 0
      %398 = vperm.xlu0 %397, %v394
      %v399 = vpop.permute.xlu0 %398
      %402 = vset.pattern.permute.xlu0 0
      %403 = vperm.xlu0 %402, %v395
      %v404 = vpop.permute.xlu0 %403
      %v406 = vadd.f32 %v392, %v399
      %v407 = vadd.f32 %v393, %v404
      %v408 = vmax.f32 %v406, 0.0
      %v409 = vmax.f32 %v407, 0.0
      %vm410 = vcmask 154624
      %411 = vst.msk [vmem:[%s170] sm:$0xff] %vm410, %v408
      %412 = vst.msk [vmem:[%s170 + $0x8] sm:$0xff] %vm410, %v409
      %p413 = scmp.lt.s32.totalorder %s14, 1
      %s414 = scalar_select %p413, %s14, 1
      %s415 = smul.addr %s414, 2
      %s416 = smul.addr %s415, 8
      %s417 = scalar_lea.vmem %s3, %s416
      // Predicated region
      $region33: #{model_step.16} parent=31 // pred_check
        %p418 = pneg %p100
      $region34: #{model_step.16} parent=31 // pred_check_branch
        %420 = sbr.rel (%p418) target = $region36
      $region35: #{model_step.16} parent=31 // pred_region
        _
      $region36: #{model_step.16} parent=31 // pred_fallthru
        _
    $region32: #{model_step.16} parent=5 // pred_fallthru
      _
    %p421 = scmp.le.s32.totalorder 2, %s9
    // Predicated region
    $region37: #{model_step.16} parent=5 // pred_check
      %p422 = pneg %p421
    $region38: #{model_step.16} parent=5 // pred_check_branch
      %424 = sbr.rel (%p422) target = $region40
    $region39: #{model_step.16} parent=5 // pred_region
      %s425 = ssub.s32 %s9, 2
      // Predicated region
      $region41: #{model_step.16} parent=39 // pred_check
        %p426 = pneg %p106
      $region42: #{model_step.16} parent=39 // pred_check_branch
        %428 = sbr.rel (%p426) target = $region44
      $region43: #{model_step.16} parent=39 // pred_region
        %p429 = scmp.lt.s32.totalorder %s15, 1
        %s430 = scalar_select %p429, %s15, 1
        %s431 = smul.addr %s430, 2
        %s432 = smul.addr %s431, 8
        %s433 = scalar_lea.vmem %s3, %s432
      $region44: #{model_step.16} parent=39 // pred_fallthru
        _
    $region40: #{model_step.16} parent=5 // pred_fallthru
      _
  $region6: #{model_step.16} parent=0 // loop_footer
    %s13 = sadd.s32 1, %s9
  $region7: #{model_step.16} parent=0 // loop_footer_branch
    %8 = sbr.rel target = $region3
  $region8: #{model_step.16} parent=0 // loop_exit
    _

// kernel: model_step.24
$region0: #{model_step.24}
  #allocation0 [shape = 'u32[]', space=smem, size = 0x4, offset = 0x4, fixed_abs, tag = 'smem constant byte address 0x4 - core index']
  #allocation1 [shape = 'u32[144,128]{1,0:T(1,128)}', space=vmem, size = 0x12000, scoped, tag = 'internal scratch']
  %s0 = inlined_call_operand.vmem [shape: f32[2,16,16], index: 0, kind: input, shape index: {}]
  %s1 = inlined_call_operand.vmem [shape: f32[1,8,16], index: 1, kind: input, shape index: {}]
  %s2 = inlined_call_operand.vmem [shape: f32[8,1], index: 2, kind: input, shape index: {}]
  %s3 = inlined_call_operand.vmem [shape: f32[2,8,16], index: 3, kind: output, shape index: {}]
  %s4 = sld [smem:[#allocation0]]
  $region45: #{model_step.24} parent=0
    _
  %s6 = ssub.s32 1, %s4
  %s7 = scalar_select 0, %s6, %s4
  loop: start=0, step=1, limit=4
  $region2: #{model_step.24} parent=0 // loop_pre_header
    _
  $region3: #{model_step.24} parent=0 // loop_header
    %s9 = sphi 0, %s13
    %p10 = scmp.ge.s32.totalorder %s9, 4
    %s19 = sphi 0, %s21
    %s22 = sphi 0, %s19
    %s23 = sphi 0, %s22
    %s39 = sphi 0, %s23
    %s43 = sphi 0, %s43
    %s45 = sphi 0, %s43
    %s46 = sphi 0, %s45
    %s60 = sphi 0, %s46
    %s64 = sphi 0, %s64
    %s66 = sphi 0, %s64
    %s67 = sphi 0, %s66
    %s81 = sphi 0, %s67
    %s87 = sphi 0, %s89
    %s90 = sphi 0, %s87
    %s91 = sphi 0, %s90
    %s107 = sphi 0, %s91
  $region4: #{model_step.24} parent=0 // loop_header_branch
    %12 = sbr.rel (%p10) target = $region8
  $region5: #{model_step.24} parent=0 // loop_body
    %s14 = ssub.s32 %s9, 1
    %s15 = ssub.s32 %s9, 2
    %s16 = sadd.s32 %s9, 1
    %s17 = ssub.s32 %s9, %s16
    %p18 = scmp.eq.s32.totalorder %s17, 0
    %s20 = sadd.s32 %s19, 1
    %s21 = scalar_select %p18, %s19, %s20
    %p24 = pneg %p18
    %p25 = scmp.eq.s32.totalorder %s9, 1
    %p26 = por %p24, %p25
    %p27 = scmp.ne.s32.totalorder %s19, %s22
    %p28 = scmp.eq.s32.totalorder %s9, 0
    %p29 = por %p27, %p28
    %p30 = scmp.ne.s32.totalorder %s19, %s22
    %p31 = scmp.eq.s32.totalorder %s14, 1
    %p32 = por %p30, %p31
    %p33 = scmp.ne.s32.totalorder %s22, %s23
    %p34 = scmp.eq.s32.totalorder %s14, 0
    %p35 = por %p33, %p34
    %p36 = scmp.ne.s32.totalorder %s22, %s23
    %p37 = scmp.eq.s32.totalorder %s15, 1
    %p38 = por %p36, %p37
    %p40 = scmp.ne.s32.totalorder %s23, %s39
    %p41 = scmp.eq.s32.totalorder %s15, 0
    %p42 = por %p40, %p41
    %s44 = sadd.s32 %s43, 1
    %p47 = scmp.eq.s32.totalorder %s9, 1
    %p48 = scmp.ne.s32.totalorder %s43, %s45
    %p49 = scmp.eq.s32.totalorder %s9, 0
    %p50 = por %p48, %p49
    %p51 = scmp.ne.s32.totalorder %s43, %s45
    %p52 = scmp.eq.s32.totalorder %s14, 1
    %p53 = por %p51, %p52
    %p54 = scmp.ne.s32.totalorder %s45, %s46
    %p55 = scmp.eq.s32.totalorder %s14, 0
    %p56 = por %p54, %p55
    %p57 = scmp.ne.s32.totalorder %s45, %s46
    %p58 = scmp.eq.s32.totalorder %s15, 1
    %p59 = por %p57, %p58
    %p61 = scmp.ne.s32.totalorder %s46, %s60
    %p62 = scmp.eq.s32.totalorder %s15, 0
    %p63 = por %p61, %p62
    %s65 = sadd.s32 %s64, 1
    %p68 = scmp.eq.s32.totalorder %s9, 1
    %p69 = scmp.ne.s32.totalorder %s64, %s66
    %p70 = scmp.eq.s32.totalorder %s9, 0
    %p71 = por %p69, %p70
    %p72 = scmp.ne.s32.totalorder %s64, %s66
    %p73 = scmp.eq.s32.totalorder %s14, 1
    %p74 = por %p72, %p73
    %p75 = scmp.ne.s32.totalorder %s66, %s67
    %p76 = scmp.eq.s32.totalorder %s14, 0
    %p77 = por %p75, %p76
    %p78 = scmp.ne.s32.totalorder %s66, %s67
    %p79 = scmp.eq.s32.totalorder %s15, 1
    %p80 = por %p78, %p79
    %p82 = scmp.ne.s32.totalorder %s67, %s81
    %p83 = scmp.eq.s32.totalorder %s15, 0
    %p84 = por %p82, %p83
    %s85 = ssub.s32 %s9, %s16
    %p86 = scmp.eq.s32.totalorder %s85, 0
    %s88 = sadd.s32 %s87, 1
    %s89 = scalar_select %p86, %s87, %s88
    %p92 = pneg %p86
    %p93 = scmp.eq.s32.totalorder %s9, 1
    %p94 = por %p92, %p93
    %p95 = scmp.ne.s32.totalorder %s87, %s90
    %p96 = scmp.eq.s32.totalorder %s9, 0
    %p97 = por %p95, %p96
    %p98 = scmp.ne.s32.totalorder %s87, %s90
    %p99 = scmp.eq.s32.totalorder %s14, 1
    %p100 = por %p98, %p99
    %p101 = scmp.ne.s32.totalorder %s90, %s91
    %p102 = scmp.eq.s32.totalorder %s14, 0
    %p103 = por %p101, %p102
    %p104 = scmp.ne.s32.totalorder %s90, %s91
    %p105 = scmp.eq.s32.totalorder %s15, 1
    %p106 = por %p104, %p105
    %p108 = scmp.ne.s32.totalorder %s91, %s107
    %p109 = scmp.eq.s32.totalorder %s15, 0
    %p110 = por %p108, %p109
    %p111 = scmp.le.s32.totalorder 1, %s9
    %p112 = scmp.lt.s32.totalorder %s9, 3
    %p113 = pnand %p111, %p112
    %p114 = pneg %p113
    // Predicated region
    $region9: #{model_step.24} parent=5 // pred_check
      _
    $region10: #{model_step.24} parent=5 // pred_check_branch
      %116 = sbr.rel (%p113) target = $region12
    $region11: #{model_step.24} parent=5 // pred_region
      %s117 = ssub.s32 %s9, 1
      // Predicated region
      $region13: #{model_step.24} parent=11 // pred_check
        %p118 = pneg %p56
      $region14: #{model_step.24} parent=11 // pred_check_branch
        %120 = sbr.rel (%p118) target = $region16
      $region15: #{model_step.24} parent=11 // pred_region
        _
      $region16: #{model_step.24} parent=11 // pred_fallthru
        _
      // Predicated region
      $region17: #{model_step.24} parent=11 // pred_check
        %p121 = pneg %p77
      $region18: #{model_step.24} parent=11 // pred_check_branch
        %123 = sbr.rel (%p121) target = $region20
      $region19: #{model_step.24} parent=11 // pred_region
        _
      $region20: #{model_step.24} parent=11 // pred_fallthru
        _
    $region12: #{model_step.24} parent=5 // pred_fallthru
      _
    %p124 = scmp.lt.s32.totalorder %s9, 2
    // Predicated region
    $region21: #{model_step.24} parent=5 // pred_check
      %p125 = pneg %p124
    $region22: #{model_step.24} parent=5 // pred_check_branch
      %127 = sbr.rel (%p125) target = $region24
    $region23: #{model_step.24} parent=5 // pred_region
      // Predicated region
      $region25: #{model_step.24} parent=23 // pred_check
        %p128 = pneg %p29
      $region26: #{model_step.24} parent=23 // pred_check_branch
        %130 = sbr.rel (%p128) target = $region28
      $region27: #{model_step.24} parent=23 // pred_region
        %p131 = scmp.lt.s32.totalorder %s9, 1
        %s132 = scalar_select %p131, %s9, 1
        %s133 = smul.addr %s132, 2
        %s134 = smul.addr %s133, 8
        %s135 = scalar_lea.vmem %s0, %s134
      $region28: #{model_step.24} parent=23 // pred_fallthru
        _
    $region24: #{model_step.24} parent=5 // pred_fallthru
      _
    %p136 = scmp.le.s32.totalorder 1, %s9
    %p137 = scmp.lt.s32.totalorder %s9, 3
    %p138 = pnand %p136, %p137
    %p139 = pneg %p138
    // Predicated region
    $region29: #{model_step.24} parent=5 // pred_check
      _
    $region30: #{model_step.24} parent=5 // pred_check_branch
      %141 = sbr.rel (%p138) target = $region32
    $region31: #{model_step.24} parent=5 // pred_region
      %s142 = ssub.s32 %s9, 1
      %p143 = scmp.lt.s32.totalorder %s14, 1
      %s144 = scalar_select %p143, %s14, 1
      %s145 = smul.addr %s144, 2
      %s146 = smul.addr %s145, 8
      %s147 = scalar_lea.vmem %s0, %s146
      %p148 = pneg %p35
      %p149 = pneg %p32
      %p150 = pneg %p56
      %p151 = pneg %p53
      %p152 = pneg %p77
      %p153 = pneg %p74
      %p154 = pneg %p103
      %p155 = pneg %p100
      %p156 = scmp.lt.s32.totalorder %s14, 1
      %s157 = scalar_select %p156, %s14, 1
      %s158 = smul.addr %s157, 8
      %s159 = scalar_lea.vmem %s3, %s158
      %p160 = scmp.lt.s32.totalorder %s14, 1
      %s161 = scalar_select %p160, %s14, 1
      %s162 = smul.addr %s161, 2
      %s163 = smul.addr %s162, 8
      %s164 = scalar_lea.vmem %s0, %s163
      %p165 = scmp.lt.s32.totalorder %s14, 1
      %s166 = scalar_select %p165, %s14, 1
      %s167 = smul.addr %s166, 8
      %s168 = scalar_lea.vmem %s3, %s167
      %v170 = vld [vmem:[%s164] sm:$0xff]
      %v171 = vld [vmem:[%s164 + $0x8] sm:$0xff]
      %v172 = vpack.c.bf16 %v171, %v170
      %v173 = vld [vmem:[%s1] sm:$0xff]
      %v174 = vpack.c.bf16 %v173, %v173
      %v175 = vld [vmem:[%s2] sm:$0xff]
      %177 = vset.pattern.permute.xlu0 0
      %178 = vperm.xlu0 %177, %v175
      %v179 = vpop.permute.xlu0 %178
      %vm181 = vcmask 130048
      %v183 = vsel %vm181, %v174, 0
      %185 = vmatprep.subr.bf16.mxu0 0
      %186 = vmatpush1.bf16.msra.mxu0 %v172
      %187 = vmatprep.subr.bf16.mxu0 0
      %188 = vmatpush1.bf16.msra.mxu0 0
      %189 = vmatprep.subr.bf16.mxu0 0
      %190 = vmatpush1.bf16.msra.mxu0 0
      %191 = vmatprep.subr.bf16.mxu0 0
      %192 = vmatpush1.bf16.msra.mxu0 0
      %193 = vmatprep.subr.bf16.mxu0 0
      %194 = vmatpush1.bf16.msra.mxu0 0
      %195 = vmatprep.subr.bf16.mxu0 0
      %196 = vmatpush1.bf16.msra.mxu0 0
      %197 = vmatprep.subr.bf16.mxu0 0
      %198 = vmatpush1.bf16.msra.mxu0 0
      %199 = vmatprep.subr.bf16.mxu0 0
      %200 = vmatpush1.bf16.msra.mxu0 0
      %201 = vmatprep.subr.bf16.mxu0 0
      %202 = vmatpush1.bf16.msra.mxu0 0
      %203 = vmatprep.subr.bf16.mxu0 0
      %204 = vmatpush1.bf16.msra.mxu0 0
      %205 = vmatprep.subr.bf16.mxu0 0
      %206 = vmatpush1.bf16.msra.mxu0 0
      %207 = vmatprep.subr.bf16.mxu0 0
      %208 = vmatpush1.bf16.msra.mxu0 0
      %209 = vmatprep.subr.bf16.mxu0 0
      %210 = vmatpush1.bf16.msra.mxu0 0
      %211 = vmatprep.subr.bf16.mxu0 0
      %212 = vmatpush1.bf16.msra.mxu0 0
      %213 = vmatprep.subr.bf16.mxu0 0
      %214 = vmatpush1.bf16.msra.mxu0 0
      %215 = vmatprep.subr.bf16.mxu0 0
      %216 = vmatpush1.bf16.msra.mxu0 0
      %217 = vmatprep.mubr.bf16.mxu0 0
      %218 = vmatmul.mubr.bf16.gmra.mrb[0].mxu0 %v183
      %v219 = vpop.f32.mrb[0].mxu0
      %v220 = vadd.f32 %v179, %v219
      %v221 = vpop.f32.mrb[0].mxu0
      %v222 = vpop.f32.mrb[0].mxu0
      %v223 = vpop.f32.mrb[0].mxu0
      %224 = vdwg.mxu0
      %v225 = vmax.f32 %v220, 0.0
      %226 = vst.msk [vmem:[%s168] sm:$0xff] %vm181, %v225
      %p227 = scmp.lt.s32.totalorder %s14, 1
      %s228 = scalar_select %p227, %s14, 1
      %s229 = smul.addr %s228, 8
      %s230 = scalar_lea.vmem %s3, %s229
      // Predicated region
      $region33: #{model_step.24} parent=31 // pred_check
        %p231 = pneg %p100
      $region34: #{model_step.24} parent=31 // pred_check_branch
        %233 = sbr.rel (%p231) target = $region36
      $region35: #{model_step.24} parent=31 // pred_region
        _
      $region36: #{model_step.24} parent=31 // pred_fallthru
        _
    $region32: #{model_step.24} parent=5 // pred_fallthru
      _
    %p234 = scmp.le.s32.totalorder 2, %s9
    // Predicated region
    $region37: #{model_step.24} parent=5 // pred_check
      %p235 = pneg %p234
    $region38: #{model_step.24} parent=5 // pred_check_branch
      %237 = sbr.rel (%p235) target = $region40
    $region39: #{model_step.24} parent=5 // pred_region
      %s238 = ssub.s32 %s9, 2
      // Predicated region
      $region41: #{model_step.24} parent=39 // pred_check
        %p239 = pneg %p106
      $region42: #{model_step.24} parent=39 // pred_check_branch
        %241 = sbr.rel (%p239) target = $region44
      $region43: #{model_step.24} parent=39 // pred_region
        %p242 = scmp.lt.s32.totalorder %s15, 1
        %s243 = scalar_select %p242, %s15, 1
        %s244 = smul.addr %s243, 8
        %s245 = scalar_lea.vmem %s3, %s244
      $region44: #{model_step.24} parent=39 // pred_fallthru
        _
    $region40: #{model_step.24} parent=5 // pred_fallthru
      _
  $region6: #{model_step.24} parent=0 // loop_footer
    %s13 = sadd.s32 1, %s9
  $region7: #{model_step.24} parent=0 // loop_footer_branch
    %8 = sbr.rel target = $region3
  $region8: #{model_step.24} parent=0 // loop_exit
    _

// kernel: model_step.19
$region0: #{model_step.19}
  #allocation0 [shape = 'u32[]', space=smem, size = 0x4, offset = 0x4, fixed_abs, tag = 'smem constant byte address 0x4 - core index']
  #allocation1 [shape = 'u32[144,128]{1,0:T(1,128)}', space=vmem, size = 0x12000, scoped, tag = 'internal scratch']
  %s0 = inlined_call_operand.vmem [shape: f32[2,32,4], index: 0, kind: input, shape index: {}]
  %s1 = inlined_call_operand.vmem [shape: f32[2,32,1], index: 1, kind: output, shape index: {}]
  %s2 = sld [smem:[#allocation0]]
  $region37: #{model_step.19} parent=0
    _
  %s4 = ssub.s32 1, %s2
  %s5 = scalar_select 0, %s4, %s2
  loop: start=0, step=1, limit=4
  $region2: #{model_step.19} parent=0 // loop_pre_header
    _
  $region3: #{model_step.19} parent=0 // loop_header
    %s7 = sphi 0, %s11
    %p8 = scmp.ge.s32.totalorder %s7, 4
    %s17 = sphi 0, %s19
    %s20 = sphi 0, %s17
    %s21 = sphi 0, %s20
    %s37 = sphi 0, %s21
    %s43 = sphi 0, %s45
    %s46 = sphi 0, %s43
    %s47 = sphi 0, %s46
    %s63 = sphi 0, %s47
  $region4: #{model_step.19} parent=0 // loop_header_branch
    %10 = sbr.rel (%p8) target = $region8
  $region5: #{model_step.19} parent=0 // loop_body
    %s12 = ssub.s32 %s7, 1
    %s13 = ssub.s32 %s7, 2
    %s14 = sadd.s32 %s7, 1
    %s15 = ssub.s32 %s7, %s14
    %p16 = scmp.eq.s32.totalorder %s15, 0
    %s18 = sadd.s32 %s17, 1
    %s19 = scalar_select %p16, %s17, %s18
    %p22 = pneg %p16
    %p23 = scmp.eq.s32.totalorder %s7, 1
    %p24 = por %p22, %p23
    %p25 = scmp.ne.s32.totalorder %s17, %s20
    %p26 = scmp.eq.s32.totalorder %s7, 0
    %p27 = por %p25, %p26
    %p28 = scmp.ne.s32.totalorder %s17, %s20
    %p29 = scmp.eq.s32.totalorder %s12, 1
    %p30 = por %p28, %p29
    %p31 = scmp.ne.s32.totalorder %s20, %s21
    %p32 = scmp.eq.s32.totalorder %s12, 0
    %p33 = por %p31, %p32
    %p34 = scmp.ne.s32.totalorder %s20, %s21
    %p35 = scmp.eq.s32.totalorder %s13, 1
    %p36 = por %p34, %p35
    %p38 = scmp.ne.s32.totalorder %s21, %s37
    %p39 = scmp.eq.s32.totalorder %s13, 0
    %p40 = por %p38, %p39
    %s41 = ssub.s32 %s7, %s14
    %p42 = scmp.eq.s32.totalorder %s41, 0
    %s44 = sadd.s32 %s43, 1
    %s45 = scalar_select %p42, %s43, %s44
    %p48 = pneg %p42
    %p49 = scmp.eq.s32.totalorder %s7, 1
    %p50 = por %p48, %p49
    %p51 = scmp.ne.s32.totalorder %s43, %s46
    %p52 = scmp.eq.s32.totalorder %s7, 0
    %p53 = por %p51, %p52
    %p54 = scmp.ne.s32.totalorder %s43, %s46
    %p55 = scmp.eq.s32.totalorder %s12, 1
    %p56 = por %p54, %p55
    %p57 = scmp.ne.s32.totalorder %s46, %s47
    %p58 = scmp.eq.s32.totalorder %s12, 0
    %p59 = por %p57, %p58
    %p60 = scmp.ne.s32.totalorder %s46, %s47
    %p61 = scmp.eq.s32.totalorder %s13, 1
    %p62 = por %p60, %p61
    %p64 = scmp.ne.s32.totalorder %s47, %s63
    %p65 = scmp.eq.s32.totalorder %s13, 0
    %p66 = por %p64, %p65
    %p67 = scmp.le.s32.totalorder 1, %s7
    %p68 = scmp.lt.s32.totalorder %s7, 3
    %p69 = pnand %p67, %p68
    %p70 = pneg %p69
    // Predicated region
    $region9: #{model_step.19} parent=5 // pred_check
      _
    $region10: #{model_step.19} parent=5 // pred_check_branch
      %72 = sbr.rel (%p69) target = $region12
    $region11: #{model_step.19} parent=5 // pred_region
      %s73 = ssub.s32 %s7, 1
    $region12: #{model_step.19} parent=5 // pred_fallthru
      _
    %p74 = scmp.lt.s32.totalorder %s7, 2
    // Predicated region
    $region13: #{model_step.19} parent=5 // pred_check
      %p75 = pneg %p74
    $region14: #{model_step.19} parent=5 // pred_check_branch
      %77 = sbr.rel (%p75) target = $region16
    $region15: #{model_step.19} parent=5 // pred_region
      // Predicated region
      $region17: #{model_step.19} parent=15 // pred_check
        %p78 = pneg %p27
      $region18: #{model_step.19} parent=15 // pred_check_branch
        %80 = sbr.rel (%p78) target = $region20
      $region19: #{model_step.19} parent=15 // pred_region
        %p81 = scmp.lt.s32.totalorder %s7, 1
        %s82 = scalar_select %p81, %s7, 1
        %s83 = smul.addr %s82, 4
        %s84 = smul.addr %s83, 8
        %s85 = scalar_lea.vmem %s0, %s84
      $region20: #{model_step.19} parent=15 // pred_fallthru
        _
    $region16: #{model_step.19} parent=5 // pred_fallthru
      _
    %p86 = scmp.le.s32.totalorder 1, %s7
    %p87 = scmp.lt.s32.totalorder %s7, 3
    %p88 = pnand %p86, %p87
    %p89 = pneg %p88
    // Predicated region
    $region21: #{model_step.19} parent=5 // pred_check
      _
    $region22: #{model_step.19} parent=5 // pred_check_branch
      %91 = sbr.rel (%p88) target = $region24
    $region23: #{model_step.19} parent=5 // pred_region
      %s92 = ssub.s32 %s7, 1
      %p93 = scmp.lt.s32.totalorder %s12, 1
      %s94 = scalar_select %p93, %s12, 1
      %s95 = smul.addr %s94, 4
      %s96 = smul.addr %s95, 8
      %s97 = scalar_lea.vmem %s0, %s96
      %p98 = pneg %p33
      %p99 = pneg %p30
      %p100 = pneg %p59
      %p101 = pneg %p56
      %p102 = scmp.lt.s32.totalorder %s12, 1
      %s103 = scalar_select %p102, %s12, 1
      %s104 = smul.addr %s103, 4
      %s105 = smul.addr %s104, 8
      %s106 = scalar_lea.vmem %s1, %s105
      %p107 = scmp.lt.s32.totalorder %s12, 1
      %s108 = scalar_select %p107, %s12, 1
      %s109 = smul.addr %s108, 4
      %s110 = smul.addr %s109, 8
      %s111 = scalar_lea.vmem %s0, %s110
      %p112 = scmp.lt.s32.totalorder %s12, 1
      %s113 = scalar_select %p112, %s12, 1
      %s114 = smul.addr %s113, 4
      %s115 = smul.addr %s114, 8
      %s116 = scalar_lea.vmem %s1, %s115
      %v117 = vld [vmem:[%s111] sm:$0xff]
      %v118 = vld [vmem:[%s111 + $0x8] sm:$0xff]
      %v119 = vld [vmem:[%s111 + $0x10] sm:$0xff]
      %v120 = vld [vmem:[%s111 + $0x18] sm:$0xff]
      %vm121 = vcmask 31744
      %v122 = vsel %vm121, %v117, 0.0
      %123 = vadd.xlane.f32.xlu0 %v122
      %v124 = vpop.xlane.xlu0 %123
      %v125 = vsel %vm121, %v118, 0.0
      %126 = vadd.xlane.f32.xlu0 %v125
      %v127 = vpop.xlane.xlu0 %126
      %v128 = vsel %vm121, %v119, 0.0
      %129 = vadd.xlane.f32.xlu0 %v128
      %v130 = vpop.xlane.xlu0 %129
      %v131 = vsel %vm121, %v120, 0.0
      %132 = vadd.xlane.f32.xlu0 %v131
      %v133 = vpop.xlane.xlu0 %132
      %v134 = vrcp.pop 4.0
      %v135 = vmul.f32 %v124, %v134
      %v136 = vmul.f32 %v127, %v134
      %v137 = vmul.f32 %v130, %v134
      %v138 = vmul.f32 %v133, %v134
      %vm139 = vcmask 7168
      %140 = vst.msk [vmem:[%s116] sm:$0xff] %vm139, %v135
      %141 = vst.msk [vmem:[%s116 + $0x8] sm:$0xff] %vm139, %v136
      %142 = vst.msk [vmem:[%s116 + $0x10] sm:$0xff] %vm139, %v137
      %143 = vst.msk [vmem:[%s116 + $0x18] sm:$0xff] %vm139, %v138
      %p144 = scmp.lt.s32.totalorder %s12, 1
      %s145 = scalar_select %p144, %s12, 1
      %s146 = smul.addr %s145, 4
      %s147 = smul.addr %s146, 8
      %s148 = scalar_lea.vmem %s1, %s147
      // Predicated region
      $region25: #{model_step.19} parent=23 // pred_check
        %p149 = pneg %p56
      $region26: #{model_step.19} parent=23 // pred_check_branch
        %151 = sbr.rel (%p149) target = $region28
      $region27: #{model_step.19} parent=23 // pred_region
        _
      $region28: #{model_step.19} parent=23 // pred_fallthru
        _
    $region24: #{model_step.19} parent=5 // pred_fallthru
      _
    %p152 = scmp.le.s32.totalorder 2, %s7
    // Predicated region
    $region29: #{model_step.19} parent=5 // pred_check
      %p153 = pneg %p152
    $region30: #{model_step.19} parent=5 // pred_check_branch
      %155 = sbr.rel (%p153) target = $region32
    $region31: #{model_step.19} parent=5 // pred_region
      %s156 = ssub.s32 %s7, 2
      // Predicated region
      $region33: #{model_step.19} parent=31 // pred_check
        %p157 = pneg %p62
      $region34: #{model_step.19} parent=31 // pred_check_branch
        %159 = sbr.rel (%p157) target = $region36
      $region35: #{model_step.19} parent=31 // pred_region
        %p160 = scmp.lt.s32.totalorder %s13, 1
        %s161 = scalar_select %p160, %s13, 1
        %s162 = smul.addr %s161, 4
        %s163 = smul.addr %s162, 8
        %s164 = scalar_lea.vmem %s1, %s163
      $region36: #{model_step.19} parent=31 // pred_fallthru
        _
    $region32: #{model_step.19} parent=5 // pred_fallthru
      _
  $region6: #{model_step.19} parent=0 // loop_footer
    %s11 = sadd.s32 1, %s7
  $region7: #{model_step.19} parent=0 // loop_footer_branch
    %6 = sbr.rel target = $region3
  $region8: #{model_step.19} parent=0 // loop_exit
    _

// kernel: model_step.17
$region0: #{model_step.17}
  #allocation0 [shape = 'u32[]', space=smem, size = 0x4, offset = 0x4, fixed_abs, tag = 'smem constant byte address 0x4 - core index']
  #allocation1 [shape = 'u32[144,128]{1,0:T(1,128)}', space=vmem, size = 0x12000, scoped, tag = 'internal scratch']
  %s0 = inlined_call_operand.vmem [shape: f32[2,64,9], index: 0, kind: input, shape index: {}]
  %s1 = inlined_call_operand.vmem [shape: f32[4,32,64], index: 1, kind: input, shape index: {}]
  %s2 = inlined_call_operand.vmem [shape: f32[32,1], index: 2, kind: input, shape index: {}]
  %s3 = inlined_call_operand.vmem [shape: f32[2,32,5], index: 3, kind: output, shape index: {}]
  %s4 = sld [smem:[#allocation0]]
  $region45: #{model_step.17} parent=0
    _
  %s6 = ssub.s32 1, %s4
  %s7 = scalar_select 0, %s6, %s4
  loop: start=0, step=1, limit=4
  $region2: #{model_step.17} parent=0 // loop_pre_header
    _
  $region3: #{model_step.17} parent=0 // loop_header
    %s9 = sphi 0, %s13
    %p10 = scmp.ge.s32.totalorder %s9, 4
    %s19 = sphi 0, %s21
    %s22 = sphi 0, %s19
    %s23 = sphi 0, %s22
    %s39 = sphi 0, %s23
    %s43 = sphi 0, %s43
    %s45 = sphi 0, %s43
    %s46 = sphi 0, %s45
    %s60 = sphi 0, %s46
    %s64 = sphi 0, %s64
    %s66 = sphi 0, %s64
    %s67 = sphi 0, %s66
    %s81 = sphi 0, %s67
    %s87 = sphi 0, %s89
    %s90 = sphi 0, %s87
    %s91 = sphi 0, %s90
    %s107 = sphi 0, %s91
  $region4: #{model_step.17} parent=0 // loop_header_branch
    %12 = sbr.rel (%p10) target = $region8
  $region5: #{model_step.17} parent=0 // loop_body
    %s14 = ssub.s32 %s9, 1
    %s15 = ssub.s32 %s9, 2
    %s16 = sadd.s32 %s9, 1
    %s17 = ssub.s32 %s9, %s16
    %p18 = scmp.eq.s32.totalorder %s17, 0
    %s20 = sadd.s32 %s19, 1
    %s21 = scalar_select %p18, %s19, %s20
    %p24 = pneg %p18
    %p25 = scmp.eq.s32.totalorder %s9, 1
    %p26 = por %p24, %p25
    %p27 = scmp.ne.s32.totalorder %s19, %s22
    %p28 = scmp.eq.s32.totalorder %s9, 0
    %p29 = por %p27, %p28
    %p30 = scmp.ne.s32.totalorder %s19, %s22
    %p31 = scmp.eq.s32.totalorder %s14, 1
    %p32 = por %p30, %p31
    %p33 = scmp.ne.s32.totalorder %s22, %s23
    %p34 = scmp.eq.s32.totalorder %s14, 0
    %p35 = por %p33, %p34
    %p36 = scmp.ne.s32.totalorder %s22, %s23
    %p37 = scmp.eq.s32.totalorder %s15, 1
    %p38 = por %p36, %p37
    %p40 = scmp.ne.s32.totalorder %s23, %s39
    %p41 = scmp.eq.s32.totalorder %s15, 0
    %p42 = por %p40, %p41
    %s44 = sadd.s32 %s43, 1
    %p47 = scmp.eq.s32.totalorder %s9, 1
    %p48 = scmp.ne.s32.totalorder %s43, %s45
    %p49 = scmp.eq.s32.totalorder %s9, 0
    %p50 = por %p48, %p49
    %p51 = scmp.ne.s32.totalorder %s43, %s45
    %p52 = scmp.eq.s32.totalorder %s14, 1
    %p53 = por %p51, %p52
    %p54 = scmp.ne.s32.totalorder %s45, %s46
    %p55 = scmp.eq.s32.totalorder %s14, 0
    %p56 = por %p54, %p55
    %p57 = scmp.ne.s32.totalorder %s45, %s46
    %p58 = scmp.eq.s32.totalorder %s15, 1
    %p59 = por %p57, %p58
    %p61 = scmp.ne.s32.totalorder %s46, %s60
    %p62 = scmp.eq.s32.totalorder %s15, 0
    %p63 = por %p61, %p62
    %s65 = sadd.s32 %s64, 1
    %p68 = scmp.eq.s32.totalorder %s9, 1
    %p69 = scmp.ne.s32.totalorder %s64, %s66
    %p70 = scmp.eq.s32.totalorder %s9, 0
    %p71 = por %p69, %p70
    %p72 = scmp.ne.s32.totalorder %s64, %s66
    %p73 = scmp.eq.s32.totalorder %s14, 1
    %p74 = por %p72, %p73
    %p75 = scmp.ne.s32.totalorder %s66, %s67
    %p76 = scmp.eq.s32.totalorder %s14, 0
    %p77 = por %p75, %p76
    %p78 = scmp.ne.s32.totalorder %s66, %s67
    %p79 = scmp.eq.s32.totalorder %s15, 1
    %p80 = por %p78, %p79
    %p82 = scmp.ne.s32.totalorder %s67, %s81
    %p83 = scmp.eq.s32.totalorder %s15, 0
    %p84 = por %p82, %p83
    %s85 = ssub.s32 %s9, %s16
    %p86 = scmp.eq.s32.totalorder %s85, 0
    %s88 = sadd.s32 %s87, 1
    %s89 = scalar_select %p86, %s87, %s88
    %p92 = pneg %p86
    %p93 = scmp.eq.s32.totalorder %s9, 1
    %p94 = por %p92, %p93
    %p95 = scmp.ne.s32.totalorder %s87, %s90
    %p96 = scmp.eq.s32.totalorder %s9, 0
    %p97 = por %p95, %p96
    %p98 = scmp.ne.s32.totalorder %s87, %s90
    %p99 = scmp.eq.s32.totalorder %s14, 1
    %p100 = por %p98, %p99
    %p101 = scmp.ne.s32.totalorder %s90, %s91
    %p102 = scmp.eq.s32.totalorder %s14, 0
    %p103 = por %p101, %p102
    %p104 = scmp.ne.s32.totalorder %s90, %s91
    %p105 = scmp.eq.s32.totalorder %s15, 1
    %p106 = por %p104, %p105
    %p108 = scmp.ne.s32.totalorder %s91, %s107
    %p109 = scmp.eq.s32.totalorder %s15, 0
    %p110 = por %p108, %p109
    %p111 = scmp.le.s32.totalorder 1, %s9
    %p112 = scmp.lt.s32.totalorder %s9, 3
    %p113 = pnand %p111, %p112
    %p114 = pneg %p113
    // Predicated region
    $region9: #{model_step.17} parent=5 // pred_check
      _
    $region10: #{model_step.17} parent=5 // pred_check_branch
      %116 = sbr.rel (%p113) target = $region12
    $region11: #{model_step.17} parent=5 // pred_region
      %s117 = ssub.s32 %s9, 1
      // Predicated region
      $region13: #{model_step.17} parent=11 // pred_check
        %p118 = pneg %p56
      $region14: #{model_step.17} parent=11 // pred_check_branch
        %120 = sbr.rel (%p118) target = $region16
      $region15: #{model_step.17} parent=11 // pred_region
        _
      $region16: #{model_step.17} parent=11 // pred_fallthru
        _
      // Predicated region
      $region17: #{model_step.17} parent=11 // pred_check
        %p121 = pneg %p77
      $region18: #{model_step.17} parent=11 // pred_check_branch
        %123 = sbr.rel (%p121) target = $region20
      $region19: #{model_step.17} parent=11 // pred_region
        _
      $region20: #{model_step.17} parent=11 // pred_fallthru
        _
    $region12: #{model_step.17} parent=5 // pred_fallthru
      _
    %p124 = scmp.lt.s32.totalorder %s9, 2
    // Predicated region
    $region21: #{model_step.17} parent=5 // pred_check
      %p125 = pneg %p124
    $region22: #{model_step.17} parent=5 // pred_check_branch
      %127 = sbr.rel (%p125) target = $region24
    $region23: #{model_step.17} parent=5 // pred_region
      // Predicated region
      $region25: #{model_step.17} parent=23 // pred_check
        %p128 = pneg %p29
      $region26: #{model_step.17} parent=23 // pred_check_branch
        %130 = sbr.rel (%p128) target = $region28
      $region27: #{model_step.17} parent=23 // pred_region
        %p131 = scmp.lt.s32.totalorder %s9, 1
        %s132 = scalar_select %p131, %s9, 1
        %s133 = smul.addr %s132, 8
        %s134 = smul.addr %s133, 8
        %s135 = scalar_lea.vmem %s0, %s134
      $region28: #{model_step.17} parent=23 // pred_fallthru
        _
    $region24: #{model_step.17} parent=5 // pred_fallthru
      _
    %p136 = scmp.le.s32.totalorder 1, %s9
    %p137 = scmp.lt.s32.totalorder %s9, 3
    %p138 = pnand %p136, %p137
    %p139 = pneg %p138
    // Predicated region
    $region29: #{model_step.17} parent=5 // pred_check
      _
    $region30: #{model_step.17} parent=5 // pred_check_branch
      %141 = sbr.rel (%p138) target = $region32
    $region31: #{model_step.17} parent=5 // pred_region
      %s142 = ssub.s32 %s9, 1
      %p143 = scmp.lt.s32.totalorder %s14, 1
      %s144 = scalar_select %p143, %s14, 1
      %s145 = smul.addr %s144, 8
      %s146 = smul.addr %s145, 8
      %s147 = scalar_lea.vmem %s0, %s146
      %p148 = pneg %p35
      %p149 = pneg %p32
      %p150 = pneg %p56
      %p151 = pneg %p53
      %p152 = pneg %p77
      %p153 = pneg %p74
      %p154 = pneg %p103
      %p155 = pneg %p100
      %p156 = scmp.lt.s32.totalorder %s14, 1
      %s157 = scalar_select %p156, %s14, 1
      %s158 = smul.addr %s157, 4
      %s159 = smul.addr %s158, 8
      %s160 = scalar_lea.vmem %s3, %s159
      %p161 = scmp.lt.s32.totalorder %s14, 1
      %s162 = scalar_select %p161, %s14, 1
      %s163 = smul.addr %s162, 8
      %s164 = smul.addr %s163, 8
      %s165 = scalar_lea.vmem %s0, %s164
      %p166 = scmp.lt.s32.totalorder %s14, 1
      %s167 = scalar_select %p166, %s14, 1
      %s168 = smul.addr %s167, 4
      %s169 = smul.addr %s168, 8
      %s170 = scalar_lea.vmem %s3, %s169
      %v172 = vld [vmem:[%s165] sm:$0xff]
      %v173 = vld [vmem:[%s165 + $0x8] sm:$0xff]
      %v174 = vld [vmem:[%s165 + $0x10] sm:$0xff]
      %v175 = vld [vmem:[%s165 + $0x18] sm:$0xff]
      %v176 = vld [vmem:[%s165 + $0x20] sm:$0xff]
      %v177 = vld [vmem:[%s165 + $0x28] sm:$0xff]
      %v178 = vld [vmem:[%s165 + $0x30] sm:$0xff]
      %v179 = vld [vmem:[%s165 + $0x38] sm:$0xff]
      %v180 = vpack.c.bf16 %v173, %v172
      %v181 = vpack.c.bf16 %v175, %v174
      %v182 = vpack.c.bf16 %v177, %v176
      %v183 = vpack.c.bf16 %v179, %v178
      %v184 = vld [vmem:[%s1] sm:$0xff]
      %v185 = vld [vmem:[%s1 + $0x8] sm:$0xff]
      %v186 = vld [vmem:[%s1 + $0x10] sm:$0xff]
      %v187 = vld [vmem:[%s1 + $0x18] sm:$0xff]
      %v188 = vpack.c.bf16 %v185, %v184
      %v189 = vpack.c.bf16 %v187, %v186
      %s190 = scalar_lea.vmem %s1, 32
      %v191 = vld [vmem:[%s190] sm:$0xff]
      %v192 = vld [vmem:[%s190 + $0x8] sm:$0xff]
      %v193 = vld [vmem:[%s190 + $0x10] sm:$0xff]
      %v194 = vld [vmem:[%s190 + $0x18] sm:$0xff]
      %v195 = vpack.c.bf16 %v192, %v191
      %v196 = vpack.c.bf16 %v194, %v193
      %201 = vrot.lane.b32.xlu0 %v180, 127
      %v202 = vpop.permute.xlu0 %201
      %203 = vrot.lane.b32.xlu0 %v181, 127
      %v204 = vpop.permute.xlu0 %203
      %205 = vrot.lane.b32.xlu0 %v182, 127
      %v206 = vpop.permute.xlu0 %205
      %207 = vrot.lane.b32.xlu0 %v183, 127
      %v208 = vpop.permute.xlu0 %207
      %vm213 = vcmask 523264
      %v215 = vsel %vm213, %v195, 0
      %v218 = vsel %vm213, %v196, 0
      %220 = vmatprep.subr.bf16.mxu0 0
      %221 = vmatpush1.bf16.msra.mxu0 %v202
      %222 = vmatprep.subr.bf16.mxu0 0
      %223 = vmatpush1.bf16.msra.mxu0 %v204
      %224 = vmatprep.subr.bf16.mxu0 0
      %225 = vmatpush1.bf16.msra.mxu0 %v206
      %226 = vmatprep.subr.bf16.mxu0 0
      %227 = vmatpush1.bf16.msra.mxu0 %v208
      %228 = vmatprep.subr.bf16.mxu0 0
      %229 = vmatpush1.bf16.msra.mxu0 0
      %230 = vmatprep.subr.bf16.mxu0 0
      %231 = vmatpush1.bf16.msra.mxu0 0
      %232 = vmatprep.subr.bf16.mxu0 0
      %233 = vmatpush1.bf16.msra.mxu0 0
      %234 = vmatprep.subr.bf16.mxu0 0
      %235 = vmatpush1.bf16.msra.mxu0 0
      %236 = vmatprep.subr.bf16.mxu0 0
      %237 = vmatpush1.bf16.msra.mxu0 0
      %238 = vmatprep.subr.bf16.mxu0 0
      %239 = vmatpush1.bf16.msra.mxu0 0
      %240 = vmatprep.subr.bf16.mxu0 0
      %241 = vmatpush1.bf16.msra.mxu0 0
      %242 = vmatprep.subr.bf16.mxu0 0
      %243 = vmatpush1.bf16.msra.mxu0 0
      %244 = vmatprep.subr.bf16.mxu0 0
      %245 = vmatpush1.bf16.msra.mxu0 0
      %246 = vmatprep.subr.bf16.mxu0 0
      %247 = vmatpush1.bf16.msra.mxu0 0
      %248 = vmatprep.subr.bf16.mxu0 0
      %249 = vmatpush1.bf16.msra.mxu0 0
      %250 = vmatprep.subr.bf16.mxu0 0
      %251 = vmatpush1.bf16.msra.mxu0 0
      %252 = vmatprep.mubr.bf16.mxu0 0
      %253 = vmatmul.mubr.bf16.gmra.mrb[0].mxu0 %v215
      %v254 = vpop.f32.mrb[0].mxu0
      %v255 = vadd.f32 0.0, %v254
      %v256 = vpop.f32.mrb[0].mxu0
      %v257 = vpop.f32.mrb[0].mxu0
      %v258 = vadd.f32 0.0, %v257
      %v259 = vpop.f32.mrb[0].mxu0
      %260 = vmatprep.mubr.bf16.mxu0 0
      %261 = vmatmul.mubr.bf16.gmra.mrb[0].mxu0 %v218
      %v262 = vpop.f32.mrb[0].mxu0
      %v263 = vadd.f32 0.0, %v262
      %v264 = vpop.f32.mrb[0].mxu0
      %v265 = vpop.f32.mrb[0].mxu0
      %v266 = vadd.f32 0.0, %v265
      %v267 = vpop.f32.mrb[0].mxu0
      %268 = vdwg.mxu0
      %v270 = vsel %vm213, %v188, 0
      %v273 = vsel %vm213, %v189, 0
      %275 = vmatprep.subr.bf16.mxu0 0
      %276 = vmatpush1.bf16.msra.mxu0 %v180
      %277 = vmatprep.subr.bf16.mxu0 0
      %278 = vmatpush1.bf16.msra.mxu0 %v181
      %279 = vmatprep.subr.bf16.mxu0 0
      %280 = vmatpush1.bf16.msra.mxu0 %v182
      %281 = vmatprep.subr.bf16.mxu0 0
      %282 = vmatpush1.bf16.msra.mxu0 %v183
      %283 = vmatprep.subr.bf16.mxu0 0
      %284 = vmatpush1.bf16.msra.mxu0 0
      %285 = vmatprep.subr.bf16.mxu0 0
      %286 = vmatpush1.bf16.msra.mxu0 0
      %287 = vmatprep.subr.bf16.mxu0 0
      %288 = vmatpush1.bf16.msra.mxu0 0
      %289 = vmatprep.subr.bf16.mxu0 0
      %290 = vmatpush1.bf16.msra.mxu0 0
      %291 = vmatprep.subr.bf16.mxu0 0
      %292 = vmatpush1.bf16.msra.mxu0 0
      %293 = vmatprep.subr.bf16.mxu0 0
      %294 = vmatpush1.bf16.msra.mxu0 0
      %295 = vmatprep.subr.bf16.mxu0 0
      %296 = vmatpush1.bf16.msra.mxu0 0
      %297 = vmatprep.subr.bf16.mxu0 0
      %298 = vmatpush1.bf16.msra.mxu0 0
      %299 = vmatprep.subr.bf16.mxu0 0
      %300 = vmatpush1.bf16.msra.mxu0 0
      %301 = vmatprep.subr.bf16.mxu0 0
      %302 = vmatpush1.bf16.msra.mxu0 0
      %303 = vmatprep.subr.bf16.mxu0 0
      %304 = vmatpush1.bf16.msra.mxu0 0
      %305 = vmatprep.subr.bf16.mxu0 0
      %306 = vmatpush1.bf16.msra.mxu0 0
      %307 = vmatprep.mubr.bf16.mxu0 0
      %308 = vmatmul.mubr.bf16.gmra.mrb[0].mxu0 %v270
      %v309 = vpop.f32.mrb[0].mxu0
      %v310 = vadd.f32 %v255, %v309
      %v311 = vpop.f32.mrb[0].mxu0
      %v312 = vpop.f32.mrb[0].mxu0
      %v313 = vadd.f32 %v258, %v312
      %v314 = vpop.f32.mrb[0].mxu0
      %315 = vmatprep.mubr.bf16.mxu0 0
      %316 = vmatmul.mubr.bf16.gmra.mrb[0].mxu0 %v273
      %v317 = vpop.f32.mrb[0].mxu0
      %v318 = vadd.f32 %v263, %v317
      %v319 = vpop.f32.mrb[0].mxu0
      %v320 = vpop.f32.mrb[0].mxu0
      %v321 = vadd.f32 %v266, %v320
      %v322 = vpop.f32.mrb[0].mxu0
      %323 = vdwg.mxu0
      %s324 = scalar_lea.vmem %s1, 64
      %v325 = vld [vmem:[%s324] sm:$0xff]
      %v326 = vld [vmem:[%s324 + $0x8] sm:$0xff]
      %v327 = vld [vmem:[%s324 + $0x10] sm:$0xff]
      %v328 = vld [vmem:[%s324 + $0x18] sm:$0xff]
      %v329 = vpack.c.bf16 %v326, %v325
      %v330 = vpack.c.bf16 %v328, %v327
      %331 = vrot.lane.b32.xlu0 %v180, 125
      %v332 = vpop.permute.xlu0 %331
      %333 = vrot.lane.b32.xlu0 %v181, 125
      %v334 = vpop.permute.xlu0 %333
      %335 = vrot.lane.b32.xlu0 %v182, 125
      %v336 = vpop.permute.xlu0 %335
      %337 = vrot.lane.b32.xlu0 %v183, 125
      %v338 = vpop.permute.xlu0 %337
      %v344 = vsel %vm213, %v329, 0
      %v347 = vsel %vm213, %v330, 0
      %349 = vmatprep.subr.bf16.mxu0 0
      %350 = vmatpush1.bf16.msra.mxu0 %v332
      %351 = vmatprep.subr.bf16.mxu0 0
      %352 = vmatpush1.bf16.msra.mxu0 %v334
      %353 = vmatprep.subr.bf16.mxu0 0
      %354 = vmatpush1.bf16.msra.mxu0 %v336
      %355 = vmatprep.subr.bf16.mxu0 0
      %356 = vmatpush1.bf16.msra.mxu0 %v338
      %357 = vmatprep.subr.bf16.mxu0 0
      %358 = vmatpush1.bf16.msra.mxu0 0
      %359 = vmatprep.subr.bf16.mxu0 0
      %360 = vmatpush1.bf16.msra.mxu0 0
      %361 = vmatprep.subr.bf16.mxu0 0
      %362 = vmatpush1.bf16.msra.mxu0 0
      %363 = vmatprep.subr.bf16.mxu0 0
      %364 = vmatpush1.bf16.msra.mxu0 0
      %365 = vmatprep.subr.bf16.mxu0 0
      %366 = vmatpush1.bf16.msra.mxu0 0
      %367 = vmatprep.subr.bf16.mxu0 0
      %368 = vmatpush1.bf16.msra.mxu0 0
      %369 = vmatprep.subr.bf16.mxu0 0
      %370 = vmatpush1.bf16.msra.mxu0 0
      %371 = vmatprep.subr.bf16.mxu0 0
      %372 = vmatpush1.bf16.msra.mxu0 0
      %373 = vmatprep.subr.bf16.mxu0 0
      %374 = vmatpush1.bf16.msra.mxu0 0
      %375 = vmatprep.subr.bf16.mxu0 0
      %376 = vmatpush1.bf16.msra.mxu0 0
      %377 = vmatprep.subr.bf16.mxu0 0
      %378 = vmatpush1.bf16.msra.mxu0 0
      %379 = vmatprep.subr.bf16.mxu0 0
      %380 = vmatpush1.bf16.msra.mxu0 0
      %381 = vmatprep.mubr.bf16.mxu0 0
      %382 = vmatmul.mubr.bf16.gmra.mrb[0].mxu0 %v344
      %v383 = vpop.f32.mrb[0].mxu0
      %v384 = vadd.f32 0.0, %v383
      %v385 = vpop.f32.mrb[0].mxu0
      %v386 = vpop.f32.mrb[0].mxu0
      %v387 = vadd.f32 0.0, %v386
      %v388 = vpop.f32.mrb[0].mxu0
      %389 = vmatprep.mubr.bf16.mxu0 0
      %390 = vmatmul.mubr.bf16.gmra.mrb[0].mxu0 %v347
      %v391 = vpop.f32.mrb[0].mxu0
      %v392 = vadd.f32 0.0, %v391
      %v393 = vpop.f32.mrb[0].mxu0
      %v394 = vpop.f32.mrb[0].mxu0
      %v395 = vadd.f32 0.0, %v394
      %v396 = vpop.f32.mrb[0].mxu0
      %397 = vdwg.mxu0
      %v398 = vadd.f32 %v310, %v384
      %v399 = vadd.f32 %v313, %v387
      %v400 = vadd.f32 %v318, %v392
      %v401 = vadd.f32 %v321, %v395
      %s402 = scalar_lea.vmem %s1, 96
      %v403 = vld [vmem:[%s402] sm:$0xff]
      %v404 = vld [vmem:[%s402 + $0x8] sm:$0xff]
      %v405 = vld [vmem:[%s402 + $0x10] sm:$0xff]
      %v406 = vld [vmem:[%s402 + $0x18] sm:$0xff]
      %v407 = vpack.c.bf16 %v404, %v403
      %v408 = vpack.c.bf16 %v406, %v405
      %409 = vrot.lane.b32.xlu0 %v180, 124
      %v410 = vpop.permute.xlu0 %409
      %411 = vrot.lane.b32.xlu0 %v181, 124
      %v412 = vpop.permute.xlu0 %411
      %413 = vrot.lane.b32.xlu0 %v182, 124
      %v414 = vpop.permute.xlu0 %413
      %415 = vrot.lane.b32.xlu0 %v183, 124
      %v416 = vpop.permute.xlu0 %415
      %v422 = vsel %vm213, %v407, 0
      %v425 = vsel %vm213, %v408, 0
      %427 = vmatprep.subr.bf16.mxu0 0
      %428 = vmatpush1.bf16.msra.mxu0 %v410
      %429 = vmatprep.subr.bf16.mxu0 0
      %430 = vmatpush1.bf16.msra.mxu0 %v412
      %431 = vmatprep.subr.bf16.mxu0 0
      %432 = vmatpush1.bf16.msra.mxu0 %v414
      %433 = vmatprep.subr.bf16.mxu0 0
      %434 = vmatpush1.bf16.msra.mxu0 %v416
      %435 = vmatprep.subr.bf16.mxu0 0
      %436 = vmatpush1.bf16.msra.mxu0 0
      %437 = vmatprep.subr.bf16.mxu0 0
      %438 = vmatpush1.bf16.msra.mxu0 0
      %439 = vmatprep.subr.bf16.mxu0 0
      %440 = vmatpush1.bf16.msra.mxu0 0
      %441 = vmatprep.subr.bf16.mxu0 0
      %442 = vmatpush1.bf16.msra.mxu0 0
      %443 = vmatprep.subr.bf16.mxu0 0
      %444 = vmatpush1.bf16.msra.mxu0 0
      %445 = vmatprep.subr.bf16.mxu0 0
      %446 = vmatpush1.bf16.msra.mxu0 0
      %447 = vmatprep.subr.bf16.mxu0 0
      %448 = vmatpush1.bf16.msra.mxu0 0
      %449 = vmatprep.subr.bf16.mxu0 0
      %450 = vmatpush1.bf16.msra.mxu0 0
      %451 = vmatprep.subr.bf16.mxu0 0
      %452 = vmatpush1.bf16.msra.mxu0 0
      %453 = vmatprep.subr.bf16.mxu0 0
      %454 = vmatpush1.bf16.msra.mxu0 0
      %455 = vmatprep.subr.bf16.mxu0 0
      %456 = vmatpush1.bf16.msra.mxu0 0
      %457 = vmatprep.subr.bf16.mxu0 0
      %458 = vmatpush1.bf16.msra.mxu0 0
      %459 = vmatprep.mubr.bf16.mxu0 0
      %460 = vmatmul.mubr.bf16.gmra.mrb[0].mxu0 %v422
      %v461 = vpop.f32.mrb[0].mxu0
      %v462 = vadd.f32 0.0, %v461
      %v463 = vpop.f32.mrb[0].mxu0
      %v464 = vpop.f32.mrb[0].mxu0
      %v465 = vadd.f32 0.0, %v464
      %v466 = vpop.f32.mrb[0].mxu0
      %467 = vmatprep.mubr.bf16.mxu0 0
      %468 = vmatmul.mubr.bf16.gmra.mrb[0].mxu0 %v425
      %v469 = vpop.f32.mrb[0].mxu0
      %v470 = vadd.f32 0.0, %v469
      %v471 = vpop.f32.mrb[0].mxu0
      %v472 = vpop.f32.mrb[0].mxu0
      %v473 = vadd.f32 0.0, %v472
      %v474 = vpop.f32.mrb[0].mxu0
      %475 = vdwg.mxu0
      %v476 = vadd.f32 %v398, %v462
      %v477 = vadd.f32 %v399, %v465
      %v478 = vadd.f32 %v400, %v470
      %v479 = vadd.f32 %v401, %v473
      %v480 = vld [vmem:[%s2] sm:$0xff]
      %v481 = vld [vmem:[%s2 + $0x8] sm:$0xff]
      %v482 = vld [vmem:[%s2 + $0x10] sm:$0xff]
      %v483 = vld [vmem:[%s2 + $0x18] sm:$0xff]
      %485 = vset.pattern.permute.xlu0 0
      %486 = vperm.xlu0 %485, %v480
      %v487 = vpop.permute.xlu0 %486
      %490 = vset.pattern.permute.xlu0 0
      %491 = vperm.xlu0 %490, %v481
      %v492 = vpop.permute.xlu0 %491
      %495 = vset.pattern.permute.xlu0 0
      %496 = vperm.xlu0 %495, %v482
      %v497 = vpop.permute.xlu0 %496
      %500 = vset.pattern.permute.xlu0 0
      %501 = vperm.xlu0 %500, %v483
      %v502 = vpop.permute.xlu0 %501
      %v504 = vadd.f32 %v476, %v487
      %v505 = vadd.f32 %v477, %v492
      %v506 = vadd.f32 %v478, %v497
      %v507 = vadd.f32 %v479, %v502
      %v508 = vmax.f32 %v504, 0.0
      %v509 = vmax.f32 %v505, 0.0
      %v510 = vmax.f32 %v506, 0.0
      %v511 = vmax.f32 %v507, 0.0
      %vm512 = vcmask 39936
      %513 = vst.msk [vmem:[%s170] sm:$0xff] %vm512, %v508
      %514 = vst.msk [vmem:[%s170 + $0x8] sm:$0xff] %vm512, %v509
      %515 = vst.msk [vmem:[%s170 + $0x10] sm:$0xff] %vm512, %v510
      %516 = vst.msk [vmem:[%s170 + $0x18] sm:$0xff] %vm512, %v511
      %p517 = scmp.lt.s32.totalorder %s14, 1
      %s518 = scalar_select %p517, %s14, 1
      %s519 = smul.addr %s518, 4
      %s520 = smul.addr %s519, 8
      %s521 = scalar_lea.vmem %s3, %s520
      // Predicated region
      $region33: #{model_step.17} parent=31 // pred_check
        %p522 = pneg %p100
      $region34: #{model_step.17} parent=31 // pred_check_branch
        %524 = sbr.rel (%p522) target = $region36
      $region35: #{model_step.17} parent=31 // pred_region
        _
      $region36: #{model_step.17} parent=31 // pred_fallthru
        _
    $region32: #{model_step.17} parent=5 // pred_fallthru
      _
    %p525 = scmp.le.s32.totalorder 2, %s9
    // Predicated region
    $region37: #{model_step.17} parent=5 // pred_check
      %p526 = pneg %p525
    $region38: #{model_step.17} parent=5 // pred_check_branch
      %528 = sbr.rel (%p526) target = $region40
    $region39: #{model_step.17} parent=5 // pred_region
      %s529 = ssub.s32 %s9, 2
      // Predicated region
      $region41: #{model_step.17} parent=39 // pred_check
        %p530 = pneg %p106
      $region42: #{model_step.17} parent=39 // pred_check_branch
        %532 = sbr.rel (%p530) target = $region44
      $region43: #{model_step.17} parent=39 // pred_region
        %p533 = scmp.lt.s32.totalorder %s15, 1
        %s534 = scalar_select %p533, %s15, 1
        %s535 = smul.addr %s534, 4
        %s536 = smul.addr %s535, 8
        %s537 = scalar_lea.vmem %s3, %s536
      $region44: #{model_step.17} parent=39 // pred_fallthru
        _
    $region40: #{model_step.17} parent=5 // pred_fallthru
      _
  $region6: #{model_step.17} parent=0 // loop_footer
    %s13 = sadd.s32 1, %s9
  $region7: #{model_step.17} parent=0 // loop_footer_branch
    %8 = sbr.rel target = $region3
  $region8: #{model_step.17} parent=0 // loop_exit
    _

// kernel: model_step.20
$region0: #{model_step.20}
  #allocation0 [shape = 'u32[]', space=smem, size = 0x4, offset = 0x4, fixed_abs, tag = 'smem constant byte address 0x4 - core index']
  #allocation1 [shape = 'u32[144,128]{1,0:T(1,128)}', space=vmem, size = 0x12000, scoped, tag = 'internal scratch']
  %s0 = inlined_call_operand.vmem [shape: f32[2,32,1], index: 0, kind: input, shape index: {}]
  %s1 = inlined_call_operand.vmem [shape: f32[1,16,32], index: 1, kind: input, shape index: {}]
  %s2 = inlined_call_operand.vmem [shape: f32[16,1], index: 2, kind: input, shape index: {}]
  %s3 = inlined_call_operand.vmem [shape: f32[2,16,1], index: 3, kind: output, shape index: {}]
  %s4 = sld [smem:[#allocation0]]
  $region45: #{model_step.20} parent=0
    _
  %s6 = ssub.s32 1, %s4
  %s7 = scalar_select 0, %s6, %s4
  loop: start=0, step=1, limit=4
  $region2: #{model_step.20} parent=0 // loop_pre_header
    _
  $region3: #{model_step.20} parent=0 // loop_header
    %s9 = sphi 0, %s13
    %p10 = scmp.ge.s32.totalorder %s9, 4
    %s19 = sphi 0, %s21
    %s22 = sphi 0, %s19
    %s23 = sphi 0, %s22
    %s39 = sphi 0, %s23
    %s43 = sphi 0, %s43
    %s45 = sphi 0, %s43
    %s46 = sphi 0, %s45
    %s60 = sphi 0, %s46
    %s64 = sphi 0, %s64
    %s66 = sphi 0, %s64
    %s67 = sphi 0, %s66
    %s81 = sphi 0, %s67
    %s87 = sphi 0, %s89
    %s90 = sphi 0, %s87
    %s91 = sphi 0, %s90
    %s107 = sphi 0, %s91
  $region4: #{model_step.20} parent=0 // loop_header_branch
    %12 = sbr.rel (%p10) target = $region8
  $region5: #{model_step.20} parent=0 // loop_body
    %s14 = ssub.s32 %s9, 1
    %s15 = ssub.s32 %s9, 2
    %s16 = sadd.s32 %s9, 1
    %s17 = ssub.s32 %s9, %s16
    %p18 = scmp.eq.s32.totalorder %s17, 0
    %s20 = sadd.s32 %s19, 1
    %s21 = scalar_select %p18, %s19, %s20
    %p24 = pneg %p18
    %p25 = scmp.eq.s32.totalorder %s9, 1
    %p26 = por %p24, %p25
    %p27 = scmp.ne.s32.totalorder %s19, %s22
    %p28 = scmp.eq.s32.totalorder %s9, 0
    %p29 = por %p27, %p28
    %p30 = scmp.ne.s32.totalorder %s19, %s22
    %p31 = scmp.eq.s32.totalorder %s14, 1
    %p32 = por %p30, %p31
    %p33 = scmp.ne.s32.totalorder %s22, %s23
    %p34 = scmp.eq.s32.totalorder %s14, 0
    %p35 = por %p33, %p34
    %p36 = scmp.ne.s32.totalorder %s22, %s23
    %p37 = scmp.eq.s32.totalorder %s15, 1
    %p38 = por %p36, %p37
    %p40 = scmp.ne.s32.totalorder %s23, %s39
    %p41 = scmp.eq.s32.totalorder %s15, 0
    %p42 = por %p40, %p41
    %s44 = sadd.s32 %s43, 1
    %p47 = scmp.eq.s32.totalorder %s9, 1
    %p48 = scmp.ne.s32.totalorder %s43, %s45
    %p49 = scmp.eq.s32.totalorder %s9, 0
    %p50 = por %p48, %p49
    %p51 = scmp.ne.s32.totalorder %s43, %s45
    %p52 = scmp.eq.s32.totalorder %s14, 1
    %p53 = por %p51, %p52
    %p54 = scmp.ne.s32.totalorder %s45, %s46
    %p55 = scmp.eq.s32.totalorder %s14, 0
    %p56 = por %p54, %p55
    %p57 = scmp.ne.s32.totalorder %s45, %s46
    %p58 = scmp.eq.s32.totalorder %s15, 1
    %p59 = por %p57, %p58
    %p61 = scmp.ne.s32.totalorder %s46, %s60
    %p62 = scmp.eq.s32.totalorder %s15, 0
    %p63 = por %p61, %p62
    %s65 = sadd.s32 %s64, 1
    %p68 = scmp.eq.s32.totalorder %s9, 1
    %p69 = scmp.ne.s32.totalorder %s64, %s66
    %p70 = scmp.eq.s32.totalorder %s9, 0
    %p71 = por %p69, %p70
    %p72 = scmp.ne.s32.totalorder %s64, %s66
    %p73 = scmp.eq.s32.totalorder %s14, 1
    %p74 = por %p72, %p73
    %p75 = scmp.ne.s32.totalorder %s66, %s67
    %p76 = scmp.eq.s32.totalorder %s14, 0
    %p77 = por %p75, %p76
    %p78 = scmp.ne.s32.totalorder %s66, %s67
    %p79 = scmp.eq.s32.totalorder %s15, 1
    %p80 = por %p78, %p79
    %p82 = scmp.ne.s32.totalorder %s67, %s81
    %p83 = scmp.eq.s32.totalorder %s15, 0
    %p84 = por %p82, %p83
    %s85 = ssub.s32 %s9, %s16
    %p86 = scmp.eq.s32.totalorder %s85, 0
    %s88 = sadd.s32 %s87, 1
    %s89 = scalar_select %p86, %s87, %s88
    %p92 = pneg %p86
    %p93 = scmp.eq.s32.totalorder %s9, 1
    %p94 = por %p92, %p93
    %p95 = scmp.ne.s32.totalorder %s87, %s90
    %p96 = scmp.eq.s32.totalorder %s9, 0
    %p97 = por %p95, %p96
    %p98 = scmp.ne.s32.totalorder %s87, %s90
    %p99 = scmp.eq.s32.totalorder %s14, 1
    %p100 = por %p98, %p99
    %p101 = scmp.ne.s32.totalorder %s90, %s91
    %p102 = scmp.eq.s32.totalorder %s14, 0
    %p103 = por %p101, %p102
    %p104 = scmp.ne.s32.totalorder %s90, %s91
    %p105 = scmp.eq.s32.totalorder %s15, 1
    %p106 = por %p104, %p105
    %p108 = scmp.ne.s32.totalorder %s91, %s107
    %p109 = scmp.eq.s32.totalorder %s15, 0
    %p110 = por %p108, %p109
    %p111 = scmp.le.s32.totalorder 1, %s9
    %p112 = scmp.lt.s32.totalorder %s9, 3
    %p113 = pnand %p111, %p112
    %p114 = pneg %p113
    // Predicated region
    $region9: #{model_step.20} parent=5 // pred_check
      _
    $region10: #{model_step.20} parent=5 // pred_check_branch
      %116 = sbr.rel (%p113) target = $region12
    $region11: #{model_step.20} parent=5 // pred_region
      %s117 = ssub.s32 %s9, 1
      // Predicated region
      $region13: #{model_step.20} parent=11 // pred_check
        %p118 = pneg %p56
      $region14: #{model_step.20} parent=11 // pred_check_branch
        %120 = sbr.rel (%p118) target = $region16
      $region15: #{model_step.20} parent=11 // pred_region
        _
      $region16: #{model_step.20} parent=11 // pred_fallthru
        _
      // Predicated region
      $region17: #{model_step.20} parent=11 // pred_check
        %p121 = pneg %p77
      $region18: #{model_step.20} parent=11 // pred_check_branch
        %123 = sbr.rel (%p121) target = $region20
      $region19: #{model_step.20} parent=11 // pred_region
        _
      $region20: #{model_step.20} parent=11 // pred_fallthru
        _
    $region12: #{model_step.20} parent=5 // pred_fallthru
      _
    %p124 = scmp.lt.s32.totalorder %s9, 2
    // Predicated region
    $region21: #{model_step.20} parent=5 // pred_check
      %p125 = pneg %p124
    $region22: #{model_step.20} parent=5 // pred_check_branch
      %127 = sbr.rel (%p125) target = $region24
    $region23: #{model_step.20} parent=5 // pred_region
      // Predicated region
      $region25: #{model_step.20} parent=23 // pred_check
        %p128 = pneg %p29
      $region26: #{model_step.20} parent=23 // pred_check_branch
        %130 = sbr.rel (%p128) target = $region28
      $region27: #{model_step.20} parent=23 // pred_region
        %p131 = scmp.lt.s32.totalorder %s9, 1
        %s132 = scalar_select %p131, %s9, 1
        %s133 = smul.addr %s132, 4
        %s134 = smul.addr %s133, 8
        %s135 = scalar_lea.vmem %s0, %s134
      $region28: #{model_step.20} parent=23 // pred_fallthru
        _
    $region24: #{model_step.20} parent=5 // pred_fallthru
      _
    %p136 = scmp.le.s32.totalorder 1, %s9
    %p137 = scmp.lt.s32.totalorder %s9, 3
    %p138 = pnand %p136, %p137
    %p139 = pneg %p138
    // Predicated region
    $region29: #{model_step.20} parent=5 // pred_check
      _
    $region30: #{model_step.20} parent=5 // pred_check_branch
      %141 = sbr.rel (%p138) target = $region32
    $region31: #{model_step.20} parent=5 // pred_region
      %s142 = ssub.s32 %s9, 1
      %p143 = scmp.lt.s32.totalorder %s14, 1
      %s144 = scalar_select %p143, %s14, 1
      %s145 = smul.addr %s144, 4
      %s146 = smul.addr %s145, 8
      %s147 = scalar_lea.vmem %s0, %s146
      %p148 = pneg %p35
      %p149 = pneg %p32
      %p150 = pneg %p56
      %p151 = pneg %p53
      %p152 = pneg %p77
      %p153 = pneg %p74
      %p154 = pneg %p103
      %p155 = pneg %p100
      %p156 = scmp.lt.s32.totalorder %s14, 1
      %s157 = scalar_select %p156, %s14, 1
      %s158 = smul.addr %s157, 2
      %s159 = smul.addr %s158, 8
      %s160 = scalar_lea.vmem %s3, %s159
      %p161 = scmp.lt.s32.totalorder %s14, 1
      %s162 = scalar_select %p161, %s14, 1
      %s163 = smul.addr %s162, 4
      %s164 = smul.addr %s163, 8
      %s165 = scalar_lea.vmem %s0, %s164
      %p166 = scmp.lt.s32.totalorder %s14, 1
      %s167 = scalar_select %p166, %s14, 1
      %s168 = smul.addr %s167, 2
      %s169 = smul.addr %s168, 8
      %s170 = scalar_lea.vmem %s3, %s169
      %v172 = vld [vmem:[%s165] sm:$0xff]
      %v173 = vld [vmem:[%s165 + $0x8] sm:$0xff]
      %v174 = vld [vmem:[%s165 + $0x10] sm:$0xff]
      %v175 = vld [vmem:[%s165 + $0x18] sm:$0xff]
      %v176 = vpack.c.bf16 %v173, %v172
      %v177 = vpack.c.bf16 %v175, %v174
      %v178 = vld [vmem:[%s1] sm:$0xff]
      %v179 = vld [vmem:[%s1 + $0x8] sm:$0xff]
      %v180 = vpack.c.bf16 %v179, %v178
      %v181 = vld [vmem:[%s2] sm:$0xff]
      %v182 = vld [vmem:[%s2 + $0x8] sm:$0xff]
      %vm183 = vcmask 261120
      %v185 = vsel %vm183, %v180, 0
      %187 = vmatprep.subr.bf16.mxu0 0
      %188 = vmatpush1.bf16.msra.mxu0 %v176
      %189 = vmatprep.subr.bf16.mxu0 0
      %190 = vmatpush1.bf16.msra.mxu0 %v177
      %191 = vmatprep.subr.bf16.mxu0 0
      %192 = vmatpush1.bf16.msra.mxu0 0
      %193 = vmatprep.subr.bf16.mxu0 0
      %194 = vmatpush1.bf16.msra.mxu0 0
      %195 = vmatprep.subr.bf16.mxu0 0
      %196 = vmatpush1.bf16.msra.mxu0 0
      %197 = vmatprep.subr.bf16.mxu0 0
      %198 = vmatpush1.bf16.msra.mxu0 0
      %199 = vmatprep.subr.bf16.mxu0 0
      %200 = vmatpush1.bf16.msra.mxu0 0
      %201 = vmatprep.subr.bf16.mxu0 0
      %202 = vmatpush1.bf16.msra.mxu0 0
      %203 = vmatprep.subr.bf16.mxu0 0
      %204 = vmatpush1.bf16.msra.mxu0 0
      %205 = vmatprep.subr.bf16.mxu0 0
      %206 = vmatpush1.bf16.msra.mxu0 0
      %207 = vmatprep.subr.bf16.mxu0 0
      %208 = vmatpush1.bf16.msra.mxu0 0
      %209 = vmatprep.subr.bf16.mxu0 0
      %210 = vmatpush1.bf16.msra.mxu0 0
      %211 = vmatprep.subr.bf16.mxu0 0
      %212 = vmatpush1.bf16.msra.mxu0 0
      %213 = vmatprep.subr.bf16.mxu0 0
      %214 = vmatpush1.bf16.msra.mxu0 0
      %215 = vmatprep.subr.bf16.mxu0 0
      %216 = vmatpush1.bf16.msra.mxu0 0
      %217 = vmatprep.subr.bf16.mxu0 0
      %218 = vmatpush1.bf16.msra.mxu0 0
      %219 = vmatprep.mubr.bf16.mxu0 0
      %220 = vmatmul.mubr.bf16.gmra.mrb[0].mxu0 %v185
      %v221 = vpop.f32.mrb[0].mxu0
      %v222 = vadd.f32 %v181, %v221
      %v223 = vpop.f32.mrb[0].mxu0
      %v224 = vpop.f32.mrb[0].mxu0
      %v225 = vadd.f32 %v182, %v224
      %v226 = vpop.f32.mrb[0].mxu0
      %227 = vdwg.mxu0
      %v228 = vmax.f32 %v222, 0.0
      %v229 = vmax.f32 %v225, 0.0
      %vm230 = vcmask 7168
      %231 = vst.msk [vmem:[%s170] sm:$0xff] %vm230, %v228
      %232 = vst.msk [vmem:[%s170 + $0x8] sm:$0xff] %vm230, %v229
      %p233 = scmp.lt.s32.totalorder %s14, 1
      %s234 = scalar_select %p233, %s14, 1
      %s235 = smul.addr %s234, 2
      %s236 = smul.addr %s235, 8
      %s237 = scalar_lea.vmem %s3, %s236
      // Predicated region
      $region33: #{model_step.20} parent=31 // pred_check
        %p238 = pneg %p100
      $region34: #{model_step.20} parent=31 // pred_check_branch
        %240 = sbr.rel (%p238) target = $region36
      $region35: #{model_step.20} parent=31 // pred_region
        _
      $region36: #{model_step.20} parent=31 // pred_fallthru
        _
    $region32: #{model_step.20} parent=5 // pred_fallthru
      _
    %p241 = scmp.le.s32.totalorder 2, %s9
    // Predicated region
    $region37: #{model_step.20} parent=5 // pred_check
      %p242 = pneg %p241
    $region38: #{model_step.20} parent=5 // pred_check_branch
      %244 = sbr.rel (%p242) target = $region40
    $region39: #{model_step.20} parent=5 // pred_region
      %s245 = ssub.s32 %s9, 2
      // Predicated region
      $region41: #{model_step.20} parent=39 // pred_check
        %p246 = pneg %p106
      $region42: #{model_step.20} parent=39 // pred_check_branch
        %248 = sbr.rel (%p246) target = $region44
      $region43: #{model_step.20} parent=39 // pred_region
        %p249 = scmp.lt.s32.totalorder %s15, 1
        %s250 = scalar_select %p249, %s15, 1
        %s251 = smul.addr %s250, 2
        %s252 = smul.addr %s251, 8
        %s253 = scalar_lea.vmem %s3, %s252
      $region44: #{model_step.20} parent=39 // pred_fallthru
        _
    $region40: #{model_step.20} parent=5 // pred_fallthru
      _
  $region6: #{model_step.20} parent=0 // loop_footer
    %s13 = sadd.s32 1, %s9
  $region7: #{model_step.20} parent=0 // loop_footer_branch
    %8 = sbr.rel target = $region3
  $region8: #{model_step.20} parent=0 // loop_exit
    _

// kernel: model_step.18
$region0: #{model_step.18}
  #allocation0 [shape = 'u32[]', space=smem, size = 0x4, offset = 0x4, fixed_abs, tag = 'smem constant byte address 0x4 - core index']
  #allocation1 [shape = 'u32[144,128]{1,0:T(1,128)}', space=vmem, size = 0x12000, scoped, tag = 'internal scratch']
  %s0 = inlined_call_operand.vmem [shape: f32[2,32,4], index: 0, kind: input, shape index: {}]
  %s1 = inlined_call_operand.vmem [shape: f32[1,16,32], index: 1, kind: input, shape index: {}]
  %s2 = inlined_call_operand.vmem [shape: f32[16,1], index: 2, kind: input, shape index: {}]
  %s3 = inlined_call_operand.vmem [shape: f32[2,16,4], index: 3, kind: output, shape index: {}]
  %s4 = sld [smem:[#allocation0]]
  $region45: #{model_step.18} parent=0
    _
  %s6 = ssub.s32 1, %s4
  %s7 = scalar_select 0, %s6, %s4
  loop: start=0, step=1, limit=4
  $region2: #{model_step.18} parent=0 // loop_pre_header
    _
  $region3: #{model_step.18} parent=0 // loop_header
    %s9 = sphi 0, %s13
    %p10 = scmp.ge.s32.totalorder %s9, 4
    %s19 = sphi 0, %s21
    %s22 = sphi 0, %s19
    %s23 = sphi 0, %s22
    %s39 = sphi 0, %s23
    %s43 = sphi 0, %s43
    %s45 = sphi 0, %s43
    %s46 = sphi 0, %s45
    %s60 = sphi 0, %s46
    %s64 = sphi 0, %s64
    %s66 = sphi 0, %s64
    %s67 = sphi 0, %s66
    %s81 = sphi 0, %s67
    %s87 = sphi 0, %s89
    %s90 = sphi 0, %s87
    %s91 = sphi 0, %s90
    %s107 = sphi 0, %s91
  $region4: #{model_step.18} parent=0 // loop_header_branch
    %12 = sbr.rel (%p10) target = $region8
  $region5: #{model_step.18} parent=0 // loop_body
    %s14 = ssub.s32 %s9, 1
    %s15 = ssub.s32 %s9, 2
    %s16 = sadd.s32 %s9, 1
    %s17 = ssub.s32 %s9, %s16
    %p18 = scmp.eq.s32.totalorder %s17, 0
    %s20 = sadd.s32 %s19, 1
    %s21 = scalar_select %p18, %s19, %s20
    %p24 = pneg %p18
    %p25 = scmp.eq.s32.totalorder %s9, 1
    %p26 = por %p24, %p25
    %p27 = scmp.ne.s32.totalorder %s19, %s22
    %p28 = scmp.eq.s32.totalorder %s9, 0
    %p29 = por %p27, %p28
    %p30 = scmp.ne.s32.totalorder %s19, %s22
    %p31 = scmp.eq.s32.totalorder %s14, 1
    %p32 = por %p30, %p31
    %p33 = scmp.ne.s32.totalorder %s22, %s23
    %p34 = scmp.eq.s32.totalorder %s14, 0
    %p35 = por %p33, %p34
    %p36 = scmp.ne.s32.totalorder %s22, %s23
    %p37 = scmp.eq.s32.totalorder %s15, 1
    %p38 = por %p36, %p37
    %p40 = scmp.ne.s32.totalorder %s23, %s39
    %p41 = scmp.eq.s32.totalorder %s15, 0
    %p42 = por %p40, %p41
    %s44 = sadd.s32 %s43, 1
    %p47 = scmp.eq.s32.totalorder %s9, 1
    %p48 = scmp.ne.s32.totalorder %s43, %s45
    %p49 = scmp.eq.s32.totalorder %s9, 0
    %p50 = por %p48, %p49
    %p51 = scmp.ne.s32.totalorder %s43, %s45
    %p52 = scmp.eq.s32.totalorder %s14, 1
    %p53 = por %p51, %p52
    %p54 = scmp.ne.s32.totalorder %s45, %s46
    %p55 = scmp.eq.s32.totalorder %s14, 0
    %p56 = por %p54, %p55
    %p57 = scmp.ne.s32.totalorder %s45, %s46
    %p58 = scmp.eq.s32.totalorder %s15, 1
    %p59 = por %p57, %p58
    %p61 = scmp.ne.s32.totalorder %s46, %s60
    %p62 = scmp.eq.s32.totalorder %s15, 0
    %p63 = por %p61, %p62
    %s65 = sadd.s32 %s64, 1
    %p68 = scmp.eq.s32.totalorder %s9, 1
    %p69 = scmp.ne.s32.totalorder %s64, %s66
    %p70 = scmp.eq.s32.totalorder %s9, 0
    %p71 = por %p69, %p70
    %p72 = scmp.ne.s32.totalorder %s64, %s66
    %p73 = scmp.eq.s32.totalorder %s14, 1
    %p74 = por %p72, %p73
    %p75 = scmp.ne.s32.totalorder %s66, %s67
    %p76 = scmp.eq.s32.totalorder %s14, 0
    %p77 = por %p75, %p76
    %p78 = scmp.ne.s32.totalorder %s66, %s67
    %p79 = scmp.eq.s32.totalorder %s15, 1
    %p80 = por %p78, %p79
    %p82 = scmp.ne.s32.totalorder %s67, %s81
    %p83 = scmp.eq.s32.totalorder %s15, 0
    %p84 = por %p82, %p83
    %s85 = ssub.s32 %s9, %s16
    %p86 = scmp.eq.s32.totalorder %s85, 0
    %s88 = sadd.s32 %s87, 1
    %s89 = scalar_select %p86, %s87, %s88
    %p92 = pneg %p86
    %p93 = scmp.eq.s32.totalorder %s9, 1
    %p94 = por %p92, %p93
    %p95 = scmp.ne.s32.totalorder %s87, %s90
    %p96 = scmp.eq.s32.totalorder %s9, 0
    %p97 = por %p95, %p96
    %p98 = scmp.ne.s32.totalorder %s87, %s90
    %p99 = scmp.eq.s32.totalorder %s14, 1
    %p100 = por %p98, %p99
    %p101 = scmp.ne.s32.totalorder %s90, %s91
    %p102 = scmp.eq.s32.totalorder %s14, 0
    %p103 = por %p101, %p102
    %p104 = scmp.ne.s32.totalorder %s90, %s91
    %p105 = scmp.eq.s32.totalorder %s15, 1
    %p106 = por %p104, %p105
    %p108 = scmp.ne.s32.totalorder %s91, %s107
    %p109 = scmp.eq.s32.totalorder %s15, 0
    %p110 = por %p108, %p109
    %p111 = scmp.le.s32.totalorder 1, %s9
    %p112 = scmp.lt.s32.totalorder %s9, 3
    %p113 = pnand %p111, %p112
    %p114 = pneg %p113
    // Predicated region
    $region9: #{model_step.18} parent=5 // pred_check
      _
    $region10: #{model_step.18} parent=5 // pred_check_branch
      %116 = sbr.rel (%p113) target = $region12
    $region11: #{model_step.18} parent=5 // pred_region
      %s117 = ssub.s32 %s9, 1
      // Predicated region
      $region13: #{model_step.18} parent=11 // pred_check
        %p118 = pneg %p56
      $region14: #{model_step.18} parent=11 // pred_check_branch
        %120 = sbr.rel (%p118) target = $region16
      $region15: #{model_step.18} parent=11 // pred_region
        _
      $region16: #{model_step.18} parent=11 // pred_fallthru
        _
      // Predicated region
      $region17: #{model_step.18} parent=11 // pred_check
        %p121 = pneg %p77
      $region18: #{model_step.18} parent=11 // pred_check_branch
        %123 = sbr.rel (%p121) target = $region20
      $region19: #{model_step.18} parent=11 // pred_region
        _
      $region20: #{model_step.18} parent=11 // pred_fallthru
        _
    $region12: #{model_step.18} parent=5 // pred_fallthru
      _
    %p124 = scmp.lt.s32.totalorder %s9, 2
    // Predicated region
    $region21: #{model_step.18} parent=5 // pred_check
      %p125 = pneg %p124
    $region22: #{model_step.18} parent=5 // pred_check_branch
      %127 = sbr.rel (%p125) target = $region24
    $region23: #{model_step.18} parent=5 // pred_region
      // Predicated region
      $region25: #{model_step.18} parent=23 // pred_check
        %p128 = pneg %p29
      $region26: #{model_step.18} parent=23 // pred_check_branch
        %130 = sbr.rel (%p128) target = $region28
      $region27: #{model_step.18} parent=23 // pred_region
        %p131 = scmp.lt.s32.totalorder %s9, 1
        %s132 = scalar_select %p131, %s9, 1
        %s133 = smul.addr %s132, 4
        %s134 = smul.addr %s133, 8
        %s135 = scalar_lea.vmem %s0, %s134
      $region28: #{model_step.18} parent=23 // pred_fallthru
        _
    $region24: #{model_step.18} parent=5 // pred_fallthru
      _
    %p136 = scmp.le.s32.totalorder 1, %s9
    %p137 = scmp.lt.s32.totalorder %s9, 3
    %p138 = pnand %p136, %p137
    %p139 = pneg %p138
    // Predicated region
    $region29: #{model_step.18} parent=5 // pred_check
      _
    $region30: #{model_step.18} parent=5 // pred_check_branch
      %141 = sbr.rel (%p138) target = $region32
    $region31: #{model_step.18} parent=5 // pred_region
      %s142 = ssub.s32 %s9, 1
      %p143 = scmp.lt.s32.totalorder %s14, 1
      %s144 = scalar_select %p143, %s14, 1
      %s145 = smul.addr %s144, 4
      %s146 = smul.addr %s145, 8
      %s147 = scalar_lea.vmem %s0, %s146
      %p148 = pneg %p35
      %p149 = pneg %p32
      %p150 = pneg %p56
      %p151 = pneg %p53
      %p152 = pneg %p77
      %p153 = pneg %p74
      %p154 = pneg %p103
      %p155 = pneg %p100
      %p156 = scmp.lt.s32.totalorder %s14, 1
      %s157 = scalar_select %p156, %s14, 1
      %s158 = smul.addr %s157, 2
      %s159 = smul.addr %s158, 8
      %s160 = scalar_lea.vmem %s3, %s159
      %p161 = scmp.lt.s32.totalorder %s14, 1
      %s162 = scalar_select %p161, %s14, 1
      %s163 = smul.addr %s162, 4
      %s164 = smul.addr %s163, 8
      %s165 = scalar_lea.vmem %s0, %s164
      %p166 = scmp.lt.s32.totalorder %s14, 1
      %s167 = scalar_select %p166, %s14, 1
      %s168 = smul.addr %s167, 2
      %s169 = smul.addr %s168, 8
      %s170 = scalar_lea.vmem %s3, %s169
      %v172 = vld [vmem:[%s165] sm:$0xff]
      %v173 = vld [vmem:[%s165 + $0x8] sm:$0xff]
      %v174 = vld [vmem:[%s165 + $0x10] sm:$0xff]
      %v175 = vld [vmem:[%s165 + $0x18] sm:$0xff]
      %v176 = vpack.c.bf16 %v173, %v172
      %v177 = vpack.c.bf16 %v175, %v174
      %v178 = vld [vmem:[%s1] sm:$0xff]
      %v179 = vld [vmem:[%s1 + $0x8] sm:$0xff]
      %v180 = vpack.c.bf16 %v179, %v178
      %v181 = vld [vmem:[%s2] sm:$0xff]
      %v182 = vld [vmem:[%s2 + $0x8] sm:$0xff]
      %184 = vset.pattern.permute.xlu0 0
      %185 = vperm.xlu0 %184, %v181
      %v186 = vpop.permute.xlu0 %185
      %189 = vset.pattern.permute.xlu0 0
      %190 = vperm.xlu0 %189, %v182
      %v191 = vpop.permute.xlu0 %190
      %vm193 = vcmask 261120
      %v195 = vsel %vm193, %v180, 0
      %197 = vmatprep.subr.bf16.mxu0 0
      %198 = vmatpush1.bf16.msra.mxu0 %v176
      %199 = vmatprep.subr.bf16.mxu0 0
      %200 = vmatpush1.bf16.msra.mxu0 %v177
      %201 = vmatprep.subr.bf16.mxu0 0
      %202 = vmatpush1.bf16.msra.mxu0 0
      %203 = vmatprep.subr.bf16.mxu0 0
      %204 = vmatpush1.bf16.msra.mxu0 0
      %205 = vmatprep.subr.bf16.mxu0 0
      %206 = vmatpush1.bf16.msra.mxu0 0
      %207 = vmatprep.subr.bf16.mxu0 0
      %208 = vmatpush1.bf16.msra.mxu0 0
      %209 = vmatprep.subr.bf16.mxu0 0
      %210 = vmatpush1.bf16.msra.mxu0 0
      %211 = vmatprep.subr.bf16.mxu0 0
      %212 = vmatpush1.bf16.msra.mxu0 0
      %213 = vmatprep.subr.bf16.mxu0 0
      %214 = vmatpush1.bf16.msra.mxu0 0
      %215 = vmatprep.subr.bf16.mxu0 0
      %216 = vmatpush1.bf16.msra.mxu0 0
      %217 = vmatprep.subr.bf16.mxu0 0
      %218 = vmatpush1.bf16.msra.mxu0 0
      %219 = vmatprep.subr.bf16.mxu0 0
      %220 = vmatpush1.bf16.msra.mxu0 0
      %221 = vmatprep.subr.bf16.mxu0 0
      %222 = vmatpush1.bf16.msra.mxu0 0
      %223 = vmatprep.subr.bf16.mxu0 0
      %224 = vmatpush1.bf16.msra.mxu0 0
      %225 = vmatprep.subr.bf16.mxu0 0
      %226 = vmatpush1.bf16.msra.mxu0 0
      %227 = vmatprep.subr.bf16.mxu0 0
      %228 = vmatpush1.bf16.msra.mxu0 0
      %229 = vmatprep.mubr.bf16.mxu0 0
      %230 = vmatmul.mubr.bf16.gmra.mrb[0].mxu0 %v195
      %v231 = vpop.f32.mrb[0].mxu0
      %v232 = vadd.f32 %v186, %v231
      %v233 = vpop.f32.mrb[0].mxu0
      %v234 = vpop.f32.mrb[0].mxu0
      %v235 = vadd.f32 %v191, %v234
      %v236 = vpop.f32.mrb[0].mxu0
      %237 = vdwg.mxu0
      %v238 = vmax.f32 %v232, 0.0
      %v239 = vmax.f32 %v235, 0.0
      %vm240 = vcmask 31744
      %241 = vst.msk [vmem:[%s170] sm:$0xff] %vm240, %v238
      %242 = vst.msk [vmem:[%s170 + $0x8] sm:$0xff] %vm240, %v239
      %p243 = scmp.lt.s32.totalorder %s14, 1
      %s244 = scalar_select %p243, %s14, 1
      %s245 = smul.addr %s244, 2
      %s246 = smul.addr %s245, 8
      %s247 = scalar_lea.vmem %s3, %s246
      // Predicated region
      $region33: #{model_step.18} parent=31 // pred_check
        %p248 = pneg %p100
      $region34: #{model_step.18} parent=31 // pred_check_branch
        %250 = sbr.rel (%p248) target = $region36
      $region35: #{model_step.18} parent=31 // pred_region
        _
      $region36: #{model_step.18} parent=31 // pred_fallthru
        _
    $region32: #{model_step.18} parent=5 // pred_fallthru
      _
    %p251 = scmp.le.s32.totalorder 2, %s9
    // Predicated region
    $region37: #{model_step.18} parent=5 // pred_check
      %p252 = pneg %p251
    $region38: #{model_step.18} parent=5 // pred_check_branch
      %254 = sbr.rel (%p252) target = $region40
    $region39: #{model_step.18} parent=5 // pred_region
      %s255 = ssub.s32 %s9, 2
      // Predicated region
      $region41: #{model_step.18} parent=39 // pred_check
        %p256 = pneg %p106
      $region42: #{model_step.18} parent=39 // pred_check_branch
        %258 = sbr.rel (%p256) target = $region44
      $region43: #{model_step.18} parent=39 // pred_region
        %p259 = scmp.lt.s32.totalorder %s15, 1
        %s260 = scalar_select %p259, %s15, 1
        %s261 = smul.addr %s260, 2
        %s262 = smul.addr %s261, 8
        %s263 = scalar_lea.vmem %s3, %s262
      $region44: #{model_step.18} parent=39 // pred_fallthru
        _
    $region40: #{model_step.18} parent=5 // pred_fallthru
      _
  $region6: #{model_step.18} parent=0 // loop_footer
    %s13 = sadd.s32 1, %s9
  $region7: #{model_step.18} parent=0 // loop_footer_branch
    %8 = sbr.rel target = $region3
  $region8: #{model_step.18} parent=0 // loop_exit
    _

// kernel: model_step.22
$region0: #{model_step.22}
  #allocation0 [shape = 'u32[]', space=smem, size = 0x4, offset = 0x4, fixed_abs, tag = 'smem constant byte address 0x4 - core index']
  #allocation1 [shape = 'u32[144,128]{1,0:T(1,128)}', space=vmem, size = 0x12000, scoped, tag = 'internal scratch']
  %s0 = inlined_call_operand.vmem [shape: f32[64,2], index: 0, kind: input, shape index: {}]
  %s1 = inlined_call_operand.vmem [shape: f32[2,4], index: 1, kind: input, shape index: {}]
  %s2 = inlined_call_operand.vmem [shape: f32[64,4], index: 2, kind: output, shape index: {}]
  %s3 = sld [smem:[#allocation0]]
  $region18: #{model_step.22} parent=0
    _
  %s5 = ssub.s32 1, %s3
  %s6 = scalar_select 0, %s5, %s3
  // Predicated region
  $region2: #{model_step.22} parent=0 // pred_check
    _
  $region3: #{model_step.22} parent=0 // pred_check_branch
    %8 = sbr.rel (0) target = $region5
  $region4: #{model_step.22} parent=0 // pred_region
    _
  $region5: #{model_step.22} parent=0 // pred_fallthru
    _
  // Predicated region
  $region6: #{model_step.22} parent=0 // pred_check
    _
  $region7: #{model_step.22} parent=0 // pred_check_branch
    %10 = sbr.rel (0) target = $region9
  $region8: #{model_step.22} parent=0 // pred_region
    _
  $region9: #{model_step.22} parent=0 // pred_fallthru
    _
  %v11 = vld [vmem:[%s0] sm:$0xff]
  %v12 = vld [vmem:[%s0 + $0x8] sm:$0xff]
  %v13 = vld [vmem:[%s0 + $0x10] sm:$0xff]
  %v14 = vld [vmem:[%s0 + $0x18] sm:$0xff]
  %v15 = vld [vmem:[%s0 + $0x20] sm:$0xff]
  %v16 = vld [vmem:[%s0 + $0x28] sm:$0xff]
  %v17 = vld [vmem:[%s0 + $0x30] sm:$0xff]
  %v18 = vld [vmem:[%s0 + $0x38] sm:$0xff]
  %v19 = vld [vmem:[%s1] sm:$0x3]
  %vm20 = vcmask 15360
  %v22 = vsel %vm20, %v11, 0
  %v25 = vsel %vm20, %v12, 0
  %v28 = vsel %vm20, %v13, 0
  %v31 = vsel %vm20, %v14, 0
  %v34 = vsel %vm20, %v15, 0
  %v37 = vsel %vm20, %v16, 0
  %v40 = vsel %vm20, %v17, 0
  %v43 = vsel %vm20, %v18, 0
  %vm45 = vcmask 1041408
  %v47 = vsel %vm45, %v19, 0
  %49 = vmatprep.subr.mxu0 0.0
  %50 = vmatpush1.msra.mxu0 %v47
  %51 = vmatprep.subr.mxu0 0.0
  %52 = vmatpush1.msra.mxu0 0.0
  %53 = vmatprep.subr.mxu0 0.0
  %54 = vmatpush1.msra.mxu0 0.0
  %55 = vmatprep.subr.mxu0 0.0
  %56 = vmatpush1.msra.mxu0 0.0
  %57 = vmatprep.subr.mxu0 0.0
  %58 = vmatpush1.msra.mxu0 0.0
  %59 = vmatprep.subr.mxu0 0.0
  %60 = vmatpush1.msra.mxu0 0.0
  %61 = vmatprep.subr.mxu0 0.0
  %62 = vmatpush1.msra.mxu0 0.0
  %63 = vmatprep.subr.mxu0 0.0
  %64 = vmatpush1.msra.mxu0 0.0
  %65 = vmatprep.subr.mxu0 0.0
  %66 = vmatpush1.msra.mxu0 0.0
  %67 = vmatprep.subr.mxu0 0.0
  %68 = vmatpush1.msra.mxu0 0.0
  %69 = vmatprep.subr.mxu0 0.0
  %70 = vmatpush1.msra.mxu0 0.0
  %71 = vmatprep.subr.mxu0 0.0
  %72 = vmatpush1.msra.mxu0 0.0
  %73 = vmatprep.subr.mxu0 0.0
  %74 = vmatpush1.msra.mxu0 0.0
  %75 = vmatprep.subr.mxu0 0.0
  %76 = vmatpush1.msra.mxu0 0.0
  %77 = vmatprep.subr.mxu0 0.0
  %78 = vmatpush1.msra.mxu0 0.0
  %79 = vmatprep.subr.mxu0 0.0
  %80 = vmatpush1.msra.mxu0 0.0
  %81 = vmatprep.subr.mxu0 0.0
  %82 = vmatpush1.msra.mxu0 0.0
  %83 = vmatprep.subr.mxu0 0.0
  %84 = vmatpush1.msra.mxu0 0.0
  %85 = vmatprep.subr.mxu0 0.0
  %86 = vmatpush1.msra.mxu0 0.0
  %87 = vmatprep.subr.mxu0 0.0
  %88 = vmatpush1.msra.mxu0 0.0
  %89 = vmatprep.subr.mxu0 0.0
  %90 = vmatpush1.msra.mxu0 0.0
  %91 = vmatprep.subr.mxu0 0.0
  %92 = vmatpush1.msra.mxu0 0.0
  %93 = vmatprep.subr.mxu0 0.0
  %94 = vmatpush1.msra.mxu0 0.0
  %95 = vmatprep.subr.mxu0 0.0
  %96 = vmatpush1.msra.mxu0 0.0
  %97 = vmatprep.subr.mxu0 0.0
  %98 = vmatpush1.msra.mxu0 0.0
  %99 = vmatprep.subr.mxu0 0.0
  %100 = vmatpush1.msra.mxu0 0.0
  %101 = vmatprep.subr.mxu0 0.0
  %102 = vmatpush1.msra.mxu0 0.0
  %103 = vmatprep.subr.mxu0 0.0
  %104 = vmatpush1.msra.mxu0 0.0
  %105 = vmatprep.subr.mxu0 0.0
  %106 = vmatpush1.msra.mxu0 0.0
  %107 = vmatprep.subr.mxu0 0.0
  %108 = vmatpush1.msra.mxu0 0.0
  %109 = vmatprep.subr.mxu0 0.0
  %110 = vmatpush1.msra.mxu0 0.0
  %111 = vmatprep.subr.mxu0 0.0
  %112 = vmatpush1.msra.mxu0 0.0
  %113 = vmatprep.mubr.f32.mxu0 0.0
  %114 = vmatmul.mubr.f32.gmra.mrb[0].mxu0 %v22
  %v115 = vpop.f32.mrb[0].mxu0
  %v116 = vadd.f32 0.0, %v115
  %v117 = vpop.f32.mrb[0].mxu0
  %118 = vmatprep.mubr.f32.mxu0 0.0
  %119 = vmatmul.mubr.f32.gmra.mrb[0].mxu0 %v25
  %v120 = vpop.f32.mrb[0].mxu0
  %v121 = vadd.f32 0.0, %v120
  %v122 = vpop.f32.mrb[0].mxu0
  %123 = vmatprep.mubr.f32.mxu0 0.0
  %124 = vmatmul.mubr.f32.gmra.mrb[0].mxu0 %v28
  %v125 = vpop.f32.mrb[0].mxu0
  %v126 = vadd.f32 0.0, %v125
  %v127 = vpop.f32.mrb[0].mxu0
  %128 = vmatprep.mubr.f32.mxu0 0.0
  %129 = vmatmul.mubr.f32.gmra.mrb[0].mxu0 %v31
  %v130 = vpop.f32.mrb[0].mxu0
  %v131 = vadd.f32 0.0, %v130
  %v132 = vpop.f32.mrb[0].mxu0
  %133 = vmatprep.mubr.f32.mxu0 0.0
  %134 = vmatmul.mubr.f32.gmra.mrb[0].mxu0 %v34
  %v135 = vpop.f32.mrb[0].mxu0
  %v136 = vadd.f32 0.0, %v135
  %v137 = vpop.f32.mrb[0].mxu0
  %138 = vmatprep.mubr.f32.mxu0 0.0
  %139 = vmatmul.mubr.f32.gmra.mrb[0].mxu0 %v37
  %v140 = vpop.f32.mrb[0].mxu0
  %v141 = vadd.f32 0.0, %v140
  %v142 = vpop.f32.mrb[0].mxu0
  %143 = vmatprep.mubr.f32.mxu0 0.0
  %144 = vmatmul.mubr.f32.gmra.mrb[0].mxu0 %v40
  %v145 = vpop.f32.mrb[0].mxu0
  %v146 = vadd.f32 0.0, %v145
  %v147 = vpop.f32.mrb[0].mxu0
  %148 = vmatprep.mubr.f32.mxu0 0.0
  %149 = vmatmul.mubr.f32.gmra.mrb[0].mxu0 %v43
  %v150 = vpop.f32.mrb[0].mxu0
  %v151 = vadd.f32 0.0, %v150
  %v152 = vpop.f32.mrb[0].mxu0
  %153 = vdwg.mxu0
  %vm154 = vcmask 31744
  %155 = vst.msk [vmem:[%s2] sm:$0xff] %vm154, %v116
  %156 = vst.msk [vmem:[%s2 + $0x8] sm:$0xff] %vm154, %v121
  %157 = vst.msk [vmem:[%s2 + $0x10] sm:$0xff] %vm154, %v126
  %158 = vst.msk [vmem:[%s2 + $0x18] sm:$0xff] %vm154, %v131
  %159 = vst.msk [vmem:[%s2 + $0x20] sm:$0xff] %vm154, %v136
  %160 = vst.msk [vmem:[%s2 + $0x28] sm:$0xff] %vm154, %v141
  %161 = vst.msk [vmem:[%s2 + $0x30] sm:$0xff] %vm154, %v146
  %162 = vst.msk [vmem:[%s2 + $0x38] sm:$0xff] %vm154, %v151
  // Predicated region
  $region10: #{model_step.22} parent=0 // pred_check
    _
  $region11: #{model_step.22} parent=0 // pred_check_branch
    %164 = sbr.rel (0) target = $region13
  $region12: #{model_step.22} parent=0 // pred_region
    _
  $region13: #{model_step.22} parent=0 // pred_fallthru
    _
  // Predicated region
  $region14: #{model_step.22} parent=0 // pred_check
    _
  $region15: #{model_step.22} parent=0 // pred_check_branch
    %166 = sbr.rel (0) target = $region17
  $region16: #{model_step.22} parent=0 // pred_region
    _
  $region17: #{model_step.22} parent=0 // pred_fallthru
    _

// kernel: model_step.23
$region0: #{model_step.23}
  #allocation0 [shape = 'u32[]', space=smem, size = 0x4, offset = 0x4, fixed_abs, tag = 'smem constant byte address 0x4 - core index']
  #allocation1 [shape = 'u32[144,128]{1,0:T(1,128)}', space=vmem, size = 0x12000, scoped, tag = 'internal scratch']
  %s0 = inlined_call_operand.vmem [shape: f32[128,2], index: 0, kind: input, shape index: {}]
  %s1 = inlined_call_operand.vmem [shape: f32[2,4], index: 1, kind: input, shape index: {}]
  %s2 = inlined_call_operand.vmem [shape: f32[128,4], index: 2, kind: output, shape index: {}]
  %s3 = sld [smem:[#allocation0]]
  $region18: #{model_step.23} parent=0
    _
  %s5 = ssub.s32 1, %s3
  %s6 = scalar_select 0, %s5, %s3
  // Predicated region
  $region2: #{model_step.23} parent=0 // pred_check
    _
  $region3: #{model_step.23} parent=0 // pred_check_branch
    %8 = sbr.rel (0) target = $region5
  $region4: #{model_step.23} parent=0 // pred_region
    _
  $region5: #{model_step.23} parent=0 // pred_fallthru
    _
  // Predicated region
  $region6: #{model_step.23} parent=0 // pred_check
    _
  $region7: #{model_step.23} parent=0 // pred_check_branch
    %10 = sbr.rel (0) target = $region9
  $region8: #{model_step.23} parent=0 // pred_region
    _
  $region9: #{model_step.23} parent=0 // pred_fallthru
    _
  %v11 = vld [vmem:[%s0] sm:$0xff]
  %v12 = vld [vmem:[%s0 + $0x8] sm:$0xff]
  %v13 = vld [vmem:[%s0 + $0x10] sm:$0xff]
  %v14 = vld [vmem:[%s0 + $0x18] sm:$0xff]
  %v15 = vld [vmem:[%s0 + $0x20] sm:$0xff]
  %v16 = vld [vmem:[%s0 + $0x28] sm:$0xff]
  %v17 = vld [vmem:[%s0 + $0x30] sm:$0xff]
  %v18 = vld [vmem:[%s0 + $0x38] sm:$0xff]
  %v19 = vld [vmem:[%s0 + $0x40] sm:$0xff]
  %v20 = vld [vmem:[%s0 + $0x48] sm:$0xff]
  %v21 = vld [vmem:[%s0 + $0x50] sm:$0xff]
  %v22 = vld [vmem:[%s0 + $0x58] sm:$0xff]
  %v23 = vld [vmem:[%s0 + $0x60] sm:$0xff]
  %v24 = vld [vmem:[%s0 + $0x68] sm:$0xff]
  %v25 = vld [vmem:[%s0 + $0x70] sm:$0xff]
  %v26 = vld [vmem:[%s0 + $0x78] sm:$0xff]
  %v27 = vld [vmem:[%s1] sm:$0x3]
  %vm28 = vcmask 15360
  %v30 = vsel %vm28, %v11, 0
  %v33 = vsel %vm28, %v12, 0
  %v36 = vsel %vm28, %v13, 0
  %v39 = vsel %vm28, %v14, 0
  %v42 = vsel %vm28, %v15, 0
  %v45 = vsel %vm28, %v16, 0
  %v48 = vsel %vm28, %v17, 0
  %v51 = vsel %vm28, %v18, 0
  %v54 = vsel %vm28, %v19, 0
  %v57 = vsel %vm28, %v20, 0
  %v60 = vsel %vm28, %v21, 0
  %v63 = vsel %vm28, %v22, 0
  %v66 = vsel %vm28, %v23, 0
  %v69 = vsel %vm28, %v24, 0
  %v72 = vsel %vm28, %v25, 0
  %v75 = vsel %vm28, %v26, 0
  %vm77 = vcmask 1041408
  %v79 = vsel %vm77, %v27, 0
  %81 = vmatprep.subr.mxu0 0.0
  %82 = vmatpush1.msra.mxu0 %v79
  %83 = vmatprep.subr.mxu0 0.0
  %84 = vmatpush1.msra.mxu0 0.0
  %85 = vmatprep.subr.mxu0 0.0
  %86 = vmatpush1.msra.mxu0 0.0
  %87 = vmatprep.subr.mxu0 0.0
  %88 = vmatpush1.msra.mxu0 0.0
  %89 = vmatprep.subr.mxu0 0.0
  %90 = vmatpush1.msra.mxu0 0.0
  %91 = vmatprep.subr.mxu0 0.0
  %92 = vmatpush1.msra.mxu0 0.0
  %93 = vmatprep.subr.mxu0 0.0
  %94 = vmatpush1.msra.mxu0 0.0
  %95 = vmatprep.subr.mxu0 0.0
  %96 = vmatpush1.msra.mxu0 0.0
  %97 = vmatprep.subr.mxu0 0.0
  %98 = vmatpush1.msra.mxu0 0.0
  %99 = vmatprep.subr.mxu0 0.0
  %100 = vmatpush1.msra.mxu0 0.0
  %101 = vmatprep.subr.mxu0 0.0
  %102 = vmatpush1.msra.mxu0 0.0
  %103 = vmatprep.subr.mxu0 0.0
  %104 = vmatpush1.msra.mxu0 0.0
  %105 = vmatprep.subr.mxu0 0.0
  %106 = vmatpush1.msra.mxu0 0.0
  %107 = vmatprep.subr.mxu0 0.0
  %108 = vmatpush1.msra.mxu0 0.0
  %109 = vmatprep.subr.mxu0 0.0
  %110 = vmatpush1.msra.mxu0 0.0
  %111 = vmatprep.subr.mxu0 0.0
  %112 = vmatpush1.msra.mxu0 0.0
  %113 = vmatprep.subr.mxu0 0.0
  %114 = vmatpush1.msra.mxu0 0.0
  %115 = vmatprep.subr.mxu0 0.0
  %116 = vmatpush1.msra.mxu0 0.0
  %117 = vmatprep.subr.mxu0 0.0
  %118 = vmatpush1.msra.mxu0 0.0
  %119 = vmatprep.subr.mxu0 0.0
  %120 = vmatpush1.msra.mxu0 0.0
  %121 = vmatprep.subr.mxu0 0.0
  %122 = vmatpush1.msra.mxu0 0.0
  %123 = vmatprep.subr.mxu0 0.0
  %124 = vmatpush1.msra.mxu0 0.0
  %125 = vmatprep.subr.mxu0 0.0
  %126 = vmatpush1.msra.mxu0 0.0
  %127 = vmatprep.subr.mxu0 0.0
  %128 = vmatpush1.msra.mxu0 0.0
  %129 = vmatprep.subr.mxu0 0.0
  %130 = vmatpush1.msra.mxu0 0.0
  %131 = vmatprep.subr.mxu0 0.0
  %132 = vmatpush1.msra.mxu0 0.0
  %133 = vmatprep.subr.mxu0 0.0
  %134 = vmatpush1.msra.mxu0 0.0
  %135 = vmatprep.subr.mxu0 0.0
  %136 = vmatpush1.msra.mxu0 0.0
  %137 = vmatprep.subr.mxu0 0.0
  %138 = vmatpush1.msra.mxu0 0.0
  %139 = vmatprep.subr.mxu0 0.0
  %140 = vmatpush1.msra.mxu0 0.0
  %141 = vmatprep.subr.mxu0 0.0
  %142 = vmatpush1.msra.mxu0 0.0
  %143 = vmatprep.subr.mxu0 0.0
  %144 = vmatpush1.msra.mxu0 0.0
  %145 = vmatprep.mubr.f32.mxu0 0.0
  %146 = vmatmul.mubr.f32.gmra.mrb[0].mxu0 %v30
  %v147 = vpop.f32.mrb[0].mxu0
  %v148 = vadd.f32 0.0, %v147
  %v149 = vpop.f32.mrb[0].mxu0
  %150 = vmatprep.mubr.f32.mxu0 0.0
  %151 = vmatmul.mubr.f32.gmra.mrb[0].mxu0 %v33
  %v152 = vpop.f32.mrb[0].mxu0
  %v153 = vadd.f32 0.0, %v152
  %v154 = vpop.f32.mrb[0].mxu0
  %155 = vmatprep.mubr.f32.mxu0 0.0
  %156 = vmatmul.mubr.f32.gmra.mrb[0].mxu0 %v36
  %v157 = vpop.f32.mrb[0].mxu0
  %v158 = vadd.f32 0.0, %v157
  %v159 = vpop.f32.mrb[0].mxu0
  %160 = vmatprep.mubr.f32.mxu0 0.0
  %161 = vmatmul.mubr.f32.gmra.mrb[0].mxu0 %v39
  %v162 = vpop.f32.mrb[0].mxu0
  %v163 = vadd.f32 0.0, %v162
  %v164 = vpop.f32.mrb[0].mxu0
  %165 = vmatprep.mubr.f32.mxu0 0.0
  %166 = vmatmul.mubr.f32.gmra.mrb[0].mxu0 %v42
  %v167 = vpop.f32.mrb[0].mxu0
  %v168 = vadd.f32 0.0, %v167
  %v169 = vpop.f32.mrb[0].mxu0
  %170 = vmatprep.mubr.f32.mxu0 0.0
  %171 = vmatmul.mubr.f32.gmra.mrb[0].mxu0 %v45
  %v172 = vpop.f32.mrb[0].mxu0
  %v173 = vadd.f32 0.0, %v172
  %v174 = vpop.f32.mrb[0].mxu0
  %175 = vmatprep.mubr.f32.mxu0 0.0
  %176 = vmatmul.mubr.f32.gmra.mrb[0].mxu0 %v48
  %v177 = vpop.f32.mrb[0].mxu0
  %v178 = vadd.f32 0.0, %v177
  %v179 = vpop.f32.mrb[0].mxu0
  %180 = vmatprep.mubr.f32.mxu0 0.0
  %181 = vmatmul.mubr.f32.gmra.mrb[0].mxu0 %v51
  %v182 = vpop.f32.mrb[0].mxu0
  %v183 = vadd.f32 0.0, %v182
  %v184 = vpop.f32.mrb[0].mxu0
  %185 = vmatprep.mubr.f32.mxu0 0.0
  %186 = vmatmul.mubr.f32.gmra.mrb[0].mxu0 %v54
  %v187 = vpop.f32.mrb[0].mxu0
  %v188 = vadd.f32 0.0, %v187
  %v189 = vpop.f32.mrb[0].mxu0
  %190 = vmatprep.mubr.f32.mxu0 0.0
  %191 = vmatmul.mubr.f32.gmra.mrb[0].mxu0 %v57
  %v192 = vpop.f32.mrb[0].mxu0
  %v193 = vadd.f32 0.0, %v192
  %v194 = vpop.f32.mrb[0].mxu0
  %195 = vmatprep.mubr.f32.mxu0 0.0
  %196 = vmatmul.mubr.f32.gmra.mrb[0].mxu0 %v60
  %v197 = vpop.f32.mrb[0].mxu0
  %v198 = vadd.f32 0.0, %v197
  %v199 = vpop.f32.mrb[0].mxu0
  %200 = vmatprep.mubr.f32.mxu0 0.0
  %201 = vmatmul.mubr.f32.gmra.mrb[0].mxu0 %v63
  %v202 = vpop.f32.mrb[0].mxu0
  %v203 = vadd.f32 0.0, %v202
  %v204 = vpop.f32.mrb[0].mxu0
  %205 = vmatprep.mubr.f32.mxu0 0.0
  %206 = vmatmul.mubr.f32.gmra.mrb[0].mxu0 %v66
  %v207 = vpop.f32.mrb[0].mxu0
  %v208 = vadd.f32 0.0, %v207
  %v209 = vpop.f32.mrb[0].mxu0
  %210 = vmatprep.mubr.f32.mxu0 0.0
  %211 = vmatmul.mubr.f32.gmra.mrb[0].mxu0 %v69
  %v212 = vpop.f32.mrb[0].mxu0
  %v213 = vadd.f32 0.0, %v212
  %v214 = vpop.f32.mrb[0].mxu0
  %215 = vmatprep.mubr.f32.mxu0 0.0
  %216 = vmatmul.mubr.f32.gmra.mrb[0].mxu0 %v72
  %v217 = vpop.f32.mrb[0].mxu0
  %v218 = vadd.f32 0.0, %v217
  %v219 = vpop.f32.mrb[0].mxu0
  %220 = vmatprep.mubr.f32.mxu0 0.0
  %221 = vmatmul.mubr.f32.gmra.mrb[0].mxu0 %v75
  %v222 = vpop.f32.mrb[0].mxu0
  %v223 = vadd.f32 0.0, %v222
  %v224 = vpop.f32.mrb[0].mxu0
  %225 = vdwg.mxu0
  %vm226 = vcmask 31744
  %227 = vst.msk [vmem:[%s2] sm:$0xff] %vm226, %v148
  %228 = vst.msk [vmem:[%s2 + $0x8] sm:$0xff] %vm226, %v153
  %229 = vst.msk [vmem:[%s2 + $0x10] sm:$0xff] %vm226, %v158
  %230 = vst.msk [vmem:[%s2 + $0x18] sm:$0xff] %vm226, %v163
  %231 = vst.msk [vmem:[%s2 + $0x20] sm:$0xff] %vm226, %v168
  %232 = vst.msk [vmem:[%s2 + $0x28] sm:$0xff] %vm226, %v173
  %233 = vst.msk [vmem:[%s2 + $0x30] sm:$0xff] %vm226, %v178
  %234 = vst.msk [vmem:[%s2 + $0x38] sm:$0xff] %vm226, %v183
  %235 = vst.msk [vmem:[%s2 + $0x40] sm:$0xff] %vm226, %v188
  %236 = vst.msk [vmem:[%s2 + $0x48] sm:$0xff] %vm226, %v193
  %237 = vst.msk [vmem:[%s2 + $0x50] sm:$0xff] %vm226, %v198
  %238 = vst.msk [vmem:[%s2 + $0x58] sm:$0xff] %vm226, %v203
  %239 = vst.msk [vmem:[%s2 + $0x60] sm:$0xff] %vm226, %v208
  %240 = vst.msk [vmem:[%s2 + $0x68] sm:$0xff] %vm226, %v213
  %241 = vst.msk [vmem:[%s2 + $0x70] sm:$0xff] %vm226, %v218
  %242 = vst.msk [vmem:[%s2 + $0x78] sm:$0xff] %vm226, %v223
  // Predicated region
  $region10: #{model_step.23} parent=0 // pred_check
    _
  $region11: #{model_step.23} parent=0 // pred_check_branch
    %244 = sbr.rel (0) target = $region13
  $region12: #{model_step.23} parent=0 // pred_region
    _
  $region13: #{model_step.23} parent=0 // pred_fallthru
    _
  // Predicated region
  $region14: #{model_step.23} parent=0 // pred_check
    _
  $region15: #{model_step.23} parent=0 // pred_check_branch
    %246 = sbr.rel (0) target = $region17
  $region16: #{model_step.23} parent=0 // pred_region
    _
  $region17: #{model_step.23} parent=0 // pred_fallthru
    _

// kernel: model_step.26
$region0: #{model_step.26}
  #allocation0 [shape = 'u32[]', space=smem, size = 0x4, offset = 0x4, fixed_abs, tag = 'smem constant byte address 0x4 - core index']
  #allocation1 [shape = 'u32[144,128]{1,0:T(1,128)}', space=vmem, size = 0x12000, scoped, tag = 'internal scratch']
  %s0 = inlined_call_operand.vmem [shape: f32[2,16,16], index: 0, kind: input, shape index: {}]
  %s1 = inlined_call_operand.vmem [shape: f32[1,2,16], index: 1, kind: input, shape index: {}]
  %s2 = inlined_call_operand.vmem [shape: f32[2,1], index: 2, kind: input, shape index: {}]
  %s3 = inlined_call_operand.vmem [shape: f32[2,2,16], index: 3, kind: output, shape index: {}]
  %s4 = sld [smem:[#allocation0]]
  $region45: #{model_step.26} parent=0
    _
  %s6 = ssub.s32 1, %s4
  %s7 = scalar_select 0, %s6, %s4
  loop: start=0, step=1, limit=4
  $region2: #{model_step.26} parent=0 // loop_pre_header
    _
  $region3: #{model_step.26} parent=0 // loop_header
    %s9 = sphi 0, %s13
    %p10 = scmp.ge.s32.totalorder %s9, 4
    %s19 = sphi 0, %s21
    %s22 = sphi 0, %s19
    %s23 = sphi 0, %s22
    %s39 = sphi 0, %s23
    %s43 = sphi 0, %s43
    %s45 = sphi 0, %s43
    %s46 = sphi 0, %s45
    %s60 = sphi 0, %s46
    %s64 = sphi 0, %s64
    %s66 = sphi 0, %s64
    %s67 = sphi 0, %s66
    %s81 = sphi 0, %s67
    %s87 = sphi 0, %s89
    %s90 = sphi 0, %s87
    %s91 = sphi 0, %s90
    %s107 = sphi 0, %s91
  $region4: #{model_step.26} parent=0 // loop_header_branch
    %12 = sbr.rel (%p10) target = $region8
  $region5: #{model_step.26} parent=0 // loop_body
    %s14 = ssub.s32 %s9, 1
    %s15 = ssub.s32 %s9, 2
    %s16 = sadd.s32 %s9, 1
    %s17 = ssub.s32 %s9, %s16
    %p18 = scmp.eq.s32.totalorder %s17, 0
    %s20 = sadd.s32 %s19, 1
    %s21 = scalar_select %p18, %s19, %s20
    %p24 = pneg %p18
    %p25 = scmp.eq.s32.totalorder %s9, 1
    %p26 = por %p24, %p25
    %p27 = scmp.ne.s32.totalorder %s19, %s22
    %p28 = scmp.eq.s32.totalorder %s9, 0
    %p29 = por %p27, %p28
    %p30 = scmp.ne.s32.totalorder %s19, %s22
    %p31 = scmp.eq.s32.totalorder %s14, 1
    %p32 = por %p30, %p31
    %p33 = scmp.ne.s32.totalorder %s22, %s23
    %p34 = scmp.eq.s32.totalorder %s14, 0
    %p35 = por %p33, %p34
    %p36 = scmp.ne.s32.totalorder %s22, %s23
    %p37 = scmp.eq.s32.totalorder %s15, 1
    %p38 = por %p36, %p37
    %p40 = scmp.ne.s32.totalorder %s23, %s39
    %p41 = scmp.eq.s32.totalorder %s15, 0
    %p42 = por %p40, %p41
    %s44 = sadd.s32 %s43, 1
    %p47 = scmp.eq.s32.totalorder %s9, 1
    %p48 = scmp.ne.s32.totalorder %s43, %s45
    %p49 = scmp.eq.s32.totalorder %s9, 0
    %p50 = por %p48, %p49
    %p51 = scmp.ne.s32.totalorder %s43, %s45
    %p52 = scmp.eq.s32.totalorder %s14, 1
    %p53 = por %p51, %p52
    %p54 = scmp.ne.s32.totalorder %s45, %s46
    %p55 = scmp.eq.s32.totalorder %s14, 0
    %p56 = por %p54, %p55
    %p57 = scmp.ne.s32.totalorder %s45, %s46
    %p58 = scmp.eq.s32.totalorder %s15, 1
    %p59 = por %p57, %p58
    %p61 = scmp.ne.s32.totalorder %s46, %s60
    %p62 = scmp.eq.s32.totalorder %s15, 0
    %p63 = por %p61, %p62
    %s65 = sadd.s32 %s64, 1
    %p68 = scmp.eq.s32.totalorder %s9, 1
    %p69 = scmp.ne.s32.totalorder %s64, %s66
    %p70 = scmp.eq.s32.totalorder %s9, 0
    %p71 = por %p69, %p70
    %p72 = scmp.ne.s32.totalorder %s64, %s66
    %p73 = scmp.eq.s32.totalorder %s14, 1
    %p74 = por %p72, %p73
    %p75 = scmp.ne.s32.totalorder %s66, %s67
    %p76 = scmp.eq.s32.totalorder %s14, 0
    %p77 = por %p75, %p76
    %p78 = scmp.ne.s32.totalorder %s66, %s67
    %p79 = scmp.eq.s32.totalorder %s15, 1
    %p80 = por %p78, %p79
    %p82 = scmp.ne.s32.totalorder %s67, %s81
    %p83 = scmp.eq.s32.totalorder %s15, 0
    %p84 = por %p82, %p83
    %s85 = ssub.s32 %s9, %s16
    %p86 = scmp.eq.s32.totalorder %s85, 0
    %s88 = sadd.s32 %s87, 1
    %s89 = scalar_select %p86, %s87, %s88
    %p92 = pneg %p86
    %p93 = scmp.eq.s32.totalorder %s9, 1
    %p94 = por %p92, %p93
    %p95 = scmp.ne.s32.totalorder %s87, %s90
    %p96 = scmp.eq.s32.totalorder %s9, 0
    %p97 = por %p95, %p96
    %p98 = scmp.ne.s32.totalorder %s87, %s90
    %p99 = scmp.eq.s32.totalorder %s14, 1
    %p100 = por %p98, %p99
    %p101 = scmp.ne.s32.totalorder %s90, %s91
    %p102 = scmp.eq.s32.totalorder %s14, 0
    %p103 = por %p101, %p102
    %p104 = scmp.ne.s32.totalorder %s90, %s91
    %p105 = scmp.eq.s32.totalorder %s15, 1
    %p106 = por %p104, %p105
    %p108 = scmp.ne.s32.totalorder %s91, %s107
    %p109 = scmp.eq.s32.totalorder %s15, 0
    %p110 = por %p108, %p109
    %p111 = scmp.le.s32.totalorder 1, %s9
    %p112 = scmp.lt.s32.totalorder %s9, 3
    %p113 = pnand %p111, %p112
    %p114 = pneg %p113
    // Predicated region
    $region9: #{model_step.26} parent=5 // pred_check
      _
    $region10: #{model_step.26} parent=5 // pred_check_branch
      %116 = sbr.rel (%p113) target = $region12
    $region11: #{model_step.26} parent=5 // pred_region
      %s117 = ssub.s32 %s9, 1
      // Predicated region
      $region13: #{model_step.26} parent=11 // pred_check
        %p118 = pneg %p56
      $region14: #{model_step.26} parent=11 // pred_check_branch
        %120 = sbr.rel (%p118) target = $region16
      $region15: #{model_step.26} parent=11 // pred_region
        _
      $region16: #{model_step.26} parent=11 // pred_fallthru
        _
      // Predicated region
      $region17: #{model_step.26} parent=11 // pred_check
        %p121 = pneg %p77
      $region18: #{model_step.26} parent=11 // pred_check_branch
        %123 = sbr.rel (%p121) target = $region20
      $region19: #{model_step.26} parent=11 // pred_region
        _
      $region20: #{model_step.26} parent=11 // pred_fallthru
        _
    $region12: #{model_step.26} parent=5 // pred_fallthru
      _
    %p124 = scmp.lt.s32.totalorder %s9, 2
    // Predicated region
    $region21: #{model_step.26} parent=5 // pred_check
      %p125 = pneg %p124
    $region22: #{model_step.26} parent=5 // pred_check_branch
      %127 = sbr.rel (%p125) target = $region24
    $region23: #{model_step.26} parent=5 // pred_region
      // Predicated region
      $region25: #{model_step.26} parent=23 // pred_check
        %p128 = pneg %p29
      $region26: #{model_step.26} parent=23 // pred_check_branch
        %130 = sbr.rel (%p128) target = $region28
      $region27: #{model_step.26} parent=23 // pred_region
        %p131 = scmp.lt.s32.totalorder %s9, 1
        %s132 = scalar_select %p131, %s9, 1
        %s133 = smul.addr %s132, 2
        %s134 = smul.addr %s133, 8
        %s135 = scalar_lea.vmem %s0, %s134
      $region28: #{model_step.26} parent=23 // pred_fallthru
        _
    $region24: #{model_step.26} parent=5 // pred_fallthru
      _
    %p136 = scmp.le.s32.totalorder 1, %s9
    %p137 = scmp.lt.s32.totalorder %s9, 3
    %p138 = pnand %p136, %p137
    %p139 = pneg %p138
    // Predicated region
    $region29: #{model_step.26} parent=5 // pred_check
      _
    $region30: #{model_step.26} parent=5 // pred_check_branch
      %141 = sbr.rel (%p138) target = $region32
    $region31: #{model_step.26} parent=5 // pred_region
      %s142 = ssub.s32 %s9, 1
      %p143 = scmp.lt.s32.totalorder %s14, 1
      %s144 = scalar_select %p143, %s14, 1
      %s145 = smul.addr %s144, 2
      %s146 = smul.addr %s145, 8
      %s147 = scalar_lea.vmem %s0, %s146
      %p148 = pneg %p35
      %p149 = pneg %p32
      %p150 = pneg %p56
      %p151 = pneg %p53
      %p152 = pneg %p77
      %p153 = pneg %p74
      %p154 = pneg %p103
      %p155 = pneg %p100
      %p156 = scmp.lt.s32.totalorder %s14, 1
      %s157 = scalar_select %p156, %s14, 1
      %s158 = smul.addr %s157, 2
      %s159 = scalar_lea.vmem %s3, %s158
      %p160 = scmp.lt.s32.totalorder %s14, 1
      %s161 = scalar_select %p160, %s14, 1
      %s162 = smul.addr %s161, 2
      %s163 = smul.addr %s162, 8
      %s164 = scalar_lea.vmem %s0, %s163
      %p165 = scmp.lt.s32.totalorder %s14, 1
      %s166 = scalar_select %p165, %s14, 1
      %s167 = smul.addr %s166, 2
      %s168 = scalar_lea.vmem %s3, %s167
      %v170 = vld [vmem:[%s164] sm:$0xff]
      %v171 = vld [vmem:[%s164 + $0x8] sm:$0xff]
      %v172 = vpack.c.bf16 %v171, %v170
      %v173 = vld [vmem:[%s1] sm:$0x3]
      %v174 = vpack.c.bf16 %v173, %v173
      %v175 = vld [vmem:[%s2] sm:$0x3]
      %177 = vset.pattern.permute.xlu0 0
      %178 = vperm.xlu0 %177, %v175
      %v179 = vpop.permute.xlu0 %178
      %vm181 = vcmask 130048
      %v183 = vsel %vm181, %v174, 0
      %185 = vmatprep.subr.bf16.mxu0 0
      %186 = vmatpush1.bf16.msra.mxu0 %v172
      %187 = vmatprep.subr.bf16.mxu0 0
      %188 = vmatpush1.bf16.msra.mxu0 0
      %189 = vmatprep.subr.bf16.mxu0 0
      %190 = vmatpush1.bf16.msra.mxu0 0
      %191 = vmatprep.subr.bf16.mxu0 0
      %192 = vmatpush1.bf16.msra.mxu0 0
      %193 = vmatprep.subr.bf16.mxu0 0
      %194 = vmatpush1.bf16.msra.mxu0 0
      %195 = vmatprep.subr.bf16.mxu0 0
      %196 = vmatpush1.bf16.msra.mxu0 0
      %197 = vmatprep.subr.bf16.mxu0 0
      %198 = vmatpush1.bf16.msra.mxu0 0
      %199 = vmatprep.subr.bf16.mxu0 0
      %200 = vmatpush1.bf16.msra.mxu0 0
      %201 = vmatprep.subr.bf16.mxu0 0
      %202 = vmatpush1.bf16.msra.mxu0 0
      %203 = vmatprep.subr.bf16.mxu0 0
      %204 = vmatpush1.bf16.msra.mxu0 0
      %205 = vmatprep.subr.bf16.mxu0 0
      %206 = vmatpush1.bf16.msra.mxu0 0
      %207 = vmatprep.subr.bf16.mxu0 0
      %208 = vmatpush1.bf16.msra.mxu0 0
      %209 = vmatprep.subr.bf16.mxu0 0
      %210 = vmatpush1.bf16.msra.mxu0 0
      %211 = vmatprep.subr.bf16.mxu0 0
      %212 = vmatpush1.bf16.msra.mxu0 0
      %213 = vmatprep.subr.bf16.mxu0 0
      %214 = vmatpush1.bf16.msra.mxu0 0
      %215 = vmatprep.subr.bf16.mxu0 0
      %216 = vmatpush1.bf16.msra.mxu0 0
      %217 = vmatprep.mubr.bf16.mxu0 0
      %218 = vmatmul.mubr.bf16.gmra.mrb[0].mxu0 %v183
      %v219 = vpop.f32.mrb[0].mxu0
      %v220 = vadd.f32 %v179, %v219
      %v221 = vpop.f32.mrb[0].mxu0
      %v222 = vpop.f32.mrb[0].mxu0
      %v223 = vpop.f32.mrb[0].mxu0
      %224 = vdwg.mxu0
      %vm225 = vcmask 123904
      %226 = vst.msk [vmem:[%s168] sm:$0x3] %vm225, %v220
      %p227 = scmp.lt.s32.totalorder %s14, 1
      %s228 = scalar_select %p227, %s14, 1
      %s229 = smul.addr %s228, 2
      %s230 = scalar_lea.vmem %s3, %s229
      // Predicated region
      $region33: #{model_step.26} parent=31 // pred_check
        %p231 = pneg %p100
      $region34: #{model_step.26} parent=31 // pred_check_branch
        %233 = sbr.rel (%p231) target = $region36
      $region35: #{model_step.26} parent=31 // pred_region
        _
      $region36: #{model_step.26} parent=31 // pred_fallthru
        _
    $region32: #{model_step.26} parent=5 // pred_fallthru
      _
    %p234 = scmp.le.s32.totalorder 2, %s9
    // Predicated region
    $region37: #{model_step.26} parent=5 // pred_check
      %p235 = pneg %p234
    $region38: #{model_step.26} parent=5 // pred_check_branch
      %237 = sbr.rel (%p235) target = $region40
    $region39: #{model_step.26} parent=5 // pred_region
      %s238 = ssub.s32 %s9, 2
      // Predicated region
      $region41: #{model_step.26} parent=39 // pred_check
        %p239 = pneg %p106
      $region42: #{model_step.26} parent=39 // pred_check_branch
        %241 = sbr.rel (%p239) target = $region44
      $region43: #{model_step.26} parent=39 // pred_region
        %p242 = scmp.lt.s32.totalorder %s15, 1
        %s243 = scalar_select %p242, %s15, 1
        %s244 = smul.addr %s243, 2
        %s245 = scalar_lea.vmem %s3, %s244
      $region44: #{model_step.26} parent=39 // pred_fallthru
        _
    $region40: #{model_step.26} parent=5 // pred_fallthru
      _
  $region6: #{model_step.26} parent=0 // loop_footer
    %s13 = sadd.s32 1, %s9
  $region7: #{model_step.26} parent=0 // loop_footer_branch
    %8 = sbr.rel target = $region3
  $region8: #{model_step.26} parent=0 // loop_exit
    _

// kernel: model_step.25
$region0: #{model_step.25}
  #allocation0 [shape = 'u32[]', space=smem, size = 0x4, offset = 0x4, fixed_abs, tag = 'smem constant byte address 0x4 - core index']
  #allocation1 [shape = 'u32[144,128]{1,0:T(1,128)}', space=vmem, size = 0x12000, scoped, tag = 'internal scratch']
  %s0 = inlined_call_operand.vmem [shape: f32[2,24,36], index: 0, kind: input, shape index: {}]
  %s1 = inlined_call_operand.vmem [shape: f32[9,16,24], index: 1, kind: input, shape index: {}]
  %s2 = inlined_call_operand.vmem [shape: f32[16,1], index: 2, kind: input, shape index: {}]
  %s3 = inlined_call_operand.vmem [shape: f32[2,16,22], index: 3, kind: output, shape index: {}]
  %s4 = sld [smem:[#allocation0]]
  $region45: #{model_step.25} parent=0
    _
  %s6 = ssub.s32 1, %s4
  %s7 = scalar_select 0, %s6, %s4
  loop: start=0, step=1, limit=4
  $region2: #{model_step.25} parent=0 // loop_pre_header
    _
  $region3: #{model_step.25} parent=0 // loop_header
    %s9 = sphi 0, %s13
    %p10 = scmp.ge.s32.totalorder %s9, 4
    %s19 = sphi 0, %s21
    %s22 = sphi 0, %s19
    %s23 = sphi 0, %s22
    %s39 = sphi 0, %s23
    %s43 = sphi 0, %s43
    %s45 = sphi 0, %s43
    %s46 = sphi 0, %s45
    %s60 = sphi 0, %s46
    %s64 = sphi 0, %s64
    %s66 = sphi 0, %s64
    %s67 = sphi 0, %s66
    %s81 = sphi 0, %s67
    %s87 = sphi 0, %s89
    %s90 = sphi 0, %s87
    %s91 = sphi 0, %s90
    %s107 = sphi 0, %s91
  $region4: #{model_step.25} parent=0 // loop_header_branch
    %12 = sbr.rel (%p10) target = $region8
  $region5: #{model_step.25} parent=0 // loop_body
    %s14 = ssub.s32 %s9, 1
    %s15 = ssub.s32 %s9, 2
    %s16 = sadd.s32 %s9, 1
    %s17 = ssub.s32 %s9, %s16
    %p18 = scmp.eq.s32.totalorder %s17, 0
    %s20 = sadd.s32 %s19, 1
    %s21 = scalar_select %p18, %s19, %s20
    %p24 = pneg %p18
    %p25 = scmp.eq.s32.totalorder %s9, 1
    %p26 = por %p24, %p25
    %p27 = scmp.ne.s32.totalorder %s19, %s22
    %p28 = scmp.eq.s32.totalorder %s9, 0
    %p29 = por %p27, %p28
    %p30 = scmp.ne.s32.totalorder %s19, %s22
    %p31 = scmp.eq.s32.totalorder %s14, 1
    %p32 = por %p30, %p31
    %p33 = scmp.ne.s32.totalorder %s22, %s23
    %p34 = scmp.eq.s32.totalorder %s14, 0
    %p35 = por %p33, %p34
    %p36 = scmp.ne.s32.totalorder %s22, %s23
    %p37 = scmp.eq.s32.totalorder %s15, 1
    %p38 = por %p36, %p37
    %p40 = scmp.ne.s32.totalorder %s23, %s39
    %p41 = scmp.eq.s32.totalorder %s15, 0
    %p42 = por %p40, %p41
    %s44 = sadd.s32 %s43, 1
    %p47 = scmp.eq.s32.totalorder %s9, 1
    %p48 = scmp.ne.s32.totalorder %s43, %s45
    %p49 = scmp.eq.s32.totalorder %s9, 0
    %p50 = por %p48, %p49
    %p51 = scmp.ne.s32.totalorder %s43, %s45
    %p52 = scmp.eq.s32.totalorder %s14, 1
    %p53 = por %p51, %p52
    %p54 = scmp.ne.s32.totalorder %s45, %s46
    %p55 = scmp.eq.s32.totalorder %s14, 0
    %p56 = por %p54, %p55
    %p57 = scmp.ne.s32.totalorder %s45, %s46
    %p58 = scmp.eq.s32.totalorder %s15, 1
    %p59 = por %p57, %p58
    %p61 = scmp.ne.s32.totalorder %s46, %s60
    %p62 = scmp.eq.s32.totalorder %s15, 0
    %p63 = por %p61, %p62
    %s65 = sadd.s32 %s64, 1
    %p68 = scmp.eq.s32.totalorder %s9, 1
    %p69 = scmp.ne.s32.totalorder %s64, %s66
    %p70 = scmp.eq.s32.totalorder %s9, 0
    %p71 = por %p69, %p70
    %p72 = scmp.ne.s32.totalorder %s64, %s66
    %p73 = scmp.eq.s32.totalorder %s14, 1
    %p74 = por %p72, %p73
    %p75 = scmp.ne.s32.totalorder %s66, %s67
    %p76 = scmp.eq.s32.totalorder %s14, 0
    %p77 = por %p75, %p76
    %p78 = scmp.ne.s32.totalorder %s66, %s67
    %p79 = scmp.eq.s32.totalorder %s15, 1
    %p80 = por %p78, %p79
    %p82 = scmp.ne.s32.totalorder %s67, %s81
    %p83 = scmp.eq.s32.totalorder %s15, 0
    %p84 = por %p82, %p83
    %s85 = ssub.s32 %s9, %s16
    %p86 = scmp.eq.s32.totalorder %s85, 0
    %s88 = sadd.s32 %s87, 1
    %s89 = scalar_select %p86, %s87, %s88
    %p92 = pneg %p86
    %p93 = scmp.eq.s32.totalorder %s9, 1
    %p94 = por %p92, %p93
    %p95 = scmp.ne.s32.totalorder %s87, %s90
    %p96 = scmp.eq.s32.totalorder %s9, 0
    %p97 = por %p95, %p96
    %p98 = scmp.ne.s32.totalorder %s87, %s90
    %p99 = scmp.eq.s32.totalorder %s14, 1
    %p100 = por %p98, %p99
    %p101 = scmp.ne.s32.totalorder %s90, %s91
    %p102 = scmp.eq.s32.totalorder %s14, 0
    %p103 = por %p101, %p102
    %p104 = scmp.ne.s32.totalorder %s90, %s91
    %p105 = scmp.eq.s32.totalorder %s15, 1
    %p106 = por %p104, %p105
    %p108 = scmp.ne.s32.totalorder %s91, %s107
    %p109 = scmp.eq.s32.totalorder %s15, 0
    %p110 = por %p108, %p109
    %p111 = scmp.le.s32.totalorder 1, %s9
    %p112 = scmp.lt.s32.totalorder %s9, 3
    %p113 = pnand %p111, %p112
    %p114 = pneg %p113
    // Predicated region
    $region9: #{model_step.25} parent=5 // pred_check
      _
    $region10: #{model_step.25} parent=5 // pred_check_branch
      %116 = sbr.rel (%p113) target = $region12
    $region11: #{model_step.25} parent=5 // pred_region
      %s117 = ssub.s32 %s9, 1
      // Predicated region
      $region13: #{model_step.25} parent=11 // pred_check
        %p118 = pneg %p56
      $region14: #{model_step.25} parent=11 // pred_check_branch
        %120 = sbr.rel (%p118) target = $region16
      $region15: #{model_step.25} parent=11 // pred_region
        _
      $region16: #{model_step.25} parent=11 // pred_fallthru
        _
      // Predicated region
      $region17: #{model_step.25} parent=11 // pred_check
        %p121 = pneg %p77
      $region18: #{model_step.25} parent=11 // pred_check_branch
        %123 = sbr.rel (%p121) target = $region20
      $region19: #{model_step.25} parent=11 // pred_region
        _
      $region20: #{model_step.25} parent=11 // pred_fallthru
        _
    $region12: #{model_step.25} parent=5 // pred_fallthru
      _
    %p124 = scmp.lt.s32.totalorder %s9, 2
    // Predicated region
    $region21: #{model_step.25} parent=5 // pred_check
      %p125 = pneg %p124
    $region22: #{model_step.25} parent=5 // pred_check_branch
      %127 = sbr.rel (%p125) target = $region24
    $region23: #{model_step.25} parent=5 // pred_region
      // Predicated region
      $region25: #{model_step.25} parent=23 // pred_check
        %p128 = pneg %p29
      $region26: #{model_step.25} parent=23 // pred_check_branch
        %130 = sbr.rel (%p128) target = $region28
      $region27: #{model_step.25} parent=23 // pred_region
        %p131 = scmp.lt.s32.totalorder %s9, 1
        %s132 = scalar_select %p131, %s9, 1
        %s133 = smul.addr %s132, 3
        %s134 = smul.addr %s133, 8
        %s135 = scalar_lea.vmem %s0, %s134
      $region28: #{model_step.25} parent=23 // pred_fallthru
        _
    $region24: #{model_step.25} parent=5 // pred_fallthru
      _
    %p136 = scmp.le.s32.totalorder 1, %s9
    %p137 = scmp.lt.s32.totalorder %s9, 3
    %p138 = pnand %p136, %p137
    %p139 = pneg %p138
    // Predicated region
    $region29: #{model_step.25} parent=5 // pred_check
      _
    $region30: #{model_step.25} parent=5 // pred_check_branch
      %141 = sbr.rel (%p138) target = $region32
    $region31: #{model_step.25} parent=5 // pred_region
      %s142 = ssub.s32 %s9, 1
      %p143 = scmp.lt.s32.totalorder %s14, 1
      %s144 = scalar_select %p143, %s14, 1
      %s145 = smul.addr %s144, 3
      %s146 = smul.addr %s145, 8
      %s147 = scalar_lea.vmem %s0, %s146
      %p148 = pneg %p35
      %p149 = pneg %p32
      %p150 = pneg %p56
      %p151 = pneg %p53
      %p152 = pneg %p77
      %p153 = pneg %p74
      %p154 = pneg %p103
      %p155 = pneg %p100
      %p156 = scmp.lt.s32.totalorder %s14, 1
      %s157 = scalar_select %p156, %s14, 1
      %s158 = smul.addr %s157, 2
      %s159 = smul.addr %s158, 8
      %s160 = scalar_lea.vmem %s3, %s159
      %p161 = scmp.lt.s32.totalorder %s14, 1
      %s162 = scalar_select %p161, %s14, 1
      %s163 = smul.addr %s162, 3
      %s164 = smul.addr %s163, 8
      %s165 = scalar_lea.vmem %s0, %s164
      %p166 = scmp.lt.s32.totalorder %s14, 1
      %s167 = scalar_select %p166, %s14, 1
      %s168 = smul.addr %s167, 2
      %s169 = smul.addr %s168, 8
      %s170 = scalar_lea.vmem %s3, %s169
      %v172 = vld [vmem:[%s165] sm:$0xff]
      %v173 = vld [vmem:[%s165 + $0x8] sm:$0xff]
      %v174 = vld [vmem:[%s165 + $0x10] sm:$0xff]
      %v175 = vpack.c.bf16 %v173, %v172
      %v176 = vpack.c.bf16 %v174, %v174
      %v177 = vld [vmem:[%s1] sm:$0xff]
      %v178 = vld [vmem:[%s1 + $0x8] sm:$0xff]
      %v179 = vpack.c.bf16 %v178, %v177
      %s180 = scalar_lea.vmem %s1, 16
      %v181 = vld [vmem:[%s180] sm:$0xff]
      %v182 = vld [vmem:[%s180 + $0x8] sm:$0xff]
      %v183 = vpack.c.bf16 %v182, %v181
      %186 = vrot.lane.b32.xlu0 %v175, 127
      %v187 = vpop.permute.xlu0 %186
      %188 = vrot.lane.b32.xlu0 %v176, 127
      %v189 = vpop.permute.xlu0 %188
      %vm191 = vcmask 195584
      %v193 = vsel %vm191, %v183, 0
      %vm195 = vcmask 1043456
      %v197 = vsel %vm195, %v189, 0
      %199 = vmatprep.subr.bf16.mxu0 0
      %200 = vmatpush1.bf16.msra.mxu0 %v187
      %201 = vmatprep.subr.bf16.mxu0 0
      %202 = vmatpush1.bf16.msra.mxu0 %v197
      %203 = vmatprep.subr.bf16.mxu0 0
      %204 = vmatpush1.bf16.msra.mxu0 0
      %205 = vmatprep.subr.bf16.mxu0 0
      %206 = vmatpush1.bf16.msra.mxu0 0
      %207 = vmatprep.subr.bf16.mxu0 0
      %208 = vmatpush1.bf16.msra.mxu0 0
      %209 = vmatprep.subr.bf16.mxu0 0
      %210 = vmatpush1.bf16.msra.mxu0 0
      %211 = vmatprep.subr.bf16.mxu0 0
      %212 = vmatpush1.bf16.msra.mxu0 0
      %213 = vmatprep.subr.bf16.mxu0 0
      %214 = vmatpush1.bf16.msra.mxu0 0
      %215 = vmatprep.subr.bf16.mxu0 0
      %216 = vmatpush1.bf16.msra.mxu0 0
      %217 = vmatprep.subr.bf16.mxu0 0
      %218 = vmatpush1.bf16.msra.mxu0 0
      %219 = vmatprep.subr.bf16.mxu0 0
      %220 = vmatpush1.bf16.msra.mxu0 0
      %221 = vmatprep.subr.bf16.mxu0 0
      %222 = vmatpush1.bf16.msra.mxu0 0
      %223 = vmatprep.subr.bf16.mxu0 0
      %224 = vmatpush1.bf16.msra.mxu0 0
      %225 = vmatprep.subr.bf16.mxu0 0
      %226 = vmatpush1.bf16.msra.mxu0 0
      %227 = vmatprep.subr.bf16.mxu0 0
      %228 = vmatpush1.bf16.msra.mxu0 0
      %229 = vmatprep.subr.bf16.mxu0 0
      %230 = vmatpush1.bf16.msra.mxu0 0
      %231 = vmatprep.mubr.bf16.mxu0 0
      %232 = vmatmul.mubr.bf16.gmra.mrb[0].mxu0 %v193
      %v233 = vpop.f32.mrb[0].mxu0
      %v234 = vadd.f32 0.0, %v233
      %v235 = vpop.f32.mrb[0].mxu0
      %v236 = vpop.f32.mrb[0].mxu0
      %v237 = vadd.f32 0.0, %v236
      %v238 = vpop.f32.mrb[0].mxu0
      %239 = vdwg.mxu0
      %v241 = vsel %vm191, %v179, 0
      %v244 = vsel %vm195, %v176, 0
      %246 = vmatprep.subr.bf16.mxu0 0
      %247 = vmatpush1.bf16.msra.mxu0 %v175
      %248 = vmatprep.subr.bf16.mxu0 0
      %249 = vmatpush1.bf16.msra.mxu0 %v244
      %250 = vmatprep.subr.bf16.mxu0 0
      %251 = vmatpush1.bf16.msra.mxu0 0
      %252 = vmatprep.subr.bf16.mxu0 0
      %253 = vmatpush1.bf16.msra.mxu0 0
      %254 = vmatprep.subr.bf16.mxu0 0
      %255 = vmatpush1.bf16.msra.mxu0 0
      %256 = vmatprep.subr.bf16.mxu0 0
      %257 = vmatpush1.bf16.msra.mxu0 0
      %258 = vmatprep.subr.bf16.mxu0 0
      %259 = vmatpush1.bf16.msra.mxu0 0
      %260 = vmatprep.subr.bf16.mxu0 0
      %261 = vmatpush1.bf16.msra.mxu0 0
      %262 = vmatprep.subr.bf16.mxu0 0
      %263 = vmatpush1.bf16.msra.mxu0 0
      %264 = vmatprep.subr.bf16.mxu0 0
      %265 = vmatpush1.bf16.msra.mxu0 0
      %266 = vmatprep.subr.bf16.mxu0 0
      %267 = vmatpush1.bf16.msra.mxu0 0
      %268 = vmatprep.subr.bf16.mxu0 0
      %269 = vmatpush1.bf16.msra.mxu0 0
      %270 = vmatprep.subr.bf16.mxu0 0
      %271 = vmatpush1.bf16.msra.mxu0 0
      %272 = vmatprep.subr.bf16.mxu0 0
      %273 = vmatpush1.bf16.msra.mxu0 0
      %274 = vmatprep.subr.bf16.mxu0 0
      %275 = vmatpush1.bf16.msra.mxu0 0
      %276 = vmatprep.subr.bf16.mxu0 0
      %277 = vmatpush1.bf16.msra.mxu0 0
      %278 = vmatprep.mubr.bf16.mxu0 0
      %279 = vmatmul.mubr.bf16.gmra.mrb[0].mxu0 %v241
      %v280 = vpop.f32.mrb[0].mxu0
      %v281 = vadd.f32 %v234, %v280
      %v282 = vpop.f32.mrb[0].mxu0
      %v283 = vpop.f32.mrb[0].mxu0
      %v284 = vadd.f32 %v237, %v283
      %v285 = vpop.f32.mrb[0].mxu0
      %286 = vdwg.mxu0
      %s287 = scalar_lea.vmem %s1, 32
      %v288 = vld [vmem:[%s287] sm:$0xff]
      %v289 = vld [vmem:[%s287 + $0x8] sm:$0xff]
      %v290 = vpack.c.bf16 %v289, %v288
      %291 = vrot.lane.b32.xlu0 %v175, 126
      %v292 = vpop.permute.xlu0 %291
      %293 = vrot.lane.b32.xlu0 %v176, 126
      %v294 = vpop.permute.xlu0 %293
      %v297 = vsel %vm191, %v290, 0
      %v300 = vsel %vm195, %v294, 0
      %302 = vmatprep.subr.bf16.mxu0 0
      %303 = vmatpush1.bf16.msra.mxu0 %v292
      %304 = vmatprep.subr.bf16.mxu0 0
      %305 = vmatpush1.bf16.msra.mxu0 %v300
      %306 = vmatprep.subr.bf16.mxu0 0
      %307 = vmatpush1.bf16.msra.mxu0 0
      %308 = vmatprep.subr.bf16.mxu0 0
      %309 = vmatpush1.bf16.msra.mxu0 0
      %310 = vmatprep.subr.bf16.mxu0 0
      %311 = vmatpush1.bf16.msra.mxu0 0
      %312 = vmatprep.subr.bf16.mxu0 0
      %313 = vmatpush1.bf16.msra.mxu0 0
      %314 = vmatprep.subr.bf16.mxu0 0
      %315 = vmatpush1.bf16.msra.mxu0 0
      %316 = vmatprep.subr.bf16.mxu0 0
      %317 = vmatpush1.bf16.msra.mxu0 0
      %318 = vmatprep.subr.bf16.mxu0 0
      %319 = vmatpush1.bf16.msra.mxu0 0
      %320 = vmatprep.subr.bf16.mxu0 0
      %321 = vmatpush1.bf16.msra.mxu0 0
      %322 = vmatprep.subr.bf16.mxu0 0
      %323 = vmatpush1.bf16.msra.mxu0 0
      %324 = vmatprep.subr.bf16.mxu0 0
      %325 = vmatpush1.bf16.msra.mxu0 0
      %326 = vmatprep.subr.bf16.mxu0 0
      %327 = vmatpush1.bf16.msra.mxu0 0
      %328 = vmatprep.subr.bf16.mxu0 0
      %329 = vmatpush1.bf16.msra.mxu0 0
      %330 = vmatprep.subr.bf16.mxu0 0
      %331 = vmatpush1.bf16.msra.mxu0 0
      %332 = vmatprep.subr.bf16.mxu0 0
      %333 = vmatpush1.bf16.msra.mxu0 0
      %334 = vmatprep.mubr.bf16.mxu0 0
      %335 = vmatmul.mubr.bf16.gmra.mrb[0].mxu0 %v297
      %v336 = vpop.f32.mrb[0].mxu0
      %v337 = vadd.f32 0.0, %v336
      %v338 = vpop.f32.mrb[0].mxu0
      %v339 = vpop.f32.mrb[0].mxu0
      %v340 = vadd.f32 0.0, %v339
      %v341 = vpop.f32.mrb[0].mxu0
      %342 = vdwg.mxu0
      %v343 = vadd.f32 %v281, %v337
      %v344 = vadd.f32 %v284, %v340
      %s345 = scalar_lea.vmem %s1, 48
      %v346 = vld [vmem:[%s345] sm:$0xff]
      %v347 = vld [vmem:[%s345 + $0x8] sm:$0xff]
      %v348 = vpack.c.bf16 %v347, %v346
      %349 = vrot.lane.b32.xlu0 %v175, 122
      %v350 = vpop.permute.xlu0 %349
      %351 = vrot.lane.b32.xlu0 %v176, 122
      %v352 = vpop.permute.xlu0 %351
      %v355 = vsel %vm191, %v348, 0
      %v358 = vsel %vm195, %v352, 0
      %360 = vmatprep.subr.bf16.mxu0 0
      %361 = vmatpush1.bf16.msra.mxu0 %v350
      %362 = vmatprep.subr.bf16.mxu0 0
      %363 = vmatpush1.bf16.msra.mxu0 %v358
      %364 = vmatprep.subr.bf16.mxu0 0
      %365 = vmatpush1.bf16.msra.mxu0 0
      %366 = vmatprep.subr.bf16.mxu0 0
      %367 = vmatpush1.bf16.msra.mxu0 0
      %368 = vmatprep.subr.bf16.mxu0 0
      %369 = vmatpush1.bf16.msra.mxu0 0
      %370 = vmatprep.subr.bf16.mxu0 0
      %371 = vmatpush1.bf16.msra.mxu0 0
      %372 = vmatprep.subr.bf16.mxu0 0
      %373 = vmatpush1.bf16.msra.mxu0 0
      %374 = vmatprep.subr.bf16.mxu0 0
      %375 = vmatpush1.bf16.msra.mxu0 0
      %376 = vmatprep.subr.bf16.mxu0 0
      %377 = vmatpush1.bf16.msra.mxu0 0
      %378 = vmatprep.subr.bf16.mxu0 0
      %379 = vmatpush1.bf16.msra.mxu0 0
      %380 = vmatprep.subr.bf16.mxu0 0
      %381 = vmatpush1.bf16.msra.mxu0 0
      %382 = vmatprep.subr.bf16.mxu0 0
      %383 = vmatpush1.bf16.msra.mxu0 0
      %384 = vmatprep.subr.bf16.mxu0 0
      %385 = vmatpush1.bf16.msra.mxu0 0
      %386 = vmatprep.subr.bf16.mxu0 0
      %387 = vmatpush1.bf16.msra.mxu0 0
      %388 = vmatprep.subr.bf16.mxu0 0
      %389 = vmatpush1.bf16.msra.mxu0 0
      %390 = vmatprep.subr.bf16.mxu0 0
      %391 = vmatpush1.bf16.msra.mxu0 0
      %392 = vmatprep.mubr.bf16.mxu0 0
      %393 = vmatmul.mubr.bf16.gmra.mrb[0].mxu0 %v355
      %v394 = vpop.f32.mrb[0].mxu0
      %v395 = vadd.f32 0.0, %v394
      %v396 = vpop.f32.mrb[0].mxu0
      %v397 = vpop.f32.mrb[0].mxu0
      %v398 = vadd.f32 0.0, %v397
      %v399 = vpop.f32.mrb[0].mxu0
      %400 = vdwg.mxu0
      %v401 = vadd.f32 %v343, %v395
      %v402 = vadd.f32 %v344, %v398
      %s403 = scalar_lea.vmem %s1, 64
      %v404 = vld [vmem:[%s403] sm:$0xff]
      %v405 = vld [vmem:[%s403 + $0x8] sm:$0xff]
      %v406 = vpack.c.bf16 %v405, %v404
      %407 = vrot.lane.b32.xlu0 %v175, 121
      %v408 = vpop.permute.xlu0 %407
      %409 = vrot.lane.b32.xlu0 %v176, 121
      %v410 = vpop.permute.xlu0 %409
      %v413 = vsel %vm191, %v406, 0
      %v416 = vsel %vm195, %v410, 0
      %418 = vmatprep.subr.bf16.mxu0 0
      %419 = vmatpush1.bf16.msra.mxu0 %v408
      %420 = vmatprep.subr.bf16.mxu0 0
      %421 = vmatpush1.bf16.msra.mxu0 %v416
      %422 = vmatprep.subr.bf16.mxu0 0
      %423 = vmatpush1.bf16.msra.mxu0 0
      %424 = vmatprep.subr.bf16.mxu0 0
      %425 = vmatpush1.bf16.msra.mxu0 0
      %426 = vmatprep.subr.bf16.mxu0 0
      %427 = vmatpush1.bf16.msra.mxu0 0
      %428 = vmatprep.subr.bf16.mxu0 0
      %429 = vmatpush1.bf16.msra.mxu0 0
      %430 = vmatprep.subr.bf16.mxu0 0
      %431 = vmatpush1.bf16.msra.mxu0 0
      %432 = vmatprep.subr.bf16.mxu0 0
      %433 = vmatpush1.bf16.msra.mxu0 0
      %434 = vmatprep.subr.bf16.mxu0 0
      %435 = vmatpush1.bf16.msra.mxu0 0
      %436 = vmatprep.subr.bf16.mxu0 0
      %437 = vmatpush1.bf16.msra.mxu0 0
      %438 = vmatprep.subr.bf16.mxu0 0
      %439 = vmatpush1.bf16.msra.mxu0 0
      %440 = vmatprep.subr.bf16.mxu0 0
      %441 = vmatpush1.bf16.msra.mxu0 0
      %442 = vmatprep.subr.bf16.mxu0 0
      %443 = vmatpush1.bf16.msra.mxu0 0
      %444 = vmatprep.subr.bf16.mxu0 0
      %445 = vmatpush1.bf16.msra.mxu0 0
      %446 = vmatprep.subr.bf16.mxu0 0
      %447 = vmatpush1.bf16.msra.mxu0 0
      %448 = vmatprep.subr.bf16.mxu0 0
      %449 = vmatpush1.bf16.msra.mxu0 0
      %450 = vmatprep.mubr.bf16.mxu0 0
      %451 = vmatmul.mubr.bf16.gmra.mrb[0].mxu0 %v413
      %v452 = vpop.f32.mrb[0].mxu0
      %v453 = vadd.f32 0.0, %v452
      %v454 = vpop.f32.mrb[0].mxu0
      %v455 = vpop.f32.mrb[0].mxu0
      %v456 = vadd.f32 0.0, %v455
      %v457 = vpop.f32.mrb[0].mxu0
      %458 = vdwg.mxu0
      %v459 = vadd.f32 %v401, %v453
      %v460 = vadd.f32 %v402, %v456
      %s461 = scalar_lea.vmem %s1, 80
      %v462 = vld [vmem:[%s461] sm:$0xff]
      %v463 = vld [vmem:[%s461 + $0x8] sm:$0xff]
      %v464 = vpack.c.bf16 %v463, %v462
      %465 = vrot.lane.b32.xlu0 %v175, 120
      %v466 = vpop.permute.xlu0 %465
      %467 = vrot.lane.b32.xlu0 %v176, 120
      %v468 = vpop.permute.xlu0 %467
      %v471 = vsel %vm191, %v464, 0
      %v474 = vsel %vm195, %v468, 0
      %476 = vmatprep.subr.bf16.mxu0 0
      %477 = vmatpush1.bf16.msra.mxu0 %v466
      %478 = vmatprep.subr.bf16.mxu0 0
      %479 = vmatpush1.bf16.msra.mxu0 %v474
      %480 = vmatprep.subr.bf16.mxu0 0
      %481 = vmatpush1.bf16.msra.mxu0 0
      %482 = vmatprep.subr.bf16.mxu0 0
      %483 = vmatpush1.bf16.msra.mxu0 0
      %484 = vmatprep.subr.bf16.mxu0 0
      %485 = vmatpush1.bf16.msra.mxu0 0
      %486 = vmatprep.subr.bf16.mxu0 0
      %487 = vmatpush1.bf16.msra.mxu0 0
      %488 = vmatprep.subr.bf16.mxu0 0
      %489 = vmatpush1.bf16.msra.mxu0 0
      %490 = vmatprep.subr.bf16.mxu0 0
      %491 = vmatpush1.bf16.msra.mxu0 0
      %492 = vmatprep.subr.bf16.mxu0 0
      %493 = vmatpush1.bf16.msra.mxu0 0
      %494 = vmatprep.subr.bf16.mxu0 0
      %495 = vmatpush1.bf16.msra.mxu0 0
      %496 = vmatprep.subr.bf16.mxu0 0
      %497 = vmatpush1.bf16.msra.mxu0 0
      %498 = vmatprep.subr.bf16.mxu0 0
      %499 = vmatpush1.bf16.msra.mxu0 0
      %500 = vmatprep.subr.bf16.mxu0 0
      %501 = vmatpush1.bf16.msra.mxu0 0
      %502 = vmatprep.subr.bf16.mxu0 0
      %503 = vmatpush1.bf16.msra.mxu0 0
      %504 = vmatprep.subr.bf16.mxu0 0
      %505 = vmatpush1.bf16.msra.mxu0 0
      %506 = vmatprep.subr.bf16.mxu0 0
      %507 = vmatpush1.bf16.msra.mxu0 0
      %508 = vmatprep.mubr.bf16.mxu0 0
      %509 = vmatmul.mubr.bf16.gmra.mrb[0].mxu0 %v471
      %v510 = vpop.f32.mrb[0].mxu0
      %v511 = vadd.f32 0.0, %v510
      %v512 = vpop.f32.mrb[0].mxu0
      %v513 = vpop.f32.mrb[0].mxu0
      %v514 = vadd.f32 0.0, %v513
      %v515 = vpop.f32.mrb[0].mxu0
      %516 = vdwg.mxu0
      %v517 = vadd.f32 %v459, %v511
      %v518 = vadd.f32 %v460, %v514
      %s519 = scalar_lea.vmem %s1, 96
      %v520 = vld [vmem:[%s519] sm:$0xff]
      %v521 = vld [vmem:[%s519 + $0x8] sm:$0xff]
      %v522 = vpack.c.bf16 %v521, %v520
      %523 = vrot.lane.b32.xlu0 %v175, 116
      %v524 = vpop.permute.xlu0 %523
      %525 = vrot.lane.b32.xlu0 %v176, 116
      %v526 = vpop.permute.xlu0 %525
      %v529 = vsel %vm191, %v522, 0
      %v532 = vsel %vm195, %v526, 0
      %534 = vmatprep.subr.bf16.mxu0 0
      %535 = vmatpush1.bf16.msra.mxu0 %v524
      %536 = vmatprep.subr.bf16.mxu0 0
      %537 = vmatpush1.bf16.msra.mxu0 %v532
      %538 = vmatprep.subr.bf16.mxu0 0
      %539 = vmatpush1.bf16.msra.mxu0 0
      %540 = vmatprep.subr.bf16.mxu0 0
      %541 = vmatpush1.bf16.msra.mxu0 0
      %542 = vmatprep.subr.bf16.mxu0 0
      %543 = vmatpush1.bf16.msra.mxu0 0
      %544 = vmatprep.subr.bf16.mxu0 0
      %545 = vmatpush1.bf16.msra.mxu0 0
      %546 = vmatprep.subr.bf16.mxu0 0
      %547 = vmatpush1.bf16.msra.mxu0 0
      %548 = vmatprep.subr.bf16.mxu0 0
      %549 = vmatpush1.bf16.msra.mxu0 0
      %550 = vmatprep.subr.bf16.mxu0 0
      %551 = vmatpush1.bf16.msra.mxu0 0
      %552 = vmatprep.subr.bf16.mxu0 0
      %553 = vmatpush1.bf16.msra.mxu0 0
      %554 = vmatprep.subr.bf16.mxu0 0
      %555 = vmatpush1.bf16.msra.mxu0 0
      %556 = vmatprep.subr.bf16.mxu0 0
      %557 = vmatpush1.bf16.msra.mxu0 0
      %558 = vmatprep.subr.bf16.mxu0 0
      %559 = vmatpush1.bf16.msra.mxu0 0
      %560 = vmatprep.subr.bf16.mxu0 0
      %561 = vmatpush1.bf16.msra.mxu0 0
      %562 = vmatprep.subr.bf16.mxu0 0
      %563 = vmatpush1.bf16.msra.mxu0 0
      %564 = vmatprep.subr.bf16.mxu0 0
      %565 = vmatpush1.bf16.msra.mxu0 0
      %566 = vmatprep.mubr.bf16.mxu0 0
      %567 = vmatmul.mubr.bf16.gmra.mrb[0].mxu0 %v529
      %v568 = vpop.f32.mrb[0].mxu0
      %v569 = vadd.f32 0.0, %v568
      %v570 = vpop.f32.mrb[0].mxu0
      %v571 = vpop.f32.mrb[0].mxu0
      %v572 = vadd.f32 0.0, %v571
      %v573 = vpop.f32.mrb[0].mxu0
      %574 = vdwg.mxu0
      %v575 = vadd.f32 %v517, %v569
      %v576 = vadd.f32 %v518, %v572
      %s577 = scalar_lea.vmem %s1, 112
      %v578 = vld [vmem:[%s577] sm:$0xff]
      %v579 = vld [vmem:[%s577 + $0x8] sm:$0xff]
      %v580 = vpack.c.bf16 %v579, %v578
      %581 = vrot.lane.b32.xlu0 %v175, 115
      %v582 = vpop.permute.xlu0 %581
      %583 = vrot.lane.b32.xlu0 %v176, 115
      %v584 = vpop.permute.xlu0 %583
      %v587 = vsel %vm191, %v580, 0
      %v590 = vsel %vm195, %v584, 0
      %592 = vmatprep.subr.bf16.mxu0 0
      %593 = vmatpush1.bf16.msra.mxu0 %v582
      %594 = vmatprep.subr.bf16.mxu0 0
      %595 = vmatpush1.bf16.msra.mxu0 %v590
      %596 = vmatprep.subr.bf16.mxu0 0
      %597 = vmatpush1.bf16.msra.mxu0 0
      %598 = vmatprep.subr.bf16.mxu0 0
      %599 = vmatpush1.bf16.msra.mxu0 0
      %600 = vmatprep.subr.bf16.mxu0 0
      %601 = vmatpush1.bf16.msra.mxu0 0
      %602 = vmatprep.subr.bf16.mxu0 0
      %603 = vmatpush1.bf16.msra.mxu0 0
      %604 = vmatprep.subr.bf16.mxu0 0
      %605 = vmatpush1.bf16.msra.mxu0 0
      %606 = vmatprep.subr.bf16.mxu0 0
      %607 = vmatpush1.bf16.msra.mxu0 0
      %608 = vmatprep.subr.bf16.mxu0 0
      %609 = vmatpush1.bf16.msra.mxu0 0
      %610 = vmatprep.subr.bf16.mxu0 0
      %611 = vmatpush1.bf16.msra.mxu0 0
      %612 = vmatprep.subr.bf16.mxu0 0
      %613 = vmatpush1.bf16.msra.mxu0 0
      %614 = vmatprep.subr.bf16.mxu0 0
      %615 = vmatpush1.bf16.msra.mxu0 0
      %616 = vmatprep.subr.bf16.mxu0 0
      %617 = vmatpush1.bf16.msra.mxu0 0
      %618 = vmatprep.subr.bf16.mxu0 0
      %619 = vmatpush1.bf16.msra.mxu0 0
      %620 = vmatprep.subr.bf16.mxu0 0
      %621 = vmatpush1.bf16.msra.mxu0 0
      %622 = vmatprep.subr.bf16.mxu0 0
      %623 = vmatpush1.bf16.msra.mxu0 0
      %624 = vmatprep.mubr.bf16.mxu0 0
      %625 = vmatmul.mubr.bf16.gmra.mrb[0].mxu0 %v587
      %v626 = vpop.f32.mrb[0].mxu0
      %v627 = vadd.f32 0.0, %v626
      %v628 = vpop.f32.mrb[0].mxu0
      %v629 = vpop.f32.mrb[0].mxu0
      %v630 = vadd.f32 0.0, %v629
      %v631 = vpop.f32.mrb[0].mxu0
      %632 = vdwg.mxu0
      %v633 = vadd.f32 %v575, %v627
      %v634 = vadd.f32 %v576, %v630
      %s635 = scalar_lea.vmem %s1, 128
      %v636 = vld [vmem:[%s635] sm:$0xff]
      %v637 = vld [vmem:[%s635 + $0x8] sm:$0xff]
      %v638 = vpack.c.bf16 %v637, %v636
      %639 = vrot.lane.b32.xlu0 %v175, 114
      %v640 = vpop.permute.xlu0 %639
      %641 = vrot.lane.b32.xlu0 %v176, 114
      %v642 = vpop.permute.xlu0 %641
      %v645 = vsel %vm191, %v638, 0
      %v648 = vsel %vm195, %v642, 0
      %650 = vmatprep.subr.bf16.mxu0 0
      %651 = vmatpush1.bf16.msra.mxu0 %v640
      %652 = vmatprep.subr.bf16.mxu0 0
      %653 = vmatpush1.bf16.msra.mxu0 %v648
      %654 = vmatprep.subr.bf16.mxu0 0
      %655 = vmatpush1.bf16.msra.mxu0 0
      %656 = vmatprep.subr.bf16.mxu0 0
      %657 = vmatpush1.bf16.msra.mxu0 0
      %658 = vmatprep.subr.bf16.mxu0 0
      %659 = vmatpush1.bf16.msra.mxu0 0
      %660 = vmatprep.subr.bf16.mxu0 0
      %661 = vmatpush1.bf16.msra.mxu0 0
      %662 = vmatprep.subr.bf16.mxu0 0
      %663 = vmatpush1.bf16.msra.mxu0 0
      %664 = vmatprep.subr.bf16.mxu0 0
      %665 = vmatpush1.bf16.msra.mxu0 0
      %666 = vmatprep.subr.bf16.mxu0 0
      %667 = vmatpush1.bf16.msra.mxu0 0
      %668 = vmatprep.subr.bf16.mxu0 0
      %669 = vmatpush1.bf16.msra.mxu0 0
      %670 = vmatprep.subr.bf16.mxu0 0
      %671 = vmatpush1.bf16.msra.mxu0 0
      %672 = vmatprep.subr.bf16.mxu0 0
      %673 = vmatpush1.bf16.msra.mxu0 0
      %674 = vmatprep.subr.bf16.mxu0 0
      %675 = vmatpush1.bf16.msra.mxu0 0
      %676 = vmatprep.subr.bf16.mxu0 0
      %677 = vmatpush1.bf16.msra.mxu0 0
      %678 = vmatprep.subr.bf16.mxu0 0
      %679 = vmatpush1.bf16.msra.mxu0 0
      %680 = vmatprep.subr.bf16.mxu0 0
      %681 = vmatpush1.bf16.msra.mxu0 0
      %682 = vmatprep.mubr.bf16.mxu0 0
      %683 = vmatmul.mubr.bf16.gmra.mrb[0].mxu0 %v645
      %v684 = vpop.f32.mrb[0].mxu0
      %v685 = vadd.f32 0.0, %v684
      %v686 = vpop.f32.mrb[0].mxu0
      %v687 = vpop.f32.mrb[0].mxu0
      %v688 = vadd.f32 0.0, %v687
      %v689 = vpop.f32.mrb[0].mxu0
      %690 = vdwg.mxu0
      %v691 = vadd.f32 %v633, %v685
      %v692 = vadd.f32 %v634, %v688
      %v693 = vld [vmem:[%s2] sm:$0xff]
      %v694 = vld [vmem:[%s2 + $0x8] sm:$0xff]
      %696 = vset.pattern.permute.xlu0 0
      %697 = vperm.xlu0 %696, %v693
      %v698 = vpop.permute.xlu0 %697
      %701 = vset.pattern.permute.xlu0 0
      %702 = vperm.xlu0 %701, %v694
      %v703 = vpop.permute.xlu0 %702
      %v705 = vadd.f32 %v691, %v698
      %v706 = vadd.f32 %v692, %v703
      %v707 = vmax.f32 %v705, 0.0
      %v708 = vmax.f32 %v706, 0.0
      %vm709 = vcmask 179200
      %710 = vst.msk [vmem:[%s170] sm:$0xff] %vm709, %v707
      %711 = vst.msk [vmem:[%s170 + $0x8] sm:$0xff] %vm709, %v708
      %p712 = scmp.lt.s32.totalorder %s14, 1
      %s713 = scalar_select %p712, %s14, 1
      %s714 = smul.addr %s713, 2
      %s715 = smul.addr %s714, 8
      %s716 = scalar_lea.vmem %s3, %s715
      // Predicated region
      $region33: #{model_step.25} parent=31 // pred_check
        %p717 = pneg %p100
      $region34: #{model_step.25} parent=31 // pred_check_branch
        %719 = sbr.rel (%p717) target = $region36
      $region35: #{model_step.25} parent=31 // pred_region
        _
      $region36: #{model_step.25} parent=31 // pred_fallthru
        _
    $region32: #{model_step.25} parent=5 // pred_fallthru
      _
    %p720 = scmp.le.s32.totalorder 2, %s9
    // Predicated region
    $region37: #{model_step.25} parent=5 // pred_check
      %p721 = pneg %p720
    $region38: #{model_step.25} parent=5 // pred_check_branch
      %723 = sbr.rel (%p721) target = $region40
    $region39: #{model_step.25} parent=5 // pred_region
      %s724 = ssub.s32 %s9, 2
      // Predicated region
      $region41: #{model_step.25} parent=39 // pred_check
        %p725 = pneg %p106
      $region42: #{model_step.25} parent=39 // pred_check_branch
        %727 = sbr.rel (%p725) target = $region44
      $region43: #{model_step.25} parent=39 // pred_region
        %p728 = scmp.lt.s32.totalorder %s15, 1
        %s729 = scalar_select %p728, %s15, 1
        %s730 = smul.addr %s729, 2
        %s731 = smul.addr %s730, 8
        %s732 = scalar_lea.vmem %s3, %s731
      $region44: #{model_step.25} parent=39 // pred_fallthru
        _
    $region40: #{model_step.25} parent=5 // pred_fallthru
      _
  $region6: #{model_step.25} parent=0 // loop_footer
    %s13 = sadd.s32 1, %s9
  $region7: #{model_step.25} parent=0 // loop_footer_branch
    %8 = sbr.rel target = $region3
  $region8: #{model_step.25} parent=0 // loop_exit
    _

// kernel: model_step.27
$region0: #{model_step.27}
  #allocation0 [shape = 'u32[]', space=smem, size = 0x4, offset = 0x4, fixed_abs, tag = 'smem constant byte address 0x4 - core index']
  #allocation1 [shape = 'u32[144,128]{1,0:T(1,128)}', space=vmem, size = 0x12000, scoped, tag = 'internal scratch']
  %s0 = inlined_call_operand.vmem [shape: f32[16,4], index: 0, kind: input, shape index: {}]
  %s1 = inlined_call_operand.hbm [shape: f32[4,16], index: 1, kind: input, shape index: {}]
  %s2 = inlined_call_operand.vmem [shape: f32[16,16], index: 2, kind: output, shape index: {}]
  %s3 = sld [smem:[#allocation0]]
  $region22: #{model_step.27} parent=0
    _
  %s5 = ssub.s32 1, %s3
  %s6 = scalar_select 0, %s5, %s3
  $region1: #{model_step.27} parent=0
    #allocation2 [shape = 'u8[2048]{0}', space=vmem, size = 0x800, scoped, tag = 'input window, operand 1, single buffered']
    #allocation3 [shape = 's32[1]{0}', space=sflag, size = 0x4, scoped, tag = 'scoped memory for model_step.27']
    %7 = vsyncpa [#allocation3], 0
    // Predicated region
    $region2: #{model_step.27} parent=1 // pred_check
      _
    $region3: #{model_step.27} parent=1 // pred_check_branch
      %9 = sbr.rel (0) target = $region5
    $region4: #{model_step.27} parent=1 // pred_region
      _
    $region5: #{model_step.27} parent=1 // pred_fallthru
      _
    // Predicated region
    $region6: #{model_step.27} parent=1 // pred_check
      _
    $region7: #{model_step.27} parent=1 // pred_check_branch
      %11 = sbr.rel (0) target = $region9
    $region8: #{model_step.27} parent=1 // pred_region
      %s13 = ssub.s32 64, 64
      %14 = vsyncadd [#allocation3], %s13
      %s16 = sshll.u32 [#allocation2], 4
      %s17 = int_to_ptr.vmem [resolvable:$true] %s16
      %19 = dma.hbm_to_vmem [thread:$0]  %s1, 64, %s17, [#allocation3]
    $region9: #{model_step.27} parent=1 // pred_fallthru
      _
    // Predicated region
    $region10: #{model_step.27} parent=1 // pred_check
      _
    $region11: #{model_step.27} parent=1 // pred_check_branch
      %21 = sbr.rel (0) target = $region13
    $region12: #{model_step.27} parent=1 // pred_region
      %22 = dma.done [#allocation3], 64
    $region13: #{model_step.27} parent=1 // pred_fallthru
      _
    %v23 = vld [vmem:[%s0] sm:$0xff]
    %v24 = vld [vmem:[%s0 + $0x8] sm:$0xff]
    %v25 = vld [vmem:[#allocation2] sm:$0xf]
    %vm26 = vcmask 31744
    %v28 = vsel %vm26, %v23, 0
    %v31 = vsel %vm26, %v24, 0
    %vm33 = vcmask 1043456
    %v35 = vsel %vm33, %v25, 0
    %37 = vmatprep.subr.mxu0 0.0
    %38 = vmatpush1.msra.mxu0 %v35
    %39 = vmatprep.subr.mxu0 0.0
    %40 = vmatpush1.msra.mxu0 0.0
    %41 = vmatprep.subr.mxu0 0.0
    %42 = vmatpush1.msra.mxu0 0.0
    %43 = vmatprep.subr.mxu0 0.0
    %44 = vmatpush1.msra.mxu0 0.0
    %45 = vmatprep.subr.mxu0 0.0
    %46 = vmatpush1.msra.mxu0 0.0
    %47 = vmatprep.subr.mxu0 0.0
    %48 = vmatpush1.msra.mxu0 0.0
    %49 = vmatprep.subr.mxu0 0.0
    %50 = vmatpush1.msra.mxu0 0.0
    %51 = vmatprep.subr.mxu0 0.0
    %52 = vmatpush1.msra.mxu0 0.0
    %53 = vmatprep.subr.mxu0 0.0
    %54 = vmatpush1.msra.mxu0 0.0
    %55 = vmatprep.subr.mxu0 0.0
    %56 = vmatpush1.msra.mxu0 0.0
    %57 = vmatprep.subr.mxu0 0.0
    %58 = vmatpush1.msra.mxu0 0.0
    %59 = vmatprep.subr.mxu0 0.0
    %60 = vmatpush1.msra.mxu0 0.0
    %61 = vmatprep.subr.mxu0 0.0
    %62 = vmatpush1.msra.mxu0 0.0
    %63 = vmatprep.subr.mxu0 0.0
    %64 = vmatpush1.msra.mxu0 0.0
    %65 = vmatprep.subr.mxu0 0.0
    %66 = vmatpush1.msra.mxu0 0.0
    %67 = vmatprep.subr.mxu0 0.0
    %68 = vmatpush1.msra.mxu0 0.0
    %69 = vmatprep.subr.mxu0 0.0
    %70 = vmatpush1.msra.mxu0 0.0
    %71 = vmatprep.subr.mxu0 0.0
    %72 = vmatpush1.msra.mxu0 0.0
    %73 = vmatprep.subr.mxu0 0.0
    %74 = vmatpush1.msra.mxu0 0.0
    %75 = vmatprep.subr.mxu0 0.0
    %76 = vmatpush1.msra.mxu0 0.0
    %77 = vmatprep.subr.mxu0 0.0
    %78 = vmatpush1.msra.mxu0 0.0
    %79 = vmatprep.subr.mxu0 0.0
    %80 = vmatpush1.msra.mxu0 0.0
    %81 = vmatprep.subr.mxu0 0.0
    %82 = vmatpush1.msra.mxu0 0.0
    %83 = vmatprep.subr.mxu0 0.0
    %84 = vmatpush1.msra.mxu0 0.0
    %85 = vmatprep.subr.mxu0 0.0
    %86 = vmatpush1.msra.mxu0 0.0
    %87 = vmatprep.subr.mxu0 0.0
    %88 = vmatpush1.msra.mxu0 0.0
    %89 = vmatprep.subr.mxu0 0.0
    %90 = vmatpush1.msra.mxu0 0.0
    %91 = vmatprep.subr.mxu0 0.0
    %92 = vmatpush1.msra.mxu0 0.0
    %93 = vmatprep.subr.mxu0 0.0
    %94 = vmatpush1.msra.mxu0 0.0
    %95 = vmatprep.subr.mxu0 0.0
    %96 = vmatpush1.msra.mxu0 0.0
    %97 = vmatprep.subr.mxu0 0.0
    %98 = vmatpush1.msra.mxu0 0.0
    %99 = vmatprep.subr.mxu0 0.0
    %100 = vmatpush1.msra.mxu0 0.0
    %101 = vmatprep.mubr.f32.mxu0 0.0
    %102 = vmatmul.mubr.f32.gmra.mrb[0].mxu0 %v28
    %v103 = vpop.f32.mrb[0].mxu0
    %v104 = vadd.f32 0.0, %v103
    %v105 = vpop.f32.mrb[0].mxu0
    %106 = vmatprep.mubr.f32.mxu0 0.0
    %107 = vmatmul.mubr.f32.gmra.mrb[0].mxu0 %v31
    %v108 = vpop.f32.mrb[0].mxu0
    %v109 = vadd.f32 0.0, %v108
    %v110 = vpop.f32.mrb[0].mxu0
    %111 = vdwg.mxu0
    %vm112 = vcmask 130048
    %113 = vst.msk [vmem:[%s2] sm:$0xff] %vm112, %v104
    %114 = vst.msk [vmem:[%s2 + $0x8] sm:$0xff] %vm112, %v109
    // Predicated region
    $region14: #{model_step.27} parent=1 // pred_check
      _
    $region15: #{model_step.27} parent=1 // pred_check_branch
      %116 = sbr.rel (0) target = $region17
    $region16: #{model_step.27} parent=1 // pred_region
      _
    $region17: #{model_step.27} parent=1 // pred_fallthru
      _
    // Predicated region
    $region18: #{model_step.27} parent=1 // pred_check
      _
    $region19: #{model_step.27} parent=1 // pred_check_branch
      %118 = sbr.rel (0) target = $region21
    $region20: #{model_step.27} parent=1 // pred_region
      _
    $region21: #{model_step.27} parent=1 // pred_fallthru
      _
    %119 = vsyncpa [#allocation3], 1

// kernel: model_step.28
$region0: #{model_step.28}
  #allocation0 [shape = 'u32[]', space=smem, size = 0x4, offset = 0x4, fixed_abs, tag = 'smem constant byte address 0x4 - core index']
  #allocation1 [shape = 'u32[144,128]{1,0:T(1,128)}', space=vmem, size = 0x12000, scoped, tag = 'internal scratch']
  %s0 = inlined_call_operand.vmem [shape: f32[64,4], index: 0, kind: input, shape index: {}]
  %s1 = inlined_call_operand.vmem [shape: f32[4,16], index: 1, kind: input, shape index: {}]
  %s2 = inlined_call_operand.vmem [shape: f32[64,16], index: 2, kind: output, shape index: {}]
  %s3 = sld [smem:[#allocation0]]
  $region18: #{model_step.28} parent=0
    _
  %s5 = ssub.s32 1, %s3
  %s6 = scalar_select 0, %s5, %s3
  // Predicated region
  $region2: #{model_step.28} parent=0 // pred_check
    _
  $region3: #{model_step.28} parent=0 // pred_check_branch
    %8 = sbr.rel (0) target = $region5
  $region4: #{model_step.28} parent=0 // pred_region
    _
  $region5: #{model_step.28} parent=0 // pred_fallthru
    _
  // Predicated region
  $region6: #{model_step.28} parent=0 // pred_check
    _
  $region7: #{model_step.28} parent=0 // pred_check_branch
    %10 = sbr.rel (0) target = $region9
  $region8: #{model_step.28} parent=0 // pred_region
    _
  $region9: #{model_step.28} parent=0 // pred_fallthru
    _
  %v11 = vld [vmem:[%s0] sm:$0xff]
  %v12 = vld [vmem:[%s0 + $0x8] sm:$0xff]
  %v13 = vld [vmem:[%s0 + $0x10] sm:$0xff]
  %v14 = vld [vmem:[%s0 + $0x18] sm:$0xff]
  %v15 = vld [vmem:[%s0 + $0x20] sm:$0xff]
  %v16 = vld [vmem:[%s0 + $0x28] sm:$0xff]
  %v17 = vld [vmem:[%s0 + $0x30] sm:$0xff]
  %v18 = vld [vmem:[%s0 + $0x38] sm:$0xff]
  %v19 = vld [vmem:[%s1] sm:$0xf]
  %vm20 = vcmask 31744
  %v22 = vsel %vm20, %v11, 0
  %v25 = vsel %vm20, %v12, 0
  %v28 = vsel %vm20, %v13, 0
  %v31 = vsel %vm20, %v14, 0
  %v34 = vsel %vm20, %v15, 0
  %v37 = vsel %vm20, %v16, 0
  %v40 = vsel %vm20, %v17, 0
  %v43 = vsel %vm20, %v18, 0
  %vm45 = vcmask 1043456
  %v47 = vsel %vm45, %v19, 0
  %49 = vmatprep.subr.mxu0 0.0
  %50 = vmatpush1.msra.mxu0 %v47
  %51 = vmatprep.subr.mxu0 0.0
  %52 = vmatpush1.msra.mxu0 0.0
  %53 = vmatprep.subr.mxu0 0.0
  %54 = vmatpush1.msra.mxu0 0.0
  %55 = vmatprep.subr.mxu0 0.0
  %56 = vmatpush1.msra.mxu0 0.0
  %57 = vmatprep.subr.mxu0 0.0
  %58 = vmatpush1.msra.mxu0 0.0
  %59 = vmatprep.subr.mxu0 0.0
  %60 = vmatpush1.msra.mxu0 0.0
  %61 = vmatprep.subr.mxu0 0.0
  %62 = vmatpush1.msra.mxu0 0.0
  %63 = vmatprep.subr.mxu0 0.0
  %64 = vmatpush1.msra.mxu0 0.0
  %65 = vmatprep.subr.mxu0 0.0
  %66 = vmatpush1.msra.mxu0 0.0
  %67 = vmatprep.subr.mxu0 0.0
  %68 = vmatpush1.msra.mxu0 0.0
  %69 = vmatprep.subr.mxu0 0.0
  %70 = vmatpush1.msra.mxu0 0.0
  %71 = vmatprep.subr.mxu0 0.0
  %72 = vmatpush1.msra.mxu0 0.0
  %73 = vmatprep.subr.mxu0 0.0
  %74 = vmatpush1.msra.mxu0 0.0
  %75 = vmatprep.subr.mxu0 0.0
  %76 = vmatpush1.msra.mxu0 0.0
  %77 = vmatprep.subr.mxu0 0.0
  %78 = vmatpush1.msra.mxu0 0.0
  %79 = vmatprep.subr.mxu0 0.0
  %80 = vmatpush1.msra.mxu0 0.0
  %81 = vmatprep.subr.mxu0 0.0
  %82 = vmatpush1.msra.mxu0 0.0
  %83 = vmatprep.subr.mxu0 0.0
  %84 = vmatpush1.msra.mxu0 0.0
  %85 = vmatprep.subr.mxu0 0.0
  %86 = vmatpush1.msra.mxu0 0.0
  %87 = vmatprep.subr.mxu0 0.0
  %88 = vmatpush1.msra.mxu0 0.0
  %89 = vmatprep.subr.mxu0 0.0
  %90 = vmatpush1.msra.mxu0 0.0
  %91 = vmatprep.subr.mxu0 0.0
  %92 = vmatpush1.msra.mxu0 0.0
  %93 = vmatprep.subr.mxu0 0.0
  %94 = vmatpush1.msra.mxu0 0.0
  %95 = vmatprep.subr.mxu0 0.0
  %96 = vmatpush1.msra.mxu0 0.0
  %97 = vmatprep.subr.mxu0 0.0
  %98 = vmatpush1.msra.mxu0 0.0
  %99 = vmatprep.subr.mxu0 0.0
  %100 = vmatpush1.msra.mxu0 0.0
  %101 = vmatprep.subr.mxu0 0.0
  %102 = vmatpush1.msra.mxu0 0.0
  %103 = vmatprep.subr.mxu0 0.0
  %104 = vmatpush1.msra.mxu0 0.0
  %105 = vmatprep.subr.mxu0 0.0
  %106 = vmatpush1.msra.mxu0 0.0
  %107 = vmatprep.subr.mxu0 0.0
  %108 = vmatpush1.msra.mxu0 0.0
  %109 = vmatprep.subr.mxu0 0.0
  %110 = vmatpush1.msra.mxu0 0.0
  %111 = vmatprep.subr.mxu0 0.0
  %112 = vmatpush1.msra.mxu0 0.0
  %113 = vmatprep.mubr.f32.mxu0 0.0
  %114 = vmatmul.mubr.f32.gmra.mrb[0].mxu0 %v22
  %v115 = vpop.f32.mrb[0].mxu0
  %v116 = vadd.f32 0.0, %v115
  %v117 = vpop.f32.mrb[0].mxu0
  %118 = vmatprep.mubr.f32.mxu0 0.0
  %119 = vmatmul.mubr.f32.gmra.mrb[0].mxu0 %v25
  %v120 = vpop.f32.mrb[0].mxu0
  %v121 = vadd.f32 0.0, %v120
  %v122 = vpop.f32.mrb[0].mxu0
  %123 = vmatprep.mubr.f32.mxu0 0.0
  %124 = vmatmul.mubr.f32.gmra.mrb[0].mxu0 %v28
  %v125 = vpop.f32.mrb[0].mxu0
  %v126 = vadd.f32 0.0, %v125
  %v127 = vpop.f32.mrb[0].mxu0
  %128 = vmatprep.mubr.f32.mxu0 0.0
  %129 = vmatmul.mubr.f32.gmra.mrb[0].mxu0 %v31
  %v130 = vpop.f32.mrb[0].mxu0
  %v131 = vadd.f32 0.0, %v130
  %v132 = vpop.f32.mrb[0].mxu0
  %133 = vmatprep.mubr.f32.mxu0 0.0
  %134 = vmatmul.mubr.f32.gmra.mrb[0].mxu0 %v34
  %v135 = vpop.f32.mrb[0].mxu0
  %v136 = vadd.f32 0.0, %v135
  %v137 = vpop.f32.mrb[0].mxu0
  %138 = vmatprep.mubr.f32.mxu0 0.0
  %139 = vmatmul.mubr.f32.gmra.mrb[0].mxu0 %v37
  %v140 = vpop.f32.mrb[0].mxu0
  %v141 = vadd.f32 0.0, %v140
  %v142 = vpop.f32.mrb[0].mxu0
  %143 = vmatprep.mubr.f32.mxu0 0.0
  %144 = vmatmul.mubr.f32.gmra.mrb[0].mxu0 %v40
  %v145 = vpop.f32.mrb[0].mxu0
  %v146 = vadd.f32 0.0, %v145
  %v147 = vpop.f32.mrb[0].mxu0
  %148 = vmatprep.mubr.f32.mxu0 0.0
  %149 = vmatmul.mubr.f32.gmra.mrb[0].mxu0 %v43
  %v150 = vpop.f32.mrb[0].mxu0
  %v151 = vadd.f32 0.0, %v150
  %v152 = vpop.f32.mrb[0].mxu0
  %153 = vdwg.mxu0
  %vm154 = vcmask 130048
  %155 = vst.msk [vmem:[%s2] sm:$0xff] %vm154, %v116
  %156 = vst.msk [vmem:[%s2 + $0x8] sm:$0xff] %vm154, %v121
  %157 = vst.msk [vmem:[%s2 + $0x10] sm:$0xff] %vm154, %v126
  %158 = vst.msk [vmem:[%s2 + $0x18] sm:$0xff] %vm154, %v131
  %159 = vst.msk [vmem:[%s2 + $0x20] sm:$0xff] %vm154, %v136
  %160 = vst.msk [vmem:[%s2 + $0x28] sm:$0xff] %vm154, %v141
  %161 = vst.msk [vmem:[%s2 + $0x30] sm:$0xff] %vm154, %v146
  %162 = vst.msk [vmem:[%s2 + $0x38] sm:$0xff] %vm154, %v151
  // Predicated region
  $region10: #{model_step.28} parent=0 // pred_check
    _
  $region11: #{model_step.28} parent=0 // pred_check_branch
    %164 = sbr.rel (0) target = $region13
  $region12: #{model_step.28} parent=0 // pred_region
    _
  $region13: #{model_step.28} parent=0 // pred_fallthru
    _
  // Predicated region
  $region14: #{model_step.28} parent=0 // pred_check
    _
  $region15: #{model_step.28} parent=0 // pred_check_branch
    %166 = sbr.rel (0) target = $region17
  $region16: #{model_step.28} parent=0 // pred_region
    _
  $region17: #{model_step.28} parent=0 // pred_fallthru
    _

// kernel: model_step.29
$region0: #{model_step.29}
  #allocation0 [shape = 'u32[]', space=smem, size = 0x4, offset = 0x4, fixed_abs, tag = 'smem constant byte address 0x4 - core index']
  #allocation1 [shape = 'u32[144,128]{1,0:T(1,128)}', space=vmem, size = 0x12000, scoped, tag = 'internal scratch']
  #allocation2 [shape = 'f32[2,324]{1,0:T(2,128)}', space=vmem, size = 0xc00, scoped, tag = 'scratch operand']
  #allocation3 [shape = 'f32[2,286]{1,0:T(2,128)}', space=vmem, size = 0xc00, scoped, tag = 'scratch operand']
  %s0 = inlined_call_operand.vmem [shape: f32[2,3,2,324], index: 0, kind: input, shape index: {}]
  %s1 = inlined_call_operand.vmem [shape: f32[2,2,324], index: 1, kind: input, shape index: {}]
  %s2 = inlined_call_operand.vmem [shape: f32[2,2,286], index: 2, kind: input, shape index: {}]
  %s3 = inlined_call_operand.vmem [shape: f32[9,8,2], index: 3, kind: input, shape index: {}]
  %s4 = inlined_call_operand.vmem [shape: f32[9,8,2], index: 4, kind: input, shape index: {}]
  %s5 = inlined_call_operand.vmem [shape: f32[8,1], index: 5, kind: input, shape index: {}]
  %s6 = inlined_call_operand.vmem [shape: f32[1,286], index: 6, kind: input, shape index: {}]
  %s7 = inlined_call_operand.vmem [shape: f32[2,2,286], index: 7, kind: output, shape index: {0}]
  %s8 = inlined_call_operand.vmem [shape: f32[2,2,286], index: 8, kind: output, shape index: {1}]
  %9 = xla_tuple %s7, %s8
  %s10 = sld [smem:[#allocation0]]
  $region77: #{model_step.29} parent=0
    _
  %s12 = ssub.s32 1, %s10
  %s13 = scalar_select 0, %s12, %s10
  loop: start=0, step=1, limit=8
  $region2: #{model_step.29} parent=0 // loop_pre_header
    _
  $region3: #{model_step.29} parent=0 // loop_header
    %s15 = sphi 0, %s19
    %p16 = scmp.ge.s32.totalorder %s15, 8
    %s22 = sphi 0, %s34
    %s23 = sphi 0, %s30
    %s24 = sphi 0, %s22
    %s25 = sphi 0, %s23
    %s26 = sphi 0, %s24
    %s27 = sphi 0, %s25
    %s39 = sphi 0, %s41
    %s42 = sphi 0, %s39
    %s43 = sphi 0, %s42
    %s59 = sphi 0, %s43
    %s65 = sphi 0, %s67
    %s68 = sphi 0, %s65
    %s69 = sphi 0, %s68
    %s85 = sphi 0, %s69
    %s91 = sphi 0, %s93
    %s94 = sphi 0, %s91
    %s95 = sphi 0, %s94
    %s111 = sphi 0, %s95
    %s115 = sphi 0, %s115
    %s117 = sphi 0, %s115
    %s118 = sphi 0, %s117
    %s132 = sphi 0, %s118
    %s136 = sphi 0, %s136
    %s138 = sphi 0, %s136
    %s139 = sphi 0, %s138
    %s153 = sphi 0, %s139
    %s157 = sphi 0, %s157
    %s159 = sphi 0, %s157
    %s160 = sphi 0, %s159
    %s174 = sphi 0, %s160
    %s178 = sphi 0, %s178
    %s180 = sphi 0, %s178
    %s181 = sphi 0, %s180
    %s195 = sphi 0, %s181
    %s201 = sphi 0, %s203
    %s204 = sphi 0, %s201
    %s205 = sphi 0, %s204
    %s221 = sphi 0, %s205
    %s227 = sphi 0, %s229
    %s230 = sphi 0, %s227
    %s231 = sphi 0, %s230
    %s247 = sphi 0, %s231
  $region4: #{model_step.29} parent=0 // loop_header_branch
    %18 = sbr.rel (%p16) target = $region8
  $region5: #{model_step.29} parent=0 // loop_body
    %s20 = ssub.s32 %s15, 1
    %s21 = ssub.s32 %s15, 2
    %s28 = sadd.s32 1, %s23
    %p29 = scmp.ge.s32.totalorder %s28, 3
    %s30 = scalar_select %p29, 0, %s28
    %s31 = sadd.s32 1, %s22
    %s32 = scalar_select %p29, %s31, %s22
    %p33 = scmp.ge.s32.totalorder %s32, 2
    %s34 = scalar_select %p33, 0, %s32
    %s35 = ssub.s32 %s22, %s34
    %s36 = ssub.s32 %s23, %s30
    %s37 = sor.u32 %s35, %s36
    %p38 = scmp.eq.s32.totalorder %s37, 0
    %s40 = sadd.s32 %s39, 1
    %s41 = scalar_select %p38, %s39, %s40
    %p44 = pneg %p38
    %p45 = scmp.eq.s32.totalorder %s15, 5
    %p46 = por %p44, %p45
    %p47 = scmp.ne.s32.totalorder %s39, %s42
    %p48 = scmp.eq.s32.totalorder %s15, 0
    %p49 = por %p47, %p48
    %p50 = scmp.ne.s32.totalorder %s39, %s42
    %p51 = scmp.eq.s32.totalorder %s20, 5
    %p52 = por %p50, %p51
    %p53 = scmp.ne.s32.totalorder %s42, %s43
    %p54 = scmp.eq.s32.totalorder %s20, 0
    %p55 = por %p53, %p54
    %p56 = scmp.ne.s32.totalorder %s42, %s43
    %p57 = scmp.eq.s32.totalorder %s21, 5
    %p58 = por %p56, %p57
    %p60 = scmp.ne.s32.totalorder %s43, %s59
    %p61 = scmp.eq.s32.totalorder %s21, 0
    %p62 = por %p60, %p61
    %s63 = ssub.s32 %s22, %s34
    %p64 = scmp.eq.s32.totalorder %s63, 0
    %s66 = sadd.s32 %s65, 1
    %s67 = scalar_select %p64, %s65, %s66
    %p70 = pneg %p64
    %p71 = scmp.eq.s32.totalorder %s15, 5
    %p72 = por %p70, %p71
    %p73 = scmp.ne.s32.totalorder %s65, %s68
    %p74 = scmp.eq.s32.totalorder %s15, 0
    %p75 = por %p73, %p74
    %p76 = scmp.ne.s32.totalorder %s65, %s68
    %p77 = scmp.eq.s32.totalorder %s20, 5
    %p78 = por %p76, %p77
    %p79 = scmp.ne.s32.totalorder %s68, %s69
    %p80 = scmp.eq.s32.totalorder %s20, 0
    %p81 = por %p79, %p80
    %p82 = scmp.ne.s32.totalorder %s68, %s69
    %p83 = scmp.eq.s32.totalorder %s21, 5
    %p84 = por %p82, %p83
    %p86 = scmp.ne.s32.totalorder %s69, %s85
    %p87 = scmp.eq.s32.totalorder %s21, 0
    %p88 = por %p86, %p87
    %s89 = ssub.s32 %s22, %s34
    %p90 = scmp.eq.s32.totalorder %s89, 0
    %s92 = sadd.s32 %s91, 1
    %s93 = scalar_select %p90, %s91, %s92
    %p96 = pneg %p90
    %p97 = scmp.eq.s32.totalorder %s15, 5
    %p98 = por %p96, %p97
    %p99 = scmp.ne.s32.totalorder %s91, %s94
    %p100 = scmp.eq.s32.totalorder %s15, 0
    %p101 = por %p99, %p100
    %p102 = scmp.ne.s32.totalorder %s91, %s94
    %p103 = scmp.eq.s32.totalorder %s20, 5
    %p104 = por %p102, %p103
    %p105 = scmp.ne.s32.totalorder %s94, %s95
    %p106 = scmp.eq.s32.totalorder %s20, 0
    %p107 = por %p105, %p106
    %p108 = scmp.ne.s32.totalorder %s94, %s95
    %p109 = scmp.eq.s32.totalorder %s21, 5
    %p110 = por %p108, %p109
    %p112 = scmp.ne.s32.totalorder %s95, %s111
    %p113 = scmp.eq.s32.totalorder %s21, 0
    %p114 = por %p112, %p113
    %s116 = sadd.s32 %s115, 1
    %p119 = scmp.eq.s32.totalorder %s15, 5
    %p120 = scmp.ne.s32.totalorder %s115, %s117
    %p121 = scmp.eq.s32.totalorder %s15, 0
    %p122 = por %p120, %p121
    %p123 = scmp.ne.s32.totalorder %s115, %s117
    %p124 = scmp.eq.s32.totalorder %s20, 5
    %p125 = por %p123, %p124
    %p126 = scmp.ne.s32.totalorder %s117, %s118
    %p127 = scmp.eq.s32.totalorder %s20, 0
    %p128 = por %p126, %p127
    %p129 = scmp.ne.s32.totalorder %s117, %s118
    %p130 = scmp.eq.s32.totalorder %s21, 5
    %p131 = por %p129, %p130
    %p133 = scmp.ne.s32.totalorder %s118, %s132
    %p134 = scmp.eq.s32.totalorder %s21, 0
    %p135 = por %p133, %p134
    %s137 = sadd.s32 %s136, 1
    %p140 = scmp.eq.s32.totalorder %s15, 5
    %p141 = scmp.ne.s32.totalorder %s136, %s138
    %p142 = scmp.eq.s32.totalorder %s15, 0
    %p143 = por %p141, %p142
    %p144 = scmp.ne.s32.totalorder %s136, %s138
    %p145 = scmp.eq.s32.totalorder %s20, 5
    %p146 = por %p144, %p145
    %p147 = scmp.ne.s32.totalorder %s138, %s139
    %p148 = scmp.eq.s32.totalorder %s20, 0
    %p149 = por %p147, %p148
    %p150 = scmp.ne.s32.totalorder %s138, %s139
    %p151 = scmp.eq.s32.totalorder %s21, 5
    %p152 = por %p150, %p151
    %p154 = scmp.ne.s32.totalorder %s139, %s153
    %p155 = scmp.eq.s32.totalorder %s21, 0
    %p156 = por %p154, %p155
    %s158 = sadd.s32 %s157, 1
    %p161 = scmp.eq.s32.totalorder %s15, 5
    %p162 = scmp.ne.s32.totalorder %s157, %s159
    %p163 = scmp.eq.s32.totalorder %s15, 0
    %p164 = por %p162, %p163
    %p165 = scmp.ne.s32.totalorder %s157, %s159
    %p166 = scmp.eq.s32.totalorder %s20, 5
    %p167 = por %p165, %p166
    %p168 = scmp.ne.s32.totalorder %s159, %s160
    %p169 = scmp.eq.s32.totalorder %s20, 0
    %p170 = por %p168, %p169
    %p171 = scmp.ne.s32.totalorder %s159, %s160
    %p172 = scmp.eq.s32.totalorder %s21, 5
    %p173 = por %p171, %p172
    %p175 = scmp.ne.s32.totalorder %s160, %s174
    %p176 = scmp.eq.s32.totalorder %s21, 0
    %p177 = por %p175, %p176
    %s179 = sadd.s32 %s178, 1
    %p182 = scmp.eq.s32.totalorder %s15, 5
    %p183 = scmp.ne.s32.totalorder %s178, %s180
    %p184 = scmp.eq.s32.totalorder %s15, 0
    %p185 = por %p183, %p184
    %p186 = scmp.ne.s32.totalorder %s178, %s180
    %p187 = scmp.eq.s32.totalorder %s20, 5
    %p188 = por %p186, %p187
    %p189 = scmp.ne.s32.totalorder %s180, %s181
    %p190 = scmp.eq.s32.totalorder %s20, 0
    %p191 = por %p189, %p190
    %p192 = scmp.ne.s32.totalorder %s180, %s181
    %p193 = scmp.eq.s32.totalorder %s21, 5
    %p194 = por %p192, %p193
    %p196 = scmp.ne.s32.totalorder %s181, %s195
    %p197 = scmp.eq.s32.totalorder %s21, 0
    %p198 = por %p196, %p197
    %s199 = ssub.s32 %s22, %s34
    %p200 = scmp.eq.s32.totalorder %s199, 0
    %s202 = sadd.s32 %s201, 1
    %s203 = scalar_select %p200, %s201, %s202
    %p206 = pneg %p200
    %p207 = scmp.eq.s32.totalorder %s15, 5
    %p208 = por %p206, %p207
    %p209 = scmp.ne.s32.totalorder %s201, %s204
    %p210 = scmp.eq.s32.totalorder %s15, 0
    %p211 = por %p209, %p210
    %p212 = scmp.ne.s32.totalorder %s201, %s204
    %p213 = scmp.eq.s32.totalorder %s20, 5
    %p214 = por %p212, %p213
    %p215 = scmp.ne.s32.totalorder %s204, %s205
    %p216 = scmp.eq.s32.totalorder %s20, 0
    %p217 = por %p215, %p216
    %p218 = scmp.ne.s32.totalorder %s204, %s205
    %p219 = scmp.eq.s32.totalorder %s21, 5
    %p220 = por %p218, %p219
    %p222 = scmp.ne.s32.totalorder %s205, %s221
    %p223 = scmp.eq.s32.totalorder %s21, 0
    %p224 = por %p222, %p223
    %s225 = ssub.s32 %s22, %s34
    %p226 = scmp.eq.s32.totalorder %s225, 0
    %s228 = sadd.s32 %s227, 1
    %s229 = scalar_select %p226, %s227, %s228
    %p232 = pneg %p226
    %p233 = scmp.eq.s32.totalorder %s15, 5
    %p234 = por %p232, %p233
    %p235 = scmp.ne.s32.totalorder %s227, %s230
    %p236 = scmp.eq.s32.totalorder %s15, 0
    %p237 = por %p235, %p236
    %p238 = scmp.ne.s32.totalorder %s227, %s230
    %p239 = scmp.eq.s32.totalorder %s20, 5
    %p240 = por %p238, %p239
    %p241 = scmp.ne.s32.totalorder %s230, %s231
    %p242 = scmp.eq.s32.totalorder %s20, 0
    %p243 = por %p241, %p242
    %p244 = scmp.ne.s32.totalorder %s230, %s231
    %p245 = scmp.eq.s32.totalorder %s21, 5
    %p246 = por %p244, %p245
    %p248 = scmp.ne.s32.totalorder %s231, %s247
    %p249 = scmp.eq.s32.totalorder %s21, 0
    %p250 = por %p248, %p249
    %p251 = scmp.le.s32.totalorder 1, %s15
    %p252 = scmp.lt.s32.totalorder %s15, 7
    %p253 = pnand %p251, %p252
    %p254 = pneg %p253
    // Predicated region
    $region9: #{model_step.29} parent=5 // pred_check
      _
    $region10: #{model_step.29} parent=5 // pred_check_branch
      %256 = sbr.rel (%p253) target = $region12
    $region11: #{model_step.29} parent=5 // pred_region
      %s257 = ssub.s32 %s15, 1
      // Predicated region
      $region13: #{model_step.29} parent=11 // pred_check
        %p258 = pneg %p128
      $region14: #{model_step.29} parent=11 // pred_check_branch
        %260 = sbr.rel (%p258) target = $region16
      $region15: #{model_step.29} parent=11 // pred_region
        _
      $region16: #{model_step.29} parent=11 // pred_fallthru
        _
      // Predicated region
      $region17: #{model_step.29} parent=11 // pred_check
        %p261 = pneg %p149
      $region18: #{model_step.29} parent=11 // pred_check_branch
        %263 = sbr.rel (%p261) target = $region20
      $region19: #{model_step.29} parent=11 // pred_region
        _
      $region20: #{model_step.29} parent=11 // pred_fallthru
        _
      // Predicated region
      $region21: #{model_step.29} parent=11 // pred_check
        %p264 = pneg %p170
      $region22: #{model_step.29} parent=11 // pred_check_branch
        %266 = sbr.rel (%p264) target = $region24
      $region23: #{model_step.29} parent=11 // pred_region
        _
      $region24: #{model_step.29} parent=11 // pred_fallthru
        _
      // Predicated region
      $region25: #{model_step.29} parent=11 // pred_check
        %p267 = pneg %p191
      $region26: #{model_step.29} parent=11 // pred_check_branch
        %269 = sbr.rel (%p267) target = $region28
      $region27: #{model_step.29} parent=11 // pred_region
        _
      $region28: #{model_step.29} parent=11 // pred_fallthru
        _
    $region12: #{model_step.29} parent=5 // pred_fallthru
      _
    %p270 = scmp.lt.s32.totalorder %s15, 6
    // Predicated region
    $region29: #{model_step.29} parent=5 // pred_check
      %p271 = pneg %p270
    $region30: #{model_step.29} parent=5 // pred_check_branch
      %273 = sbr.rel (%p271) target = $region32
    $region31: #{model_step.29} parent=5 // pred_region
      // Predicated region
      $region33: #{model_step.29} parent=31 // pred_check
        %p274 = pneg %p49
      $region34: #{model_step.29} parent=31 // pred_check_branch
        %276 = sbr.rel (%p274) target = $region36
      $region35: #{model_step.29} parent=31 // pred_region
        %p277 = scmp.lt.s32.totalorder %s22, 1
        %s278 = scalar_select %p277, %s22, 1
        %p279 = scmp.lt.s32.totalorder %s23, 2
        %s280 = scalar_select %p279, %s23, 2
        %s281 = smul.addr %s280, 3
        %s282 = smul.addr %s278, 9
        %s283 = sadd.s32 %s281, %s282
        %s284 = smul.addr %s283, 2
        %s285 = scalar_lea.vmem %s0, %s284
      $region36: #{model_step.29} parent=31 // pred_fallthru
        _
      // Predicated region
      $region37: #{model_step.29} parent=31 // pred_check
        %p286 = pneg %p75
      $region38: #{model_step.29} parent=31 // pred_check_branch
        %288 = sbr.rel (%p286) target = $region40
      $region39: #{model_step.29} parent=31 // pred_region
        %p289 = scmp.lt.s32.totalorder %s22, 1
        %s290 = scalar_select %p289, %s22, 1
        %s291 = smul.addr %s290, 3
        %s292 = smul.addr %s291, 2
        %s293 = scalar_lea.vmem %s1, %s292
      $region40: #{model_step.29} parent=31 // pred_fallthru
        _
      // Predicated region
      $region41: #{model_step.29} parent=31 // pred_check
        %p294 = pneg %p101
      $region42: #{model_step.29} parent=31 // pred_check_branch
        %296 = sbr.rel (%p294) target = $region44
      $region43: #{model_step.29} parent=31 // pred_region
        %p297 = scmp.lt.s32.totalorder %s22, 1
        %s298 = scalar_select %p297, %s22, 1
        %s299 = smul.addr %s298, 3
        %s300 = smul.addr %s299, 2
        %s301 = scalar_lea.vmem %s2, %s300
      $region44: #{model_step.29} parent=31 // pred_fallthru
        _
    $region32: #{model_step.29} parent=5 // pred_fallthru
      _
    %p302 = scmp.le.s32.totalorder 1, %s15
    %p303 = scmp.lt.s32.totalorder %s15, 7
    %p304 = pnand %p302, %p303
    %p305 = pneg %p304
    // Predicated region
    $region45: #{model_step.29} parent=5 // pred_check
      _
    $region46: #{model_step.29} parent=5 // pred_check_branch
      %307 = sbr.rel (%p304) target = $region48
    $region47: #{model_step.29} parent=5 // pred_region
      %s308 = ssub.s32 %s15, 1
      %p309 = scmp.lt.s32.totalorder %s24, 1
      %s310 = scalar_select %p309, %s24, 1
      %p311 = scmp.lt.s32.totalorder %s25, 2
      %s312 = scalar_select %p311, %s25, 2
      %s313 = smul.addr %s312, 3
      %s314 = smul.addr %s310, 9
      %s315 = sadd.s32 %s313, %s314
      %s316 = smul.addr %s315, 2
      %s317 = scalar_lea.vmem %s0, %s316
      %p318 = pneg %p55
      %p319 = pneg %p52
      %p320 = scmp.lt.s32.totalorder %s24, 1
      %s321 = scalar_select %p320, %s24, 1
      %s322 = smul.addr %s321, 3
      %s323 = smul.addr %s322, 2
      %s324 = scalar_lea.vmem %s1, %s323
      %p325 = pneg %p81
      %p326 = pneg %p78
      %p327 = scmp.lt.s32.totalorder %s24, 1
      %s328 = scalar_select %p327, %s24, 1
      %s329 = smul.addr %s328, 3
      %s330 = smul.addr %s329, 2
      %s331 = scalar_lea.vmem %s2, %s330
      %p332 = pneg %p107
      %p333 = pneg %p104
      %p334 = pneg %p128
      %p335 = pneg %p125
      %p336 = pneg %p149
      %p337 = pneg %p146
      %p338 = pneg %p170
      %p339 = pneg %p167
      %p340 = pneg %p191
      %p341 = pneg %p188
      %p342 = pneg %p217
      %p343 = pneg %p214
      %p344 = scmp.lt.s32.totalorder %s24, 1
      %s345 = scalar_select %p344, %s24, 1
      %s346 = smul.addr %s345, 3
      %s347 = smul.addr %s346, 2
      %s348 = scalar_lea.vmem %s7, %s347
      %p349 = pneg %p243
      %p350 = pneg %p240
      %p351 = scmp.lt.s32.totalorder %s24, 1
      %s352 = scalar_select %p351, %s24, 1
      %s353 = smul.addr %s352, 3
      %s354 = smul.addr %s353, 2
      %s355 = scalar_lea.vmem %s8, %s354
      %p356 = scmp.lt.s32.totalorder %s24, 1
      %s357 = scalar_select %p356, %s24, 1
      %p358 = scmp.lt.s32.totalorder %s25, 2
      %s359 = scalar_select %p358, %s25, 2
      %s360 = smul.addr %s359, 3
      %s361 = smul.addr %s357, 9
      %s362 = sadd.s32 %s360, %s361
      %s363 = smul.addr %s362, 2
      %s364 = scalar_lea.vmem %s0, %s363
      %p365 = scmp.lt.s32.totalorder %s24, 1
      %s366 = scalar_select %p365, %s24, 1
      %s367 = smul.addr %s366, 3
      %s368 = smul.addr %s367, 2
      %s369 = scalar_lea.vmem %s1, %s368
      %p370 = scmp.lt.s32.totalorder %s24, 1
      %s371 = scalar_select %p370, %s24, 1
      %s372 = smul.addr %s371, 3
      %s373 = smul.addr %s372, 2
      %s374 = scalar_lea.vmem %s2, %s373
      %p375 = scmp.lt.s32.totalorder %s24, 1
      %s376 = scalar_select %p375, %s24, 1
      %s377 = smul.addr %s376, 3
      %s378 = smul.addr %s377, 2
      %s379 = scalar_lea.vmem %s7, %s378
      %p380 = scmp.lt.s32.totalorder %s24, 1
      %s381 = scalar_select %p380, %s24, 1
      %s382 = smul.addr %s381, 3
      %s383 = smul.addr %s382, 2
      %s384 = scalar_lea.vmem %s8, %s383
      %p386 = scmp.eq.s32.totalorder %s25, 0
      // Predicated region
      $region49: #{model_step.29} parent=47 // pred_check
        %p387 = pneg %p386
      $region50: #{model_step.29} parent=47 // pred_check_branch
        %389 = sbr.rel (%p387) target = $region52
      $region51: #{model_step.29} parent=47 // pred_region
        %v390 = vld [vmem:[%s369] sm:$0x3f]
        %vm391 = vcmask 1041408
        %vm392 = vcmask 1043458
        %vm393 = vmor %vm392, %vm391
        %vm394 = vcmask 553988
        %vm395 = vmor %vm394, %vm393
        %396 = vst.msk [vmem:[#allocation2] sm:$0x3f] %vm395, %v390
        %v397 = vld [vmem:[%s374] sm:$0x3f]
        %vm398 = vcmask 242692
        %vm399 = vmor %vm398, %vm393
        %400 = vst.msk [vmem:[#allocation3] sm:$0x3f] %vm399, %v397
      $region52: #{model_step.29} parent=47 // pred_fallthru
        _
      %v401 = vld [vmem:[%s364] sm:$0x3f]
      %v402 = vld [vmem:[#allocation2] sm:$0x3f]
      %v404 = vcombine.high %v401, %v401
      %v406 = vunpack.c.l.s4 1983009808
      %v407 = vunpack.c.0.s8 %v406
      %v408 = vlaneseq
      %v409 = vshrl.u32 %v408, 7
      %v410 = vsub.s32 %v407, %v409
      %v411 = vrot.slane %v401, %v410
      %v413 = vunpack.c.l.s4 1983009808
      %v414 = vunpack.c.0.s8 %v413
      %v415 = vlaneseq
      %v416 = vshrl.u32 %v415, 7
      %v417 = vsub.s32 %v414, %v416
      %v418 = vrot.slane %v404, %v417
      %v419 = vcombine.high %v411, %v411
      %v423 = vpack.c.bf16 %v411, %v411
      %v424 = vpack.c.bf16 %v419, %v419
      %v425 = vpack.c.bf16 %v418, %v418
      %v427 = vcombine.high %v402, %v402
      %v429 = vunpack.c.l.s4 1983009808
      %v430 = vunpack.c.0.s8 %v429
      %v431 = vlaneseq
      %v432 = vshrl.u32 %v431, 7
      %v433 = vsub.s32 %v430, %v432
      %v434 = vrot.slane %v402, %v433
      %v436 = vunpack.c.l.s4 1983009808
      %v437 = vunpack.c.0.s8 %v436
      %v438 = vlaneseq
      %v439 = vshrl.u32 %v438, 7
      %v440 = vsub.s32 %v437, %v439
      %v441 = vrot.slane %v427, %v440
      %v442 = vcombine.high %v434, %v434
      %v446 = vpack.c.bf16 %v434, %v434
      %v447 = vpack.c.bf16 %v442, %v442
      %v448 = vpack.c.bf16 %v441, %v441
      %v449 = vld [vmem:[%s3] sm:$0xff]
      %v450 = vpack.c.bf16 %v449, %v449
      %v451 = vld [vmem:[%s4] sm:$0xff]
      %v452 = vpack.c.bf16 %v451, %v451
      %vm453 = vcmask 15360
      %v455 = vsel %vm453, %v452, 0
      %vm457 = vcmask 1040384
      %v459 = vsel %vm457, %v446, 0
      %v462 = vsel %vm457, %v447, 0
      %v465 = vsel %vm457, %v448, 0
      %467 = vmatprep.subr.bf16.mxu0 %v462
      %468 = vmatpush1.bf16.msra.mxu0 %v459
      %469 = vmatprep.subr.bf16.mxu0 0
      %470 = vmatpush1.bf16.msra.mxu0 0
      %471 = vmatprep.subr.bf16.mxu0 0
      %472 = vmatpush1.bf16.msra.mxu0 0
      %473 = vmatprep.subr.bf16.mxu0 0
      %474 = vmatpush1.bf16.msra.mxu0 0
      %475 = vmatprep.subr.bf16.mxu0 0
      %476 = vmatpush1.bf16.msra.mxu0 0
      %477 = vmatprep.subr.bf16.mxu0 0
      %478 = vmatpush1.bf16.msra.mxu0 0
      %479 = vmatprep.subr.bf16.mxu0 0
      %480 = vmatpush1.bf16.msra.mxu0 0
      %481 = vmatprep.subr.bf16.mxu0 0
      %482 = vmatpush1.bf16.msra.mxu0 0
      %483 = vmatprep.subr.bf16.mxu0 0
      %484 = vmatpush1.bf16.msra.mxu0 0
      %485 = vmatprep.subr.bf16.mxu0 0
      %486 = vmatpush1.bf16.msra.mxu0 0
      %487 = vmatprep.subr.bf16.mxu0 0
      %488 = vmatpush1.bf16.msra.mxu0 0
      %489 = vmatprep.subr.bf16.mxu0 0
      %490 = vmatpush1.bf16.msra.mxu0 0
      %491 = vmatprep.subr.bf16.mxu0 0
      %492 = vmatpush1.bf16.msra.mxu0 0
      %493 = vmatprep.subr.bf16.mxu0 0
      %494 = vmatpush1.bf16.msra.mxu0 0
      %495 = vmatprep.subr.bf16.mxu0 0
      %496 = vmatpush1.bf16.msra.mxu0 0
      %497 = vmatprep.subr.bf16.mxu0 0
      %498 = vmatpush1.bf16.msra.mxu0 0
      %499 = vmatprep.mubr.bf16.mxu0 0
      %500 = vmatmul.mubr.bf16.gmra.mrb[0].mxu0 %v455
      %v501 = vpop.f32.mrb[0].mxu0
      %v502 = vadd.f32 0.0, %v501
      %v503 = vpop.f32.mrb[0].mxu0
      %v504 = vadd.f32 0.0, %v503
      %v505 = vpop.f32.mrb[0].mxu0
      %v506 = vpop.f32.mrb[0].mxu0
      %507 = vdwg.mxu0
      %508 = vmatprep.subr.bf16.mxu0 0
      %509 = vmatpush1.bf16.msra.mxu0 %v465
      %510 = vmatprep.subr.bf16.mxu0 0
      %511 = vmatpush1.bf16.msra.mxu0 0
      %512 = vmatprep.subr.bf16.mxu0 0
      %513 = vmatpush1.bf16.msra.mxu0 0
      %514 = vmatprep.subr.bf16.mxu0 0
      %515 = vmatpush1.bf16.msra.mxu0 0
      %516 = vmatprep.subr.bf16.mxu0 0
      %517 = vmatpush1.bf16.msra.mxu0 0
      %518 = vmatprep.subr.bf16.mxu0 0
      %519 = vmatpush1.bf16.msra.mxu0 0
      %520 = vmatprep.subr.bf16.mxu0 0
      %521 = vmatpush1.bf16.msra.mxu0 0
      %522 = vmatprep.subr.bf16.mxu0 0
      %523 = vmatpush1.bf16.msra.mxu0 0
      %524 = vmatprep.subr.bf16.mxu0 0
      %525 = vmatpush1.bf16.msra.mxu0 0
      %526 = vmatprep.subr.bf16.mxu0 0
      %527 = vmatpush1.bf16.msra.mxu0 0
      %528 = vmatprep.subr.bf16.mxu0 0
      %529 = vmatpush1.bf16.msra.mxu0 0
      %530 = vmatprep.subr.bf16.mxu0 0
      %531 = vmatpush1.bf16.msra.mxu0 0
      %532 = vmatprep.subr.bf16.mxu0 0
      %533 = vmatpush1.bf16.msra.mxu0 0
      %534 = vmatprep.subr.bf16.mxu0 0
      %535 = vmatpush1.bf16.msra.mxu0 0
      %536 = vmatprep.subr.bf16.mxu0 0
      %537 = vmatpush1.bf16.msra.mxu0 0
      %538 = vmatprep.subr.bf16.mxu0 0
      %539 = vmatpush1.bf16.msra.mxu0 0
      %540 = vmatprep.mubr.bf16.mxu0 0
      %541 = vmatmul.mubr.bf16.gmra.mrb[0].mxu0 %v455
      %v542 = vpop.f32.mrb[0].mxu0
      %v543 = vadd.f32 0.0, %v542
      %v544 = vpop.f32.mrb[0].mxu0
      %v545 = vpop.f32.mrb[0].mxu0
      %v546 = vpop.f32.mrb[0].mxu0
      %547 = vdwg.mxu0
      %v549 = vsel %vm453, %v450, 0
      %v552 = vsel %vm457, %v423, 0
      %v555 = vsel %vm457, %v424, 0
      %v558 = vsel %vm457, %v425, 0
      %560 = vmatprep.subr.bf16.mxu0 %v555
      %561 = vmatpush1.bf16.msra.mxu0 %v552
      %562 = vmatprep.subr.bf16.mxu0 0
      %563 = vmatpush1.bf16.msra.mxu0 0
      %564 = vmatprep.subr.bf16.mxu0 0
      %565 = vmatpush1.bf16.msra.mxu0 0
      %566 = vmatprep.subr.bf16.mxu0 0
      %567 = vmatpush1.bf16.msra.mxu0 0
      %568 = vmatprep.subr.bf16.mxu0 0
      %569 = vmatpush1.bf16.msra.mxu0 0
      %570 = vmatprep.subr.bf16.mxu0 0
      %571 = vmatpush1.bf16.msra.mxu0 0
      %572 = vmatprep.subr.bf16.mxu0 0
      %573 = vmatpush1.bf16.msra.mxu0 0
      %574 = vmatprep.subr.bf16.mxu0 0
      %575 = vmatpush1.bf16.msra.mxu0 0
      %576 = vmatprep.subr.bf16.mxu0 0
      %577 = vmatpush1.bf16.msra.mxu0 0
      %578 = vmatprep.subr.bf16.mxu0 0
      %579 = vmatpush1.bf16.msra.mxu0 0
      %580 = vmatprep.subr.bf16.mxu0 0
      %581 = vmatpush1.bf16.msra.mxu0 0
      %582 = vmatprep.subr.bf16.mxu0 0
      %583 = vmatpush1.bf16.msra.mxu0 0
      %584 = vmatprep.subr.bf16.mxu0 0
      %585 = vmatpush1.bf16.msra.mxu0 0
      %586 = vmatprep.subr.bf16.mxu0 0
      %587 = vmatpush1.bf16.msra.mxu0 0
      %588 = vmatprep.subr.bf16.mxu0 0
      %589 = vmatpush1.bf16.msra.mxu0 0
      %590 = vmatprep.subr.bf16.mxu0 0
      %591 = vmatpush1.bf16.msra.mxu0 0
      %592 = vmatprep.mubr.bf16.mxu0 0
      %593 = vmatmul.mubr.bf16.gmra.mrb[0].mxu0 %v549
      %v594 = vpop.f32.mrb[0].mxu0
      %v595 = vadd.f32 %v502, %v594
      %v596 = vpop.f32.mrb[0].mxu0
      %v597 = vadd.f32 %v504, %v596
      %v598 = vpop.f32.mrb[0].mxu0
      %v599 = vpop.f32.mrb[0].mxu0
      %600 = vdwg.mxu0
      %601 = vmatprep.subr.bf16.mxu0 0
      %602 = vmatpush1.bf16.msra.mxu0 %v558
      %603 = vmatprep.subr.bf16.mxu0 0
      %604 = vmatpush1.bf16.msra.mxu0 0
      %605 = vmatprep.subr.bf16.mxu0 0
      %606 = vmatpush1.bf16.msra.mxu0 0
      %607 = vmatprep.subr.bf16.mxu0 0
      %608 = vmatpush1.bf16.msra.mxu0 0
      %609 = vmatprep.subr.bf16.mxu0 0
      %610 = vmatpush1.bf16.msra.mxu0 0
      %611 = vmatprep.subr.bf16.mxu0 0
      %612 = vmatpush1.bf16.msra.mxu0 0
      %613 = vmatprep.subr.bf16.mxu0 0
      %614 = vmatpush1.bf16.msra.mxu0 0
      %615 = vmatprep.subr.bf16.mxu0 0
      %616 = vmatpush1.bf16.msra.mxu0 0
      %617 = vmatprep.subr.bf16.mxu0 0
      %618 = vmatpush1.bf16.msra.mxu0 0
      %619 = vmatprep.subr.bf16.mxu0 0
      %620 = vmatpush1.bf16.msra.mxu0 0
      %621 = vmatprep.subr.bf16.mxu0 0
      %622 = vmatpush1.bf16.msra.mxu0 0
      %623 = vmatprep.subr.bf16.mxu0 0
      %624 = vmatpush1.bf16.msra.mxu0 0
      %625 = vmatprep.subr.bf16.mxu0 0
      %626 = vmatpush1.bf16.msra.mxu0 0
      %627 = vmatprep.subr.bf16.mxu0 0
      %628 = vmatpush1.bf16.msra.mxu0 0
      %629 = vmatprep.subr.bf16.mxu0 0
      %630 = vmatpush1.bf16.msra.mxu0 0
      %631 = vmatprep.subr.bf16.mxu0 0
      %632 = vmatpush1.bf16.msra.mxu0 0
      %633 = vmatprep.mubr.bf16.mxu0 0
      %634 = vmatmul.mubr.bf16.gmra.mrb[0].mxu0 %v549
      %v635 = vpop.f32.mrb[0].mxu0
      %v636 = vadd.f32 %v543, %v635
      %v637 = vpop.f32.mrb[0].mxu0
      %v638 = vpop.f32.mrb[0].mxu0
      %v639 = vpop.f32.mrb[0].mxu0
      %640 = vdwg.mxu0
      %s641 = scalar_lea.vmem %s3, 8
      %v642 = vld [vmem:[%s641] sm:$0xff]
      %v643 = vpack.c.bf16 %v642, %v642
      %647 = vrot.lane.b32.xlu0 %v423, 127
      %v648 = vpop.permute.xlu0 %647
      %649 = vrot.lane.b32.xlu0 %v424, 127
      %v650 = vpop.permute.xlu0 %649
      %651 = vrot.lane.b32.xlu0 %v425, 127
      %v652 = vpop.permute.xlu0 %651
      %vm653 = vcmask 1039360
      %v654 = vsel %vm653, %v648, %v650
      %v655 = vsel %vm653, %v650, %v652
      %v657 = vsel %vm453, %v643, 0
      %v660 = vsel %vm457, %v654, 0
      %v663 = vsel %vm457, %v655, 0
      %v666 = vsel %vm457, %v652, 0
      %668 = vmatprep.subr.bf16.mxu0 %v663
      %669 = vmatpush1.bf16.msra.mxu0 %v660
      %670 = vmatprep.subr.bf16.mxu0 0
      %671 = vmatpush1.bf16.msra.mxu0 0
      %672 = vmatprep.subr.bf16.mxu0 0
      %673 = vmatpush1.bf16.msra.mxu0 0
      %674 = vmatprep.subr.bf16.mxu0 0
      %675 = vmatpush1.bf16.msra.mxu0 0
      %676 = vmatprep.subr.bf16.mxu0 0
      %677 = vmatpush1.bf16.msra.mxu0 0
      %678 = vmatprep.subr.bf16.mxu0 0
      %679 = vmatpush1.bf16.msra.mxu0 0
      %680 = vmatprep.subr.bf16.mxu0 0
      %681 = vmatpush1.bf16.msra.mxu0 0
      %682 = vmatprep.subr.bf16.mxu0 0
      %683 = vmatpush1.bf16.msra.mxu0 0
      %684 = vmatprep.subr.bf16.mxu0 0
      %685 = vmatpush1.bf16.msra.mxu0 0
      %686 = vmatprep.subr.bf16.mxu0 0
      %687 = vmatpush1.bf16.msra.mxu0 0
      %688 = vmatprep.subr.bf16.mxu0 0
      %689 = vmatpush1.bf16.msra.mxu0 0
      %690 = vmatprep.subr.bf16.mxu0 0
      %691 = vmatpush1.bf16.msra.mxu0 0
      %692 = vmatprep.subr.bf16.mxu0 0
      %693 = vmatpush1.bf16.msra.mxu0 0
      %694 = vmatprep.subr.bf16.mxu0 0
      %695 = vmatpush1.bf16.msra.mxu0 0
      %696 = vmatprep.subr.bf16.mxu0 0
      %697 = vmatpush1.bf16.msra.mxu0 0
      %698 = vmatprep.subr.bf16.mxu0 0
      %699 = vmatpush1.bf16.msra.mxu0 0
      %700 = vmatprep.mubr.bf16.mxu0 0
      %701 = vmatmul.mubr.bf16.gmra.mrb[0].mxu0 %v657
      %v702 = vpop.f32.mrb[0].mxu0
      %v703 = vadd.f32 0.0, %v702
      %v704 = vpop.f32.mrb[0].mxu0
      %v705 = vadd.f32 0.0, %v704
      %v706 = vpop.f32.mrb[0].mxu0
      %v707 = vpop.f32.mrb[0].mxu0
      %708 = vdwg.mxu0
      %709 = vmatprep.subr.bf16.mxu0 0
      %710 = vmatpush1.bf16.msra.mxu0 %v666
      %711 = vmatprep.subr.bf16.mxu0 0
      %712 = vmatpush1.bf16.msra.mxu0 0
      %713 = vmatprep.subr.bf16.mxu0 0
      %714 = vmatpush1.bf16.msra.mxu0 0
      %715 = vmatprep.subr.bf16.mxu0 0
      %716 = vmatpush1.bf16.msra.mxu0 0
      %717 = vmatprep.subr.bf16.mxu0 0
      %718 = vmatpush1.bf16.msra.mxu0 0
      %719 = vmatprep.subr.bf16.mxu0 0
      %720 = vmatpush1.bf16.msra.mxu0 0
      %721 = vmatprep.subr.bf16.mxu0 0
      %722 = vmatpush1.bf16.msra.mxu0 0
      %723 = vmatprep.subr.bf16.mxu0 0
      %724 = vmatpush1.bf16.msra.mxu0 0
      %725 = vmatprep.subr.bf16.mxu0 0
      %726 = vmatpush1.bf16.msra.mxu0 0
      %727 = vmatprep.subr.bf16.mxu0 0
      %728 = vmatpush1.bf16.msra.mxu0 0
      %729 = vmatprep.subr.bf16.mxu0 0
      %730 = vmatpush1.bf16.msra.mxu0 0
      %731 = vmatprep.subr.bf16.mxu0 0
      %732 = vmatpush1.bf16.msra.mxu0 0
      %733 = vmatprep.subr.bf16.mxu0 0
      %734 = vmatpush1.bf16.msra.mxu0 0
      %735 = vmatprep.subr.bf16.mxu0 0
      %736 = vmatpush1.bf16.msra.mxu0 0
      %737 = vmatprep.subr.bf16.mxu0 0
      %738 = vmatpush1.bf16.msra.mxu0 0
      %739 = vmatprep.subr.bf16.mxu0 0
      %740 = vmatpush1.bf16.msra.mxu0 0
      %741 = vmatprep.mubr.bf16.mxu0 0
      %742 = vmatmul.mubr.bf16.gmra.mrb[0].mxu0 %v657
      %v743 = vpop.f32.mrb[0].mxu0
      %v744 = vadd.f32 0.0, %v743
      %v745 = vpop.f32.mrb[0].mxu0
      %v746 = vpop.f32.mrb[0].mxu0
      %v747 = vpop.f32.mrb[0].mxu0
      %748 = vdwg.mxu0
      %v749 = vadd.f32 %v595, %v703
      %v750 = vadd.f32 %v597, %v705
      %v751 = vadd.f32 %v636, %v744
      %s752 = scalar_lea.vmem %s4, 8
      %v753 = vld [vmem:[%s752] sm:$0xff]
      %v754 = vpack.c.bf16 %v753, %v753
      %758 = vrot.lane.b32.xlu0 %v446, 127
      %v759 = vpop.permute.xlu0 %758
      %760 = vrot.lane.b32.xlu0 %v447, 127
      %v761 = vpop.permute.xlu0 %760
      %762 = vrot.lane.b32.xlu0 %v448, 127
      %v763 = vpop.permute.xlu0 %762
      %v764 = vsel %vm653, %v759, %v761
      %v765 = vsel %vm653, %v761, %v763
      %v767 = vsel %vm453, %v754, 0
      %v770 = vsel %vm457, %v764, 0
      %v773 = vsel %vm457, %v765, 0
      %v776 = vsel %vm457, %v763, 0
      %778 = vmatprep.subr.bf16.mxu0 %v773
      %779 = vmatpush1.bf16.msra.mxu0 %v770
      %780 = vmatprep.subr.bf16.mxu0 0
      %781 = vmatpush1.bf16.msra.mxu0 0
      %782 = vmatprep.subr.bf16.mxu0 0
      %783 = vmatpush1.bf16.msra.mxu0 0
      %784 = vmatprep.subr.bf16.mxu0 0
      %785 = vmatpush1.bf16.msra.mxu0 0
      %786 = vmatprep.subr.bf16.mxu0 0
      %787 = vmatpush1.bf16.msra.mxu0 0
      %788 = vmatprep.subr.bf16.mxu0 0
      %789 = vmatpush1.bf16.msra.mxu0 0
      %790 = vmatprep.subr.bf16.mxu0 0
      %791 = vmatpush1.bf16.msra.mxu0 0
      %792 = vmatprep.subr.bf16.mxu0 0
      %793 = vmatpush1.bf16.msra.mxu0 0
      %794 = vmatprep.subr.bf16.mxu0 0
      %795 = vmatpush1.bf16.msra.mxu0 0
      %796 = vmatprep.subr.bf16.mxu0 0
      %797 = vmatpush1.bf16.msra.mxu0 0
      %798 = vmatprep.subr.bf16.mxu0 0
      %799 = vmatpush1.bf16.msra.mxu0 0
      %800 = vmatprep.subr.bf16.mxu0 0
      %801 = vmatpush1.bf16.msra.mxu0 0
      %802 = vmatprep.subr.bf16.mxu0 0
      %803 = vmatpush1.bf16.msra.mxu0 0
      %804 = vmatprep.subr.bf16.mxu0 0
      %805 = vmatpush1.bf16.msra.mxu0 0
      %806 = vmatprep.subr.bf16.mxu0 0
      %807 = vmatpush1.bf16.msra.mxu0 0
      %808 = vmatprep.subr.bf16.mxu0 0
      %809 = vmatpush1.bf16.msra.mxu0 0
      %810 = vmatprep.mubr.bf16.mxu0 0
      %811 = vmatmul.mubr.bf16.gmra.mrb[0].mxu0 %v767
      %v812 = vpop.f32.mrb[0].mxu0
      %v813 = vadd.f32 0.0, %v812
      %v814 = vpop.f32.mrb[0].mxu0
      %v815 = vadd.f32 0.0, %v814
      %v816 = vpop.f32.mrb[0].mxu0
      %v817 = vpop.f32.mrb[0].mxu0
      %818 = vdwg.mxu0
      %819 = vmatprep.subr.bf16.mxu0 0
      %820 = vmatpush1.bf16.msra.mxu0 %v776
      %821 = vmatprep.subr.bf16.mxu0 0
      %822 = vmatpush1.bf16.msra.mxu0 0
      %823 = vmatprep.subr.bf16.mxu0 0
      %824 = vmatpush1.bf16.msra.mxu0 0
      %825 = vmatprep.subr.bf16.mxu0 0
      %826 = vmatpush1.bf16.msra.mxu0 0
      %827 = vmatprep.subr.bf16.mxu0 0
      %828 = vmatpush1.bf16.msra.mxu0 0
      %829 = vmatprep.subr.bf16.mxu0 0
      %830 = vmatpush1.bf16.msra.mxu0 0
      %831 = vmatprep.subr.bf16.mxu0 0
      %832 = vmatpush1.bf16.msra.mxu0 0
      %833 = vmatprep.subr.bf16.mxu0 0
      %834 = vmatpush1.bf16.msra.mxu0 0
      %835 = vmatprep.subr.bf16.mxu0 0
      %836 = vmatpush1.bf16.msra.mxu0 0
      %837 = vmatprep.subr.bf16.mxu0 0
      %838 = vmatpush1.bf16.msra.mxu0 0
      %839 = vmatprep.subr.bf16.mxu0 0
      %840 = vmatpush1.bf16.msra.mxu0 0
      %841 = vmatprep.subr.bf16.mxu0 0
      %842 = vmatpush1.bf16.msra.mxu0 0
      %843 = vmatprep.subr.bf16.mxu0 0
      %844 = vmatpush1.bf16.msra.mxu0 0
      %845 = vmatprep.subr.bf16.mxu0 0
      %846 = vmatpush1.bf16.msra.mxu0 0
      %847 = vmatprep.subr.bf16.mxu0 0
      %848 = vmatpush1.bf16.msra.mxu0 0
      %849 = vmatprep.subr.bf16.mxu0 0
      %850 = vmatpush1.bf16.msra.mxu0 0
      %851 = vmatprep.mubr.bf16.mxu0 0
      %852 = vmatmul.mubr.bf16.gmra.mrb[0].mxu0 %v767
      %v853 = vpop.f32.mrb[0].mxu0
      %v854 = vadd.f32 0.0, %v853
      %v855 = vpop.f32.mrb[0].mxu0
      %v856 = vpop.f32.mrb[0].mxu0
      %v857 = vpop.f32.mrb[0].mxu0
      %858 = vdwg.mxu0
      %v859 = vadd.f32 %v749, %v813
      %v860 = vadd.f32 %v750, %v815
      %v861 = vadd.f32 %v751, %v854
      %s862 = scalar_lea.vmem %s3, 16
      %v863 = vld [vmem:[%s862] sm:$0xff]
      %v864 = vpack.c.bf16 %v863, %v863
      %865 = vrot.lane.b32.xlu0 %v423, 126
      %v866 = vpop.permute.xlu0 %865
      %867 = vrot.lane.b32.xlu0 %v424, 126
      %v868 = vpop.permute.xlu0 %867
      %869 = vrot.lane.b32.xlu0 %v425, 126
      %v870 = vpop.permute.xlu0 %869
      %vm871 = vcmask 1031168
      %v872 = vsel %vm871, %v866, %v868
      %v873 = vsel %vm871, %v868, %v870
      %v875 = vsel %vm453, %v864, 0
      %v878 = vsel %vm457, %v872, 0
      %v881 = vsel %vm457, %v873, 0
      %v884 = vsel %vm457, %v870, 0
      %886 = vmatprep.subr.bf16.mxu0 %v881
      %887 = vmatpush1.bf16.msra.mxu0 %v878
      %888 = vmatprep.subr.bf16.mxu0 0
      %889 = vmatpush1.bf16.msra.mxu0 0
      %890 = vmatprep.subr.bf16.mxu0 0
      %891 = vmatpush1.bf16.msra.mxu0 0
      %892 = vmatprep.subr.bf16.mxu0 0
      %893 = vmatpush1.bf16.msra.mxu0 0
      %894 = vmatprep.subr.bf16.mxu0 0
      %895 = vmatpush1.bf16.msra.mxu0 0
      %896 = vmatprep.subr.bf16.mxu0 0
      %897 = vmatpush1.bf16.msra.mxu0 0
      %898 = vmatprep.subr.bf16.mxu0 0
      %899 = vmatpush1.bf16.msra.mxu0 0
      %900 = vmatprep.subr.bf16.mxu0 0
      %901 = vmatpush1.bf16.msra.mxu0 0
      %902 = vmatprep.subr.bf16.mxu0 0
      %903 = vmatpush1.bf16.msra.mxu0 0
      %904 = vmatprep.subr.bf16.mxu0 0
      %905 = vmatpush1.bf16.msra.mxu0 0
      %906 = vmatprep.subr.bf16.mxu0 0
      %907 = vmatpush1.bf16.msra.mxu0 0
      %908 = vmatprep.subr.bf16.mxu0 0
      %909 = vmatpush1.bf16.msra.mxu0 0
      %910 = vmatprep.subr.bf16.mxu0 0
      %911 = vmatpush1.bf16.msra.mxu0 0
      %912 = vmatprep.subr.bf16.mxu0 0
      %913 = vmatpush1.bf16.msra.mxu0 0
      %914 = vmatprep.subr.bf16.mxu0 0
      %915 = vmatpush1.bf16.msra.mxu0 0
      %916 = vmatprep.subr.bf16.mxu0 0
      %917 = vmatpush1.bf16.msra.mxu0 0
      %918 = vmatprep.mubr.bf16.mxu0 0
      %919 = vmatmul.mubr.bf16.gmra.mrb[0].mxu0 %v875
      %v920 = vpop.f32.mrb[0].mxu0
      %v921 = vadd.f32 0.0, %v920
      %v922 = vpop.f32.mrb[0].mxu0
      %v923 = vadd.f32 0.0, %v922
      %v924 = vpop.f32.mrb[0].mxu0
      %v925 = vpop.f32.mrb[0].mxu0
      %926 = vdwg.mxu0
      %927 = vmatprep.subr.bf16.mxu0 0
      %928 = vmatpush1.bf16.msra.mxu0 %v884
      %929 = vmatprep.subr.bf16.mxu0 0
      %930 = vmatpush1.bf16.msra.mxu0 0
      %931 = vmatprep.subr.bf16.mxu0 0
      %932 = vmatpush1.bf16.msra.mxu0 0
      %933 = vmatprep.subr.bf16.mxu0 0
      %934 = vmatpush1.bf16.msra.mxu0 0
      %935 = vmatprep.subr.bf16.mxu0 0
      %936 = vmatpush1.bf16.msra.mxu0 0
      %937 = vmatprep.subr.bf16.mxu0 0
      %938 = vmatpush1.bf16.msra.mxu0 0
      %939 = vmatprep.subr.bf16.mxu0 0
      %940 = vmatpush1.bf16.msra.mxu0 0
      %941 = vmatprep.subr.bf16.mxu0 0
      %942 = vmatpush1.bf16.msra.mxu0 0
      %943 = vmatprep.subr.bf16.mxu0 0
      %944 = vmatpush1.bf16.msra.mxu0 0
      %945 = vmatprep.subr.bf16.mxu0 0
      %946 = vmatpush1.bf16.msra.mxu0 0
      %947 = vmatprep.subr.bf16.mxu0 0
      %948 = vmatpush1.bf16.msra.mxu0 0
      %949 = vmatprep.subr.bf16.mxu0 0
      %950 = vmatpush1.bf16.msra.mxu0 0
      %951 = vmatprep.subr.bf16.mxu0 0
      %952 = vmatpush1.bf16.msra.mxu0 0
      %953 = vmatprep.subr.bf16.mxu0 0
      %954 = vmatpush1.bf16.msra.mxu0 0
      %955 = vmatprep.subr.bf16.mxu0 0
      %956 = vmatpush1.bf16.msra.mxu0 0
      %957 = vmatprep.subr.bf16.mxu0 0
      %958 = vmatpush1.bf16.msra.mxu0 0
      %959 = vmatprep.mubr.bf16.mxu0 0
      %960 = vmatmul.mubr.bf16.gmra.mrb[0].mxu0 %v875
      %v961 = vpop.f32.mrb[0].mxu0
      %v962 = vadd.f32 0.0, %v961
      %v963 = vpop.f32.mrb[0].mxu0
      %v964 = vpop.f32.mrb[0].mxu0
      %v965 = vpop.f32.mrb[0].mxu0
      %966 = vdwg.mxu0
      %v967 = vadd.f32 %v859, %v921
      %v968 = vadd.f32 %v860, %v923
      %v969 = vadd.f32 %v861, %v962
      %s970 = scalar_lea.vmem %s4, 16
      %v971 = vld [vmem:[%s970] sm:$0xff]
      %v972 = vpack.c.bf16 %v971, %v971
      %973 = vrot.lane.b32.xlu0 %v446, 126
      %v974 = vpop.permute.xlu0 %973
      %975 = vrot.lane.b32.xlu0 %v447, 126
      %v976 = vpop.permute.xlu0 %975
      %977 = vrot.lane.b32.xlu0 %v448, 126
      %v978 = vpop.permute.xlu0 %977
      %v979 = vsel %vm871, %v974, %v976
      %v980 = vsel %vm871, %v976, %v978
      %v982 = vsel %vm453, %v972, 0
      %v985 = vsel %vm457, %v979, 0
      %v988 = vsel %vm457, %v980, 0
      %v991 = vsel %vm457, %v978, 0
      %993 = vmatprep.subr.bf16.mxu0 %v988
      %994 = vmatpush1.bf16.msra.mxu0 %v985
      %995 = vmatprep.subr.bf16.mxu0 0
      %996 = vmatpush1.bf16.msra.mxu0 0
      %997 = vmatprep.subr.bf16.mxu0 0
      %998 = vmatpush1.bf16.msra.mxu0 0
      %999 = vmatprep.subr.bf16.mxu0 0
      %1000 = vmatpush1.bf16.msra.mxu0 0
      %1001 = vmatprep.subr.bf16.mxu0 0
      %1002 = vmatpush1.bf16.msra.mxu0 0
      %1003 = vmatprep.subr.bf16.mxu0 0
      %1004 = vmatpush1.bf16.msra.mxu0 0
      %1005 = vmatprep.subr.bf16.mxu0 0
      %1006 = vmatpush1.bf16.msra.mxu0 0
      %1007 = vmatprep.subr.bf16.mxu0 0
      %1008 = vmatpush1.bf16.msra.mxu0 0
      %1009 = vmatprep.subr.bf16.mxu0 0
      %1010 = vmatpush1.bf16.msra.mxu0 0
      %1011 = vmatprep.subr.bf16.mxu0 0
      %1012 = vmatpush1.bf16.msra.mxu0 0
      %1013 = vmatprep.subr.bf16.mxu0 0
      %1014 = vmatpush1.bf16.msra.mxu0 0
      %1015 = vmatprep.subr.bf16.mxu0 0
      %1016 = vmatpush1.bf16.msra.mxu0 0
      %1017 = vmatprep.subr.bf16.mxu0 0
      %1018 = vmatpush1.bf16.msra.mxu0 0
      %1019 = vmatprep.subr.bf16.mxu0 0
      %1020 = vmatpush1.bf16.msra.mxu0 0
      %1021 = vmatprep.subr.bf16.mxu0 0
      %1022 = vmatpush1.bf16.msra.mxu0 0
      %1023 = vmatprep.subr.bf16.mxu0 0
      %1024 = vmatpush1.bf16.msra.mxu0 0
      %1025 = vmatprep.mubr.bf16.mxu0 0
      %1026 = vmatmul.mubr.bf16.gmra.mrb[0].mxu0 %v982
      %v1027 = vpop.f32.mrb[0].mxu0
      %v1028 = vadd.f32 0.0, %v1027
      %v1029 = vpop.f32.mrb[0].mxu0
      %v1030 = vadd.f32 0.0, %v1029
      %v1031 = vpop.f32.mrb[0].mxu0
      %v1032 = vpop.f32.mrb[0].mxu0
      %1033 = vdwg.mxu0
      %1034 = vmatprep.subr.bf16.mxu0 0
      %1035 = vmatpush1.bf16.msra.mxu0 %v991
      %1036 = vmatprep.subr.bf16.mxu0 0
      %1037 = vmatpush1.bf16.msra.mxu0 0
      %1038 = vmatprep.subr.bf16.mxu0 0
      %1039 = vmatpush1.bf16.msra.mxu0 0
      %1040 = vmatprep.subr.bf16.mxu0 0
      %1041 = vmatpush1.bf16.msra.mxu0 0
      %1042 = vmatprep.subr.bf16.mxu0 0
      %1043 = vmatpush1.bf16.msra.mxu0 0
      %1044 = vmatprep.subr.bf16.mxu0 0
      %1045 = vmatpush1.bf16.msra.mxu0 0
      %1046 = vmatprep.subr.bf16.mxu0 0
      %1047 = vmatpush1.bf16.msra.mxu0 0
      %1048 = vmatprep.subr.bf16.mxu0 0
      %1049 = vmatpush1.bf16.msra.mxu0 0
      %1050 = vmatprep.subr.bf16.mxu0 0
      %1051 = vmatpush1.bf16.msra.mxu0 0
      %1052 = vmatprep.subr.bf16.mxu0 0
      %1053 = vmatpush1.bf16.msra.mxu0 0
      %1054 = vmatprep.subr.bf16.mxu0 0
      %1055 = vmatpush1.bf16.msra.mxu0 0
      %1056 = vmatprep.subr.bf16.mxu0 0
      %1057 = vmatpush1.bf16.msra.mxu0 0
      %1058 = vmatprep.subr.bf16.mxu0 0
      %1059 = vmatpush1.bf16.msra.mxu0 0
      %1060 = vmatprep.subr.bf16.mxu0 0
      %1061 = vmatpush1.bf16.msra.mxu0 0
      %1062 = vmatprep.subr.bf16.mxu0 0
      %1063 = vmatpush1.bf16.msra.mxu0 0
      %1064 = vmatprep.subr.bf16.mxu0 0
      %1065 = vmatpush1.bf16.msra.mxu0 0
      %1066 = vmatprep.mubr.bf16.mxu0 0
      %1067 = vmatmul.mubr.bf16.gmra.mrb[0].mxu0 %v982
      %v1068 = vpop.f32.mrb[0].mxu0
      %v1069 = vadd.f32 0.0, %v1068
      %v1070 = vpop.f32.mrb[0].mxu0
      %v1071 = vpop.f32.mrb[0].mxu0
      %v1072 = vpop.f32.mrb[0].mxu0
      %1073 = vdwg.mxu0
      %v1074 = vadd.f32 %v967, %v1028
      %v1075 = vadd.f32 %v968, %v1030
      %v1076 = vadd.f32 %v969, %v1069
      %s1077 = scalar_lea.vmem %s3, 24
      %v1078 = vld [vmem:[%s1077] sm:$0xff]
      %v1079 = vpack.c.bf16 %v1078, %v1078
      %1080 = vrot.lane.b32.xlu0 %v423, 110
      %v1081 = vpop.permute.xlu0 %1080
      %1082 = vrot.lane.b32.xlu0 %v424, 110
      %v1083 = vpop.permute.xlu0 %1082
      %1084 = vrot.lane.b32.xlu0 %v425, 110
      %v1085 = vpop.permute.xlu0 %1084
      %vm1086 = vcmask 900096
      %v1087 = vsel %vm1086, %v1081, %v1083
      %v1088 = vsel %vm1086, %v1083, %v1085
      %v1090 = vsel %vm453, %v1079, 0
      %v1093 = vsel %vm457, %v1087, 0
      %v1096 = vsel %vm457, %v1088, 0
      %v1099 = vsel %vm457, %v1085, 0
      %1101 = vmatprep.subr.bf16.mxu0 %v1096
      %1102 = vmatpush1.bf16.msra.mxu0 %v1093
      %1103 = vmatprep.subr.bf16.mxu0 0
      %1104 = vmatpush1.bf16.msra.mxu0 0
      %1105 = vmatprep.subr.bf16.mxu0 0
      %1106 = vmatpush1.bf16.msra.mxu0 0
      %1107 = vmatprep.subr.bf16.mxu0 0
      %1108 = vmatpush1.bf16.msra.mxu0 0
      %1109 = vmatprep.subr.bf16.mxu0 0
      %1110 = vmatpush1.bf16.msra.mxu0 0
      %1111 = vmatprep.subr.bf16.mxu0 0
      %1112 = vmatpush1.bf16.msra.mxu0 0
      %1113 = vmatprep.subr.bf16.mxu0 0
      %1114 = vmatpush1.bf16.msra.mxu0 0
      %1115 = vmatprep.subr.bf16.mxu0 0
      %1116 = vmatpush1.bf16.msra.mxu0 0
      %1117 = vmatprep.subr.bf16.mxu0 0
      %1118 = vmatpush1.bf16.msra.mxu0 0
      %1119 = vmatprep.subr.bf16.mxu0 0
      %1120 = vmatpush1.bf16.msra.mxu0 0
      %1121 = vmatprep.subr.bf16.mxu0 0
      %1122 = vmatpush1.bf16.msra.mxu0 0
      %1123 = vmatprep.subr.bf16.mxu0 0
      %1124 = vmatpush1.bf16.msra.mxu0 0
      %1125 = vmatprep.subr.bf16.mxu0 0
      %1126 = vmatpush1.bf16.msra.mxu0 0
      %1127 = vmatprep.subr.bf16.mxu0 0
      %1128 = vmatpush1.bf16.msra.mxu0 0
      %1129 = vmatprep.subr.bf16.mxu0 0
      %1130 = vmatpush1.bf16.msra.mxu0 0
      %1131 = vmatprep.subr.bf16.mxu0 0
      %1132 = vmatpush1.bf16.msra.mxu0 0
      %1133 = vmatprep.mubr.bf16.mxu0 0
      %1134 = vmatmul.mubr.bf16.gmra.mrb[0].mxu0 %v1090
      %v1135 = vpop.f32.mrb[0].mxu0
      %v1136 = vadd.f32 0.0, %v1135
      %v1137 = vpop.f32.mrb[0].mxu0
      %v1138 = vadd.f32 0.0, %v1137
      %v1139 = vpop.f32.mrb[0].mxu0
      %v1140 = vpop.f32.mrb[0].mxu0
      %1141 = vdwg.mxu0
      %1142 = vmatprep.subr.bf16.mxu0 0
      %1143 = vmatpush1.bf16.msra.mxu0 %v1099
      %1144 = vmatprep.subr.bf16.mxu0 0
      %1145 = vmatpush1.bf16.msra.mxu0 0
      %1146 = vmatprep.subr.bf16.mxu0 0
      %1147 = vmatpush1.bf16.msra.mxu0 0
      %1148 = vmatprep.subr.bf16.mxu0 0
      %1149 = vmatpush1.bf16.msra.mxu0 0
      %1150 = vmatprep.subr.bf16.mxu0 0
      %1151 = vmatpush1.bf16.msra.mxu0 0
      %1152 = vmatprep.subr.bf16.mxu0 0
      %1153 = vmatpush1.bf16.msra.mxu0 0
      %1154 = vmatprep.subr.bf16.mxu0 0
      %1155 = vmatpush1.bf16.msra.mxu0 0
      %1156 = vmatprep.subr.bf16.mxu0 0
      %1157 = vmatpush1.bf16.msra.mxu0 0
      %1158 = vmatprep.subr.bf16.mxu0 0
      %1159 = vmatpush1.bf16.msra.mxu0 0
      %1160 = vmatprep.subr.bf16.mxu0 0
      %1161 = vmatpush1.bf16.msra.mxu0 0
      %1162 = vmatprep.subr.bf16.mxu0 0
      %1163 = vmatpush1.bf16.msra.mxu0 0
      %1164 = vmatprep.subr.bf16.mxu0 0
      %1165 = vmatpush1.bf16.msra.mxu0 0
      %1166 = vmatprep.subr.bf16.mxu0 0
      %1167 = vmatpush1.bf16.msra.mxu0 0
      %1168 = vmatprep.subr.bf16.mxu0 0
      %1169 = vmatpush1.bf16.msra.mxu0 0
      %1170 = vmatprep.subr.bf16.mxu0 0
      %1171 = vmatpush1.bf16.msra.mxu0 0
      %1172 = vmatprep.subr.bf16.mxu0 0
      %1173 = vmatpush1.bf16.msra.mxu0 0
      %1174 = vmatprep.mubr.bf16.mxu0 0
      %1175 = vmatmul.mubr.bf16.gmra.mrb[0].mxu0 %v1090
      %v1176 = vpop.f32.mrb[0].mxu0
      %v1177 = vadd.f32 0.0, %v1176
      %v1178 = vpop.f32.mrb[0].mxu0
      %v1179 = vpop.f32.mrb[0].mxu0
      %v1180 = vpop.f32.mrb[0].mxu0
      %1181 = vdwg.mxu0
      %v1182 = vadd.f32 %v1074, %v1136
      %v1183 = vadd.f32 %v1075, %v1138
      %v1184 = vadd.f32 %v1076, %v1177
      %s1185 = scalar_lea.vmem %s4, 24
      %v1186 = vld [vmem:[%s1185] sm:$0xff]
      %v1187 = vpack.c.bf16 %v1186, %v1186
      %1188 = vrot.lane.b32.xlu0 %v446, 110
      %v1189 = vpop.permute.xlu0 %1188
      %1190 = vrot.lane.b32.xlu0 %v447, 110
      %v1191 = vpop.permute.xlu0 %1190
      %1192 = vrot.lane.b32.xlu0 %v448, 110
      %v1193 = vpop.permute.xlu0 %1192
      %v1194 = vsel %vm1086, %v1189, %v1191
      %v1195 = vsel %vm1086, %v1191, %v1193
      %v1197 = vsel %vm453, %v1187, 0
      %v1200 = vsel %vm457, %v1194, 0
      %v1203 = vsel %vm457, %v1195, 0
      %v1206 = vsel %vm457, %v1193, 0
      %1208 = vmatprep.subr.bf16.mxu0 %v1203
      %1209 = vmatpush1.bf16.msra.mxu0 %v1200
      %1210 = vmatprep.subr.bf16.mxu0 0
      %1211 = vmatpush1.bf16.msra.mxu0 0
      %1212 = vmatprep.subr.bf16.mxu0 0
      %1213 = vmatpush1.bf16.msra.mxu0 0
      %1214 = vmatprep.subr.bf16.mxu0 0
      %1215 = vmatpush1.bf16.msra.mxu0 0
      %1216 = vmatprep.subr.bf16.mxu0 0
      %1217 = vmatpush1.bf16.msra.mxu0 0
      %1218 = vmatprep.subr.bf16.mxu0 0
      %1219 = vmatpush1.bf16.msra.mxu0 0
      %1220 = vmatprep.subr.bf16.mxu0 0
      %1221 = vmatpush1.bf16.msra.mxu0 0
      %1222 = vmatprep.subr.bf16.mxu0 0
      %1223 = vmatpush1.bf16.msra.mxu0 0
      %1224 = vmatprep.subr.bf16.mxu0 0
      %1225 = vmatpush1.bf16.msra.mxu0 0
      %1226 = vmatprep.subr.bf16.mxu0 0
      %1227 = vmatpush1.bf16.msra.mxu0 0
      %1228 = vmatprep.subr.bf16.mxu0 0
      %1229 = vmatpush1.bf16.msra.mxu0 0
      %1230 = vmatprep.subr.bf16.mxu0 0
      %1231 = vmatpush1.bf16.msra.mxu0 0
      %1232 = vmatprep.subr.bf16.mxu0 0
      %1233 = vmatpush1.bf16.msra.mxu0 0
      %1234 = vmatprep.subr.bf16.mxu0 0
      %1235 = vmatpush1.bf16.msra.mxu0 0
      %1236 = vmatprep.subr.bf16.mxu0 0
      %1237 = vmatpush1.bf16.msra.mxu0 0
      %1238 = vmatprep.subr.bf16.mxu0 0
      %1239 = vmatpush1.bf16.msra.mxu0 0
      %1240 = vmatprep.mubr.bf16.mxu0 0
      %1241 = vmatmul.mubr.bf16.gmra.mrb[0].mxu0 %v1197
      %v1242 = vpop.f32.mrb[0].mxu0
      %v1243 = vadd.f32 0.0, %v1242
      %v1244 = vpop.f32.mrb[0].mxu0
      %v1245 = vadd.f32 0.0, %v1244
      %v1246 = vpop.f32.mrb[0].mxu0
      %v1247 = vpop.f32.mrb[0].mxu0
      %1248 = vdwg.mxu0
      %1249 = vmatprep.subr.bf16.mxu0 0
      %1250 = vmatpush1.bf16.msra.mxu0 %v1206
      %1251 = vmatprep.subr.bf16.mxu0 0
      %1252 = vmatpush1.bf16.msra.mxu0 0
      %1253 = vmatprep.subr.bf16.mxu0 0
      %1254 = vmatpush1.bf16.msra.mxu0 0
      %1255 = vmatprep.subr.bf16.mxu0 0
      %1256 = vmatpush1.bf16.msra.mxu0 0
      %1257 = vmatprep.subr.bf16.mxu0 0
      %1258 = vmatpush1.bf16.msra.mxu0 0
      %1259 = vmatprep.subr.bf16.mxu0 0
      %1260 = vmatpush1.bf16.msra.mxu0 0
      %1261 = vmatprep.subr.bf16.mxu0 0
      %1262 = vmatpush1.bf16.msra.mxu0 0
      %1263 = vmatprep.subr.bf16.mxu0 0
      %1264 = vmatpush1.bf16.msra.mxu0 0
      %1265 = vmatprep.subr.bf16.mxu0 0
      %1266 = vmatpush1.bf16.msra.mxu0 0
      %1267 = vmatprep.subr.bf16.mxu0 0
      %1268 = vmatpush1.bf16.msra.mxu0 0
      %1269 = vmatprep.subr.bf16.mxu0 0
      %1270 = vmatpush1.bf16.msra.mxu0 0
      %1271 = vmatprep.subr.bf16.mxu0 0
      %1272 = vmatpush1.bf16.msra.mxu0 0
      %1273 = vmatprep.subr.bf16.mxu0 0
      %1274 = vmatpush1.bf16.msra.mxu0 0
      %1275 = vmatprep.subr.bf16.mxu0 0
      %1276 = vmatpush1.bf16.msra.mxu0 0
      %1277 = vmatprep.subr.bf16.mxu0 0
      %1278 = vmatpush1.bf16.msra.mxu0 0
      %1279 = vmatprep.subr.bf16.mxu0 0
      %1280 = vmatpush1.bf16.msra.mxu0 0
      %1281 = vmatprep.mubr.bf16.mxu0 0
      %1282 = vmatmul.mubr.bf16.gmra.mrb[0].mxu0 %v1197
      %v1283 = vpop.f32.mrb[0].mxu0
      %v1284 = vadd.f32 0.0, %v1283
      %v1285 = vpop.f32.mrb[0].mxu0
      %v1286 = vpop.f32.mrb[0].mxu0
      %v1287 = vpop.f32.mrb[0].mxu0
      %1288 = vdwg.mxu0
      %v1289 = vadd.f32 %v1182, %v1243
      %v1290 = vadd.f32 %v1183, %v1245
      %v1291 = vadd.f32 %v1184, %v1284
      %s1292 = scalar_lea.vmem %s3, 32
      %v1293 = vld [vmem:[%s1292] sm:$0xff]
      %v1294 = vpack.c.bf16 %v1293, %v1293
      %1295 = vrot.lane.b32.xlu0 %v423, 109
      %v1296 = vpop.permute.xlu0 %1295
      %1297 = vrot.lane.b32.xlu0 %v424, 109
      %v1298 = vpop.permute.xlu0 %1297
      %1299 = vrot.lane.b32.xlu0 %v425, 109
      %v1300 = vpop.permute.xlu0 %1299
      %vm1301 = vcmask 891904
      %v1302 = vsel %vm1301, %v1296, %v1298
      %v1303 = vsel %vm1301, %v1298, %v1300
      %v1305 = vsel %vm453, %v1294, 0
      %v1308 = vsel %vm457, %v1302, 0
      %v1311 = vsel %vm457, %v1303, 0
      %v1314 = vsel %vm457, %v1300, 0
      %1316 = vmatprep.subr.bf16.mxu0 %v1311
      %1317 = vmatpush1.bf16.msra.mxu0 %v1308
      %1318 = vmatprep.subr.bf16.mxu0 0
      %1319 = vmatpush1.bf16.msra.mxu0 0
      %1320 = vmatprep.subr.bf16.mxu0 0
      %1321 = vmatpush1.bf16.msra.mxu0 0
      %1322 = vmatprep.subr.bf16.mxu0 0
      %1323 = vmatpush1.bf16.msra.mxu0 0
      %1324 = vmatprep.subr.bf16.mxu0 0
      %1325 = vmatpush1.bf16.msra.mxu0 0
      %1326 = vmatprep.subr.bf16.mxu0 0
      %1327 = vmatpush1.bf16.msra.mxu0 0
      %1328 = vmatprep.subr.bf16.mxu0 0
      %1329 = vmatpush1.bf16.msra.mxu0 0
      %1330 = vmatprep.subr.bf16.mxu0 0
      %1331 = vmatpush1.bf16.msra.mxu0 0
      %1332 = vmatprep.subr.bf16.mxu0 0
      %1333 = vmatpush1.bf16.msra.mxu0 0
      %1334 = vmatprep.subr.bf16.mxu0 0
      %1335 = vmatpush1.bf16.msra.mxu0 0
      %1336 = vmatprep.subr.bf16.mxu0 0
      %1337 = vmatpush1.bf16.msra.mxu0 0
      %1338 = vmatprep.subr.bf16.mxu0 0
      %1339 = vmatpush1.bf16.msra.mxu0 0
      %1340 = vmatprep.subr.bf16.mxu0 0
      %1341 = vmatpush1.bf16.msra.mxu0 0
      %1342 = vmatprep.subr.bf16.mxu0 0
      %1343 = vmatpush1.bf16.msra.mxu0 0
      %1344 = vmatprep.subr.bf16.mxu0 0
      %1345 = vmatpush1.bf16.msra.mxu0 0
      %1346 = vmatprep.subr.bf16.mxu0 0
      %1347 = vmatpush1.bf16.msra.mxu0 0
      %1348 = vmatprep.mubr.bf16.mxu0 0
      %1349 = vmatmul.mubr.bf16.gmra.mrb[0].mxu0 %v1305
      %v1350 = vpop.f32.mrb[0].mxu0
      %v1351 = vadd.f32 0.0, %v1350
      %v1352 = vpop.f32.mrb[0].mxu0
      %v1353 = vadd.f32 0.0, %v1352
      %v1354 = vpop.f32.mrb[0].mxu0
      %v1355 = vpop.f32.mrb[0].mxu0
      %1356 = vdwg.mxu0
      %1357 = vmatprep.subr.bf16.mxu0 0
      %1358 = vmatpush1.bf16.msra.mxu0 %v1314
      %1359 = vmatprep.subr.bf16.mxu0 0
      %1360 = vmatpush1.bf16.msra.mxu0 0
      %1361 = vmatprep.subr.bf16.mxu0 0
      %1362 = vmatpush1.bf16.msra.mxu0 0
      %1363 = vmatprep.subr.bf16.mxu0 0
      %1364 = vmatpush1.bf16.msra.mxu0 0
      %1365 = vmatprep.subr.bf16.mxu0 0
      %1366 = vmatpush1.bf16.msra.mxu0 0
      %1367 = vmatprep.subr.bf16.mxu0 0
      %1368 = vmatpush1.bf16.msra.mxu0 0
      %1369 = vmatprep.subr.bf16.mxu0 0
      %1370 = vmatpush1.bf16.msra.mxu0 0
      %1371 = vmatprep.subr.bf16.mxu0 0
      %1372 = vmatpush1.bf16.msra.mxu0 0
      %1373 = vmatprep.subr.bf16.mxu0 0
      %1374 = vmatpush1.bf16.msra.mxu0 0
      %1375 = vmatprep.subr.bf16.mxu0 0
      %1376 = vmatpush1.bf16.msra.mxu0 0
      %1377 = vmatprep.subr.bf16.mxu0 0
      %1378 = vmatpush1.bf16.msra.mxu0 0
      %1379 = vmatprep.subr.bf16.mxu0 0
      %1380 = vmatpush1.bf16.msra.mxu0 0
      %1381 = vmatprep.subr.bf16.mxu0 0
      %1382 = vmatpush1.bf16.msra.mxu0 0
      %1383 = vmatprep.subr.bf16.mxu0 0
      %1384 = vmatpush1.bf16.msra.mxu0 0
      %1385 = vmatprep.subr.bf16.mxu0 0
      %1386 = vmatpush1.bf16.msra.mxu0 0
      %1387 = vmatprep.subr.bf16.mxu0 0
      %1388 = vmatpush1.bf16.msra.mxu0 0
      %1389 = vmatprep.mubr.bf16.mxu0 0
      %1390 = vmatmul.mubr.bf16.gmra.mrb[0].mxu0 %v1305
      %v1391 = vpop.f32.mrb[0].mxu0
      %v1392 = vadd.f32 0.0, %v1391
      %v1393 = vpop.f32.mrb[0].mxu0
      %v1394 = vpop.f32.mrb[0].mxu0
      %v1395 = vpop.f32.mrb[0].mxu0
      %1396 = vdwg.mxu0
      %v1397 = vadd.f32 %v1289, %v1351
      %v1398 = vadd.f32 %v1290, %v1353
      %v1399 = vadd.f32 %v1291, %v1392
      %s1400 = scalar_lea.vmem %s4, 32
      %v1401 = vld [vmem:[%s1400] sm:$0xff]
      %v1402 = vpack.c.bf16 %v1401, %v1401
      %1403 = vrot.lane.b32.xlu0 %v446, 109
      %v1404 = vpop.permute.xlu0 %1403
      %1405 = vrot.lane.b32.xlu0 %v447, 109
      %v1406 = vpop.permute.xlu0 %1405
      %1407 = vrot.lane.b32.xlu0 %v448, 109
      %v1408 = vpop.permute.xlu0 %1407
      %v1409 = vsel %vm1301, %v1404, %v1406
      %v1410 = vsel %vm1301, %v1406, %v1408
      %v1412 = vsel %vm453, %v1402, 0
      %v1415 = vsel %vm457, %v1409, 0
      %v1418 = vsel %vm457, %v1410, 0
      %v1421 = vsel %vm457, %v1408, 0
      %1423 = vmatprep.subr.bf16.mxu0 %v1418
      %1424 = vmatpush1.bf16.msra.mxu0 %v1415
      %1425 = vmatprep.subr.bf16.mxu0 0
      %1426 = vmatpush1.bf16.msra.mxu0 0
      %1427 = vmatprep.subr.bf16.mxu0 0
      %1428 = vmatpush1.bf16.msra.mxu0 0
      %1429 = vmatprep.subr.bf16.mxu0 0
      %1430 = vmatpush1.bf16.msra.mxu0 0
      %1431 = vmatprep.subr.bf16.mxu0 0
      %1432 = vmatpush1.bf16.msra.mxu0 0
      %1433 = vmatprep.subr.bf16.mxu0 0
      %1434 = vmatpush1.bf16.msra.mxu0 0
      %1435 = vmatprep.subr.bf16.mxu0 0
      %1436 = vmatpush1.bf16.msra.mxu0 0
      %1437 = vmatprep.subr.bf16.mxu0 0
      %1438 = vmatpush1.bf16.msra.mxu0 0
      %1439 = vmatprep.subr.bf16.mxu0 0
      %1440 = vmatpush1.bf16.msra.mxu0 0
      %1441 = vmatprep.subr.bf16.mxu0 0
      %1442 = vmatpush1.bf16.msra.mxu0 0
      %1443 = vmatprep.subr.bf16.mxu0 0
      %1444 = vmatpush1.bf16.msra.mxu0 0
      %1445 = vmatprep.subr.bf16.mxu0 0
      %1446 = vmatpush1.bf16.msra.mxu0 0
      %1447 = vmatprep.subr.bf16.mxu0 0
      %1448 = vmatpush1.bf16.msra.mxu0 0
      %1449 = vmatprep.subr.bf16.mxu0 0
      %1450 = vmatpush1.bf16.msra.mxu0 0
      %1451 = vmatprep.subr.bf16.mxu0 0
      %1452 = vmatpush1.bf16.msra.mxu0 0
      %1453 = vmatprep.subr.bf16.mxu0 0
      %1454 = vmatpush1.bf16.msra.mxu0 0
      %1455 = vmatprep.mubr.bf16.mxu0 0
      %1456 = vmatmul.mubr.bf16.gmra.mrb[0].mxu0 %v1412
      %v1457 = vpop.f32.mrb[0].mxu0
      %v1458 = vadd.f32 0.0, %v1457
      %v1459 = vpop.f32.mrb[0].mxu0
      %v1460 = vadd.f32 0.0, %v1459
      %v1461 = vpop.f32.mrb[0].mxu0
      %v1462 = vpop.f32.mrb[0].mxu0
      %1463 = vdwg.mxu0
      %1464 = vmatprep.subr.bf16.mxu0 0
      %1465 = vmatpush1.bf16.msra.mxu0 %v1421
      %1466 = vmatprep.subr.bf16.mxu0 0
      %1467 = vmatpush1.bf16.msra.mxu0 0
      %1468 = vmatprep.subr.bf16.mxu0 0
      %1469 = vmatpush1.bf16.msra.mxu0 0
      %1470 = vmatprep.subr.bf16.mxu0 0
      %1471 = vmatpush1.bf16.msra.mxu0 0
      %1472 = vmatprep.subr.bf16.mxu0 0
      %1473 = vmatpush1.bf16.msra.mxu0 0
      %1474 = vmatprep.subr.bf16.mxu0 0
      %1475 = vmatpush1.bf16.msra.mxu0 0
      %1476 = vmatprep.subr.bf16.mxu0 0
      %1477 = vmatpush1.bf16.msra.mxu0 0
      %1478 = vmatprep.subr.bf16.mxu0 0
      %1479 = vmatpush1.bf16.msra.mxu0 0
      %1480 = vmatprep.subr.bf16.mxu0 0
      %1481 = vmatpush1.bf16.msra.mxu0 0
      %1482 = vmatprep.subr.bf16.mxu0 0
      %1483 = vmatpush1.bf16.msra.mxu0 0
      %1484 = vmatprep.subr.bf16.mxu0 0
      %1485 = vmatpush1.bf16.msra.mxu0 0
      %1486 = vmatprep.subr.bf16.mxu0 0
      %1487 = vmatpush1.bf16.msra.mxu0 0
      %1488 = vmatprep.subr.bf16.mxu0 0
      %1489 = vmatpush1.bf16.msra.mxu0 0
      %1490 = vmatprep.subr.bf16.mxu0 0
      %1491 = vmatpush1.bf16.msra.mxu0 0
      %1492 = vmatprep.subr.bf16.mxu0 0
      %1493 = vmatpush1.bf16.msra.mxu0 0
      %1494 = vmatprep.subr.bf16.mxu0 0
      %1495 = vmatpush1.bf16.msra.mxu0 0
      %1496 = vmatprep.mubr.bf16.mxu0 0
      %1497 = vmatmul.mubr.bf16.gmra.mrb[0].mxu0 %v1412
      %v1498 = vpop.f32.mrb[0].mxu0
      %v1499 = vadd.f32 0.0, %v1498
      %v1500 = vpop.f32.mrb[0].mxu0
      %v1501 = vpop.f32.mrb[0].mxu0
      %v1502 = vpop.f32.mrb[0].mxu0
      %1503 = vdwg.mxu0
      %v1504 = vadd.f32 %v1397, %v1458
      %v1505 = vadd.f32 %v1398, %v1460
      %v1506 = vadd.f32 %v1399, %v1499
      %s1507 = scalar_lea.vmem %s3, 40
      %v1508 = vld [vmem:[%s1507] sm:$0xff]
      %v1509 = vpack.c.bf16 %v1508, %v1508
      %1510 = vrot.lane.b32.xlu0 %v423, 108
      %v1511 = vpop.permute.xlu0 %1510
      %1512 = vrot.lane.b32.xlu0 %v424, 108
      %v1513 = vpop.permute.xlu0 %1512
      %1514 = vrot.lane.b32.xlu0 %v425, 108
      %v1515 = vpop.permute.xlu0 %1514
      %vm1516 = vcmask 883712
      %v1517 = vsel %vm1516, %v1511, %v1513
      %v1518 = vsel %vm1516, %v1513, %v1515
      %v1520 = vsel %vm453, %v1509, 0
      %v1523 = vsel %vm457, %v1517, 0
      %v1526 = vsel %vm457, %v1518, 0
      %v1529 = vsel %vm457, %v1515, 0
      %1531 = vmatprep.subr.bf16.mxu0 %v1526
      %1532 = vmatpush1.bf16.msra.mxu0 %v1523
      %1533 = vmatprep.subr.bf16.mxu0 0
      %1534 = vmatpush1.bf16.msra.mxu0 0
      %1535 = vmatprep.subr.bf16.mxu0 0
      %1536 = vmatpush1.bf16.msra.mxu0 0
      %1537 = vmatprep.subr.bf16.mxu0 0
      %1538 = vmatpush1.bf16.msra.mxu0 0
      %1539 = vmatprep.subr.bf16.mxu0 0
      %1540 = vmatpush1.bf16.msra.mxu0 0
      %1541 = vmatprep.subr.bf16.mxu0 0
      %1542 = vmatpush1.bf16.msra.mxu0 0
      %1543 = vmatprep.subr.bf16.mxu0 0
      %1544 = vmatpush1.bf16.msra.mxu0 0
      %1545 = vmatprep.subr.bf16.mxu0 0
      %1546 = vmatpush1.bf16.msra.mxu0 0
      %1547 = vmatprep.subr.bf16.mxu0 0
      %1548 = vmatpush1.bf16.msra.mxu0 0
      %1549 = vmatprep.subr.bf16.mxu0 0
      %1550 = vmatpush1.bf16.msra.mxu0 0
      %1551 = vmatprep.subr.bf16.mxu0 0
      %1552 = vmatpush1.bf16.msra.mxu0 0
      %1553 = vmatprep.subr.bf16.mxu0 0
      %1554 = vmatpush1.bf16.msra.mxu0 0
      %1555 = vmatprep.subr.bf16.mxu0 0
      %1556 = vmatpush1.bf16.msra.mxu0 0
      %1557 = vmatprep.subr.bf16.mxu0 0
      %1558 = vmatpush1.bf16.msra.mxu0 0
      %1559 = vmatprep.subr.bf16.mxu0 0
      %1560 = vmatpush1.bf16.msra.mxu0 0
      %1561 = vmatprep.subr.bf16.mxu0 0
      %1562 = vmatpush1.bf16.msra.mxu0 0
      %1563 = vmatprep.mubr.bf16.mxu0 0
      %1564 = vmatmul.mubr.bf16.gmra.mrb[0].mxu0 %v1520
      %v1565 = vpop.f32.mrb[0].mxu0
      %v1566 = vadd.f32 0.0, %v1565
      %v1567 = vpop.f32.mrb[0].mxu0
      %v1568 = vadd.f32 0.0, %v1567
      %v1569 = vpop.f32.mrb[0].mxu0
      %v1570 = vpop.f32.mrb[0].mxu0
      %1571 = vdwg.mxu0
      %1572 = vmatprep.subr.bf16.mxu0 0
      %1573 = vmatpush1.bf16.msra.mxu0 %v1529
      %1574 = vmatprep.subr.bf16.mxu0 0
      %1575 = vmatpush1.bf16.msra.mxu0 0
      %1576 = vmatprep.subr.bf16.mxu0 0
      %1577 = vmatpush1.bf16.msra.mxu0 0
      %1578 = vmatprep.subr.bf16.mxu0 0
      %1579 = vmatpush1.bf16.msra.mxu0 0
      %1580 = vmatprep.subr.bf16.mxu0 0
      %1581 = vmatpush1.bf16.msra.mxu0 0
      %1582 = vmatprep.subr.bf16.mxu0 0
      %1583 = vmatpush1.bf16.msra.mxu0 0
      %1584 = vmatprep.subr.bf16.mxu0 0
      %1585 = vmatpush1.bf16.msra.mxu0 0
      %1586 = vmatprep.subr.bf16.mxu0 0
      %1587 = vmatpush1.bf16.msra.mxu0 0
      %1588 = vmatprep.subr.bf16.mxu0 0
      %1589 = vmatpush1.bf16.msra.mxu0 0
      %1590 = vmatprep.subr.bf16.mxu0 0
      %1591 = vmatpush1.bf16.msra.mxu0 0
      %1592 = vmatprep.subr.bf16.mxu0 0
      %1593 = vmatpush1.bf16.msra.mxu0 0
      %1594 = vmatprep.subr.bf16.mxu0 0
      %1595 = vmatpush1.bf16.msra.mxu0 0
      %1596 = vmatprep.subr.bf16.mxu0 0
      %1597 = vmatpush1.bf16.msra.mxu0 0
      %1598 = vmatprep.subr.bf16.mxu0 0
      %1599 = vmatpush1.bf16.msra.mxu0 0
      %1600 = vmatprep.subr.bf16.mxu0 0
      %1601 = vmatpush1.bf16.msra.mxu0 0
      %1602 = vmatprep.subr.bf16.mxu0 0
      %1603 = vmatpush1.bf16.msra.mxu0 0
      %1604 = vmatprep.mubr.bf16.mxu0 0
      %1605 = vmatmul.mubr.bf16.gmra.mrb[0].mxu0 %v1520
      %v1606 = vpop.f32.mrb[0].mxu0
      %v1607 = vadd.f32 0.0, %v1606
      %v1608 = vpop.f32.mrb[0].mxu0
      %v1609 = vpop.f32.mrb[0].mxu0
      %v1610 = vpop.f32.mrb[0].mxu0
      %1611 = vdwg.mxu0
      %v1612 = vadd.f32 %v1504, %v1566
      %v1613 = vadd.f32 %v1505, %v1568
      %v1614 = vadd.f32 %v1506, %v1607
      %s1615 = scalar_lea.vmem %s4, 40
      %v1616 = vld [vmem:[%s1615] sm:$0xff]
      %v1617 = vpack.c.bf16 %v1616, %v1616
      %1618 = vrot.lane.b32.xlu0 %v446, 108
      %v1619 = vpop.permute.xlu0 %1618
      %1620 = vrot.lane.b32.xlu0 %v447, 108
      %v1621 = vpop.permute.xlu0 %1620
      %1622 = vrot.lane.b32.xlu0 %v448, 108
      %v1623 = vpop.permute.xlu0 %1622
      %v1624 = vsel %vm1516, %v1619, %v1621
      %v1625 = vsel %vm1516, %v1621, %v1623
      %v1627 = vsel %vm453, %v1617, 0
      %v1630 = vsel %vm457, %v1624, 0
      %v1633 = vsel %vm457, %v1625, 0
      %v1636 = vsel %vm457, %v1623, 0
      %1638 = vmatprep.subr.bf16.mxu0 %v1633
      %1639 = vmatpush1.bf16.msra.mxu0 %v1630
      %1640 = vmatprep.subr.bf16.mxu0 0
      %1641 = vmatpush1.bf16.msra.mxu0 0
      %1642 = vmatprep.subr.bf16.mxu0 0
      %1643 = vmatpush1.bf16.msra.mxu0 0
      %1644 = vmatprep.subr.bf16.mxu0 0
      %1645 = vmatpush1.bf16.msra.mxu0 0
      %1646 = vmatprep.subr.bf16.mxu0 0
      %1647 = vmatpush1.bf16.msra.mxu0 0
      %1648 = vmatprep.subr.bf16.mxu0 0
      %1649 = vmatpush1.bf16.msra.mxu0 0
      %1650 = vmatprep.subr.bf16.mxu0 0
      %1651 = vmatpush1.bf16.msra.mxu0 0
      %1652 = vmatprep.subr.bf16.mxu0 0
      %1653 = vmatpush1.bf16.msra.mxu0 0
      %1654 = vmatprep.subr.bf16.mxu0 0
      %1655 = vmatpush1.bf16.msra.mxu0 0
      %1656 = vmatprep.subr.bf16.mxu0 0
      %1657 = vmatpush1.bf16.msra.mxu0 0
      %1658 = vmatprep.subr.bf16.mxu0 0
      %1659 = vmatpush1.bf16.msra.mxu0 0
      %1660 = vmatprep.subr.bf16.mxu0 0
      %1661 = vmatpush1.bf16.msra.mxu0 0
      %1662 = vmatprep.subr.bf16.mxu0 0
      %1663 = vmatpush1.bf16.msra.mxu0 0
      %1664 = vmatprep.subr.bf16.mxu0 0
      %1665 = vmatpush1.bf16.msra.mxu0 0
      %1666 = vmatprep.subr.bf16.mxu0 0
      %1667 = vmatpush1.bf16.msra.mxu0 0
      %1668 = vmatprep.subr.bf16.mxu0 0
      %1669 = vmatpush1.bf16.msra.mxu0 0
      %1670 = vmatprep.mubr.bf16.mxu0 0
      %1671 = vmatmul.mubr.bf16.gmra.mrb[0].mxu0 %v1627
      %v1672 = vpop.f32.mrb[0].mxu0
      %v1673 = vadd.f32 0.0, %v1672
      %v1674 = vpop.f32.mrb[0].mxu0
      %v1675 = vadd.f32 0.0, %v1674
      %v1676 = vpop.f32.mrb[0].mxu0
      %v1677 = vpop.f32.mrb[0].mxu0
      %1678 = vdwg.mxu0
      %1679 = vmatprep.subr.bf16.mxu0 0
      %1680 = vmatpush1.bf16.msra.mxu0 %v1636
      %1681 = vmatprep.subr.bf16.mxu0 0
      %1682 = vmatpush1.bf16.msra.mxu0 0
      %1683 = vmatprep.subr.bf16.mxu0 0
      %1684 = vmatpush1.bf16.msra.mxu0 0
      %1685 = vmatprep.subr.bf16.mxu0 0
      %1686 = vmatpush1.bf16.msra.mxu0 0
      %1687 = vmatprep.subr.bf16.mxu0 0
      %1688 = vmatpush1.bf16.msra.mxu0 0
      %1689 = vmatprep.subr.bf16.mxu0 0
      %1690 = vmatpush1.bf16.msra.mxu0 0
      %1691 = vmatprep.subr.bf16.mxu0 0
      %1692 = vmatpush1.bf16.msra.mxu0 0
      %1693 = vmatprep.subr.bf16.mxu0 0
      %1694 = vmatpush1.bf16.msra.mxu0 0
      %1695 = vmatprep.subr.bf16.mxu0 0
      %1696 = vmatpush1.bf16.msra.mxu0 0
      %1697 = vmatprep.subr.bf16.mxu0 0
      %1698 = vmatpush1.bf16.msra.mxu0 0
      %1699 = vmatprep.subr.bf16.mxu0 0
      %1700 = vmatpush1.bf16.msra.mxu0 0
      %1701 = vmatprep.subr.bf16.mxu0 0
      %1702 = vmatpush1.bf16.msra.mxu0 0
      %1703 = vmatprep.subr.bf16.mxu0 0
      %1704 = vmatpush1.bf16.msra.mxu0 0
      %1705 = vmatprep.subr.bf16.mxu0 0
      %1706 = vmatpush1.bf16.msra.mxu0 0
      %1707 = vmatprep.subr.bf16.mxu0 0
      %1708 = vmatpush1.bf16.msra.mxu0 0
      %1709 = vmatprep.subr.bf16.mxu0 0
      %1710 = vmatpush1.bf16.msra.mxu0 0
      %1711 = vmatprep.mubr.bf16.mxu0 0
      %1712 = vmatmul.mubr.bf16.gmra.mrb[0].mxu0 %v1627
      %v1713 = vpop.f32.mrb[0].mxu0
      %v1714 = vadd.f32 0.0, %v1713
      %v1715 = vpop.f32.mrb[0].mxu0
      %v1716 = vpop.f32.mrb[0].mxu0
      %v1717 = vpop.f32.mrb[0].mxu0
      %1718 = vdwg.mxu0
      %v1719 = vadd.f32 %v1612, %v1673
      %v1720 = vadd.f32 %v1613, %v1675
      %v1721 = vadd.f32 %v1614, %v1714
      %s1722 = scalar_lea.vmem %s3, 48
      %v1723 = vld [vmem:[%s1722] sm:$0xff]
      %v1724 = vpack.c.bf16 %v1723, %v1723
      %1725 = vrot.lane.b32.xlu0 %v423, 92
      %v1726 = vpop.permute.xlu0 %1725
      %1727 = vrot.lane.b32.xlu0 %v424, 92
      %v1728 = vpop.permute.xlu0 %1727
      %1729 = vrot.lane.b32.xlu0 %v425, 92
      %v1730 = vpop.permute.xlu0 %1729
      %vm1731 = vcmask 752640
      %v1732 = vsel %vm1731, %v1726, %v1728
      %v1733 = vsel %vm1731, %v1728, %v1730
      %v1735 = vsel %vm453, %v1724, 0
      %v1738 = vsel %vm457, %v1732, 0
      %v1741 = vsel %vm457, %v1733, 0
      %v1744 = vsel %vm457, %v1730, 0
      %1746 = vmatprep.subr.bf16.mxu0 %v1741
      %1747 = vmatpush1.bf16.msra.mxu0 %v1738
      %1748 = vmatprep.subr.bf16.mxu0 0
      %1749 = vmatpush1.bf16.msra.mxu0 0
      %1750 = vmatprep.subr.bf16.mxu0 0
      %1751 = vmatpush1.bf16.msra.mxu0 0
      %1752 = vmatprep.subr.bf16.mxu0 0
      %1753 = vmatpush1.bf16.msra.mxu0 0
      %1754 = vmatprep.subr.bf16.mxu0 0
      %1755 = vmatpush1.bf16.msra.mxu0 0
      %1756 = vmatprep.subr.bf16.mxu0 0
      %1757 = vmatpush1.bf16.msra.mxu0 0
      %1758 = vmatprep.subr.bf16.mxu0 0
      %1759 = vmatpush1.bf16.msra.mxu0 0
      %1760 = vmatprep.subr.bf16.mxu0 0
      %1761 = vmatpush1.bf16.msra.mxu0 0
      %1762 = vmatprep.subr.bf16.mxu0 0
      %1763 = vmatpush1.bf16.msra.mxu0 0
      %1764 = vmatprep.subr.bf16.mxu0 0
      %1765 = vmatpush1.bf16.msra.mxu0 0
      %1766 = vmatprep.subr.bf16.mxu0 0
      %1767 = vmatpush1.bf16.msra.mxu0 0
      %1768 = vmatprep.subr.bf16.mxu0 0
      %1769 = vmatpush1.bf16.msra.mxu0 0
      %1770 = vmatprep.subr.bf16.mxu0 0
      %1771 = vmatpush1.bf16.msra.mxu0 0
      %1772 = vmatprep.subr.bf16.mxu0 0
      %1773 = vmatpush1.bf16.msra.mxu0 0
      %1774 = vmatprep.subr.bf16.mxu0 0
      %1775 = vmatpush1.bf16.msra.mxu0 0
      %1776 = vmatprep.subr.bf16.mxu0 0
      %1777 = vmatpush1.bf16.msra.mxu0 0
      %1778 = vmatprep.mubr.bf16.mxu0 0
      %1779 = vmatmul.mubr.bf16.gmra.mrb[0].mxu0 %v1735
      %v1780 = vpop.f32.mrb[0].mxu0
      %v1781 = vadd.f32 0.0, %v1780
      %v1782 = vpop.f32.mrb[0].mxu0
      %v1783 = vadd.f32 0.0, %v1782
      %v1784 = vpop.f32.mrb[0].mxu0
      %v1785 = vpop.f32.mrb[0].mxu0
      %1786 = vdwg.mxu0
      %1787 = vmatprep.subr.bf16.mxu0 0
      %1788 = vmatpush1.bf16.msra.mxu0 %v1744
      %1789 = vmatprep.subr.bf16.mxu0 0
      %1790 = vmatpush1.bf16.msra.mxu0 0
      %1791 = vmatprep.subr.bf16.mxu0 0
      %1792 = vmatpush1.bf16.msra.mxu0 0
      %1793 = vmatprep.subr.bf16.mxu0 0
      %1794 = vmatpush1.bf16.msra.mxu0 0
      %1795 = vmatprep.subr.bf16.mxu0 0
      %1796 = vmatpush1.bf16.msra.mxu0 0
      %1797 = vmatprep.subr.bf16.mxu0 0
      %1798 = vmatpush1.bf16.msra.mxu0 0
      %1799 = vmatprep.subr.bf16.mxu0 0
      %1800 = vmatpush1.bf16.msra.mxu0 0
      %1801 = vmatprep.subr.bf16.mxu0 0
      %1802 = vmatpush1.bf16.msra.mxu0 0
      %1803 = vmatprep.subr.bf16.mxu0 0
      %1804 = vmatpush1.bf16.msra.mxu0 0
      %1805 = vmatprep.subr.bf16.mxu0 0
      %1806 = vmatpush1.bf16.msra.mxu0 0
      %1807 = vmatprep.subr.bf16.mxu0 0
      %1808 = vmatpush1.bf16.msra.mxu0 0
      %1809 = vmatprep.subr.bf16.mxu0 0
      %1810 = vmatpush1.bf16.msra.mxu0 0
      %1811 = vmatprep.subr.bf16.mxu0 0
      %1812 = vmatpush1.bf16.msra.mxu0 0
      %1813 = vmatprep.subr.bf16.mxu0 0
      %1814 = vmatpush1.bf16.msra.mxu0 0
      %1815 = vmatprep.subr.bf16.mxu0 0
      %1816 = vmatpush1.bf16.msra.mxu0 0
      %1817 = vmatprep.subr.bf16.mxu0 0
      %1818 = vmatpush1.bf16.msra.mxu0 0
      %1819 = vmatprep.mubr.bf16.mxu0 0
      %1820 = vmatmul.mubr.bf16.gmra.mrb[0].mxu0 %v1735
      %v1821 = vpop.f32.mrb[0].mxu0
      %v1822 = vadd.f32 0.0, %v1821
      %v1823 = vpop.f32.mrb[0].mxu0
      %v1824 = vpop.f32.mrb[0].mxu0
      %v1825 = vpop.f32.mrb[0].mxu0
      %1826 = vdwg.mxu0
      %v1827 = vadd.f32 %v1719, %v1781
      %v1828 = vadd.f32 %v1720, %v1783
      %v1829 = vadd.f32 %v1721, %v1822
      %s1830 = scalar_lea.vmem %s4, 48
      %v1831 = vld [vmem:[%s1830] sm:$0xff]
      %v1832 = vpack.c.bf16 %v1831, %v1831
      %1833 = vrot.lane.b32.xlu0 %v446, 92
      %v1834 = vpop.permute.xlu0 %1833
      %1835 = vrot.lane.b32.xlu0 %v447, 92
      %v1836 = vpop.permute.xlu0 %1835
      %1837 = vrot.lane.b32.xlu0 %v448, 92
      %v1838 = vpop.permute.xlu0 %1837
      %v1839 = vsel %vm1731, %v1834, %v1836
      %v1840 = vsel %vm1731, %v1836, %v1838
      %v1842 = vsel %vm453, %v1832, 0
      %v1845 = vsel %vm457, %v1839, 0
      %v1848 = vsel %vm457, %v1840, 0
      %v1851 = vsel %vm457, %v1838, 0
      %1853 = vmatprep.subr.bf16.mxu0 %v1848
      %1854 = vmatpush1.bf16.msra.mxu0 %v1845
      %1855 = vmatprep.subr.bf16.mxu0 0
      %1856 = vmatpush1.bf16.msra.mxu0 0
      %1857 = vmatprep.subr.bf16.mxu0 0
      %1858 = vmatpush1.bf16.msra.mxu0 0
      %1859 = vmatprep.subr.bf16.mxu0 0
      %1860 = vmatpush1.bf16.msra.mxu0 0
      %1861 = vmatprep.subr.bf16.mxu0 0
      %1862 = vmatpush1.bf16.msra.mxu0 0
      %1863 = vmatprep.subr.bf16.mxu0 0
      %1864 = vmatpush1.bf16.msra.mxu0 0
      %1865 = vmatprep.subr.bf16.mxu0 0
      %1866 = vmatpush1.bf16.msra.mxu0 0
      %1867 = vmatprep.subr.bf16.mxu0 0
      %1868 = vmatpush1.bf16.msra.mxu0 0
      %1869 = vmatprep.subr.bf16.mxu0 0
      %1870 = vmatpush1.bf16.msra.mxu0 0
      %1871 = vmatprep.subr.bf16.mxu0 0
      %1872 = vmatpush1.bf16.msra.mxu0 0
      %1873 = vmatprep.subr.bf16.mxu0 0
      %1874 = vmatpush1.bf16.msra.mxu0 0
      %1875 = vmatprep.subr.bf16.mxu0 0
      %1876 = vmatpush1.bf16.msra.mxu0 0
      %1877 = vmatprep.subr.bf16.mxu0 0
      %1878 = vmatpush1.bf16.msra.mxu0 0
      %1879 = vmatprep.subr.bf16.mxu0 0
      %1880 = vmatpush1.bf16.msra.mxu0 0
      %1881 = vmatprep.subr.bf16.mxu0 0
      %1882 = vmatpush1.bf16.msra.mxu0 0
      %1883 = vmatprep.subr.bf16.mxu0 0
      %1884 = vmatpush1.bf16.msra.mxu0 0
      %1885 = vmatprep.mubr.bf16.mxu0 0
      %1886 = vmatmul.mubr.bf16.gmra.mrb[0].mxu0 %v1842
      %v1887 = vpop.f32.mrb[0].mxu0
      %v1888 = vadd.f32 0.0, %v1887
      %v1889 = vpop.f32.mrb[0].mxu0
      %v1890 = vadd.f32 0.0, %v1889
      %v1891 = vpop.f32.mrb[0].mxu0
      %v1892 = vpop.f32.mrb[0].mxu0
      %1893 = vdwg.mxu0
      %1894 = vmatprep.subr.bf16.mxu0 0
      %1895 = vmatpush1.bf16.msra.mxu0 %v1851
      %1896 = vmatprep.subr.bf16.mxu0 0
      %1897 = vmatpush1.bf16.msra.mxu0 0
      %1898 = vmatprep.subr.bf16.mxu0 0
      %1899 = vmatpush1.bf16.msra.mxu0 0
      %1900 = vmatprep.subr.bf16.mxu0 0
      %1901 = vmatpush1.bf16.msra.mxu0 0
      %1902 = vmatprep.subr.bf16.mxu0 0
      %1903 = vmatpush1.bf16.msra.mxu0 0
      %1904 = vmatprep.subr.bf16.mxu0 0
      %1905 = vmatpush1.bf16.msra.mxu0 0
      %1906 = vmatprep.subr.bf16.mxu0 0
      %1907 = vmatpush1.bf16.msra.mxu0 0
      %1908 = vmatprep.subr.bf16.mxu0 0
      %1909 = vmatpush1.bf16.msra.mxu0 0
      %1910 = vmatprep.subr.bf16.mxu0 0
      %1911 = vmatpush1.bf16.msra.mxu0 0
      %1912 = vmatprep.subr.bf16.mxu0 0
      %1913 = vmatpush1.bf16.msra.mxu0 0
      %1914 = vmatprep.subr.bf16.mxu0 0
      %1915 = vmatpush1.bf16.msra.mxu0 0
      %1916 = vmatprep.subr.bf16.mxu0 0
      %1917 = vmatpush1.bf16.msra.mxu0 0
      %1918 = vmatprep.subr.bf16.mxu0 0
      %1919 = vmatpush1.bf16.msra.mxu0 0
      %1920 = vmatprep.subr.bf16.mxu0 0
      %1921 = vmatpush1.bf16.msra.mxu0 0
      %1922 = vmatprep.subr.bf16.mxu0 0
      %1923 = vmatpush1.bf16.msra.mxu0 0
      %1924 = vmatprep.subr.bf16.mxu0 0
      %1925 = vmatpush1.bf16.msra.mxu0 0
      %1926 = vmatprep.mubr.bf16.mxu0 0
      %1927 = vmatmul.mubr.bf16.gmra.mrb[0].mxu0 %v1842
      %v1928 = vpop.f32.mrb[0].mxu0
      %v1929 = vadd.f32 0.0, %v1928
      %v1930 = vpop.f32.mrb[0].mxu0
      %v1931 = vpop.f32.mrb[0].mxu0
      %v1932 = vpop.f32.mrb[0].mxu0
      %1933 = vdwg.mxu0
      %v1934 = vadd.f32 %v1827, %v1888
      %v1935 = vadd.f32 %v1828, %v1890
      %v1936 = vadd.f32 %v1829, %v1929
      %s1937 = scalar_lea.vmem %s3, 56
      %v1938 = vld [vmem:[%s1937] sm:$0xff]
      %v1939 = vpack.c.bf16 %v1938, %v1938
      %1940 = vrot.lane.b32.xlu0 %v423, 91
      %v1941 = vpop.permute.xlu0 %1940
      %1942 = vrot.lane.b32.xlu0 %v424, 91
      %v1943 = vpop.permute.xlu0 %1942
      %1944 = vrot.lane.b32.xlu0 %v425, 91
      %v1945 = vpop.permute.xlu0 %1944
      %vm1946 = vcmask 744448
      %v1947 = vsel %vm1946, %v1941, %v1943
      %v1948 = vsel %vm1946, %v1943, %v1945
      %v1950 = vsel %vm453, %v1939, 0
      %v1953 = vsel %vm457, %v1947, 0
      %v1956 = vsel %vm457, %v1948, 0
      %v1959 = vsel %vm457, %v1945, 0
      %1961 = vmatprep.subr.bf16.mxu0 %v1956
      %1962 = vmatpush1.bf16.msra.mxu0 %v1953
      %1963 = vmatprep.subr.bf16.mxu0 0
      %1964 = vmatpush1.bf16.msra.mxu0 0
      %1965 = vmatprep.subr.bf16.mxu0 0
      %1966 = vmatpush1.bf16.msra.mxu0 0
      %1967 = vmatprep.subr.bf16.mxu0 0
      %1968 = vmatpush1.bf16.msra.mxu0 0
      %1969 = vmatprep.subr.bf16.mxu0 0
      %1970 = vmatpush1.bf16.msra.mxu0 0
      %1971 = vmatprep.subr.bf16.mxu0 0
      %1972 = vmatpush1.bf16.msra.mxu0 0
      %1973 = vmatprep.subr.bf16.mxu0 0
      %1974 = vmatpush1.bf16.msra.mxu0 0
      %1975 = vmatprep.subr.bf16.mxu0 0
      %1976 = vmatpush1.bf16.msra.mxu0 0
      %1977 = vmatprep.subr.bf16.mxu0 0
      %1978 = vmatpush1.bf16.msra.mxu0 0
      %1979 = vmatprep.subr.bf16.mxu0 0
      %1980 = vmatpush1.bf16.msra.mxu0 0
      %1981 = vmatprep.subr.bf16.mxu0 0
      %1982 = vmatpush1.bf16.msra.mxu0 0
      %1983 = vmatprep.subr.bf16.mxu0 0
      %1984 = vmatpush1.bf16.msra.mxu0 0
      %1985 = vmatprep.subr.bf16.mxu0 0
      %1986 = vmatpush1.bf16.msra.mxu0 0
      %1987 = vmatprep.subr.bf16.mxu0 0
      %1988 = vmatpush1.bf16.msra.mxu0 0
      %1989 = vmatprep.subr.bf16.mxu0 0
      %1990 = vmatpush1.bf16.msra.mxu0 0
      %1991 = vmatprep.subr.bf16.mxu0 0
      %1992 = vmatpush1.bf16.msra.mxu0 0
      %1993 = vmatprep.mubr.bf16.mxu0 0
      %1994 = vmatmul.mubr.bf16.gmra.mrb[0].mxu0 %v1950
      %v1995 = vpop.f32.mrb[0].mxu0
      %v1996 = vadd.f32 0.0, %v1995
      %v1997 = vpop.f32.mrb[0].mxu0
      %v1998 = vadd.f32 0.0, %v1997
      %v1999 = vpop.f32.mrb[0].mxu0
      %v2000 = vpop.f32.mrb[0].mxu0
      %2001 = vdwg.mxu0
      %2002 = vmatprep.subr.bf16.mxu0 0
      %2003 = vmatpush1.bf16.msra.mxu0 %v1959
      %2004 = vmatprep.subr.bf16.mxu0 0
      %2005 = vmatpush1.bf16.msra.mxu0 0
      %2006 = vmatprep.subr.bf16.mxu0 0
      %2007 = vmatpush1.bf16.msra.mxu0 0
      %2008 = vmatprep.subr.bf16.mxu0 0
      %2009 = vmatpush1.bf16.msra.mxu0 0
      %2010 = vmatprep.subr.bf16.mxu0 0
      %2011 = vmatpush1.bf16.msra.mxu0 0
      %2012 = vmatprep.subr.bf16.mxu0 0
      %2013 = vmatpush1.bf16.msra.mxu0 0
      %2014 = vmatprep.subr.bf16.mxu0 0
      %2015 = vmatpush1.bf16.msra.mxu0 0
      %2016 = vmatprep.subr.bf16.mxu0 0
      %2017 = vmatpush1.bf16.msra.mxu0 0
      %2018 = vmatprep.subr.bf16.mxu0 0
      %2019 = vmatpush1.bf16.msra.mxu0 0
      %2020 = vmatprep.subr.bf16.mxu0 0
      %2021 = vmatpush1.bf16.msra.mxu0 0
      %2022 = vmatprep.subr.bf16.mxu0 0
      %2023 = vmatpush1.bf16.msra.mxu0 0
      %2024 = vmatprep.subr.bf16.mxu0 0
      %2025 = vmatpush1.bf16.msra.mxu0 0
      %2026 = vmatprep.subr.bf16.mxu0 0
      %2027 = vmatpush1.bf16.msra.mxu0 0
      %2028 = vmatprep.subr.bf16.mxu0 0
      %2029 = vmatpush1.bf16.msra.mxu0 0
      %2030 = vmatprep.subr.bf16.mxu0 0
      %2031 = vmatpush1.bf16.msra.mxu0 0
      %2032 = vmatprep.subr.bf16.mxu0 0
      %2033 = vmatpush1.bf16.msra.mxu0 0
      %2034 = vmatprep.mubr.bf16.mxu0 0
      %2035 = vmatmul.mubr.bf16.gmra.mrb[0].mxu0 %v1950
      %v2036 = vpop.f32.mrb[0].mxu0
      %v2037 = vadd.f32 0.0, %v2036
      %v2038 = vpop.f32.mrb[0].mxu0
      %v2039 = vpop.f32.mrb[0].mxu0
      %v2040 = vpop.f32.mrb[0].mxu0
      %2041 = vdwg.mxu0
      %v2042 = vadd.f32 %v1934, %v1996
      %v2043 = vadd.f32 %v1935, %v1998
      %v2044 = vadd.f32 %v1936, %v2037
      %s2045 = scalar_lea.vmem %s4, 56
      %v2046 = vld [vmem:[%s2045] sm:$0xff]
      %v2047 = vpack.c.bf16 %v2046, %v2046
      %2048 = vrot.lane.b32.xlu0 %v446, 91
      %v2049 = vpop.permute.xlu0 %2048
      %2050 = vrot.lane.b32.xlu0 %v447, 91
      %v2051 = vpop.permute.xlu0 %2050
      %2052 = vrot.lane.b32.xlu0 %v448, 91
      %v2053 = vpop.permute.xlu0 %2052
      %v2054 = vsel %vm1946, %v2049, %v2051
      %v2055 = vsel %vm1946, %v2051, %v2053
      %v2057 = vsel %vm453, %v2047, 0
      %v2060 = vsel %vm457, %v2054, 0
      %v2063 = vsel %vm457, %v2055, 0
      %v2066 = vsel %vm457, %v2053, 0
      %2068 = vmatprep.subr.bf16.mxu0 %v2063
      %2069 = vmatpush1.bf16.msra.mxu0 %v2060
      %2070 = vmatprep.subr.bf16.mxu0 0
      %2071 = vmatpush1.bf16.msra.mxu0 0
      %2072 = vmatprep.subr.bf16.mxu0 0
      %2073 = vmatpush1.bf16.msra.mxu0 0
      %2074 = vmatprep.subr.bf16.mxu0 0
      %2075 = vmatpush1.bf16.msra.mxu0 0
      %2076 = vmatprep.subr.bf16.mxu0 0
      %2077 = vmatpush1.bf16.msra.mxu0 0
      %2078 = vmatprep.subr.bf16.mxu0 0
      %2079 = vmatpush1.bf16.msra.mxu0 0
      %2080 = vmatprep.subr.bf16.mxu0 0
      %2081 = vmatpush1.bf16.msra.mxu0 0
      %2082 = vmatprep.subr.bf16.mxu0 0
      %2083 = vmatpush1.bf16.msra.mxu0 0
      %2084 = vmatprep.subr.bf16.mxu0 0
      %2085 = vmatpush1.bf16.msra.mxu0 0
      %2086 = vmatprep.subr.bf16.mxu0 0
      %2087 = vmatpush1.bf16.msra.mxu0 0
      %2088 = vmatprep.subr.bf16.mxu0 0
      %2089 = vmatpush1.bf16.msra.mxu0 0
      %2090 = vmatprep.subr.bf16.mxu0 0
      %2091 = vmatpush1.bf16.msra.mxu0 0
      %2092 = vmatprep.subr.bf16.mxu0 0
      %2093 = vmatpush1.bf16.msra.mxu0 0
      %2094 = vmatprep.subr.bf16.mxu0 0
      %2095 = vmatpush1.bf16.msra.mxu0 0
      %2096 = vmatprep.subr.bf16.mxu0 0
      %2097 = vmatpush1.bf16.msra.mxu0 0
      %2098 = vmatprep.subr.bf16.mxu0 0
      %2099 = vmatpush1.bf16.msra.mxu0 0
      %2100 = vmatprep.mubr.bf16.mxu0 0
      %2101 = vmatmul.mubr.bf16.gmra.mrb[0].mxu0 %v2057
      %v2102 = vpop.f32.mrb[0].mxu0
      %v2103 = vadd.f32 0.0, %v2102
      %v2104 = vpop.f32.mrb[0].mxu0
      %v2105 = vadd.f32 0.0, %v2104
      %v2106 = vpop.f32.mrb[0].mxu0
      %v2107 = vpop.f32.mrb[0].mxu0
      %2108 = vdwg.mxu0
      %2109 = vmatprep.subr.bf16.mxu0 0
      %2110 = vmatpush1.bf16.msra.mxu0 %v2066
      %2111 = vmatprep.subr.bf16.mxu0 0
      %2112 = vmatpush1.bf16.msra.mxu0 0
      %2113 = vmatprep.subr.bf16.mxu0 0
      %2114 = vmatpush1.bf16.msra.mxu0 0
      %2115 = vmatprep.subr.bf16.mxu0 0
      %2116 = vmatpush1.bf16.msra.mxu0 0
      %2117 = vmatprep.subr.bf16.mxu0 0
      %2118 = vmatpush1.bf16.msra.mxu0 0
      %2119 = vmatprep.subr.bf16.mxu0 0
      %2120 = vmatpush1.bf16.msra.mxu0 0
      %2121 = vmatprep.subr.bf16.mxu0 0
      %2122 = vmatpush1.bf16.msra.mxu0 0
      %2123 = vmatprep.subr.bf16.mxu0 0
      %2124 = vmatpush1.bf16.msra.mxu0 0
      %2125 = vmatprep.subr.bf16.mxu0 0
      %2126 = vmatpush1.bf16.msra.mxu0 0
      %2127 = vmatprep.subr.bf16.mxu0 0
      %2128 = vmatpush1.bf16.msra.mxu0 0
      %2129 = vmatprep.subr.bf16.mxu0 0
      %2130 = vmatpush1.bf16.msra.mxu0 0
      %2131 = vmatprep.subr.bf16.mxu0 0
      %2132 = vmatpush1.bf16.msra.mxu0 0
      %2133 = vmatprep.subr.bf16.mxu0 0
      %2134 = vmatpush1.bf16.msra.mxu0 0
      %2135 = vmatprep.subr.bf16.mxu0 0
      %2136 = vmatpush1.bf16.msra.mxu0 0
      %2137 = vmatprep.subr.bf16.mxu0 0
      %2138 = vmatpush1.bf16.msra.mxu0 0
      %2139 = vmatprep.subr.bf16.mxu0 0
      %2140 = vmatpush1.bf16.msra.mxu0 0
      %2141 = vmatprep.mubr.bf16.mxu0 0
      %2142 = vmatmul.mubr.bf16.gmra.mrb[0].mxu0 %v2057
      %v2143 = vpop.f32.mrb[0].mxu0
      %v2144 = vadd.f32 0.0, %v2143
      %v2145 = vpop.f32.mrb[0].mxu0
      %v2146 = vpop.f32.mrb[0].mxu0
      %v2147 = vpop.f32.mrb[0].mxu0
      %2148 = vdwg.mxu0
      %v2149 = vadd.f32 %v2042, %v2103
      %v2150 = vadd.f32 %v2043, %v2105
      %v2151 = vadd.f32 %v2044, %v2144
      %s2152 = scalar_lea.vmem %s3, 64
      %v2153 = vld [vmem:[%s2152] sm:$0xff]
      %v2154 = vpack.c.bf16 %v2153, %v2153
      %2155 = vrot.lane.b32.xlu0 %v423, 90
      %v2156 = vpop.permute.xlu0 %2155
      %2157 = vrot.lane.b32.xlu0 %v424, 90
      %v2158 = vpop.permute.xlu0 %2157
      %2159 = vrot.lane.b32.xlu0 %v425, 90
      %v2160 = vpop.permute.xlu0 %2159
      %vm2161 = vcmask 736256
      %v2162 = vsel %vm2161, %v2156, %v2158
      %v2163 = vsel %vm2161, %v2158, %v2160
      %v2165 = vsel %vm453, %v2154, 0
      %v2168 = vsel %vm457, %v2162, 0
      %v2171 = vsel %vm457, %v2163, 0
      %v2174 = vsel %vm457, %v2160, 0
      %2176 = vmatprep.subr.bf16.mxu0 %v2171
      %2177 = vmatpush1.bf16.msra.mxu0 %v2168
      %2178 = vmatprep.subr.bf16.mxu0 0
      %2179 = vmatpush1.bf16.msra.mxu0 0
      %2180 = vmatprep.subr.bf16.mxu0 0
      %2181 = vmatpush1.bf16.msra.mxu0 0
      %2182 = vmatprep.subr.bf16.mxu0 0
      %2183 = vmatpush1.bf16.msra.mxu0 0
      %2184 = vmatprep.subr.bf16.mxu0 0
      %2185 = vmatpush1.bf16.msra.mxu0 0
      %2186 = vmatprep.subr.bf16.mxu0 0
      %2187 = vmatpush1.bf16.msra.mxu0 0
      %2188 = vmatprep.subr.bf16.mxu0 0
      %2189 = vmatpush1.bf16.msra.mxu0 0
      %2190 = vmatprep.subr.bf16.mxu0 0
      %2191 = vmatpush1.bf16.msra.mxu0 0
      %2192 = vmatprep.subr.bf16.mxu0 0
      %2193 = vmatpush1.bf16.msra.mxu0 0
      %2194 = vmatprep.subr.bf16.mxu0 0
      %2195 = vmatpush1.bf16.msra.mxu0 0
      %2196 = vmatprep.subr.bf16.mxu0 0
      %2197 = vmatpush1.bf16.msra.mxu0 0
      %2198 = vmatprep.subr.bf16.mxu0 0
      %2199 = vmatpush1.bf16.msra.mxu0 0
      %2200 = vmatprep.subr.bf16.mxu0 0
      %2201 = vmatpush1.bf16.msra.mxu0 0
      %2202 = vmatprep.subr.bf16.mxu0 0
      %2203 = vmatpush1.bf16.msra.mxu0 0
      %2204 = vmatprep.subr.bf16.mxu0 0
      %2205 = vmatpush1.bf16.msra.mxu0 0
      %2206 = vmatprep.subr.bf16.mxu0 0
      %2207 = vmatpush1.bf16.msra.mxu0 0
      %2208 = vmatprep.mubr.bf16.mxu0 0
      %2209 = vmatmul.mubr.bf16.gmra.mrb[0].mxu0 %v2165
      %v2210 = vpop.f32.mrb[0].mxu0
      %v2211 = vadd.f32 0.0, %v2210
      %v2212 = vpop.f32.mrb[0].mxu0
      %v2213 = vadd.f32 0.0, %v2212
      %v2214 = vpop.f32.mrb[0].mxu0
      %v2215 = vpop.f32.mrb[0].mxu0
      %2216 = vdwg.mxu0
      %2217 = vmatprep.subr.bf16.mxu0 0
      %2218 = vmatpush1.bf16.msra.mxu0 %v2174
      %2219 = vmatprep.subr.bf16.mxu0 0
      %2220 = vmatpush1.bf16.msra.mxu0 0
      %2221 = vmatprep.subr.bf16.mxu0 0
      %2222 = vmatpush1.bf16.msra.mxu0 0
      %2223 = vmatprep.subr.bf16.mxu0 0
      %2224 = vmatpush1.bf16.msra.mxu0 0
      %2225 = vmatprep.subr.bf16.mxu0 0
      %2226 = vmatpush1.bf16.msra.mxu0 0
      %2227 = vmatprep.subr.bf16.mxu0 0
      %2228 = vmatpush1.bf16.msra.mxu0 0
      %2229 = vmatprep.subr.bf16.mxu0 0
      %2230 = vmatpush1.bf16.msra.mxu0 0
      %2231 = vmatprep.subr.bf16.mxu0 0
      %2232 = vmatpush1.bf16.msra.mxu0 0
      %2233 = vmatprep.subr.bf16.mxu0 0
      %2234 = vmatpush1.bf16.msra.mxu0 0
      %2235 = vmatprep.subr.bf16.mxu0 0
      %2236 = vmatpush1.bf16.msra.mxu0 0
      %2237 = vmatprep.subr.bf16.mxu0 0
      %2238 = vmatpush1.bf16.msra.mxu0 0
      %2239 = vmatprep.subr.bf16.mxu0 0
      %2240 = vmatpush1.bf16.msra.mxu0 0
      %2241 = vmatprep.subr.bf16.mxu0 0
      %2242 = vmatpush1.bf16.msra.mxu0 0
      %2243 = vmatprep.subr.bf16.mxu0 0
      %2244 = vmatpush1.bf16.msra.mxu0 0
      %2245 = vmatprep.subr.bf16.mxu0 0
      %2246 = vmatpush1.bf16.msra.mxu0 0
      %2247 = vmatprep.subr.bf16.mxu0 0
      %2248 = vmatpush1.bf16.msra.mxu0 0
      %2249 = vmatprep.mubr.bf16.mxu0 0
      %2250 = vmatmul.mubr.bf16.gmra.mrb[0].mxu0 %v2165
      %v2251 = vpop.f32.mrb[0].mxu0
      %v2252 = vadd.f32 0.0, %v2251
      %v2253 = vpop.f32.mrb[0].mxu0
      %v2254 = vpop.f32.mrb[0].mxu0
      %v2255 = vpop.f32.mrb[0].mxu0
      %2256 = vdwg.mxu0
      %v2257 = vadd.f32 %v2149, %v2211
      %v2258 = vadd.f32 %v2150, %v2213
      %v2259 = vadd.f32 %v2151, %v2252
      %s2260 = scalar_lea.vmem %s4, 64
      %v2261 = vld [vmem:[%s2260] sm:$0xff]
      %v2262 = vpack.c.bf16 %v2261, %v2261
      %2263 = vrot.lane.b32.xlu0 %v446, 90
      %v2264 = vpop.permute.xlu0 %2263
      %2265 = vrot.lane.b32.xlu0 %v447, 90
      %v2266 = vpop.permute.xlu0 %2265
      %2267 = vrot.lane.b32.xlu0 %v448, 90
      %v2268 = vpop.permute.xlu0 %2267
      %v2269 = vsel %vm2161, %v2264, %v2266
      %v2270 = vsel %vm2161, %v2266, %v2268
      %v2272 = vsel %vm453, %v2262, 0
      %v2275 = vsel %vm457, %v2269, 0
      %v2278 = vsel %vm457, %v2270, 0
      %v2281 = vsel %vm457, %v2268, 0
      %2283 = vmatprep.subr.bf16.mxu0 %v2278
      %2284 = vmatpush1.bf16.msra.mxu0 %v2275
      %2285 = vmatprep.subr.bf16.mxu0 0
      %2286 = vmatpush1.bf16.msra.mxu0 0
      %2287 = vmatprep.subr.bf16.mxu0 0
      %2288 = vmatpush1.bf16.msra.mxu0 0
      %2289 = vmatprep.subr.bf16.mxu0 0
      %2290 = vmatpush1.bf16.msra.mxu0 0
      %2291 = vmatprep.subr.bf16.mxu0 0
      %2292 = vmatpush1.bf16.msra.mxu0 0
      %2293 = vmatprep.subr.bf16.mxu0 0
      %2294 = vmatpush1.bf16.msra.mxu0 0
      %2295 = vmatprep.subr.bf16.mxu0 0
      %2296 = vmatpush1.bf16.msra.mxu0 0
      %2297 = vmatprep.subr.bf16.mxu0 0
      %2298 = vmatpush1.bf16.msra.mxu0 0
      %2299 = vmatprep.subr.bf16.mxu0 0
      %2300 = vmatpush1.bf16.msra.mxu0 0
      %2301 = vmatprep.subr.bf16.mxu0 0
      %2302 = vmatpush1.bf16.msra.mxu0 0
      %2303 = vmatprep.subr.bf16.mxu0 0
      %2304 = vmatpush1.bf16.msra.mxu0 0
      %2305 = vmatprep.subr.bf16.mxu0 0
      %2306 = vmatpush1.bf16.msra.mxu0 0
      %2307 = vmatprep.subr.bf16.mxu0 0
      %2308 = vmatpush1.bf16.msra.mxu0 0
      %2309 = vmatprep.subr.bf16.mxu0 0
      %2310 = vmatpush1.bf16.msra.mxu0 0
      %2311 = vmatprep.subr.bf16.mxu0 0
      %2312 = vmatpush1.bf16.msra.mxu0 0
      %2313 = vmatprep.subr.bf16.mxu0 0
      %2314 = vmatpush1.bf16.msra.mxu0 0
      %2315 = vmatprep.mubr.bf16.mxu0 0
      %2316 = vmatmul.mubr.bf16.gmra.mrb[0].mxu0 %v2272
      %v2317 = vpop.f32.mrb[0].mxu0
      %v2318 = vadd.f32 0.0, %v2317
      %v2319 = vpop.f32.mrb[0].mxu0
      %v2320 = vadd.f32 0.0, %v2319
      %v2321 = vpop.f32.mrb[0].mxu0
      %v2322 = vpop.f32.mrb[0].mxu0
      %2323 = vdwg.mxu0
      %2324 = vmatprep.subr.bf16.mxu0 0
      %2325 = vmatpush1.bf16.msra.mxu0 %v2281
      %2326 = vmatprep.subr.bf16.mxu0 0
      %2327 = vmatpush1.bf16.msra.mxu0 0
      %2328 = vmatprep.subr.bf16.mxu0 0
      %2329 = vmatpush1.bf16.msra.mxu0 0
      %2330 = vmatprep.subr.bf16.mxu0 0
      %2331 = vmatpush1.bf16.msra.mxu0 0
      %2332 = vmatprep.subr.bf16.mxu0 0
      %2333 = vmatpush1.bf16.msra.mxu0 0
      %2334 = vmatprep.subr.bf16.mxu0 0
      %2335 = vmatpush1.bf16.msra.mxu0 0
      %2336 = vmatprep.subr.bf16.mxu0 0
      %2337 = vmatpush1.bf16.msra.mxu0 0
      %2338 = vmatprep.subr.bf16.mxu0 0
      %2339 = vmatpush1.bf16.msra.mxu0 0
      %2340 = vmatprep.subr.bf16.mxu0 0
      %2341 = vmatpush1.bf16.msra.mxu0 0
      %2342 = vmatprep.subr.bf16.mxu0 0
      %2343 = vmatpush1.bf16.msra.mxu0 0
      %2344 = vmatprep.subr.bf16.mxu0 0
      %2345 = vmatpush1.bf16.msra.mxu0 0
      %2346 = vmatprep.subr.bf16.mxu0 0
      %2347 = vmatpush1.bf16.msra.mxu0 0
      %2348 = vmatprep.subr.bf16.mxu0 0
      %2349 = vmatpush1.bf16.msra.mxu0 0
      %2350 = vmatprep.subr.bf16.mxu0 0
      %2351 = vmatpush1.bf16.msra.mxu0 0
      %2352 = vmatprep.subr.bf16.mxu0 0
      %2353 = vmatpush1.bf16.msra.mxu0 0
      %2354 = vmatprep.subr.bf16.mxu0 0
      %2355 = vmatpush1.bf16.msra.mxu0 0
      %2356 = vmatprep.mubr.bf16.mxu0 0
      %2357 = vmatmul.mubr.bf16.gmra.mrb[0].mxu0 %v2272
      %v2358 = vpop.f32.mrb[0].mxu0
      %v2359 = vadd.f32 0.0, %v2358
      %v2360 = vpop.f32.mrb[0].mxu0
      %v2361 = vpop.f32.mrb[0].mxu0
      %v2362 = vpop.f32.mrb[0].mxu0
      %2363 = vdwg.mxu0
      %v2364 = vadd.f32 %v2257, %v2318
      %v2365 = vadd.f32 %v2258, %v2320
      %v2366 = vadd.f32 %v2259, %v2359
      %v2367 = vld [vmem:[%s5] sm:$0xff]
      %2369 = vset.pattern.permute.xlu0 0
      %2370 = vperm.xlu0 %2369, %v2367
      %v2371 = vpop.permute.xlu0 %2370
      %v2373 = vadd.f32 %v2364, %v2371
      %v2374 = vadd.f32 %v2365, %v2371
      %v2375 = vadd.f32 %v2366, %v2371
      %v2376 = vsub.f32 0.0, %v2373
      %v2377 = vsub.f32 0.0, %v2374
      %v2378 = vsub.f32 0.0, %v2375
      %v2379 = vmul.f32 %v2376, 1.442695
      %v2380 = vpow.pop %v2379
      %v2381 = vmul.f32 %v2377, 1.442695
      %v2382 = vpow.pop %v2381
      %v2383 = vmul.f32 %v2378, 1.442695
      %v2384 = vpow.pop %v2383
      %v2385 = vadd.f32 %v2380, 1.0
      %v2386 = vadd.f32 %v2382, 1.0
      %v2387 = vadd.f32 %v2384, 1.0
      %v2388 = vrcp.pop %v2385
      %v2389 = vrcp.pop %v2386
      %v2390 = vrcp.pop %v2387
      %v2391 = vtanh.pop %v2373
      %v2392 = vtanh.pop %v2374
      %v2393 = vtanh.pop %v2375
      %v2394 = vld [vmem:[#allocation3] sm:$0x3f]
      %v2396 = vcombine.low %v2394, %v2394
      %v2398 = vunpack.c.l.s4 1983009808
      %v2399 = vunpack.c.0.s8 %v2398
      %v2400 = vlaneseq
      %v2401 = vshrl.u32 %v2400, 7
      %v2402 = vsub.s32 %v2399, %v2401
      %v2403 = vrot.slane %v2396, %v2402
      %v2405 = vunpack.c.l.s4 1983009808
      %v2406 = vunpack.c.0.s8 %v2405
      %v2407 = vlaneseq
      %v2408 = vshrl.u32 %v2407, 7
      %v2409 = vsub.s32 %v2406, %v2408
      %v2410 = vrot.slane %v2394, %v2409
      %v2411 = vcombine.high %v2403, %v2403
      %v2415 = vmul.f32 %v2388, %v2403
      %v2416 = vmul.f32 %v2389, %v2411
      %v2417 = vmul.f32 %v2390, %v2410
      %v2421 = vrot.slane %v2391, 6
      %v2422 = vrot.slane %v2392, 6
      %v2423 = vrot.slane %v2393, 6
      %v2427 = vmul.f32 %v2388, %v2421
      %v2428 = vmul.f32 %v2389, %v2422
      %v2429 = vmul.f32 %v2390, %v2423
      %v2433 = vrot.slane %v2427, 6
      %v2434 = vrot.slane %v2428, 6
      %v2435 = vrot.slane %v2429, 6
      %v2439 = vadd.f32 %v2415, %v2433
      %v2440 = vadd.f32 %v2416, %v2434
      %v2441 = vadd.f32 %v2417, %v2435
      %v2442 = vtanh.pop %v2439
      %v2443 = vtanh.pop %v2440
      %v2444 = vtanh.pop %v2441
      %v2448 = vrot.slane %v2442, 6
      %v2449 = vrot.slane %v2443, 6
      %v2450 = vrot.slane %v2444, 6
      %v2454 = vmul.f32 %v2388, %v2448
      %v2455 = vmul.f32 %v2389, %v2449
      %v2456 = vmul.f32 %v2390, %v2450
      %v2460 = vcombine.low %v2439, %v2440
      %v2462 = vunpack.c.l.s4 1983009808
      %v2463 = vunpack.c.0.s8 %v2462
      %v2464 = vlaneseq
      %v2465 = vshrl.u32 %v2464, 7
      %v2466 = vsub.s32 %v2463, %v2465
      %v2467 = vrot.slane %v2460, %v2466
      %v2469 = vunpack.c.l.s4 1983009808
      %v2470 = vunpack.c.0.s8 %v2469
      %v2471 = vlaneseq
      %v2472 = vshrl.u32 %v2471, 7
      %v2473 = vsub.s32 %v2470, %v2472
      %v2474 = vrot.slane %v2441, %v2473
      %v2475 = vcombine.high %v2467, %v2474
      %vm2477 = vcmask 1041408
      %vm2478 = vcmask 1043458
      %vm2479 = vmor %vm2478, %vm2477
      %vm2480 = vcmask 242692
      %vm2481 = vmor %vm2480, %vm2479
      %2482 = vst.msk [vmem:[#allocation3] sm:$0x3f] %vm2481, %v2475
      %v2483 = vld [vmem:[%s6] sm:$0x7]
      %vm2484 = vcmp.gt.f32.partialorder %v2483, 0.5
      %v2485 = vsel %vm2484, 1, 0
      %v2486 = vlaneseq
      %v2487 = vshrl.u32 %v2486, 7
      %v2488 = vsub.s32 0, %v2487
      %v2489 = vrot.slane %v2485, %v2488
      %v2490 = vlaneseq
      %v2491 = vshrl.u32 %v2490, 7
      %v2492 = vsub.s32 1, %v2491
      %v2493 = vrot.slane %v2485, %v2492
      %v2494 = vlaneseq
      %v2495 = vshrl.u32 %v2494, 7
      %v2496 = vsub.s32 2, %v2495
      %v2497 = vrot.slane %v2485, %v2496
      %vm2498 = vcmp.eq.s32.totalorder %v2489, 1
      %vm2499 = vcmp.eq.s32.totalorder %v2493, 1
      %vm2500 = vcmp.eq.s32.totalorder %v2497, 1
      %v2501 = vsel %vm2498, %v2454, 0.0
      %v2502 = vsel %vm2499, %v2455, 0.0
      %v2503 = vsel %vm2500, %v2456, 0.0
      %v2507 = vcombine.high %v2501, %v2502
      %v2508 = vcombine.high %v2503, %v2503
      %v2510 = vunpack.c.l.s4 1983009808
      %v2511 = vunpack.c.0.s8 %v2510
      %v2512 = vlaneseq
      %v2513 = vshrl.u32 %v2512, 7
      %v2514 = vsub.s32 %v2511, %v2513
      %v2515 = vrot.slane %v2507, %v2514
      %v2517 = vunpack.c.l.s4 1983009808
      %v2518 = vunpack.c.0.s8 %v2517
      %v2519 = vlaneseq
      %v2520 = vshrl.u32 %v2519, 7
      %v2521 = vsub.s32 %v2518, %v2520
      %v2522 = vrot.slane %v2508, %v2521
      %v2523 = vcombine.low %v2515, %v2522
      %2524 = vrot.lane.b32.xlu0 %v2523, 19
      %v2525 = vpop.permute.xlu0 %2524
      %v2526 = vrot.slane %v2525, 6
      %vm2527 = vcmask 154624
      %v2528 = vsel %vm2527, %v2526, %v2525
      %vm2530 = vcmask 1041560
      %vm2531 = vmor %vm2478, %vm2530
      %vm2532 = vcmask 398340
      %vm2533 = vmor %vm2532, %vm2531
      %2534 = vst.msk [vmem:[#allocation2] sm:$0x3f] %vm2533, %v2528
      %p2535 = scmp.eq.s32.totalorder %s25, 2
      // Predicated region
      $region53: #{model_step.29} parent=47 // pred_check
        %p2536 = pneg %p2535
      $region54: #{model_step.29} parent=47 // pred_check_branch
        %2538 = sbr.rel (%p2536) target = $region56
      $region55: #{model_step.29} parent=47 // pred_region
        %v2542 = vcombine.high %v2454, %v2455
        %v2543 = vcombine.high %v2456, %v2456
        %v2545 = vunpack.c.l.s4 1983009808
        %v2546 = vunpack.c.0.s8 %v2545
        %v2547 = vlaneseq
        %v2548 = vshrl.u32 %v2547, 7
        %v2549 = vsub.s32 %v2546, %v2548
        %v2550 = vrot.slane %v2542, %v2549
        %v2552 = vunpack.c.l.s4 1983009808
        %v2553 = vunpack.c.0.s8 %v2552
        %v2554 = vlaneseq
        %v2555 = vshrl.u32 %v2554, 7
        %v2556 = vsub.s32 %v2553, %v2555
        %v2557 = vrot.slane %v2543, %v2556
        %v2558 = vcombine.low %v2550, %v2557
        %2560 = vst.msk [vmem:[%s379] sm:$0x3f] %vm2481, %v2558
        %2561 = vst.msk [vmem:[%s384] sm:$0x3f] %vm2481, %v2475
      $region56: #{model_step.29} parent=47 // pred_fallthru
        _
      %p2562 = scmp.lt.s32.totalorder %s24, 1
      %s2563 = scalar_select %p2562, %s24, 1
      %s2564 = smul.addr %s2563, 3
      %s2565 = smul.addr %s2564, 2
      %s2566 = scalar_lea.vmem %s7, %s2565
      %p2567 = scmp.lt.s32.totalorder %s24, 1
      %s2568 = scalar_select %p2567, %s24, 1
      %s2569 = smul.addr %s2568, 3
      %s2570 = smul.addr %s2569, 2
      %s2571 = scalar_lea.vmem %s8, %s2570
      // Predicated region
      $region57: #{model_step.29} parent=47 // pred_check
        %p2572 = pneg %p214
      $region58: #{model_step.29} parent=47 // pred_check_branch
        %2574 = sbr.rel (%p2572) target = $region60
      $region59: #{model_step.29} parent=47 // pred_region
        _
      $region60: #{model_step.29} parent=47 // pred_fallthru
        _
      // Predicated region
      $region61: #{model_step.29} parent=47 // pred_check
        %p2575 = pneg %p240
      $region62: #{model_step.29} parent=47 // pred_check_branch
        %2577 = sbr.rel (%p2575) target = $region64
      $region63: #{model_step.29} parent=47 // pred_region
        _
      $region64: #{model_step.29} parent=47 // pred_fallthru
        _
    $region48: #{model_step.29} parent=5 // pred_fallthru
      _
    %p2578 = scmp.le.s32.totalorder 2, %s15
    // Predicated region
    $region65: #{model_step.29} parent=5 // pred_check
      %p2579 = pneg %p2578
    $region66: #{model_step.29} parent=5 // pred_check_branch
      %2581 = sbr.rel (%p2579) target = $region68
    $region67: #{model_step.29} parent=5 // pred_region
      %s2582 = ssub.s32 %s15, 2
      // Predicated region
      $region69: #{model_step.29} parent=67 // pred_check
        %p2583 = pneg %p220
      $region70: #{model_step.29} parent=67 // pred_check_branch
        %2585 = sbr.rel (%p2583) target = $region72
      $region71: #{model_step.29} parent=67 // pred_region
        %p2586 = scmp.lt.s32.totalorder %s26, 1
        %s2587 = scalar_select %p2586, %s26, 1
        %s2588 = smul.addr %s2587, 3
        %s2589 = smul.addr %s2588, 2
        %s2590 = scalar_lea.vmem %s7, %s2589
      $region72: #{model_step.29} parent=67 // pred_fallthru
        _
      // Predicated region
      $region73: #{model_step.29} parent=67 // pred_check
        %p2591 = pneg %p246
      $region74: #{model_step.29} parent=67 // pred_check_branch
        %2593 = sbr.rel (%p2591) target = $region76
      $region75: #{model_step.29} parent=67 // pred_region
        %p2594 = scmp.lt.s32.totalorder %s26, 1
        %s2595 = scalar_select %p2594, %s26, 1
        %s2596 = smul.addr %s2595, 3
        %s2597 = smul.addr %s2596, 2
        %s2598 = scalar_lea.vmem %s8, %s2597
      $region76: #{model_step.29} parent=67 // pred_fallthru
        _
    $region68: #{model_step.29} parent=5 // pred_fallthru
      _
  $region6: #{model_step.29} parent=0 // loop_footer
    %s19 = sadd.s32 1, %s15
  $region7: #{model_step.29} parent=0 // loop_footer_branch
    %14 = sbr.rel target = $region3
  $region8: #{model_step.29} parent=0 // loop_exit
    _

</llo_original>
